<compile_context>
chip_gen: v6e
topology: v6e:2x2x1
jax: 0.10.0
libtpu: 0.0.40
codegen_flags: <defaults>
</compile_context>

<pallas_src>
import functools

import jax
import jax.numpy as jnp
from jax.experimental import pallas as pl
from jax.experimental.pallas import tpu as pltpu

_EPS = 1e-5  # nn.InstanceNorm2d default eps


def _vmem_limit_bytes():
    # Generation-aware scoped-VMEM limit: ~80% of physical VMEM, capped at 100 MiB.
    # (v5e/v6e: 128 MiB physical -> 100 MiB; v7x: 64 MiB physical -> ~52 MiB.)
    cap = 128 * 1024 * 1024
    try:
        cap = int(pltpu.get_tpu_info().vmem_capacity_bytes)
    except Exception:  # non-TPU tracing / older jax: fall back to a safe default
        pass
    return min(100 * 1024 * 1024, int(cap * 0.8))


# ---------------------------------------------------------------------------
# Kernel 1: ConvTranspose2d(Cin -> Cin//2, k=2, s=2, bias=True) as a single 128-wide matmul
# ---------------------------------------------------------------------------
def _tconv_kernel(x_ref, w_ref, b_ref, o_ref, *, H, W, Cup2):
    # x_ref: (1, H*W, Cin) bf16 ; w_ref: (Cin, 4*Cup) bf16, lane order (dh, dw, c)
    # b_ref: (1, 4*Cup) f32    ; o_ref: (1, H, 2, W, 2*Cup) bf16
    y = jnp.dot(x_ref[0], w_ref[...], preferred_element_type=jnp.float32) + b_ref[...]
    y = y.astype(jnp.bfloat16)
    for dh in range(2):
        # Take the dh lane-half; (H*W, 2*Cup) -> (H, W, 2*Cup) is a free leading-dim split.
        o_ref[0, :, dh, :, :] = y[:, dh * Cup2:(dh + 1) * Cup2].reshape(H, W, Cup2)


def _tconv_call(x2, w_all, b_all, H, W):
    N, HW, Cin = x2.shape
    Cup4 = w_all.shape[1]
    Cup2 = Cup4 // 2
    kernel = functools.partial(_tconv_kernel, H=H, W=W, Cup2=Cup2)
    return pl.pallas_call(
        kernel,
        out_shape=jax.ShapeDtypeStruct((N, H, 2, W, Cup2), jnp.bfloat16),
        grid=(N,),
        in_specs=[
            pl.BlockSpec((1, HW, Cin), lambda n: (n, 0, 0)),
            pl.BlockSpec((Cin, Cup4), lambda n: (0, 0)),
            pl.BlockSpec((1, Cup4), lambda n: (0, 0)),
        ],
        out_specs=pl.BlockSpec((1, H, 2, W, Cup2), lambda n: (n, 0, 0, 0, 0)),
        compiler_params=pltpu.CompilerParams(
            dimension_semantics=("parallel",), vmem_limit_bytes=_vmem_limit_bytes()),
    )(x2, w_all, b_all)


# ---------------------------------------------------------------------------
# Kernel 2: fused [concat(skip, up) -> Conv3x3 -> IN -> ReLU -> Conv3x3 -> IN -> ReLU]
# ---------------------------------------------------------------------------
def _in_relu(y):
    # InstanceNorm2d (affine=False, biased variance) + ReLU in f32, two-pass centered form.
    mean = jnp.mean(y, axis=0, keepdims=True)
    c = y - mean
    var = jnp.mean(c * c, axis=0, keepdims=True)
    return jnp.maximum(c * jax.lax.rsqrt(var + _EPS), 0.0)


def _convblock_kernel(skip_ref, up_ref, w1_ref, w2_ref, o_ref, cat_pad, a1_pad,
                      *, H2, W2, Cskip, Cup, Cout):
    Ctot = Cskip + Cup
    HW = H2 * W2

    # Zero only the 1-px halo frame (tiny stores; interiors are fully overwritten each step,
    # so no program_id gating is needed and this stays correct under megacore sharding).
    cat_pad[0:1, :, :] = jnp.zeros((1, W2 + 2, Ctot), jnp.bfloat16)
    cat_pad[H2 + 1:H2 + 2, :, :] = jnp.zeros((1, W2 + 2, Ctot), jnp.bfloat16)
    cat_pad[:, 0:1, :] = jnp.zeros((H2 + 2, 1, Ctot), jnp.bfloat16)
    cat_pad[:, W2 + 1:W2 + 2, :] = jnp.zeros((H2 + 2, 1, Ctot), jnp.bfloat16)
    a1_pad[0:1, :, :] = jnp.zeros((1, W2 + 2, Cout), jnp.bfloat16)
    a1_pad[H2 + 1:H2 + 2, :, :] = jnp.zeros((1, W2 + 2, Cout), jnp.bfloat16)
    a1_pad[:, 0:1, :] = jnp.zeros((H2 + 2, 1, Cout), jnp.bfloat16)
    a1_pad[:, W2 + 1:W2 + 2, :] = jnp.zeros((H2 + 2, 1, Cout), jnp.bfloat16)

    # Fused channel concat (torch.cat order): skip -> [0, Cskip), upsampled -> [Cskip, Ctot).
    cat_pad[1:H2 + 1, 1:W2 + 1, 0:Cskip] = skip_ref[0]
    cat_pad[1:H2 + 1, 1:W2 + 1, Cskip:Ctot] = up_ref[0]

    # conv1: 9 shifted-window matmuls over the merged channels (K = Ctot), register accumulation.
    acc = None
    for t in range(9):
        dh, dw = t // 3, t % 3
        xv = cat_pad[dh:dh + H2, dw:dw + W2, :].reshape(HW, Ctot)
        part = jnp.dot(xv, w1_ref[t], preferred_element_type=jnp.float32)
        acc = part if acc is None else acc + part
    a1 = _in_relu(acc)  # conv bias omitted: exactly cancelled by affine-less InstanceNorm
    a1_pad[1:H2 + 1, 1:W2 + 1, :] = a1.reshape(H2, W2, Cout).astype(jnp.bfloat16)

    # conv2 reads the post-IN/ReLU activation straight from VMEM scratch.
    acc = None
    for t in range(9):
        dh, dw = t // 3, t % 3
        xv = a1_pad[dh:dh + H2, dw:dw + W2, :].reshape(HW, Cout)
        part = jnp.dot(xv, w2_ref[t], preferred_element_type=jnp.float32)
        acc = part if acc is None else acc + part
    a2 = _in_relu(acc)

    # Lane-dense NCHW store: (HW, Cout) -> (Cout, HW); HW = 2H*2W is a multiple of 128.
    o_ref[0] = jnp.transpose(a2)


def _convblock_call(skip, up, w1, w2):
    N, H2, W2, Cskip = skip.shape
    Cup = up.shape[3]
    Ctot = Cskip + Cup
    Cout = w2.shape[2]
    HW = H2 * W2
    kernel = functools.partial(_convblock_kernel, H2=H2, W2=W2,
                               Cskip=Cskip, Cup=Cup, Cout=Cout)
    return pl.pallas_call(
        kernel,
        out_shape=jax.ShapeDtypeStruct((N, Cout, HW), jnp.float32),
        grid=(N,),
        in_specs=[
            pl.BlockSpec((1, H2, W2, Cskip), lambda n: (n, 0, 0, 0)),
            pl.BlockSpec((1, H2, W2, Cup), lambda n: (n, 0, 0, 0)),
            pl.BlockSpec((9, Ctot, Cout), lambda n: (0, 0, 0)),
            pl.BlockSpec((9, Cout, Cout), lambda n: (0, 0, 0)),
        ],
        out_specs=pl.BlockSpec((1, Cout, HW), lambda n: (n, 0, 0)),
        scratch_shapes=[
            pltpu.VMEM((H2 + 2, W2 + 2, Ctot), jnp.bfloat16),  # merged padded [skip | up]
            pltpu.VMEM((H2 + 2, W2 + 2, Cout), jnp.bfloat16),  # padded conv1 activation
        ],
        compiler_params=pltpu.CompilerParams(
            dimension_semantics=("parallel",), vmem_limit_bytes=_vmem_limit_bytes()),
    )(skip, up, w1, w2)


# ---------------------------------------------------------------------------
# Public forward (PyTorch-style NCHW in / NCHW out)
# ---------------------------------------------------------------------------
def up_forward(params, x_nchw, skip_nchw):
    N, Cin, H, W = x_nchw.shape
    _, Cskip, H2, W2 = skip_nchw.shape
    Cup = Cin // 2
    Cout = params["w2"].shape[2]
    assert Cskip == Cup and H2 == 2 * H and W2 == 2 * W
    assert (H2 * W2) % 128 == 0  # lane-dense NCHW output store

    # Kernel-friendly channels-last bf16 inputs (the only XLA-side data movement).
    x2 = jnp.transpose(x_nchw, (0, 2, 3, 1)).reshape(N, H * W, Cin).astype(jnp.bfloat16)
    skip = jnp.transpose(skip_nchw, (0, 2, 3, 1)).astype(jnp.bfloat16)

    # Transposed conv (single 128-wide matmul); the reshape below is metadata-only
    # (row-major order of (N,H,2,W,2*Cup) equals NHWC of the upsampled image).
    up5 = _tconv_call(x2, params["wup"], params["bup"], H, W)
    up = up5.reshape(N, H2, W2, Cup)

    # Fused concat + ConvBlock; kernel emits NCHW directly, reshape is free.
    y = _convblock_call(skip, up, params["w1"], params["w2"])
    return y.reshape(N, Cout, H2, W2)


# ---------------------------------------------------------------------------
# Parameters: PyTorch-layout init + conversion to kernel layouts
# ---------------------------------------------------------------------------
def init_pt_params(key, in_chans, out_chans):
    cup = in_chans // 2
    ks = jax.random.split(key, 6)

    def u(k, shape, fan_in):
        b = 1.0 / (fan_in ** 0.5)
        return jax.random.uniform(k, shape, jnp.float32, -b, b)

    return {
        "up_w": u(ks[0], (in_chans, cup, 2, 2), in_chans * 4),   # ConvTranspose2d.weight
        "up_b": u(ks[1], (cup,), in_chans * 4),
        "c1_w": u(ks[2], (out_chans, in_chans, 3, 3), in_chans * 9),
        "c1_b": u(ks[3], (out_chans,), in_chans * 9),
        "c2_w": u(ks[4], (out_chans, out_chans, 3, 3), out_chans * 9),
        "c2_b": u(ks[5], (out_chans,), out_chans * 9),
    }


def prepare_params(pt):
    in_chans, cup = pt["up_w"].shape[0], pt["up_w"].shape[1]
    # (Cin, Cup, kh, kw) -> (Cin, kh, kw, Cup) -> (Cin, 4*Cup): all four taps packed on lanes.
    wup = jnp.transpose(pt["up_w"], (0, 2, 3, 1)).reshape(in_chans, 4 * cup)
    bup = jnp.tile(pt["up_b"], 4)[None, :]

    def conv_w(w_pt):  # (Cout, Cin, 3, 3) -> (9, Cin, Cout), tap index = kh*3 + kw
        co, ci = w_pt.shape[0], w_pt.shape[1]
        return jnp.transpose(w_pt, (2, 3, 1, 0)).reshape(9, ci, co)

    # The 3x3-conv biases (c1_b, c2_b) are intentionally NOT passed to the kernel: they are
    # exactly cancelled by the mean subtraction of the affine-less InstanceNorm that follows.
    return {
        "wup": wup.astype(jnp.bfloat16),
        "bup": bup.astype(jnp.float32),
        "w1": conv_w(pt["c1_w"]).astype(jnp.bfloat16),  # merged [skip | up] input channels
        "w2": conv_w(pt["c2_w"]).astype(jnp.bfloat16),
    }


# ---------------------------------------------------------------------------
# Pure-JAX f32 reference (independent code path, mirrors the PyTorch module)
# ---------------------------------------------------------------------------
def up_reference(pt, x_nchw, skip_nchw):
    x = jnp.transpose(x_nchw, (0, 2, 3, 1))
    skip = jnp.transpose(skip_nchw, (0, 2, 3, 1))
    N, H, W, _ = x.shape
    cup = pt["up_w"].shape[1]

    up = jnp.einsum("nhwi,iocd->nhcwdo", x, pt["up_w"],
                    precision=jax.lax.Precision.HIGHEST)
    up = up.reshape(N, 2 * H, 2 * W, cup) + pt["up_b"]
    cat = jnp.concatenate([skip, up], axis=-1)   # torch.cat([concat_input, x], dim=1)

    def conv3(z, w_pt, b):
        w_hwio = jnp.transpose(w_pt, (2, 3, 1, 0))
        y = jax.lax.conv_general_dilated(
            z, w_hwio, window_strides=(1, 1), padding=((1, 1), (1, 1)),
            dimension_numbers=("NHWC", "HWIO", "NHWC"),
            precision=jax.lax.Precision.HIGHEST)
        return y + b

    def in_relu(y):
        mean = jnp.mean(y, axis=(1, 2), keepdims=True)
        var = jnp.mean((y - mean) ** 2, axis=(1, 2), keepdims=True)
        return jnp.maximum((y - mean) * jax.lax.rsqrt(var + _EPS), 0.0)

    a = in_relu(conv3(cat, pt["c1_w"], pt["c1_b"]))
    a = in_relu(conv3(a, pt["c2_w"], pt["c2_b"]))
    return jnp.transpose(a, (0, 3, 1, 2))


# ---------------------------------------------------------------------------
if __name__ == "__main__":
    in_chans, out_chans = 64, 32
    N, H, W = 2, 8, 8

    key = jax.random.PRNGKey(0)
    kp, kx, ks = jax.random.split(key, 3)
    pt_params = init_pt_params(kp, in_chans, out_chans)
    params = prepare_params(pt_params)

    x = jax.random.normal(kx, (N, in_chans, H, W), jnp.float32)                  # Up.forward x
    skip = jax.random.normal(ks, (N, in_chans // 2, 2 * H, 2 * W), jnp.float32)  # concat_input

    fwd = jax.jit(up_forward)
    y = jax.block_until_ready(fwd(params, x, skip))

    assert y.shape == (N, out_chans, 2 * H, 2 * W), y.shape
    assert y.dtype == jnp.float32
    assert bool(jnp.all(jnp.isfinite(y)))

    y_ref = up_reference(pt_params, x, skip)
    max_err = float(jnp.max(jnp.abs(y - y_ref)))
    assert max_err < 0.1, f"max |err| vs f32 reference = {max_err}"

    print("KERNEL_OK")
</pallas_src>

<mosaic_0001>
module attributes {stable_mosaic.version = 11 : i64} {
  func.func @_tconv_kernel(%arg0: i32, %arg1: memref<1x64x64xbf16, #tpu.memory_space<vmem>>, %arg2: memref<64x128xbf16, #tpu.memory_space<vmem>>, %arg3: memref<1x128xf32, #tpu.memory_space<vmem>>, %arg4: memref<1x8x2x8x64xbf16, #tpu.memory_space<vmem>>) attributes {dimension_semantics = [#tpu.dimension_semantics<parallel>], iteration_bounds = array<i64: 2>, scalar_prefetch = 0 : i64, scratch_operands = 0 : i64, tpu.core_type = #tpu.core_type<tc>, window_params = [{transform_indices = @transform_0, window_bounds = array<i64: 1, 64, 64>}, {pipeline_mode = #tpu.pipeline_mode<synchronous>, transform_indices = @transform_1, window_bounds = array<i64: 64, 128>}, {pipeline_mode = #tpu.pipeline_mode<synchronous>, transform_indices = @transform_2, window_bounds = array<i64: 1, 128>}, {transform_indices = @transform_3, window_bounds = array<i64: 1, 8, 2, 8, 64>}]} {
    %c0 = arith.constant 0 : index
    %c0_0 = arith.constant 0 : index
    %c0_1 = arith.constant 0 : index
    %0 = vector.load %arg1[%c0, %c0_0, %c0_1] : memref<1x64x64xbf16, #tpu.memory_space<vmem>>, vector<1x64x64xbf16>
    %1 = vector.shape_cast %0 : vector<1x64x64xbf16> to vector<64x64xbf16>
    %c0_2 = arith.constant 0 : index
    %c0_3 = arith.constant 0 : index
    %2 = vector.load %arg2[%c0_2, %c0_3] : memref<64x128xbf16, #tpu.memory_space<vmem>>, vector<64x128xbf16>
    %cst = arith.constant dense<0.000000e+00> : vector<64x128xf32>
    %3 = tpu.matmul %1, %2, %cst {dimension_numbers = #tpu.dot_dimension_numbers<[1], [0], [0], [1], [0, 0, 1, 1], [], []>} : vector<64x64xbf16>, vector<64x128xbf16>, vector<64x128xf32> -> vector<64x128xf32>
    %c0_4 = arith.constant 0 : index
    %c0_5 = arith.constant 0 : index
    %4 = vector.load %arg3[%c0_4, %c0_5] : memref<1x128xf32, #tpu.memory_space<vmem>>, vector<1x128xf32>
    %5 = vector.broadcast %4 : vector<1x128xf32> to vector<64x128xf32>
    %6 = arith.addf %3, %5 : vector<64x128xf32>
    %7 = arith.truncf %6 : vector<64x128xf32> to vector<64x128xbf16>
    %8 = vector.extract_strided_slice %7 {offsets = [0, 0], sizes = [64, 64], strides = [1, 1]} : vector<64x128xbf16> to vector<64x64xbf16>
    %9 = vector.shape_cast %8 : vector<64x64xbf16> to vector<8x8x64xbf16>
    %c0_6 = arith.constant 0 : index
    %c0_7 = arith.constant 0 : index
    %c0_8 = arith.constant 0 : index
    %c0_9 = arith.constant 0 : index
    %c0_10 = arith.constant 0 : index
    %10 = vector.load %arg4[%c0_6, %c0_7, %c0_8, %c0_9, %c0_10] : memref<1x8x2x8x64xbf16, #tpu.memory_space<vmem>>, vector<1x8x1x8x64xbf16>
    %11 = vector.shape_cast %10 : vector<1x8x1x8x64xbf16> to vector<8x8x64xbf16>
    %12 = vector.shape_cast %9 : vector<8x8x64xbf16> to vector<1x8x1x8x64xbf16>
    tpu.vector_store %arg4[%c0_6, %c0_7, %c0_8, %c0_9, %c0_10], %12 {strides = array<i32>} : memref<1x8x2x8x64xbf16, #tpu.memory_space<vmem>>, vector<1x8x1x8x64xbf16>,
    %13 = vector.extract_strided_slice %7 {offsets = [0, 64], sizes = [64, 64], strides = [1, 1]} : vector<64x128xbf16> to vector<64x64xbf16>
    %14 = vector.shape_cast %13 : vector<64x64xbf16> to vector<8x8x64xbf16>
    %c0_11 = arith.constant 0 : index
    %c0_12 = arith.constant 0 : index
    %c1 = arith.constant 1 : index
    %c0_13 = arith.constant 0 : index
    %c0_14 = arith.constant 0 : index
    %15 = vector.load %arg4[%c0_11, %c0_12, %c1, %c0_13, %c0_14] : memref<1x8x2x8x64xbf16, #tpu.memory_space<vmem>>, vector<1x8x1x8x64xbf16>
    %16 = vector.shape_cast %15 : vector<1x8x1x8x64xbf16> to vector<8x8x64xbf16>
    %17 = vector.shape_cast %14 : vector<8x8x64xbf16> to vector<1x8x1x8x64xbf16>
    tpu.vector_store %arg4[%c0_11, %c0_12, %c1, %c0_13, %c0_14], %17 {strides = array<i32>} : memref<1x8x2x8x64xbf16, #tpu.memory_space<vmem>>, vector<1x8x1x8x64xbf16>,
    return
  }
  func.func @transform_0(%arg0: i32) -> (i32, i32, i32) {
    %c0_i32 = arith.constant 0 : i32
    %c0_i32_0 = arith.constant 0 : i32
    %c0_i32_1 = arith.constant 0 : i32
    return %arg0, %c0_i32, %c0_i32_0 : i32, i32, i32
  }
  func.func @transform_1(%arg0: i32) -> (i32, i32) {
    %c0_i32 = arith.constant 0 : i32
    %c0_i32_0 = arith.constant 0 : i32
    %c0_i32_1 = arith.constant 0 : i32
    return %c0_i32, %c0_i32_0 : i32, i32
  }
  func.func @transform_2(%arg0: i32) -> (i32, i32) {
    %c0_i32 = arith.constant 0 : i32
    %c0_i32_0 = arith.constant 0 : i32
    %c0_i32_1 = arith.constant 0 : i32
    return %c0_i32, %c0_i32_0 : i32, i32
  }
  func.func @transform_3(%arg0: i32) -> (i32, i32, i32, i32, i32) {
    %c0_i32 = arith.constant 0 : i32
    %c0_i32_0 = arith.constant 0 : i32
    %c0_i32_1 = arith.constant 0 : i32
    %c0_i32_2 = arith.constant 0 : i32
    %c0_i32_3 = arith.constant 0 : i32
    return %arg0, %c0_i32, %c0_i32_0, %c0_i32_1, %c0_i32_2 : i32, i32, i32, i32, i32
  }
}

module attributes {stable_mosaic.version = 11 : i64} {
  func.func @_convblock_kernel(%arg0: i32, %arg1: memref<1x16x16x32xbf16, #tpu.memory_space<vmem>>, %arg2: memref<1x16x16x32xbf16, #tpu.memory_space<vmem>>, %arg3: memref<9x64x32xbf16, #tpu.memory_space<vmem>>, %arg4: memref<9x32x32xbf16, #tpu.memory_space<vmem>>, %arg5: memref<1x32x256xf32, #tpu.memory_space<vmem>>, %arg6: memref<18x18x64xbf16, #tpu.memory_space<vmem>>, %arg7: memref<18x18x32xbf16, #tpu.memory_space<vmem>>) attributes {dimension_semantics = [#tpu.dimension_semantics<parallel>], iteration_bounds = array<i64: 2>, scalar_prefetch = 0 : i64, scratch_operands = 2 : i64, tpu.core_type = #tpu.core_type<tc>, window_params = [{transform_indices = @transform_0, window_bounds = array<i64: 1, 16, 16, 32>}, {transform_indices = @transform_1, window_bounds = array<i64: 1, 16, 16, 32>}, {pipeline_mode = #tpu.pipeline_mode<synchronous>, transform_indices = @transform_2, window_bounds = array<i64: 9, 64, 32>}, {pipeline_mode = #tpu.pipeline_mode<synchronous>, transform_indices = @transform_3, window_bounds = array<i64: 9, 32, 32>}, {transform_indices = @transform_4, window_bounds = array<i64: 1, 32, 256>}]} {
    %cst = arith.constant 0.000000e+00 : bf16
    %0 = vector.broadcast %cst : bf16 to vector<1x18x64xbf16>
    %c0 = arith.constant 0 : index
    %c0_0 = arith.constant 0 : index
    %c0_1 = arith.constant 0 : index
    %1 = vector.load %arg6[%c0, %c0_0, %c0_1] : memref<18x18x64xbf16, #tpu.memory_space<vmem>>, vector<1x18x64xbf16>
    tpu.vector_store %arg6[%c0, %c0_0, %c0_1], %0 {strides = array<i32>} : memref<18x18x64xbf16, #tpu.memory_space<vmem>>, vector<1x18x64xbf16>,
    %cst_2 = arith.constant 0.000000e+00 : bf16
    %2 = vector.broadcast %cst_2 : bf16 to vector<1x18x64xbf16>
    %c17 = arith.constant 17 : index
    %c0_3 = arith.constant 0 : index
    %c0_4 = arith.constant 0 : index
    %3 = vector.load %arg6[%c17, %c0_3, %c0_4] : memref<18x18x64xbf16, #tpu.memory_space<vmem>>, vector<1x18x64xbf16>
    tpu.vector_store %arg6[%c17, %c0_3, %c0_4], %2 {strides = array<i32>} : memref<18x18x64xbf16, #tpu.memory_space<vmem>>, vector<1x18x64xbf16>,
    %cst_5 = arith.constant 0.000000e+00 : bf16
    %4 = vector.broadcast %cst_5 : bf16 to vector<18x1x64xbf16>
    %c0_6 = arith.constant 0 : index
    %c0_7 = arith.constant 0 : index
    %c0_8 = arith.constant 0 : index
    %5 = vector.load %arg6[%c0_6, %c0_7, %c0_8] : memref<18x18x64xbf16, #tpu.memory_space<vmem>>, vector<18x1x64xbf16>
    tpu.vector_store %arg6[%c0_6, %c0_7, %c0_8], %4 {strides = array<i32>} : memref<18x18x64xbf16, #tpu.memory_space<vmem>>, vector<18x1x64xbf16>,
    %cst_9 = arith.constant 0.000000e+00 : bf16
    %6 = vector.broadcast %cst_9 : bf16 to vector<18x1x64xbf16>
    %c0_10 = arith.constant 0 : index
    %c17_11 = arith.constant 17 : index
    %c0_12 = arith.constant 0 : index
    %7 = vector.load %arg6[%c0_10, %c17_11, %c0_12] : memref<18x18x64xbf16, #tpu.memory_space<vmem>>, vector<18x1x64xbf16>
    tpu.vector_store %arg6[%c0_10, %c17_11, %c0_12], %6 {strides = array<i32>} : memref<18x18x64xbf16, #tpu.memory_space<vmem>>, vector<18x1x64xbf16>,
    %cst_13 = arith.constant 0.000000e+00 : bf16
    %8 = vector.broadcast %cst_13 : bf16 to vector<1x18x32xbf16>
    %c0_14 = arith.constant 0 : index
    %c0_15 = arith.constant 0 : index
    %c0_16 = arith.constant 0 : index
    %9 = vector.load %arg7[%c0_14, %c0_15, %c0_16] : memref<18x18x32xbf16, #tpu.memory_space<vmem>>, vector<1x18x32xbf16>
    tpu.vector_store %arg7[%c0_14, %c0_15, %c0_16], %8 {strides = array<i32>} : memref<18x18x32xbf16, #tpu.memory_space<vmem>>, vector<1x18x32xbf16>,
    %cst_17 = arith.constant 0.000000e+00 : bf16
    %10 = vector.broadcast %cst_17 : bf16 to vector<1x18x32xbf16>
    %c17_18 = arith.constant 17 : index
    %c0_19 = arith.constant 0 : index
    %c0_20 = arith.constant 0 : index
    %11 = vector.load %arg7[%c17_18, %c0_19, %c0_20] : memref<18x18x32xbf16, #tpu.memory_space<vmem>>, vector<1x18x32xbf16>
    tpu.vector_store %arg7[%c17_18, %c0_19, %c0_20], %10 {strides = array<i32>} : memref<18x18x32xbf16, #tpu.memory_space<vmem>>, vector<1x18x32xbf16>,
    %cst_21 = arith.constant 0.000000e+00 : bf16
    %12 = vector.broadcast %cst_21 : bf16 to vector<18x1x32xbf16>
    %c0_22 = arith.constant 0 : index
    %c0_23 = arith.constant 0 : index
    %c0_24 = arith.constant 0 : index
    %13 = vector.load %arg7[%c0_22, %c0_23, %c0_24] : memref<18x18x32xbf16, #tpu.memory_space<vmem>>, vector<18x1x32xbf16>
    tpu.vector_store %arg7[%c0_22, %c0_23, %c0_24], %12 {strides = array<i32>} : memref<18x18x32xbf16, #tpu.memory_space<vmem>>, vector<18x1x32xbf16>,
    %cst_25 = arith.constant 0.000000e+00 : bf16
    %14 = vector.broadcast %cst_25 : bf16 to vector<18x1x32xbf16>
    %c0_26 = arith.constant 0 : index
    %c17_27 = arith.constant 17 : index
    %c0_28 = arith.constant 0 : index
    %15 = vector.load %arg7[%c0_26, %c17_27, %c0_28] : memref<18x18x32xbf16, #tpu.memory_space<vmem>>, vector<18x1x32xbf16>
    tpu.vector_store %arg7[%c0_26, %c17_27, %c0_28], %14 {strides = array<i32>} : memref<18x18x32xbf16, #tpu.memory_space<vmem>>, vector<18x1x32xbf16>,
    %c0_29 = arith.constant 0 : index
    %c0_30 = arith.constant 0 : index
    %c0_31 = arith.constant 0 : index
    %c0_32 = arith.constant 0 : index
    %16 = vector.load %arg1[%c0_29, %c0_30, %c0_31, %c0_32] : memref<1x16x16x32xbf16, #tpu.memory_space<vmem>>, vector<1x16x16x32xbf16>
    %17 = vector.shape_cast %16 : vector<1x16x16x32xbf16> to vector<16x16x32xbf16>
    %c1 = arith.constant 1 : index
    %c1_33 = arith.constant 1 : index
    %c0_34 = arith.constant 0 : index
    %18 = vector.load %arg6[%c1, %c1_33, %c0_34] : memref<18x18x64xbf16, #tpu.memory_space<vmem>>, vector<16x16x32xbf16>
    tpu.vector_store %arg6[%c1, %c1_33, %c0_34], %17 {strides = array<i32>} : memref<18x18x64xbf16, #tpu.memory_space<vmem>>, vector<16x16x32xbf16>,
    %c0_35 = arith.constant 0 : index
    %c0_36 = arith.constant 0 : index
    %c0_37 = arith.constant 0 : index
    %c0_38 = arith.constant 0 : index
    %19 = vector.load %arg2[%c0_35, %c0_36, %c0_37, %c0_38] : memref<1x16x16x32xbf16, #tpu.memory_space<vmem>>, vector<1x16x16x32xbf16>
    %20 = vector.shape_cast %19 : vector<1x16x16x32xbf16> to vector<16x16x32xbf16>
    %c1_39 = arith.constant 1 : index
    %c1_40 = arith.constant 1 : index
    %c32 = arith.constant 32 : index
    %21 = vector.load %arg6[%c1_39, %c1_40, %c32] : memref<18x18x64xbf16, #tpu.memory_space<vmem>>, vector<16x16x32xbf16>
    tpu.vector_store %arg6[%c1_39, %c1_40, %c32], %20 {strides = array<i32>} : memref<18x18x64xbf16, #tpu.memory_space<vmem>>, vector<16x16x32xbf16>,
    %c0_41 = arith.constant 0 : index
    %c0_42 = arith.constant 0 : index
    %c0_43 = arith.constant 0 : index
    %22 = vector.load %arg6[%c0_41, %c0_42, %c0_43] : memref<18x18x64xbf16, #tpu.memory_space<vmem>>, vector<16x16x64xbf16>
    %23 = vector.shape_cast %22 : vector<16x16x64xbf16> to vector<256x64xbf16>
    %c0_44 = arith.constant 0 : index
    %c0_45 = arith.constant 0 : index
    %c0_46 = arith.constant 0 : index
    %24 = vector.load %arg3[%c0_44, %c0_45, %c0_46] : memref<9x64x32xbf16, #tpu.memory_space<vmem>>, vector<1x64x32xbf16>
    %25 = vector.shape_cast %24 : vector<1x64x32xbf16> to vector<64x32xbf16>
    %cst_47 = arith.constant dense<0.000000e+00> : vector<256x32xf32>
    %26 = tpu.matmul %23, %25, %cst_47 {dimension_numbers = #tpu.dot_dimension_numbers<[1], [0], [0], [1], [0, 0, 1, 1], [], []>} : vector<256x64xbf16>, vector<64x32xbf16>, vector<256x32xf32> -> vector<256x32xf32>
    %c0_48 = arith.constant 0 : index
    %c1_49 = arith.constant 1 : index
    %c0_50 = arith.constant 0 : index
    %27 = vector.load %arg6[%c0_48, %c1_49, %c0_50] : memref<18x18x64xbf16, #tpu.memory_space<vmem>>, vector<16x16x64xbf16>
    %28 = vector.shape_cast %27 : vector<16x16x64xbf16> to vector<256x64xbf16>
    %c1_51 = arith.constant 1 : index
    %c0_52 = arith.constant 0 : index
    %c0_53 = arith.constant 0 : index
    %29 = vector.load %arg3[%c1_51, %c0_52, %c0_53] : memref<9x64x32xbf16, #tpu.memory_space<vmem>>, vector<1x64x32xbf16>
    %30 = vector.shape_cast %29 : vector<1x64x32xbf16> to vector<64x32xbf16>
    %cst_54 = arith.constant dense<0.000000e+00> : vector<256x32xf32>
    %31 = tpu.matmul %28, %30, %cst_54 {dimension_numbers = #tpu.dot_dimension_numbers<[1], [0], [0], [1], [0, 0, 1, 1], [], []>} : vector<256x64xbf16>, vector<64x32xbf16>, vector<256x32xf32> -> vector<256x32xf32>
    %32 = arith.addf %26, %31 : vector<256x32xf32>
    %c0_55 = arith.constant 0 : index
    %c2 = arith.constant 2 : index
    %c0_56 = arith.constant 0 : index
    %33 = vector.load %arg6[%c0_55, %c2, %c0_56] : memref<18x18x64xbf16, #tpu.memory_space<vmem>>, vector<16x16x64xbf16>
    %34 = vector.shape_cast %33 : vector<16x16x64xbf16> to vector<256x64xbf16>
    %c2_57 = arith.constant 2 : index
    %c0_58 = arith.constant 0 : index
    %c0_59 = arith.constant 0 : index
    %35 = vector.load %arg3[%c2_57, %c0_58, %c0_59] : memref<9x64x32xbf16, #tpu.memory_space<vmem>>, vector<1x64x32xbf16>
    %36 = vector.shape_cast %35 : vector<1x64x32xbf16> to vector<64x32xbf16>
    %cst_60 = arith.constant dense<0.000000e+00> : vector<256x32xf32>
    %37 = tpu.matmul %34, %36, %cst_60 {dimension_numbers = #tpu.dot_dimension_numbers<[1], [0], [0], [1], [0, 0, 1, 1], [], []>} : vector<256x64xbf16>, vector<64x32xbf16>, vector<256x32xf32> -> vector<256x32xf32>
    %38 = arith.addf %32, %37 : vector<256x32xf32>
    %c1_61 = arith.constant 1 : index
    %c0_62 = arith.constant 0 : index
    %c0_63 = arith.constant 0 : index
    %39 = vector.load %arg6[%c1_61, %c0_62, %c0_63] : memref<18x18x64xbf16, #tpu.memory_space<vmem>>, vector<16x16x64xbf16>
    %40 = vector.shape_cast %39 : vector<16x16x64xbf16> to vector<256x64xbf16>
    %c3 = arith.constant 3 : index
    %c0_64 = arith.constant 0 : index
    %c0_65 = arith.constant 0 : index
    %41 = vector.load %arg3[%c3, %c0_64, %c0_65] : memref<9x64x32xbf16, #tpu.memory_space<vmem>>, vector<1x64x32xbf16>
    %42 = vector.shape_cast %41 : vector<1x64x32xbf16> to vector<64x32xbf16>
    %cst_66 = arith.constant dense<0.000000e+00> : vector<256x32xf32>
    %43 = tpu.matmul %40, %42, %cst_66 {dimension_numbers = #tpu.dot_dimension_numbers<[1], [0], [0], [1], [0, 0, 1, 1], [], []>} : vector<256x64xbf16>, vector<64x32xbf16>, vector<256x32xf32> -> vector<256x32xf32>
    %44 = arith.addf %38, %43 : vector<256x32xf32>
    %c1_67 = arith.constant 1 : index
    %c1_68 = arith.constant 1 : index
    %c0_69 = arith.constant 0 : index
    %45 = vector.load %arg6[%c1_67, %c1_68, %c0_69] : memref<18x18x64xbf16, #tpu.memory_space<vmem>>, vector<16x16x64xbf16>
    %46 = vector.shape_cast %45 : vector<16x16x64xbf16> to vector<256x64xbf16>
    %c4 = arith.constant 4 : index
    %c0_70 = arith.constant 0 : index
    %c0_71 = arith.constant 0 : index
    %47 = vector.load %arg3[%c4, %c0_70, %c0_71] : memref<9x64x32xbf16, #tpu.memory_space<vmem>>, vector<1x64x32xbf16>
    %48 = vector.shape_cast %47 : vector<1x64x32xbf16> to vector<64x32xbf16>
    %cst_72 = arith.constant dense<0.000000e+00> : vector<256x32xf32>
    %49 = tpu.matmul %46, %48, %cst_72 {dimension_numbers = #tpu.dot_dimension_numbers<[1], [0], [0], [1], [0, 0, 1, 1], [], []>} : vector<256x64xbf16>, vector<64x32xbf16>, vector<256x32xf32> -> vector<256x32xf32>
    %50 = arith.addf %44, %49 : vector<256x32xf32>
    %c1_73 = arith.constant 1 : index
    %c2_74 = arith.constant 2 : index
    %c0_75 = arith.constant 0 : index
    %51 = vector.load %arg6[%c1_73, %c2_74, %c0_75] : memref<18x18x64xbf16, #tpu.memory_space<vmem>>, vector<16x16x64xbf16>
    %52 = vector.shape_cast %51 : vector<16x16x64xbf16> to vector<256x64xbf16>
    %c5 = arith.constant 5 : index
    %c0_76 = arith.constant 0 : index
    %c0_77 = arith.constant 0 : index
    %53 = vector.load %arg3[%c5, %c0_76, %c0_77] : memref<9x64x32xbf16, #tpu.memory_space<vmem>>, vector<1x64x32xbf16>
    %54 = vector.shape_cast %53 : vector<1x64x32xbf16> to vector<64x32xbf16>
    %cst_78 = arith.constant dense<0.000000e+00> : vector<256x32xf32>
    %55 = tpu.matmul %52, %54, %cst_78 {dimension_numbers = #tpu.dot_dimension_numbers<[1], [0], [0], [1], [0, 0, 1, 1], [], []>} : vector<256x64xbf16>, vector<64x32xbf16>, vector<256x32xf32> -> vector<256x32xf32>
    %56 = arith.addf %50, %55 : vector<256x32xf32>
    %c2_79 = arith.constant 2 : index
    %c0_80 = arith.constant 0 : index
    %c0_81 = arith.constant 0 : index
    %57 = vector.load %arg6[%c2_79, %c0_80, %c0_81] : memref<18x18x64xbf16, #tpu.memory_space<vmem>>, vector<16x16x64xbf16>
    %58 = vector.shape_cast %57 : vector<16x16x64xbf16> to vector<256x64xbf16>
    %c6 = arith.constant 6 : index
    %c0_82 = arith.constant 0 : index
    %c0_83 = arith.constant 0 : index
    %59 = vector.load %arg3[%c6, %c0_82, %c0_83] : memref<9x64x32xbf16, #tpu.memory_space<vmem>>, vector<1x64x32xbf16>
    %60 = vector.shape_cast %59 : vector<1x64x32xbf16> to vector<64x32xbf16>
    %cst_84 = arith.constant dense<0.000000e+00> : vector<256x32xf32>
    %61 = tpu.matmul %58, %60, %cst_84 {dimension_numbers = #tpu.dot_dimension_numbers<[1], [0], [0], [1], [0, 0, 1, 1], [], []>} : vector<256x64xbf16>, vector<64x32xbf16>, vector<256x32xf32> -> vector<256x32xf32>
    %62 = arith.addf %56, %61 : vector<256x32xf32>
    %c2_85 = arith.constant 2 : index
    %c1_86 = arith.constant 1 : index
    %c0_87 = arith.constant 0 : index
    %63 = vector.load %arg6[%c2_85, %c1_86, %c0_87] : memref<18x18x64xbf16, #tpu.memory_space<vmem>>, vector<16x16x64xbf16>
    %64 = vector.shape_cast %63 : vector<16x16x64xbf16> to vector<256x64xbf16>
    %c7 = arith.constant 7 : index
    %c0_88 = arith.constant 0 : index
    %c0_89 = arith.constant 0 : index
    %65 = vector.load %arg3[%c7, %c0_88, %c0_89] : memref<9x64x32xbf16, #tpu.memory_space<vmem>>, vector<1x64x32xbf16>
    %66 = vector.shape_cast %65 : vector<1x64x32xbf16> to vector<64x32xbf16>
    %cst_90 = arith.constant dense<0.000000e+00> : vector<256x32xf32>
    %67 = tpu.matmul %64, %66, %cst_90 {dimension_numbers = #tpu.dot_dimension_numbers<[1], [0], [0], [1], [0, 0, 1, 1], [], []>} : vector<256x64xbf16>, vector<64x32xbf16>, vector<256x32xf32> -> vector<256x32xf32>
    %68 = arith.addf %62, %67 : vector<256x32xf32>
    %c2_91 = arith.constant 2 : index
    %c2_92 = arith.constant 2 : index
    %c0_93 = arith.constant 0 : index
    %69 = vector.load %arg6[%c2_91, %c2_92, %c0_93] : memref<18x18x64xbf16, #tpu.memory_space<vmem>>, vector<16x16x64xbf16>
    %70 = vector.shape_cast %69 : vector<16x16x64xbf16> to vector<256x64xbf16>
    %c8 = arith.constant 8 : index
    %c0_94 = arith.constant 0 : index
    %c0_95 = arith.constant 0 : index
    %71 = vector.load %arg3[%c8, %c0_94, %c0_95] : memref<9x64x32xbf16, #tpu.memory_space<vmem>>, vector<1x64x32xbf16>
    %72 = vector.shape_cast %71 : vector<1x64x32xbf16> to vector<64x32xbf16>
    %cst_96 = arith.constant dense<0.000000e+00> : vector<256x32xf32>
    %73 = tpu.matmul %70, %72, %cst_96 {dimension_numbers = #tpu.dot_dimension_numbers<[1], [0], [0], [1], [0, 0, 1, 1], [], []>} : vector<256x64xbf16>, vector<64x32xbf16>, vector<256x32xf32> -> vector<256x32xf32>
    %74 = arith.addf %68, %73 : vector<256x32xf32>
    %cst_97 = arith.constant dense<0.000000e+00> : vector<32xf32>
    %75 = vector.multi_reduction <add>, %74, %cst_97 [0] : vector<256x32xf32> to vector<32xf32>
    %76 = vector.shape_cast %75 : vector<32xf32> to vector<1x32xf32>
    %cst_98 = arith.constant 2.560000e+02 : f32
    %77 = vector.broadcast %cst_98 : f32 to vector<1x32xf32>
    %78 = arith.divf %76, %77 : vector<1x32xf32>
    %79 = vector.broadcast %78 : vector<1x32xf32> to vector<256x32xf32>
    %80 = arith.subf %74, %79 : vector<256x32xf32>
    %81 = arith.mulf %80, %80 : vector<256x32xf32>
    %cst_99 = arith.constant dense<0.000000e+00> : vector<32xf32>
    %82 = vector.multi_reduction <add>, %81, %cst_99 [0] : vector<256x32xf32> to vector<32xf32>
    %83 = vector.shape_cast %82 : vector<32xf32> to vector<1x32xf32>
    %cst_100 = arith.constant 2.560000e+02 : f32
    %84 = vector.broadcast %cst_100 : f32 to vector<1x32xf32>
    %85 = arith.divf %83, %84 : vector<1x32xf32>
    %cst_101 = arith.constant 9.99999974E-6 : f32
    %86 = vector.broadcast %cst_101 : f32 to vector<1x32xf32>
    %87 = arith.addf %85, %86 : vector<1x32xf32>
    %88 = math.rsqrt %87 : vector<1x32xf32>
    %89 = vector.broadcast %88 : vector<1x32xf32> to vector<256x32xf32>
    %90 = arith.mulf %80, %89 : vector<256x32xf32>
    %cst_102 = arith.constant 0.000000e+00 : f32
    %91 = vector.broadcast %cst_102 : f32 to vector<256x32xf32>
    %92 = arith.maximumf %90, %91 : vector<256x32xf32>
    %93 = vector.shape_cast %92 : vector<256x32xf32> to vector<16x16x32xf32>
    %94 = arith.truncf %93 : vector<16x16x32xf32> to vector<16x16x32xbf16>
    %c1_103 = arith.constant 1 : index
    %c1_104 = arith.constant 1 : index
    %c0_105 = arith.constant 0 : index
    %95 = vector.load %arg7[%c1_103, %c1_104, %c0_105] : memref<18x18x32xbf16, #tpu.memory_space<vmem>>, vector<16x16x32xbf16>
    tpu.vector_store %arg7[%c1_103, %c1_104, %c0_105], %94 {strides = array<i32>} : memref<18x18x32xbf16, #tpu.memory_space<vmem>>, vector<16x16x32xbf16>,
    %c0_106 = arith.constant 0 : index
    %c0_107 = arith.constant 0 : index
    %c0_108 = arith.constant 0 : index
    %96 = vector.load %arg7[%c0_106, %c0_107, %c0_108] : memref<18x18x32xbf16, #tpu.memory_space<vmem>>, vector<16x16x32xbf16>
    %97 = vector.shape_cast %96 : vector<16x16x32xbf16> to vector<256x32xbf16>
    %c0_109 = arith.constant 0 : index
    %c0_110 = arith.constant 0 : index
    %c0_111 = arith.constant 0 : index
    %98 = vector.load %arg4[%c0_109, %c0_110, %c0_111] : memref<9x32x32xbf16, #tpu.memory_space<vmem>>, vector<1x32x32xbf16>
    %99 = vector.shape_cast %98 : vector<1x32x32xbf16> to vector<32x32xbf16>
    %cst_112 = arith.constant dense<0.000000e+00> : vector<256x32xf32>
    %100 = tpu.matmul %97, %99, %cst_112 {dimension_numbers = #tpu.dot_dimension_numbers<[1], [0], [0], [1], [0, 0, 1, 1], [], []>} : vector<256x32xbf16>, vector<32x32xbf16>, vector<256x32xf32> -> vector<256x32xf32>
    %c0_113 = arith.constant 0 : index
    %c1_114 = arith.constant 1 : index
    %c0_115 = arith.constant 0 : index
    %101 = vector.load %arg7[%c0_113, %c1_114, %c0_115] : memref<18x18x32xbf16, #tpu.memory_space<vmem>>, vector<16x16x32xbf16>
    %102 = vector.shape_cast %101 : vector<16x16x32xbf16> to vector<256x32xbf16>
    %c1_116 = arith.constant 1 : index
    %c0_117 = arith.constant 0 : index
    %c0_118 = arith.constant 0 : index
    %103 = vector.load %arg4[%c1_116, %c0_117, %c0_118] : memref<9x32x32xbf16, #tpu.memory_space<vmem>>, vector<1x32x32xbf16>
    %104 = vector.shape_cast %103 : vector<1x32x32xbf16> to vector<32x32xbf16>
    %cst_119 = arith.constant dense<0.000000e+00> : vector<256x32xf32>
    %105 = tpu.matmul %102, %104, %cst_119 {dimension_numbers = #tpu.dot_dimension_numbers<[1], [0], [0], [1], [0, 0, 1, 1], [], []>} : vector<256x32xbf16>, vector<32x32xbf16>, vector<256x32xf32> -> vector<256x32xf32>
    %106 = arith.addf %100, %105 : vector<256x32xf32>
    %c0_120 = arith.constant 0 : index
    %c2_121 = arith.constant 2 : index
    %c0_122 = arith.constant 0 : index
    %107 = vector.load %arg7[%c0_120, %c2_121, %c0_122] : memref<18x18x32xbf16, #tpu.memory_space<vmem>>, vector<16x16x32xbf16>
    %108 = vector.shape_cast %107 : vector<16x16x32xbf16> to vector<256x32xbf16>
    %c2_123 = arith.constant 2 : index
    %c0_124 = arith.constant 0 : index
    %c0_125 = arith.constant 0 : index
    %109 = vector.load %arg4[%c2_123, %c0_124, %c0_125] : memref<9x32x32xbf16, #tpu.memory_space<vmem>>, vector<1x32x32xbf16>
    %110 = vector.shape_cast %109 : vector<1x32x32xbf16> to vector<32x32xbf16>
    %cst_126 = arith.constant dense<0.000000e+00> : vector<256x32xf32>
    %111 = tpu.matmul %108, %110, %cst_126 {dimension_numbers = #tpu.dot_dimension_numbers<[1], [0], [0], [1], [0, 0, 1, 1], [], []>} : vector<256x32xbf16>, vector<32x32xbf16>, vector<256x32xf32> -> vector<256x32xf32>
    %112 = arith.addf %106, %111 : vector<256x32xf32>
    %c1_127 = arith.constant 1 : index
    %c0_128 = arith.constant 0 : index
    %c0_129 = arith.constant 0 : index
    %113 = vector.load %arg7[%c1_127, %c0_128, %c0_129] : memref<18x18x32xbf16, #tpu.memory_space<vmem>>, vector<16x16x32xbf16>
    %114 = vector.shape_cast %113 : vector<16x16x32xbf16> to vector<256x32xbf16>
    %c3_130 = arith.constant 3 : index
    %c0_131 = arith.constant 0 : index
    %c0_132 = arith.constant 0 : index
    %115 = vector.load %arg4[%c3_130, %c0_131, %c0_132] : memref<9x32x32xbf16, #tpu.memory_space<vmem>>, vector<1x32x32xbf16>
    %116 = vector.shape_cast %115 : vector<1x32x32xbf16> to vector<32x32xbf16>
    %cst_133 = arith.constant dense<0.000000e+00> : vector<256x32xf32>
    %117 = tpu.matmul %114, %116, %cst_133 {dimension_numbers = #tpu.dot_dimension_numbers<[1], [0], [0], [1], [0, 0, 1, 1], [], []>} : vector<256x32xbf16>, vector<32x32xbf16>, vector<256x32xf32> -> vector<256x32xf32>
    %118 = arith.addf %112, %117 : vector<256x32xf32>
    %c1_134 = arith.constant 1 : index
    %c1_135 = arith.constant 1 : index
    %c0_136 = arith.constant 0 : index
    %119 = vector.load %arg7[%c1_134, %c1_135, %c0_136] : memref<18x18x32xbf16, #tpu.memory_space<vmem>>, vector<16x16x32xbf16>
    %120 = vector.shape_cast %119 : vector<16x16x32xbf16> to vector<256x32xbf16>
    %c4_137 = arith.constant 4 : index
    %c0_138 = arith.constant 0 : index
    %c0_139 = arith.constant 0 : index
    %121 = vector.load %arg4[%c4_137, %c0_138, %c0_139] : memref<9x32x32xbf16, #tpu.memory_space<vmem>>, vector<1x32x32xbf16>
    %122 = vector.shape_cast %121 : vector<1x32x32xbf16> to vector<32x32xbf16>
    %cst_140 = arith.constant dense<0.000000e+00> : vector<256x32xf32>
    %123 = tpu.matmul %120, %122, %cst_140 {dimension_numbers = #tpu.dot_dimension_numbers<[1], [0], [0], [1], [0, 0, 1, 1], [], []>} : vector<256x32xbf16>, vector<32x32xbf16>, vector<256x32xf32> -> vector<256x32xf32>
    %124 = arith.addf %118, %123 : vector<256x32xf32>
    %c1_141 = arith.constant 1 : index
    %c2_142 = arith.constant 2 : index
    %c0_143 = arith.constant 0 : index
    %125 = vector.load %arg7[%c1_141, %c2_142, %c0_143] : memref<18x18x32xbf16, #tpu.memory_space<vmem>>, vector<16x16x32xbf16>
    %126 = vector.shape_cast %125 : vector<16x16x32xbf16> to vector<256x32xbf16>
    %c5_144 = arith.constant 5 : index
    %c0_145 = arith.constant 0 : index
    %c0_146 = arith.constant 0 : index
    %127 = vector.load %arg4[%c5_144, %c0_145, %c0_146] : memref<9x32x32xbf16, #tpu.memory_space<vmem>>, vector<1x32x32xbf16>
    %128 = vector.shape_cast %127 : vector<1x32x32xbf16> to vector<32x32xbf16>
    %cst_147 = arith.constant dense<0.000000e+00> : vector<256x32xf32>
    %129 = tpu.matmul %126, %128, %cst_147 {dimension_numbers = #tpu.dot_dimension_numbers<[1], [0], [0], [1], [0, 0, 1, 1], [], []>} : vector<256x32xbf16>, vector<32x32xbf16>, vector<256x32xf32> -> vector<256x32xf32>
    %130 = arith.addf %124, %129 : vector<256x32xf32>
    %c2_148 = arith.constant 2 : index
    %c0_149 = arith.constant 0 : index
    %c0_150 = arith.constant 0 : index
    %131 = vector.load %arg7[%c2_148, %c0_149, %c0_150] : memref<18x18x32xbf16, #tpu.memory_space<vmem>>, vector<16x16x32xbf16>
    %132 = vector.shape_cast %131 : vector<16x16x32xbf16> to vector<256x32xbf16>
    %c6_151 = arith.constant 6 : index
    %c0_152 = arith.constant 0 : index
    %c0_153 = arith.constant 0 : index
    %133 = vector.load %arg4[%c6_151, %c0_152, %c0_153] : memref<9x32x32xbf16, #tpu.memory_space<vmem>>, vector<1x32x32xbf16>
    %134 = vector.shape_cast %133 : vector<1x32x32xbf16> to vector<32x32xbf16>
    %cst_154 = arith.constant dense<0.000000e+00> : vector<256x32xf32>
    %135 = tpu.matmul %132, %134, %cst_154 {dimension_numbers = #tpu.dot_dimension_numbers<[1], [0], [0], [1], [0, 0, 1, 1], [], []>} : vector<256x32xbf16>, vector<32x32xbf16>, vector<256x32xf32> -> vector<256x32xf32>
    %136 = arith.addf %130, %135 : vector<256x32xf32>
    %c2_155 = arith.constant 2 : index
    %c1_156 = arith.constant 1 : index
    %c0_157 = arith.constant 0 : index
    %137 = vector.load %arg7[%c2_155, %c1_156, %c0_157] : memref<18x18x32xbf16, #tpu.memory_space<vmem>>, vector<16x16x32xbf16>
    %138 = vector.shape_cast %137 : vector<16x16x32xbf16> to vector<256x32xbf16>
    %c7_158 = arith.constant 7 : index
    %c0_159 = arith.constant 0 : index
    %c0_160 = arith.constant 0 : index
    %139 = vector.load %arg4[%c7_158, %c0_159, %c0_160] : memref<9x32x32xbf16, #tpu.memory_space<vmem>>, vector<1x32x32xbf16>
    %140 = vector.shape_cast %139 : vector<1x32x32xbf16> to vector<32x32xbf16>
    %cst_161 = arith.constant dense<0.000000e+00> : vector<256x32xf32>
    %141 = tpu.matmul %138, %140, %cst_161 {dimension_numbers = #tpu.dot_dimension_numbers<[1], [0], [0], [1], [0, 0, 1, 1], [], []>} : vector<256x32xbf16>, vector<32x32xbf16>, vector<256x32xf32> -> vector<256x32xf32>
    %142 = arith.addf %136, %141 : vector<256x32xf32>
    %c2_162 = arith.constant 2 : index
    %c2_163 = arith.constant 2 : index
    %c0_164 = arith.constant 0 : index
    %143 = vector.load %arg7[%c2_162, %c2_163, %c0_164] : memref<18x18x32xbf16, #tpu.memory_space<vmem>>, vector<16x16x32xbf16>
    %144 = vector.shape_cast %143 : vector<16x16x32xbf16> to vector<256x32xbf16>
    %c8_165 = arith.constant 8 : index
    %c0_166 = arith.constant 0 : index
    %c0_167 = arith.constant 0 : index
    %145 = vector.load %arg4[%c8_165, %c0_166, %c0_167] : memref<9x32x32xbf16, #tpu.memory_space<vmem>>, vector<1x32x32xbf16>
    %146 = vector.shape_cast %145 : vector<1x32x32xbf16> to vector<32x32xbf16>
    %cst_168 = arith.constant dense<0.000000e+00> : vector<256x32xf32>
    %147 = tpu.matmul %144, %146, %cst_168 {dimension_numbers = #tpu.dot_dimension_numbers<[1], [0], [0], [1], [0, 0, 1, 1], [], []>} : vector<256x32xbf16>, vector<32x32xbf16>, vector<256x32xf32> -> vector<256x32xf32>
    %148 = arith.addf %142, %147 : vector<256x32xf32>
    %cst_169 = arith.constant dense<0.000000e+00> : vector<32xf32>
    %149 = vector.multi_reduction <add>, %148, %cst_169 [0] : vector<256x32xf32> to vector<32xf32>
    %150 = vector.shape_cast %149 : vector<32xf32> to vector<1x32xf32>
    %cst_170 = arith.constant 2.560000e+02 : f32
    %151 = vector.broadcast %cst_170 : f32 to vector<1x32xf32>
    %152 = arith.divf %150, %151 : vector<1x32xf32>
    %153 = vector.broadcast %152 : vector<1x32xf32> to vector<256x32xf32>
    %154 = arith.subf %148, %153 : vector<256x32xf32>
    %155 = arith.mulf %154, %154 : vector<256x32xf32>
    %cst_171 = arith.constant dense<0.000000e+00> : vector<32xf32>
    %156 = vector.multi_reduction <add>, %155, %cst_171 [0] : vector<256x32xf32> to vector<32xf32>
    %157 = vector.shape_cast %156 : vector<32xf32> to vector<1x32xf32>
    %cst_172 = arith.constant 2.560000e+02 : f32
    %158 = vector.broadcast %cst_172 : f32 to vector<1x32xf32>
    %159 = arith.divf %157, %158 : vector<1x32xf32>
    %cst_173 = arith.constant 9.99999974E-6 : f32
    %160 = vector.broadcast %cst_173 : f32 to vector<1x32xf32>
    %161 = arith.addf %159, %160 : vector<1x32xf32>
    %162 = math.rsqrt %161 : vector<1x32xf32>
    %163 = vector.broadcast %162 : vector<1x32xf32> to vector<256x32xf32>
    %164 = arith.mulf %154, %163 : vector<256x32xf32>
    %cst_174 = arith.constant 0.000000e+00 : f32
    %165 = vector.broadcast %cst_174 : f32 to vector<256x32xf32>
    %166 = arith.maximumf %164, %165 : vector<256x32xf32>
    %167 = tpu.transpose %166, [1, 0] : vector<256x32xf32> -> vector<32x256xf32>
    %c0_175 = arith.constant 0 : index
    %c0_176 = arith.constant 0 : index
    %c0_177 = arith.constant 0 : index
    %168 = vector.load %arg5[%c0_175, %c0_176, %c0_177] : memref<1x32x256xf32, #tpu.memory_space<vmem>>, vector<1x32x256xf32>
    %169 = vector.shape_cast %168 : vector<1x32x256xf32> to vector<32x256xf32>
    %170 = vector.shape_cast %167 : vector<32x256xf32> to vector<1x32x256xf32>
    tpu.vector_store %arg5[%c0_175, %c0_176, %c0_177], %170 {strides = array<i32>} : memref<1x32x256xf32, #tpu.memory_space<vmem>>, vector<1x32x256xf32>,
    return
  }
  func.func @transform_0(%arg0: i32) -> (i32, i32, i32, i32) {
    %c0_i32 = arith.constant 0 : i32
    %c0_i32_0 = arith.constant 0 : i32
    %c0_i32_1 = arith.constant 0 : i32
    %c0_i32_2 = arith.constant 0 : i32
    return %arg0, %c0_i32, %c0_i32_0, %c0_i32_1 : i32, i32, i32, i32
  }
  func.func @transform_1(%arg0: i32) -> (i32, i32, i32, i32) {
    %c0_i32 = arith.constant 0 : i32
    %c0_i32_0 = arith.constant 0 : i32
    %c0_i32_1 = arith.constant 0 : i32
    %c0_i32_2 = arith.constant 0 : i32
    return %arg0, %c0_i32, %c0_i32_0, %c0_i32_1 : i32, i32, i32, i32
  }
  func.func @transform_2(%arg0: i32) -> (i32, i32, i32) {
    %c0_i32 = arith.constant 0 : i32
    %c0_i32_0 = arith.constant 0 : i32
    %c0_i32_1 = arith.constant 0 : i32
    %c0_i32_2 = arith.constant 0 : i32
    return %c0_i32, %c0_i32_0, %c0_i32_1 : i32, i32, i32
  }
  func.func @transform_3(%arg0: i32) -> (i32, i32, i32) {
    %c0_i32 = arith.constant 0 : i32
    %c0_i32_0 = arith.constant 0 : i32
    %c0_i32_1 = arith.constant 0 : i32
    %c0_i32_2 = arith.constant 0 : i32
    return %c0_i32, %c0_i32_0, %c0_i32_1 : i32, i32, i32
  }
  func.func @transform_4(%arg0: i32) -> (i32, i32, i32) {
    %c0_i32 = arith.constant 0 : i32
    %c0_i32_0 = arith.constant 0 : i32
    %c0_i32_1 = arith.constant 0 : i32
    return %arg0, %c0_i32, %c0_i32_0 : i32, i32, i32
  }
}

</mosaic_0001>

<llo_original>
// kernel: up_forward.2
$region0: #{up_forward.2}
  #allocation0 [shape = 'u32[]', space=smem, size = 0x4, offset = 0x4, fixed_abs, tag = 'smem constant byte address 0x4 - core index']
  #allocation1 [shape = 'u32[144,128]{1,0:T(1,128)}', space=vmem, size = 0x12000, scoped, tag = 'internal scratch']
  %s0 = inlined_call_operand.vmem [shape: bf16[2,64,64], index: 0, kind: input, shape index: {}]
  %s1 = inlined_call_operand.hbm [shape: bf16[64,128], index: 1, kind: input, shape index: {}]
  %s2 = inlined_call_operand.hbm [shape: f32[1,128], index: 2, kind: input, shape index: {}]
  %s3 = inlined_call_operand.vmem [shape: bf16[2,8,2,8,64], index: 3, kind: output, shape index: {}]
  %s4 = sld [smem:[#allocation0]]
  $region53: #{up_forward.2} parent=0
    _
  %s6 = ssub.s32 1, %s4
  %s7 = scalar_select 0, %s6, %s4
  $region1: #{up_forward.2} parent=0
    #allocation2 [shape = 'u8[16384]{0}', space=vmem, size = 0x4000, scoped, tag = 'input window, operand 1, single buffered']
    #allocation3 [shape = 's32[2]{0}', space=sflag, size = 0x8, scoped, tag = 'scoped memory for up_forward.2']
    #allocation4 [shape = 'u8[512]{0}', space=vmem, size = 0x400, scoped, tag = 'input window, operand 2, single buffered']
    #allocation5 [shape = 's32[1]{0}', space=sflag, size = 0x4, scoped, tag = 'scoped memory for up_forward.2']
    %8 = vsyncpa [#allocation3], 0
    %9 = vsyncpa [#allocation5], 0
    loop: start=0, step=1, limit=4
    $region2: #{up_forward.2} parent=1 // loop_pre_header
      _
    $region3: #{up_forward.2} parent=1 // loop_header
      %s11 = sphi 0, %s15
      %p12 = scmp.ge.s32.totalorder %s11, 4
      %s21 = sphi 0, %s23
      %s24 = sphi 0, %s21
      %s25 = sphi 0, %s24
      %s41 = sphi 0, %s25
      %s45 = sphi 0, %s45
      %s47 = sphi 0, %s45
      %s48 = sphi 0, %s47
      %s62 = sphi 0, %s48
      %s66 = sphi 0, %s66
      %s68 = sphi 0, %s66
      %s69 = sphi 0, %s68
      %s83 = sphi 0, %s69
      %s89 = sphi 0, %s91
      %s92 = sphi 0, %s89
      %s93 = sphi 0, %s92
      %s109 = sphi 0, %s93
    $region4: #{up_forward.2} parent=1 // loop_header_branch
      %14 = sbr.rel (%p12) target = $region8
    $region5: #{up_forward.2} parent=1 // loop_body
      %s16 = ssub.s32 %s11, 1
      %s17 = ssub.s32 %s11, 2
      %s18 = sadd.s32 %s11, 1
      %s19 = ssub.s32 %s11, %s18
      %p20 = scmp.eq.s32.totalorder %s19, 0
      %s22 = sadd.s32 %s21, 1
      %s23 = scalar_select %p20, %s21, %s22
      %p26 = pneg %p20
      %p27 = scmp.eq.s32.totalorder %s11, 1
      %p28 = por %p26, %p27
      %p29 = scmp.ne.s32.totalorder %s21, %s24
      %p30 = scmp.eq.s32.totalorder %s11, 0
      %p31 = por %p29, %p30
      %p32 = scmp.ne.s32.totalorder %s21, %s24
      %p33 = scmp.eq.s32.totalorder %s16, 1
      %p34 = por %p32, %p33
      %p35 = scmp.ne.s32.totalorder %s24, %s25
      %p36 = scmp.eq.s32.totalorder %s16, 0
      %p37 = por %p35, %p36
      %p38 = scmp.ne.s32.totalorder %s24, %s25
      %p39 = scmp.eq.s32.totalorder %s17, 1
      %p40 = por %p38, %p39
      %p42 = scmp.ne.s32.totalorder %s25, %s41
      %p43 = scmp.eq.s32.totalorder %s17, 0
      %p44 = por %p42, %p43
      %s46 = sadd.s32 %s45, 1
      %p49 = scmp.eq.s32.totalorder %s11, 1
      %p50 = scmp.ne.s32.totalorder %s45, %s47
      %p51 = scmp.eq.s32.totalorder %s11, 0
      %p52 = por %p50, %p51
      %p53 = scmp.ne.s32.totalorder %s45, %s47
      %p54 = scmp.eq.s32.totalorder %s16, 1
      %p55 = por %p53, %p54
      %p56 = scmp.ne.s32.totalorder %s47, %s48
      %p57 = scmp.eq.s32.totalorder %s16, 0
      %p58 = por %p56, %p57
      %p59 = scmp.ne.s32.totalorder %s47, %s48
      %p60 = scmp.eq.s32.totalorder %s17, 1
      %p61 = por %p59, %p60
      %p63 = scmp.ne.s32.totalorder %s48, %s62
      %p64 = scmp.eq.s32.totalorder %s17, 0
      %p65 = por %p63, %p64
      %s67 = sadd.s32 %s66, 1
      %p70 = scmp.eq.s32.totalorder %s11, 1
      %p71 = scmp.ne.s32.totalorder %s66, %s68
      %p72 = scmp.eq.s32.totalorder %s11, 0
      %p73 = por %p71, %p72
      %p74 = scmp.ne.s32.totalorder %s66, %s68
      %p75 = scmp.eq.s32.totalorder %s16, 1
      %p76 = por %p74, %p75
      %p77 = scmp.ne.s32.totalorder %s68, %s69
      %p78 = scmp.eq.s32.totalorder %s16, 0
      %p79 = por %p77, %p78
      %p80 = scmp.ne.s32.totalorder %s68, %s69
      %p81 = scmp.eq.s32.totalorder %s17, 1
      %p82 = por %p80, %p81
      %p84 = scmp.ne.s32.totalorder %s69, %s83
      %p85 = scmp.eq.s32.totalorder %s17, 0
      %p86 = por %p84, %p85
      %s87 = ssub.s32 %s11, %s18
      %p88 = scmp.eq.s32.totalorder %s87, 0
      %s90 = sadd.s32 %s89, 1
      %s91 = scalar_select %p88, %s89, %s90
      %p94 = pneg %p88
      %p95 = scmp.eq.s32.totalorder %s11, 1
      %p96 = por %p94, %p95
      %p97 = scmp.ne.s32.totalorder %s89, %s92
      %p98 = scmp.eq.s32.totalorder %s11, 0
      %p99 = por %p97, %p98
      %p100 = scmp.ne.s32.totalorder %s89, %s92
      %p101 = scmp.eq.s32.totalorder %s16, 1
      %p102 = por %p100, %p101
      %p103 = scmp.ne.s32.totalorder %s92, %s93
      %p104 = scmp.eq.s32.totalorder %s16, 0
      %p105 = por %p103, %p104
      %p106 = scmp.ne.s32.totalorder %s92, %s93
      %p107 = scmp.eq.s32.totalorder %s17, 1
      %p108 = por %p106, %p107
      %p110 = scmp.ne.s32.totalorder %s93, %s109
      %p111 = scmp.eq.s32.totalorder %s17, 0
      %p112 = por %p110, %p111
      %p113 = scmp.le.s32.totalorder 1, %s11
      %p114 = scmp.lt.s32.totalorder %s11, 3
      %p115 = pnand %p113, %p114
      %p116 = pneg %p115
      // Predicated region
      $region9: #{up_forward.2} parent=5 // pred_check
        _
      $region10: #{up_forward.2} parent=5 // pred_check_branch
        %118 = sbr.rel (%p115) target = $region12
      $region11: #{up_forward.2} parent=5 // pred_region
        %s119 = ssub.s32 %s11, 1
        // Predicated region
        $region13: #{up_forward.2} parent=11 // pred_check
          %p120 = pneg %p58
        $region14: #{up_forward.2} parent=11 // pred_check_branch
          %122 = sbr.rel (%p120) target = $region16
        $region15: #{up_forward.2} parent=11 // pred_region
          %s124 = ssub.s32 512, 512
          %125 = vsyncadd [#allocation3], %s124
          %s126 = sshll.u32 [#allocation2], 4
          %s127 = int_to_ptr.vmem [resolvable:$true] %s126
          %132 = dma.hbm_to_vmem [thread:$0]  %s1, 512, %s127, [#allocation3], 64, 64, 4
        $region16: #{up_forward.2} parent=11 // pred_fallthru
          _
        // Predicated region
        $region17: #{up_forward.2} parent=11 // pred_check
          %p133 = pneg %p79
        $region18: #{up_forward.2} parent=11 // pred_check_branch
          %135 = sbr.rel (%p133) target = $region20
        $region19: #{up_forward.2} parent=11 // pred_region
          %s137 = ssub.s32 16, 16
          %138 = vsyncadd [#allocation5], %s137
          %s140 = sshll.u32 [#allocation4], 4
          %s141 = int_to_ptr.vmem [resolvable:$true] %s140
          %143 = dma.hbm_to_vmem [thread:$0]  %s2, 16, %s141, [#allocation5]
        $region20: #{up_forward.2} parent=11 // pred_fallthru
          _
      $region12: #{up_forward.2} parent=5 // pred_fallthru
        _
      %p144 = scmp.lt.s32.totalorder %s11, 2
      // Predicated region
      $region21: #{up_forward.2} parent=5 // pred_check
        %p145 = pneg %p144
      $region22: #{up_forward.2} parent=5 // pred_check_branch
        %147 = sbr.rel (%p145) target = $region24
      $region23: #{up_forward.2} parent=5 // pred_region
        // Predicated region
        $region25: #{up_forward.2} parent=23 // pred_check
          %p148 = pneg %p31
        $region26: #{up_forward.2} parent=23 // pred_check_branch
          %150 = sbr.rel (%p148) target = $region28
        $region27: #{up_forward.2} parent=23 // pred_region
          %p151 = scmp.lt.s32.totalorder %s11, 1
          %s152 = scalar_select %p151, %s11, 1
          %s153 = smul.addr %s152, 8
          %s154 = smul.addr %s153, 4
          %s155 = scalar_lea.vmem %s0, %s154
        $region28: #{up_forward.2} parent=23 // pred_fallthru
          _
      $region24: #{up_forward.2} parent=5 // pred_fallthru
        _
      %p156 = scmp.le.s32.totalorder 1, %s11
      %p157 = scmp.lt.s32.totalorder %s11, 3
      %p158 = pnand %p156, %p157
      %p159 = pneg %p158
      // Predicated region
      $region29: #{up_forward.2} parent=5 // pred_check
        _
      $region30: #{up_forward.2} parent=5 // pred_check_branch
        %161 = sbr.rel (%p158) target = $region32
      $region31: #{up_forward.2} parent=5 // pred_region
        %s162 = ssub.s32 %s11, 1
        // Predicated region
        $region33: #{up_forward.2} parent=31 // pred_check
          %p163 = pneg %p58
        $region34: #{up_forward.2} parent=31 // pred_check_branch
          %165 = sbr.rel (%p163) target = $region36
        $region35: #{up_forward.2} parent=31 // pred_region
          %166 = dma.done [#allocation3], 512
        $region36: #{up_forward.2} parent=31 // pred_fallthru
          _
        // Predicated region
        $region37: #{up_forward.2} parent=31 // pred_check
          %p167 = pneg %p79
        $region38: #{up_forward.2} parent=31 // pred_check_branch
          %169 = sbr.rel (%p167) target = $region40
        $region39: #{up_forward.2} parent=31 // pred_region
          %170 = dma.done [#allocation5], 16
        $region40: #{up_forward.2} parent=31 // pred_fallthru
          _
        %p171 = scmp.lt.s32.totalorder %s16, 1
        %s172 = scalar_select %p171, %s16, 1
        %s173 = smul.addr %s172, 8
        %s174 = smul.addr %s173, 4
        %s175 = scalar_lea.vmem %s0, %s174
        %p176 = pneg %p37
        %p177 = pneg %p34
        %p178 = pneg %p58
        %p179 = pneg %p55
        %p180 = pneg %p79
        %p181 = pneg %p76
        %p182 = pneg %p105
        %p183 = pneg %p102
        %p184 = scmp.lt.s32.totalorder %s16, 1
        %s185 = scalar_select %p184, %s16, 1
        %s186 = smul.addr %s185, 16
        %s187 = smul.addr %s186, 4
        %s188 = scalar_lea.vmem %s3, %s187
        %p189 = scmp.lt.s32.totalorder %s16, 1
        %s190 = scalar_select %p189, %s16, 1
        %s191 = smul.addr %s190, 8
        %s192 = smul.addr %s191, 4
        %s193 = scalar_lea.vmem %s0, %s192
        %p194 = scmp.lt.s32.totalorder %s16, 1
        %s195 = scalar_select %p194, %s16, 1
        %s196 = smul.addr %s195, 16
        %s197 = smul.addr %s196, 4
        %s198 = scalar_lea.vmem %s3, %s197
        %v200 = vld [vmem:[%s193] sm:$0xf]
        %v201 = vld [vmem:[%s193 + $0x4] sm:$0xf]
        %v202 = vld [vmem:[%s193 + $0x8] sm:$0xf]
        %v203 = vld [vmem:[%s193 + $0xc] sm:$0xf]
        %v204 = vld [vmem:[%s193 + $0x10] sm:$0xf]
        %v205 = vld [vmem:[%s193 + $0x14] sm:$0xf]
        %v206 = vld [vmem:[%s193 + $0x18] sm:$0xf]
        %v207 = vld [vmem:[%s193 + $0x1c] sm:$0xf]
        %v208 = vld [vmem:[#allocation2] sm:$0xf]
        %v209 = vld [vmem:[#allocation2 + $0x4] sm:$0xf]
        %v210 = vld [vmem:[#allocation2 + $0x8] sm:$0xf]
        %v211 = vld [vmem:[#allocation2 + $0xc] sm:$0xf]
        %v212 = vld [vmem:[#allocation2 + $0x10] sm:$0xf]
        %v213 = vld [vmem:[#allocation2 + $0x14] sm:$0xf]
        %v214 = vld [vmem:[#allocation2 + $0x18] sm:$0xf]
        %v215 = vld [vmem:[#allocation2 + $0x1c] sm:$0xf]
        %v216 = vld [vmem:[#allocation4] sm:$0x1]
        %v218 = vlaneseq
        %v219 = vshrl.u32 %v218, 7
        %v220 = vsub.s32 0, %v219
        %v221 = vrot.slane %v216, %v220
        %v231 = vunpack.c.l.b16 %v200
        %v232 = vunpack.c.l.b16 %v201
        %v233 = vunpack.c.l.b16 %v202
        %v234 = vunpack.c.l.b16 %v203
        %v235 = vunpack.c.l.b16 %v204
        %v236 = vunpack.c.l.b16 %v205
        %v237 = vunpack.c.l.b16 %v206
        %v238 = vunpack.c.l.b16 %v207
        %v239 = vpack.c.b16 %v232, %v231
        %v240 = vpack.c.b16 %v234, %v233
        %v241 = vpack.c.b16 %v236, %v235
        %v242 = vpack.c.b16 %v238, %v237
        %v251 = vunpack.c.l.b16 %v208
        %v252 = vunpack.c.l.b16 %v209
        %v253 = vunpack.c.l.b16 %v210
        %v254 = vunpack.c.l.b16 %v211
        %v255 = vunpack.c.l.b16 %v212
        %v256 = vunpack.c.l.b16 %v213
        %v257 = vunpack.c.l.b16 %v214
        %v258 = vunpack.c.l.b16 %v215
        %v259 = vpack.c.b16 %v252, %v251
        %v260 = vpack.c.b16 %v254, %v253
        %v261 = vpack.c.b16 %v256, %v255
        %v262 = vpack.c.b16 %v258, %v257
        %vm267 = vcmask 523264
        %v269 = vsel %vm267, %v239, 0
        %v272 = vsel %vm267, %v240, 0
        %v275 = vsel %vm267, %v241, 0
        %v278 = vsel %vm267, %v242, 0
        %280 = vmatprep.subr.bf16.mxu0 0
        %281 = vmatpush1.bf16.msra.mxu0 0
        %282 = vmatprep.subr.bf16.mxu0 0
        %283 = vmatpush1.bf16.msra.mxu0 0
        %284 = vmatprep.subr.bf16.mxu0 0
        %285 = vmatpush1.bf16.msra.mxu0 0
        %286 = vmatprep.subr.bf16.mxu0 0
        %287 = vmatpush1.bf16.msra.mxu0 0
        %288 = vmatprep.subr.bf16.mxu0 0
        %289 = vmatpush1.bf16.msra.mxu0 %v262
        %290 = vmatprep.subr.bf16.mxu0 0
        %291 = vmatpush1.bf16.msra.mxu0 %v261
        %292 = vmatprep.subr.bf16.mxu0 0
        %293 = vmatpush1.bf16.msra.mxu0 %v260
        %294 = vmatprep.subr.bf16.mxu0 0
        %295 = vmatpush1.bf16.msra.mxu0 %v259
        %296 = vmatprep.subr.bf16.mxu0 0
        %297 = vmatpush2.bf16.msra.mxu0 0
        %298 = vmatprep.subr.bf16.mxu0 0
        %299 = vmatpush2.bf16.msra.mxu0 0
        %300 = vmatprep.subr.bf16.mxu0 0
        %301 = vmatpush2.bf16.msra.mxu0 0
        %302 = vmatprep.subr.bf16.mxu0 0
        %303 = vmatpush2.bf16.msra.mxu0 0
        %304 = vmatprep.subr.bf16.mxu0 0
        %305 = vmatpush2.bf16.msra.mxu0 0
        %306 = vmatprep.subr.bf16.mxu0 0
        %307 = vmatpush2.bf16.msra.mxu0 0
        %308 = vmatprep.subr.bf16.mxu0 0
        %309 = vmatpush2.bf16.msra.mxu0 0
        %310 = vmatprep.subr.bf16.mxu0 0
        %311 = vmatpush2.bf16.msra.mxu0 0
        %312 = vmatprep.mubr.bf16.mxu0 0
        %313 = vmatmul.mubr.bf16.gmra.mxu0 %v269
        %v314 = vpop.f32.mrf.mxu0
        %v315 = vadd.f32 %v221, %v314
        %v316 = vpop.f32.mrf.mxu0
        %v317 = vpop.f32.mrf.mxu0
        %v318 = vadd.f32 %v221, %v317
        %v319 = vpop.f32.mrf.mxu0
        %320 = vmatprep.mubr.bf16.mxu0 0
        %321 = vmatmul.mubr.bf16.gmra.mxu0 %v272
        %v322 = vpop.f32.mrf.mxu0
        %v323 = vadd.f32 %v221, %v322
        %v324 = vpop.f32.mrf.mxu0
        %v325 = vpop.f32.mrf.mxu0
        %v326 = vadd.f32 %v221, %v325
        %v327 = vpop.f32.mrf.mxu0
        %328 = vmatprep.mubr.bf16.mxu0 0
        %329 = vmatmul.mubr.bf16.gmra.mxu0 %v275
        %v330 = vpop.f32.mrf.mxu0
        %v331 = vadd.f32 %v221, %v330
        %v332 = vpop.f32.mrf.mxu0
        %v333 = vpop.f32.mrf.mxu0
        %v334 = vadd.f32 %v221, %v333
        %v335 = vpop.f32.mrf.mxu0
        %336 = vmatprep.mubr.bf16.mxu0 0
        %337 = vmatmul.mubr.bf16.gmra.mxu0 %v278
        %v338 = vpop.f32.mrf.mxu0
        %v339 = vadd.f32 %v221, %v338
        %v340 = vpop.f32.mrf.mxu0
        %v341 = vpop.f32.mrf.mxu0
        %v342 = vadd.f32 %v221, %v341
        %v343 = vpop.f32.mrf.mxu0
        %344 = vdwg.mxu0
        %v345 = vpack.c.bf16 %v318, %v315
        %v346 = vpack.c.bf16 %v326, %v323
        %v347 = vpack.c.bf16 %v334, %v331
        %v348 = vpack.c.bf16 %v342, %v339
        %v353 = vunpack.c.l.b16 %v345
        %v354 = vunpack.c.h.b16 %v345
        %v355 = vunpack.c.l.b16 %v346
        %v356 = vunpack.c.h.b16 %v346
        %v357 = vunpack.c.l.b16 %v347
        %v358 = vunpack.c.h.b16 %v347
        %v359 = vunpack.c.l.b16 %v348
        %v360 = vunpack.c.h.b16 %v348
        %v361 = vpack.c.b16 %v353, %v353
        %v362 = vpack.c.b16 %v354, %v354
        %v363 = vpack.c.b16 %v355, %v355
        %v364 = vpack.c.b16 %v356, %v356
        %v365 = vpack.c.b16 %v357, %v357
        %v366 = vpack.c.b16 %v358, %v358
        %v367 = vpack.c.b16 %v359, %v359
        %v368 = vpack.c.b16 %v360, %v360
        %vm377 = vcmask 519168
        %378 = vst.msk [vmem:[%s198] sm:$0xf] %vm377, %v361
        %379 = vst.msk [vmem:[%s198 + $0x8] sm:$0xf] %vm377, %v362
        %380 = vst.msk [vmem:[%s198 + $0x10] sm:$0xf] %vm377, %v363
        %381 = vst.msk [vmem:[%s198 + $0x18] sm:$0xf] %vm377, %v364
        %382 = vst.msk [vmem:[%s198 + $0x20] sm:$0xf] %vm377, %v365
        %383 = vst.msk [vmem:[%s198 + $0x28] sm:$0xf] %vm377, %v366
        %384 = vst.msk [vmem:[%s198 + $0x30] sm:$0xf] %vm377, %v367
        %385 = vst.msk [vmem:[%s198 + $0x38] sm:$0xf] %vm377, %v368
        %386 = vrot.lane.b32.xlu0 %v361, 64
        %v387 = vpop.permute.xlu0 %386
        %388 = vrot.lane.b32.xlu0 %v362, 64
        %v389 = vpop.permute.xlu0 %388
        %390 = vrot.lane.b32.xlu0 %v363, 64
        %v391 = vpop.permute.xlu0 %390
        %392 = vrot.lane.b32.xlu0 %v364, 64
        %v393 = vpop.permute.xlu0 %392
        %394 = vrot.lane.b32.xlu0 %v365, 64
        %v395 = vpop.permute.xlu0 %394
        %396 = vrot.lane.b32.xlu0 %v366, 64
        %v397 = vpop.permute.xlu0 %396
        %398 = vrot.lane.b32.xlu0 %v367, 64
        %v399 = vpop.permute.xlu0 %398
        %400 = vrot.lane.b32.xlu0 %v368, 64
        %v401 = vpop.permute.xlu0 %400
        %s410 = scalar_lea.vmem %s198, 4
        %411 = vst.msk [vmem:[%s410] sm:$0xf] %vm377, %v387
        %412 = vst.msk [vmem:[%s410 + $0x8] sm:$0xf] %vm377, %v389
        %413 = vst.msk [vmem:[%s410 + $0x10] sm:$0xf] %vm377, %v391
        %414 = vst.msk [vmem:[%s410 + $0x18] sm:$0xf] %vm377, %v393
        %415 = vst.msk [vmem:[%s410 + $0x20] sm:$0xf] %vm377, %v395
        %416 = vst.msk [vmem:[%s410 + $0x28] sm:$0xf] %vm377, %v397
        %417 = vst.msk [vmem:[%s410 + $0x30] sm:$0xf] %vm377, %v399
        %418 = vst.msk [vmem:[%s410 + $0x38] sm:$0xf] %vm377, %v401
        %p419 = scmp.lt.s32.totalorder %s16, 1
        %s420 = scalar_select %p419, %s16, 1
        %s421 = smul.addr %s420, 16
        %s422 = smul.addr %s421, 4
        %s423 = scalar_lea.vmem %s3, %s422
        // Predicated region
        $region41: #{up_forward.2} parent=31 // pred_check
          %p424 = pneg %p102
        $region42: #{up_forward.2} parent=31 // pred_check_branch
          %426 = sbr.rel (%p424) target = $region44
        $region43: #{up_forward.2} parent=31 // pred_region
          _
        $region44: #{up_forward.2} parent=31 // pred_fallthru
          _
      $region32: #{up_forward.2} parent=5 // pred_fallthru
        _
      %p427 = scmp.le.s32.totalorder 2, %s11
      // Predicated region
      $region45: #{up_forward.2} parent=5 // pred_check
        %p428 = pneg %p427
      $region46: #{up_forward.2} parent=5 // pred_check_branch
        %430 = sbr.rel (%p428) target = $region48
      $region47: #{up_forward.2} parent=5 // pred_region
        %s431 = ssub.s32 %s11, 2
        // Predicated region
        $region49: #{up_forward.2} parent=47 // pred_check
          %p432 = pneg %p108
        $region50: #{up_forward.2} parent=47 // pred_check_branch
          %434 = sbr.rel (%p432) target = $region52
        $region51: #{up_forward.2} parent=47 // pred_region
          %p435 = scmp.lt.s32.totalorder %s17, 1
          %s436 = scalar_select %p435, %s17, 1
          %s437 = smul.addr %s436, 16
          %s438 = smul.addr %s437, 4
          %s439 = scalar_lea.vmem %s3, %s438
        $region52: #{up_forward.2} parent=47 // pred_fallthru
          _
      $region48: #{up_forward.2} parent=5 // pred_fallthru
        _
    $region6: #{up_forward.2} parent=1 // loop_footer
      %s15 = sadd.s32 1, %s11
    $region7: #{up_forward.2} parent=1 // loop_footer_branch
      %10 = sbr.rel target = $region3
    $region8: #{up_forward.2} parent=1 // loop_exit
      _
    %440 = vsyncpa [#allocation3], 1
    %s441 = scalar_lea.sflag [#allocation3], 1
    %442 = vsyncpa %s441, 1
    %443 = vsyncpa [#allocation5], 1

// kernel: up_forward.3
$region0: #{up_forward.3}
  #allocation0 [shape = 'u32[]', space=smem, size = 0x4, offset = 0x4, fixed_abs, tag = 'smem constant byte address 0x4 - core index']
  #allocation1 [shape = 'u32[144,128]{1,0:T(1,128)}', space=vmem, size = 0x12000, scoped, tag = 'internal scratch']
  #allocation2 [shape = 'bf16[18,18,64]{2,1,0:T(8,128)(2,1)}', space=vmem, size = 0x1b000, scoped, tag = 'scratch operand']
  #allocation3 [shape = 'bf16[18,18,32]{2,1,0:T(8,128)(2,1)}', space=vmem, size = 0x1b000, scoped, tag = 'scratch operand']
  %s0 = inlined_call_operand.vmem [shape: bf16[2,16,16,32], index: 0, kind: input, shape index: {}]
  %s1 = inlined_call_operand.vmem [shape: bf16[2,16,16,32], index: 1, kind: input, shape index: {}]
  %s2 = inlined_call_operand.vmem [shape: bf16[9,64,32], index: 2, kind: input, shape index: {}]
  %s3 = inlined_call_operand.vmem [shape: bf16[9,32,32], index: 3, kind: input, shape index: {}]
  %s4 = inlined_call_operand.vmem [shape: f32[2,32,256], index: 4, kind: output, shape index: {}]
  %s5 = sld [smem:[#allocation0]]
  $region49: #{up_forward.3} parent=0
    _
  %s7 = ssub.s32 1, %s5
  %s8 = scalar_select 0, %s7, %s5
  loop: start=0, step=1, limit=4
  $region2: #{up_forward.3} parent=0 // loop_pre_header
    _
  $region3: #{up_forward.3} parent=0 // loop_header
    %s10 = sphi 0, %s14
    %p11 = scmp.ge.s32.totalorder %s10, 4
    %s20 = sphi 0, %s22
    %s23 = sphi 0, %s20
    %s24 = sphi 0, %s23
    %s40 = sphi 0, %s24
    %s46 = sphi 0, %s48
    %s49 = sphi 0, %s46
    %s50 = sphi 0, %s49
    %s66 = sphi 0, %s50
    %s70 = sphi 0, %s70
    %s72 = sphi 0, %s70
    %s73 = sphi 0, %s72
    %s87 = sphi 0, %s73
    %s91 = sphi 0, %s91
    %s93 = sphi 0, %s91
    %s94 = sphi 0, %s93
    %s108 = sphi 0, %s94
    %s114 = sphi 0, %s116
    %s117 = sphi 0, %s114
    %s118 = sphi 0, %s117
    %s134 = sphi 0, %s118
  $region4: #{up_forward.3} parent=0 // loop_header_branch
    %13 = sbr.rel (%p11) target = $region8
  $region5: #{up_forward.3} parent=0 // loop_body
    %s15 = ssub.s32 %s10, 1
    %s16 = ssub.s32 %s10, 2
    %s17 = sadd.s32 %s10, 1
    %s18 = ssub.s32 %s10, %s17
    %p19 = scmp.eq.s32.totalorder %s18, 0
    %s21 = sadd.s32 %s20, 1
    %s22 = scalar_select %p19, %s20, %s21
    %p25 = pneg %p19
    %p26 = scmp.eq.s32.totalorder %s10, 1
    %p27 = por %p25, %p26
    %p28 = scmp.ne.s32.totalorder %s20, %s23
    %p29 = scmp.eq.s32.totalorder %s10, 0
    %p30 = por %p28, %p29
    %p31 = scmp.ne.s32.totalorder %s20, %s23
    %p32 = scmp.eq.s32.totalorder %s15, 1
    %p33 = por %p31, %p32
    %p34 = scmp.ne.s32.totalorder %s23, %s24
    %p35 = scmp.eq.s32.totalorder %s15, 0
    %p36 = por %p34, %p35
    %p37 = scmp.ne.s32.totalorder %s23, %s24
    %p38 = scmp.eq.s32.totalorder %s16, 1
    %p39 = por %p37, %p38
    %p41 = scmp.ne.s32.totalorder %s24, %s40
    %p42 = scmp.eq.s32.totalorder %s16, 0
    %p43 = por %p41, %p42
    %s44 = ssub.s32 %s10, %s17
    %p45 = scmp.eq.s32.totalorder %s44, 0
    %s47 = sadd.s32 %s46, 1
    %s48 = scalar_select %p45, %s46, %s47
    %p51 = pneg %p45
    %p52 = scmp.eq.s32.totalorder %s10, 1
    %p53 = por %p51, %p52
    %p54 = scmp.ne.s32.totalorder %s46, %s49
    %p55 = scmp.eq.s32.totalorder %s10, 0
    %p56 = por %p54, %p55
    %p57 = scmp.ne.s32.totalorder %s46, %s49
    %p58 = scmp.eq.s32.totalorder %s15, 1
    %p59 = por %p57, %p58
    %p60 = scmp.ne.s32.totalorder %s49, %s50
    %p61 = scmp.eq.s32.totalorder %s15, 0
    %p62 = por %p60, %p61
    %p63 = scmp.ne.s32.totalorder %s49, %s50
    %p64 = scmp.eq.s32.totalorder %s16, 1
    %p65 = por %p63, %p64
    %p67 = scmp.ne.s32.totalorder %s50, %s66
    %p68 = scmp.eq.s32.totalorder %s16, 0
    %p69 = por %p67, %p68
    %s71 = sadd.s32 %s70, 1
    %p74 = scmp.eq.s32.totalorder %s10, 1
    %p75 = scmp.ne.s32.totalorder %s70, %s72
    %p76 = scmp.eq.s32.totalorder %s10, 0
    %p77 = por %p75, %p76
    %p78 = scmp.ne.s32.totalorder %s70, %s72
    %p79 = scmp.eq.s32.totalorder %s15, 1
    %p80 = por %p78, %p79
    %p81 = scmp.ne.s32.totalorder %s72, %s73
    %p82 = scmp.eq.s32.totalorder %s15, 0
    %p83 = por %p81, %p82
    %p84 = scmp.ne.s32.totalorder %s72, %s73
    %p85 = scmp.eq.s32.totalorder %s16, 1
    %p86 = por %p84, %p85
    %p88 = scmp.ne.s32.totalorder %s73, %s87
    %p89 = scmp.eq.s32.totalorder %s16, 0
    %p90 = por %p88, %p89
    %s92 = sadd.s32 %s91, 1
    %p95 = scmp.eq.s32.totalorder %s10, 1
    %p96 = scmp.ne.s32.totalorder %s91, %s93
    %p97 = scmp.eq.s32.totalorder %s10, 0
    %p98 = por %p96, %p97
    %p99 = scmp.ne.s32.totalorder %s91, %s93
    %p100 = scmp.eq.s32.totalorder %s15, 1
    %p101 = por %p99, %p100
    %p102 = scmp.ne.s32.totalorder %s93, %s94
    %p103 = scmp.eq.s32.totalorder %s15, 0
    %p104 = por %p102, %p103
    %p105 = scmp.ne.s32.totalorder %s93, %s94
    %p106 = scmp.eq.s32.totalorder %s16, 1
    %p107 = por %p105, %p106
    %p109 = scmp.ne.s32.totalorder %s94, %s108
    %p110 = scmp.eq.s32.totalorder %s16, 0
    %p111 = por %p109, %p110
    %s112 = ssub.s32 %s10, %s17
    %p113 = scmp.eq.s32.totalorder %s112, 0
    %s115 = sadd.s32 %s114, 1
    %s116 = scalar_select %p113, %s114, %s115
    %p119 = pneg %p113
    %p120 = scmp.eq.s32.totalorder %s10, 1
    %p121 = por %p119, %p120
    %p122 = scmp.ne.s32.totalorder %s114, %s117
    %p123 = scmp.eq.s32.totalorder %s10, 0
    %p124 = por %p122, %p123
    %p125 = scmp.ne.s32.totalorder %s114, %s117
    %p126 = scmp.eq.s32.totalorder %s15, 1
    %p127 = por %p125, %p126
    %p128 = scmp.ne.s32.totalorder %s117, %s118
    %p129 = scmp.eq.s32.totalorder %s15, 0
    %p130 = por %p128, %p129
    %p131 = scmp.ne.s32.totalorder %s117, %s118
    %p132 = scmp.eq.s32.totalorder %s16, 1
    %p133 = por %p131, %p132
    %p135 = scmp.ne.s32.totalorder %s118, %s134
    %p136 = scmp.eq.s32.totalorder %s16, 0
    %p137 = por %p135, %p136
    %p138 = scmp.le.s32.totalorder 1, %s10
    %p139 = scmp.lt.s32.totalorder %s10, 3
    %p140 = pnand %p138, %p139
    %p141 = pneg %p140
    // Predicated region
    $region9: #{up_forward.3} parent=5 // pred_check
      _
    $region10: #{up_forward.3} parent=5 // pred_check_branch
      %143 = sbr.rel (%p140) target = $region12
    $region11: #{up_forward.3} parent=5 // pred_region
      %s144 = ssub.s32 %s10, 1
      // Predicated region
      $region13: #{up_forward.3} parent=11 // pred_check
        %p145 = pneg %p83
      $region14: #{up_forward.3} parent=11 // pred_check_branch
        %147 = sbr.rel (%p145) target = $region16
      $region15: #{up_forward.3} parent=11 // pred_region
        _
      $region16: #{up_forward.3} parent=11 // pred_fallthru
        _
      // Predicated region
      $region17: #{up_forward.3} parent=11 // pred_check
        %p148 = pneg %p104
      $region18: #{up_forward.3} parent=11 // pred_check_branch
        %150 = sbr.rel (%p148) target = $region20
      $region19: #{up_forward.3} parent=11 // pred_region
        _
      $region20: #{up_forward.3} parent=11 // pred_fallthru
        _
    $region12: #{up_forward.3} parent=5 // pred_fallthru
      _
    %p151 = scmp.lt.s32.totalorder %s10, 2
    // Predicated region
    $region21: #{up_forward.3} parent=5 // pred_check
      %p152 = pneg %p151
    $region22: #{up_forward.3} parent=5 // pred_check_branch
      %154 = sbr.rel (%p152) target = $region24
    $region23: #{up_forward.3} parent=5 // pred_region
      // Predicated region
      $region25: #{up_forward.3} parent=23 // pred_check
        %p155 = pneg %p30
      $region26: #{up_forward.3} parent=23 // pred_check_branch
        %157 = sbr.rel (%p155) target = $region28
      $region27: #{up_forward.3} parent=23 // pred_region
        %p158 = scmp.lt.s32.totalorder %s10, 1
        %s159 = scalar_select %p158, %s10, 1
        %s160 = smul.addr %s159, 32
        %s161 = smul.addr %s160, 4
        %s162 = scalar_lea.vmem %s0, %s161
      $region28: #{up_forward.3} parent=23 // pred_fallthru
        _
      // Predicated region
      $region29: #{up_forward.3} parent=23 // pred_check
        %p163 = pneg %p56
      $region30: #{up_forward.3} parent=23 // pred_check_branch
        %165 = sbr.rel (%p163) target = $region32
      $region31: #{up_forward.3} parent=23 // pred_region
        %p166 = scmp.lt.s32.totalorder %s10, 1
        %s167 = scalar_select %p166, %s10, 1
        %s168 = smul.addr %s167, 32
        %s169 = smul.addr %s168, 4
        %s170 = scalar_lea.vmem %s1, %s169
      $region32: #{up_forward.3} parent=23 // pred_fallthru
        _
    $region24: #{up_forward.3} parent=5 // pred_fallthru
      _
    %p171 = scmp.le.s32.totalorder 1, %s10
    %p172 = scmp.lt.s32.totalorder %s10, 3
    %p173 = pnand %p171, %p172
    %p174 = pneg %p173
    // Predicated region
    $region33: #{up_forward.3} parent=5 // pred_check
      _
    $region34: #{up_forward.3} parent=5 // pred_check_branch
      %176 = sbr.rel (%p173) target = $region36
    $region35: #{up_forward.3} parent=5 // pred_region
      %s177 = ssub.s32 %s10, 1
      %p178 = scmp.lt.s32.totalorder %s15, 1
      %s179 = scalar_select %p178, %s15, 1
      %s180 = smul.addr %s179, 32
      %s181 = smul.addr %s180, 4
      %s182 = scalar_lea.vmem %s0, %s181
      %p183 = pneg %p36
      %p184 = pneg %p33
      %p185 = scmp.lt.s32.totalorder %s15, 1
      %s186 = scalar_select %p185, %s15, 1
      %s187 = smul.addr %s186, 32
      %s188 = smul.addr %s187, 4
      %s189 = scalar_lea.vmem %s1, %s188
      %p190 = pneg %p62
      %p191 = pneg %p59
      %p192 = pneg %p83
      %p193 = pneg %p80
      %p194 = pneg %p104
      %p195 = pneg %p101
      %p196 = pneg %p130
      %p197 = pneg %p127
      %p198 = scmp.lt.s32.totalorder %s15, 1
      %s199 = scalar_select %p198, %s15, 1
      %s200 = smul.addr %s199, 8
      %s201 = smul.addr %s200, 8
      %s202 = scalar_lea.vmem %s4, %s201
      %p203 = scmp.lt.s32.totalorder %s15, 1
      %s204 = scalar_select %p203, %s15, 1
      %s205 = smul.addr %s204, 32
      %s206 = smul.addr %s205, 4
      %s207 = scalar_lea.vmem %s0, %s206
      %p208 = scmp.lt.s32.totalorder %s15, 1
      %s209 = scalar_select %p208, %s15, 1
      %s210 = smul.addr %s209, 32
      %s211 = smul.addr %s210, 4
      %s212 = scalar_lea.vmem %s1, %s211
      %p213 = scmp.lt.s32.totalorder %s15, 1
      %s214 = scalar_select %p213, %s15, 1
      %s215 = smul.addr %s214, 8
      %s216 = smul.addr %s215, 8
      %s217 = scalar_lea.vmem %s4, %s216
      %vm219 = vcmask 519168
      %220 = vst.msk [vmem:[#allocation2] sm:$0xf] %vm219, 0
      %221 = vst.msk [vmem:[#allocation2 + $0x4] sm:$0xf] %vm219, 0
      %vm222 = vcmask 516096
      %223 = vst.msk [vmem:[#allocation2 + $0x8] sm:$0x1] %vm222, 0
      %s224 = scalar_lea.vmem [#allocation2], 204
      %225 = vst.msk [vmem:[%s224] sm:$0xf] %vm219, 0
      %226 = vst.msk [vmem:[%s224 + $0x4] sm:$0xf] %vm219, 0
      %227 = vst.msk [vmem:[%s224 + $0x8] sm:$0x1] %vm222, 0
      %vm228 = vcmask 516096
      %vm229 = vsmask.f32 256
      %vm230 = vmand %vm228, %vm229
      %v231 = vld [vmem:[#allocation2] sm:$0x1]
      %v232 = vsel %vm230, 0, %v231
      %233 = vst [vmem:[#allocation2] sm:$0x1] %v232
      %v234 = vld [vmem:[#allocation2 + $0xc] sm:$0x1]
      %v235 = vsel %vm230, 0, %v234
      %236 = vst [vmem:[#allocation2 + $0xc] sm:$0x1] %v235
      %v237 = vld [vmem:[#allocation2 + $0x18] sm:$0x1]
      %v238 = vsel %vm230, 0, %v237
      %239 = vst [vmem:[#allocation2 + $0x18] sm:$0x1] %v238
      %v240 = vld [vmem:[#allocation2 + $0x24] sm:$0x1]
      %v241 = vsel %vm230, 0, %v240
      %242 = vst [vmem:[#allocation2 + $0x24] sm:$0x1] %v241
      %v243 = vld [vmem:[#allocation2 + $0x30] sm:$0x1]
      %v244 = vsel %vm230, 0, %v243
      %245 = vst [vmem:[#allocation2 + $0x30] sm:$0x1] %v244
      %v246 = vld [vmem:[#allocation2 + $0x3c] sm:$0x1]
      %v247 = vsel %vm230, 0, %v246
      %248 = vst [vmem:[#allocation2 + $0x3c] sm:$0x1] %v247
      %v249 = vld [vmem:[#allocation2 + $0x48] sm:$0x1]
      %v250 = vsel %vm230, 0, %v249
      %251 = vst [vmem:[#allocation2 + $0x48] sm:$0x1] %v250
      %v252 = vld [vmem:[#allocation2 + $0x54] sm:$0x1]
      %v253 = vsel %vm230, 0, %v252
      %254 = vst [vmem:[#allocation2 + $0x54] sm:$0x1] %v253
      %v255 = vld [vmem:[#allocation2 + $0x60] sm:$0x1]
      %v256 = vsel %vm230, 0, %v255
      %257 = vst [vmem:[#allocation2 + $0x60] sm:$0x1] %v256
      %v258 = vld [vmem:[#allocation2 + $0x6c] sm:$0x1]
      %v259 = vsel %vm230, 0, %v258
      %260 = vst [vmem:[#allocation2 + $0x6c] sm:$0x1] %v259
      %v261 = vld [vmem:[#allocation2 + $0x78] sm:$0x1]
      %v262 = vsel %vm230, 0, %v261
      %263 = vst [vmem:[#allocation2 + $0x78] sm:$0x1] %v262
      %v264 = vld [vmem:[#allocation2 + $0x84] sm:$0x1]
      %v265 = vsel %vm230, 0, %v264
      %266 = vst [vmem:[#allocation2 + $0x84] sm:$0x1] %v265
      %v267 = vld [vmem:[#allocation2 + $0x90] sm:$0x1]
      %v268 = vsel %vm230, 0, %v267
      %269 = vst [vmem:[#allocation2 + $0x90] sm:$0x1] %v268
      %v270 = vld [vmem:[#allocation2 + $0x9c] sm:$0x1]
      %v271 = vsel %vm230, 0, %v270
      %272 = vst [vmem:[#allocation2 + $0x9c] sm:$0x1] %v271
      %v273 = vld [vmem:[#allocation2 + $0xa8] sm:$0x1]
      %v274 = vsel %vm230, 0, %v273
      %275 = vst [vmem:[#allocation2 + $0xa8] sm:$0x1] %v274
      %v276 = vld [vmem:[#allocation2 + $0xb4] sm:$0x1]
      %v277 = vsel %vm230, 0, %v276
      %278 = vst [vmem:[#allocation2 + $0xb4] sm:$0x1] %v277
      %v279 = vld [vmem:[#allocation2 + $0xc0] sm:$0x1]
      %v280 = vsel %vm230, 0, %v279
      %281 = vst [vmem:[#allocation2 + $0xc0] sm:$0x1] %v280
      %v282 = vld [vmem:[#allocation2 + $0xcc] sm:$0x1]
      %v283 = vsel %vm230, 0, %v282
      %284 = vst [vmem:[#allocation2 + $0xcc] sm:$0x1] %v283
      %vm285 = vsmask.f32 7938
      %vm286 = vmand %vm228, %vm285
      %v287 = vld [vmem:[#allocation2 + $0x8] sm:$0x1]
      %v288 = vsel %vm286, 0, %v287
      %289 = vst [vmem:[#allocation2 + $0x8] sm:$0x1] %v288
      %v290 = vld [vmem:[#allocation2 + $0x14] sm:$0x1]
      %v291 = vsel %vm286, 0, %v290
      %292 = vst [vmem:[#allocation2 + $0x14] sm:$0x1] %v291
      %v293 = vld [vmem:[#allocation2 + $0x20] sm:$0x1]
      %v294 = vsel %vm286, 0, %v293
      %295 = vst [vmem:[#allocation2 + $0x20] sm:$0x1] %v294
      %v296 = vld [vmem:[#allocation2 + $0x2c] sm:$0x1]
      %v297 = vsel %vm286, 0, %v296
      %298 = vst [vmem:[#allocation2 + $0x2c] sm:$0x1] %v297
      %v299 = vld [vmem:[#allocation2 + $0x38] sm:$0x1]
      %v300 = vsel %vm286, 0, %v299
      %301 = vst [vmem:[#allocation2 + $0x38] sm:$0x1] %v300
      %v302 = vld [vmem:[#allocation2 + $0x44] sm:$0x1]
      %v303 = vsel %vm286, 0, %v302
      %304 = vst [vmem:[#allocation2 + $0x44] sm:$0x1] %v303
      %v305 = vld [vmem:[#allocation2 + $0x50] sm:$0x1]
      %v306 = vsel %vm286, 0, %v305
      %307 = vst [vmem:[#allocation2 + $0x50] sm:$0x1] %v306
      %v308 = vld [vmem:[#allocation2 + $0x5c] sm:$0x1]
      %v309 = vsel %vm286, 0, %v308
      %310 = vst [vmem:[#allocation2 + $0x5c] sm:$0x1] %v309
      %v311 = vld [vmem:[#allocation2 + $0x68] sm:$0x1]
      %v312 = vsel %vm286, 0, %v311
      %313 = vst [vmem:[#allocation2 + $0x68] sm:$0x1] %v312
      %v314 = vld [vmem:[#allocation2 + $0x74] sm:$0x1]
      %v315 = vsel %vm286, 0, %v314
      %316 = vst [vmem:[#allocation2 + $0x74] sm:$0x1] %v315
      %v317 = vld [vmem:[#allocation2 + $0x80] sm:$0x1]
      %v318 = vsel %vm286, 0, %v317
      %319 = vst [vmem:[#allocation2 + $0x80] sm:$0x1] %v318
      %v320 = vld [vmem:[#allocation2 + $0x8c] sm:$0x1]
      %v321 = vsel %vm286, 0, %v320
      %322 = vst [vmem:[#allocation2 + $0x8c] sm:$0x1] %v321
      %v323 = vld [vmem:[#allocation2 + $0x98] sm:$0x1]
      %v324 = vsel %vm286, 0, %v323
      %325 = vst [vmem:[#allocation2 + $0x98] sm:$0x1] %v324
      %v326 = vld [vmem:[#allocation2 + $0xa4] sm:$0x1]
      %v327 = vsel %vm286, 0, %v326
      %328 = vst [vmem:[#allocation2 + $0xa4] sm:$0x1] %v327
      %v329 = vld [vmem:[#allocation2 + $0xb0] sm:$0x1]
      %v330 = vsel %vm286, 0, %v329
      %331 = vst [vmem:[#allocation2 + $0xb0] sm:$0x1] %v330
      %v332 = vld [vmem:[#allocation2 + $0xbc] sm:$0x1]
      %v333 = vsel %vm286, 0, %v332
      %334 = vst [vmem:[#allocation2 + $0xbc] sm:$0x1] %v333
      %v335 = vld [vmem:[#allocation2 + $0xc8] sm:$0x1]
      %v336 = vsel %vm286, 0, %v335
      %337 = vst [vmem:[#allocation2 + $0xc8] sm:$0x1] %v336
      %v338 = vld [vmem:[#allocation2 + $0xd4] sm:$0x1]
      %v339 = vsel %vm286, 0, %v338
      %340 = vst [vmem:[#allocation2 + $0xd4] sm:$0x1] %v339
      %vm341 = vcmask 257024
      %342 = vst.msk [vmem:[#allocation3] sm:$0xf] %vm341, 0
      %343 = vst.msk [vmem:[#allocation3 + $0x4] sm:$0xf] %vm341, 0
      %vm344 = vcmask 253952
      %345 = vst.msk [vmem:[#allocation3 + $0x8] sm:$0x1] %vm344, 0
      %s346 = scalar_lea.vmem [#allocation3], 204
      %347 = vst.msk [vmem:[%s346] sm:$0xf] %vm341, 0
      %348 = vst.msk [vmem:[%s346 + $0x4] sm:$0xf] %vm341, 0
      %349 = vst.msk [vmem:[%s346 + $0x8] sm:$0x1] %vm344, 0
      %vm350 = vcmask 253952
      %vm351 = vmand %vm350, %vm229
      %v352 = vld [vmem:[#allocation3] sm:$0x1]
      %v353 = vsel %vm351, 0, %v352
      %354 = vst [vmem:[#allocation3] sm:$0x1] %v353
      %v355 = vld [vmem:[#allocation3 + $0xc] sm:$0x1]
      %v356 = vsel %vm351, 0, %v355
      %357 = vst [vmem:[#allocation3 + $0xc] sm:$0x1] %v356
      %v358 = vld [vmem:[#allocation3 + $0x18] sm:$0x1]
      %v359 = vsel %vm351, 0, %v358
      %360 = vst [vmem:[#allocation3 + $0x18] sm:$0x1] %v359
      %v361 = vld [vmem:[#allocation3 + $0x24] sm:$0x1]
      %v362 = vsel %vm351, 0, %v361
      %363 = vst [vmem:[#allocation3 + $0x24] sm:$0x1] %v362
      %v364 = vld [vmem:[#allocation3 + $0x30] sm:$0x1]
      %v365 = vsel %vm351, 0, %v364
      %366 = vst [vmem:[#allocation3 + $0x30] sm:$0x1] %v365
      %v367 = vld [vmem:[#allocation3 + $0x3c] sm:$0x1]
      %v368 = vsel %vm351, 0, %v367
      %369 = vst [vmem:[#allocation3 + $0x3c] sm:$0x1] %v368
      %v370 = vld [vmem:[#allocation3 + $0x48] sm:$0x1]
      %v371 = vsel %vm351, 0, %v370
      %372 = vst [vmem:[#allocation3 + $0x48] sm:$0x1] %v371
      %v373 = vld [vmem:[#allocation3 + $0x54] sm:$0x1]
      %v374 = vsel %vm351, 0, %v373
      %375 = vst [vmem:[#allocation3 + $0x54] sm:$0x1] %v374
      %v376 = vld [vmem:[#allocation3 + $0x60] sm:$0x1]
      %v377 = vsel %vm351, 0, %v376
      %378 = vst [vmem:[#allocation3 + $0x60] sm:$0x1] %v377
      %v379 = vld [vmem:[#allocation3 + $0x6c] sm:$0x1]
      %v380 = vsel %vm351, 0, %v379
      %381 = vst [vmem:[#allocation3 + $0x6c] sm:$0x1] %v380
      %v382 = vld [vmem:[#allocation3 + $0x78] sm:$0x1]
      %v383 = vsel %vm351, 0, %v382
      %384 = vst [vmem:[#allocation3 + $0x78] sm:$0x1] %v383
      %v385 = vld [vmem:[#allocation3 + $0x84] sm:$0x1]
      %v386 = vsel %vm351, 0, %v385
      %387 = vst [vmem:[#allocation3 + $0x84] sm:$0x1] %v386
      %v388 = vld [vmem:[#allocation3 + $0x90] sm:$0x1]
      %v389 = vsel %vm351, 0, %v388
      %390 = vst [vmem:[#allocation3 + $0x90] sm:$0x1] %v389
      %v391 = vld [vmem:[#allocation3 + $0x9c] sm:$0x1]
      %v392 = vsel %vm351, 0, %v391
      %393 = vst [vmem:[#allocation3 + $0x9c] sm:$0x1] %v392
      %v394 = vld [vmem:[#allocation3 + $0xa8] sm:$0x1]
      %v395 = vsel %vm351, 0, %v394
      %396 = vst [vmem:[#allocation3 + $0xa8] sm:$0x1] %v395
      %v397 = vld [vmem:[#allocation3 + $0xb4] sm:$0x1]
      %v398 = vsel %vm351, 0, %v397
      %399 = vst [vmem:[#allocation3 + $0xb4] sm:$0x1] %v398
      %v400 = vld [vmem:[#allocation3 + $0xc0] sm:$0x1]
      %v401 = vsel %vm351, 0, %v400
      %402 = vst [vmem:[#allocation3 + $0xc0] sm:$0x1] %v401
      %v403 = vld [vmem:[#allocation3 + $0xcc] sm:$0x1]
      %v404 = vsel %vm351, 0, %v403
      %405 = vst [vmem:[#allocation3 + $0xcc] sm:$0x1] %v404
      %vm406 = vmand %vm350, %vm285
      %v407 = vld [vmem:[#allocation3 + $0x8] sm:$0x1]
      %v408 = vsel %vm406, 0, %v407
      %409 = vst [vmem:[#allocation3 + $0x8] sm:$0x1] %v408
      %v410 = vld [vmem:[#allocation3 + $0x14] sm:$0x1]
      %v411 = vsel %vm406, 0, %v410
      %412 = vst [vmem:[#allocation3 + $0x14] sm:$0x1] %v411
      %v413 = vld [vmem:[#allocation3 + $0x20] sm:$0x1]
      %v414 = vsel %vm406, 0, %v413
      %415 = vst [vmem:[#allocation3 + $0x20] sm:$0x1] %v414
      %v416 = vld [vmem:[#allocation3 + $0x2c] sm:$0x1]
      %v417 = vsel %vm406, 0, %v416
      %418 = vst [vmem:[#allocation3 + $0x2c] sm:$0x1] %v417
      %v419 = vld [vmem:[#allocation3 + $0x38] sm:$0x1]
      %v420 = vsel %vm406, 0, %v419
      %421 = vst [vmem:[#allocation3 + $0x38] sm:$0x1] %v420
      %v422 = vld [vmem:[#allocation3 + $0x44] sm:$0x1]
      %v423 = vsel %vm406, 0, %v422
      %424 = vst [vmem:[#allocation3 + $0x44] sm:$0x1] %v423
      %v425 = vld [vmem:[#allocation3 + $0x50] sm:$0x1]
      %v426 = vsel %vm406, 0, %v425
      %427 = vst [vmem:[#allocation3 + $0x50] sm:$0x1] %v426
      %v428 = vld [vmem:[#allocation3 + $0x5c] sm:$0x1]
      %v429 = vsel %vm406, 0, %v428
      %430 = vst [vmem:[#allocation3 + $0x5c] sm:$0x1] %v429
      %v431 = vld [vmem:[#allocation3 + $0x68] sm:$0x1]
      %v432 = vsel %vm406, 0, %v431
      %433 = vst [vmem:[#allocation3 + $0x68] sm:$0x1] %v432
      %v434 = vld [vmem:[#allocation3 + $0x74] sm:$0x1]
      %v435 = vsel %vm406, 0, %v434
      %436 = vst [vmem:[#allocation3 + $0x74] sm:$0x1] %v435
      %v437 = vld [vmem:[#allocation3 + $0x80] sm:$0x1]
      %v438 = vsel %vm406, 0, %v437
      %439 = vst [vmem:[#allocation3 + $0x80] sm:$0x1] %v438
      %v440 = vld [vmem:[#allocation3 + $0x8c] sm:$0x1]
      %v441 = vsel %vm406, 0, %v440
      %442 = vst [vmem:[#allocation3 + $0x8c] sm:$0x1] %v441
      %v443 = vld [vmem:[#allocation3 + $0x98] sm:$0x1]
      %v444 = vsel %vm406, 0, %v443
      %445 = vst [vmem:[#allocation3 + $0x98] sm:$0x1] %v444
      %v446 = vld [vmem:[#allocation3 + $0xa4] sm:$0x1]
      %v447 = vsel %vm406, 0, %v446
      %448 = vst [vmem:[#allocation3 + $0xa4] sm:$0x1] %v447
      %v449 = vld [vmem:[#allocation3 + $0xb0] sm:$0x1]
      %v450 = vsel %vm406, 0, %v449
      %451 = vst [vmem:[#allocation3 + $0xb0] sm:$0x1] %v450
      %v452 = vld [vmem:[#allocation3 + $0xbc] sm:$0x1]
      %v453 = vsel %vm406, 0, %v452
      %454 = vst [vmem:[#allocation3 + $0xbc] sm:$0x1] %v453
      %v455 = vld [vmem:[#allocation3 + $0xc8] sm:$0x1]
      %v456 = vsel %vm406, 0, %v455
      %457 = vst [vmem:[#allocation3 + $0xc8] sm:$0x1] %v456
      %v458 = vld [vmem:[#allocation3 + $0xd4] sm:$0x1]
      %v459 = vsel %vm406, 0, %v458
      %460 = vst [vmem:[#allocation3 + $0xd4] sm:$0x1] %v459
      %v461 = vld [vmem:[%s207] sm:$0xf]
      %v462 = vld [vmem:[%s207 + $0x4] sm:$0xf]
      %v463 = vld [vmem:[%s207 + $0x8] sm:$0xf]
      %v464 = vld [vmem:[%s207 + $0xc] sm:$0xf]
      %v465 = vld [vmem:[%s207 + $0x10] sm:$0xf]
      %v466 = vld [vmem:[%s207 + $0x14] sm:$0xf]
      %v467 = vld [vmem:[%s207 + $0x18] sm:$0xf]
      %v468 = vld [vmem:[%s207 + $0x1c] sm:$0xf]
      %v469 = vld [vmem:[%s207 + $0x20] sm:$0xf]
      %v470 = vld [vmem:[%s207 + $0x24] sm:$0xf]
      %v471 = vld [vmem:[%s207 + $0x28] sm:$0xf]
      %v472 = vld [vmem:[%s207 + $0x2c] sm:$0xf]
      %v473 = vld [vmem:[%s207 + $0x30] sm:$0xf]
      %v474 = vld [vmem:[%s207 + $0x34] sm:$0xf]
      %v475 = vld [vmem:[%s207 + $0x38] sm:$0xf]
      %v476 = vld [vmem:[%s207 + $0x3c] sm:$0xf]
      %v477 = vld [vmem:[%s207 + $0x40] sm:$0xf]
      %v478 = vld [vmem:[%s207 + $0x44] sm:$0xf]
      %v479 = vld [vmem:[%s207 + $0x48] sm:$0xf]
      %v480 = vld [vmem:[%s207 + $0x4c] sm:$0xf]
      %v481 = vld [vmem:[%s207 + $0x50] sm:$0xf]
      %v482 = vld [vmem:[%s207 + $0x54] sm:$0xf]
      %v483 = vld [vmem:[%s207 + $0x58] sm:$0xf]
      %v484 = vld [vmem:[%s207 + $0x5c] sm:$0xf]
      %v485 = vld [vmem:[%s207 + $0x60] sm:$0xf]
      %v486 = vld [vmem:[%s207 + $0x64] sm:$0xf]
      %v487 = vld [vmem:[%s207 + $0x68] sm:$0xf]
      %v488 = vld [vmem:[%s207 + $0x6c] sm:$0xf]
      %v489 = vld [vmem:[%s207 + $0x70] sm:$0xf]
      %v490 = vld [vmem:[%s207 + $0x74] sm:$0xf]
      %v491 = vld [vmem:[%s207 + $0x78] sm:$0xf]
      %v492 = vld [vmem:[%s207 + $0x7c] sm:$0xf]
      %vm493 = vsmask.f32 4368
      %vm494 = vmor %vm229, %vm493
      %v496 = vshrl.u32 %v461, 16
      %v498 = vrot.slane %v496, 7
      %v499 = vshll.u32 %v461, 16
      %v501 = vor.u32 %v498, %v499
      %v502 = vrot.slane %v498, 4
      %v504 = vshrl.u32 %v462, 16
      %v506 = vrot.slane %v504, 7
      %v507 = vshll.u32 %v462, 16
      %v509 = vor.u32 %v506, %v507
      %v510 = vsel %vm494, %v502, %v509
      %v511 = vrot.slane %v506, 4
      %v513 = vshrl.u32 %v463, 16
      %v515 = vrot.slane %v513, 7
      %v516 = vshll.u32 %v463, 16
      %v518 = vor.u32 %v515, %v516
      %v519 = vrot.slane %v515, 4
      %v521 = vshrl.u32 %v464, 16
      %v523 = vrot.slane %v521, 7
      %v524 = vshll.u32 %v464, 16
      %v526 = vor.u32 %v523, %v524
      %v527 = vsel %vm494, %v519, %v526
      %v528 = vrot.slane %v523, 4
      %v530 = vshrl.u32 %v465, 16
      %v532 = vrot.slane %v530, 7
      %v533 = vshll.u32 %v465, 16
      %v535 = vor.u32 %v532, %v533
      %v536 = vrot.slane %v532, 4
      %v538 = vshrl.u32 %v466, 16
      %v540 = vrot.slane %v538, 7
      %v541 = vshll.u32 %v466, 16
      %v543 = vor.u32 %v540, %v541
      %v544 = vsel %vm494, %v536, %v543
      %v545 = vrot.slane %v540, 4
      %v547 = vshrl.u32 %v467, 16
      %v549 = vrot.slane %v547, 7
      %v550 = vshll.u32 %v467, 16
      %v552 = vor.u32 %v549, %v550
      %v553 = vrot.slane %v549, 4
      %v555 = vshrl.u32 %v468, 16
      %v557 = vrot.slane %v555, 7
      %v558 = vshll.u32 %v468, 16
      %v560 = vor.u32 %v557, %v558
      %v561 = vsel %vm494, %v553, %v560
      %v562 = vrot.slane %v557, 4
      %v564 = vshrl.u32 %v469, 16
      %v566 = vrot.slane %v564, 7
      %v567 = vshll.u32 %v469, 16
      %v569 = vor.u32 %v566, %v567
      %v570 = vrot.slane %v566, 4
      %v572 = vshrl.u32 %v470, 16
      %v574 = vrot.slane %v572, 7
      %v575 = vshll.u32 %v470, 16
      %v577 = vor.u32 %v574, %v575
      %v578 = vsel %vm494, %v570, %v577
      %v579 = vrot.slane %v574, 4
      %v581 = vshrl.u32 %v471, 16
      %v583 = vrot.slane %v581, 7
      %v584 = vshll.u32 %v471, 16
      %v586 = vor.u32 %v583, %v584
      %v587 = vrot.slane %v583, 4
      %v589 = vshrl.u32 %v472, 16
      %v591 = vrot.slane %v589, 7
      %v592 = vshll.u32 %v472, 16
      %v594 = vor.u32 %v591, %v592
      %v595 = vsel %vm494, %v587, %v594
      %v596 = vrot.slane %v591, 4
      %v598 = vshrl.u32 %v473, 16
      %v600 = vrot.slane %v598, 7
      %v601 = vshll.u32 %v473, 16
      %v603 = vor.u32 %v600, %v601
      %v604 = vrot.slane %v600, 4
      %v606 = vshrl.u32 %v474, 16
      %v608 = vrot.slane %v606, 7
      %v609 = vshll.u32 %v474, 16
      %v611 = vor.u32 %v608, %v609
      %v612 = vsel %vm494, %v604, %v611
      %v613 = vrot.slane %v608, 4
      %v615 = vshrl.u32 %v475, 16
      %v617 = vrot.slane %v615, 7
      %v618 = vshll.u32 %v475, 16
      %v620 = vor.u32 %v617, %v618
      %v621 = vrot.slane %v617, 4
      %v623 = vshrl.u32 %v476, 16
      %v625 = vrot.slane %v623, 7
      %v626 = vshll.u32 %v476, 16
      %v628 = vor.u32 %v625, %v626
      %v629 = vsel %vm494, %v621, %v628
      %v630 = vrot.slane %v625, 4
      %v632 = vshrl.u32 %v477, 16
      %v634 = vrot.slane %v632, 7
      %v635 = vshll.u32 %v477, 16
      %v637 = vor.u32 %v634, %v635
      %v638 = vrot.slane %v634, 4
      %v640 = vshrl.u32 %v478, 16
      %v642 = vrot.slane %v640, 7
      %v643 = vshll.u32 %v478, 16
      %v645 = vor.u32 %v642, %v643
      %v646 = vsel %vm494, %v638, %v645
      %v647 = vrot.slane %v642, 4
      %v649 = vshrl.u32 %v479, 16
      %v651 = vrot.slane %v649, 7
      %v652 = vshll.u32 %v479, 16
      %v654 = vor.u32 %v651, %v652
      %v655 = vrot.slane %v651, 4
      %v657 = vshrl.u32 %v480, 16
      %v659 = vrot.slane %v657, 7
      %v660 = vshll.u32 %v480, 16
      %v662 = vor.u32 %v659, %v660
      %v663 = vsel %vm494, %v655, %v662
      %v664 = vrot.slane %v659, 4
      %v666 = vshrl.u32 %v481, 16
      %v668 = vrot.slane %v666, 7
      %v669 = vshll.u32 %v481, 16
      %v671 = vor.u32 %v668, %v669
      %v672 = vrot.slane %v668, 4
      %v674 = vshrl.u32 %v482, 16
      %v676 = vrot.slane %v674, 7
      %v677 = vshll.u32 %v482, 16
      %v679 = vor.u32 %v676, %v677
      %v680 = vsel %vm494, %v672, %v679
      %v681 = vrot.slane %v676, 4
      %v683 = vshrl.u32 %v483, 16
      %v685 = vrot.slane %v683, 7
      %v686 = vshll.u32 %v483, 16
      %v688 = vor.u32 %v685, %v686
      %v689 = vrot.slane %v685, 4
      %v691 = vshrl.u32 %v484, 16
      %v693 = vrot.slane %v691, 7
      %v694 = vshll.u32 %v484, 16
      %v696 = vor.u32 %v693, %v694
      %v697 = vsel %vm494, %v689, %v696
      %v698 = vrot.slane %v693, 4
      %v700 = vshrl.u32 %v485, 16
      %v702 = vrot.slane %v700, 7
      %v703 = vshll.u32 %v485, 16
      %v705 = vor.u32 %v702, %v703
      %v706 = vrot.slane %v702, 4
      %v708 = vshrl.u32 %v486, 16
      %v710 = vrot.slane %v708, 7
      %v711 = vshll.u32 %v486, 16
      %v713 = vor.u32 %v710, %v711
      %v714 = vsel %vm494, %v706, %v713
      %v715 = vrot.slane %v710, 4
      %v717 = vshrl.u32 %v487, 16
      %v719 = vrot.slane %v717, 7
      %v720 = vshll.u32 %v487, 16
      %v722 = vor.u32 %v719, %v720
      %v723 = vrot.slane %v719, 4
      %v725 = vshrl.u32 %v488, 16
      %v727 = vrot.slane %v725, 7
      %v728 = vshll.u32 %v488, 16
      %v730 = vor.u32 %v727, %v728
      %v731 = vsel %vm494, %v723, %v730
      %v732 = vrot.slane %v727, 4
      %v734 = vshrl.u32 %v489, 16
      %v736 = vrot.slane %v734, 7
      %v737 = vshll.u32 %v489, 16
      %v739 = vor.u32 %v736, %v737
      %v740 = vrot.slane %v736, 4
      %v742 = vshrl.u32 %v490, 16
      %v744 = vrot.slane %v742, 7
      %v745 = vshll.u32 %v490, 16
      %v747 = vor.u32 %v744, %v745
      %v748 = vsel %vm494, %v740, %v747
      %v749 = vrot.slane %v744, 4
      %v751 = vshrl.u32 %v491, 16
      %v753 = vrot.slane %v751, 7
      %v754 = vshll.u32 %v491, 16
      %v756 = vor.u32 %v753, %v754
      %v757 = vrot.slane %v753, 4
      %v759 = vshrl.u32 %v492, 16
      %v761 = vrot.slane %v759, 7
      %v762 = vshll.u32 %v492, 16
      %v764 = vor.u32 %v761, %v762
      %v765 = vsel %vm494, %v757, %v764
      %v766 = vrot.slane %v761, 4
      %s815 = scalar_lea.vmem [#allocation2], 12
      %vm816 = vcmask 257024
      %vm817 = vmand %vm816, %vm285
      %v818 = vld [vmem:[%s815] sm:$0xf]
      %v819 = vsel %vm817, %v501, %v818
      %820 = vst [vmem:[%s815] sm:$0xf] %v819
      %821 = vst.msk [vmem:[%s815 + $0x4] sm:$0xf] %vm341, %v510
      %v822 = vld [vmem:[%s815 + $0x8] sm:$0x1]
      %v823 = vsel %vm351, %v511, %v822
      %824 = vst [vmem:[%s815 + $0x8] sm:$0x1] %v823
      %v825 = vld [vmem:[%s815 + $0xc] sm:$0xf]
      %v826 = vsel %vm817, %v518, %v825
      %827 = vst [vmem:[%s815 + $0xc] sm:$0xf] %v826
      %828 = vst.msk [vmem:[%s815 + $0x10] sm:$0xf] %vm341, %v527
      %v829 = vld [vmem:[%s815 + $0x14] sm:$0x1]
      %v830 = vsel %vm351, %v528, %v829
      %831 = vst [vmem:[%s815 + $0x14] sm:$0x1] %v830
      %v832 = vld [vmem:[%s815 + $0x18] sm:$0xf]
      %v833 = vsel %vm817, %v535, %v832
      %834 = vst [vmem:[%s815 + $0x18] sm:$0xf] %v833
      %835 = vst.msk [vmem:[%s815 + $0x1c] sm:$0xf] %vm341, %v544
      %v836 = vld [vmem:[%s815 + $0x20] sm:$0x1]
      %v837 = vsel %vm351, %v545, %v836
      %838 = vst [vmem:[%s815 + $0x20] sm:$0x1] %v837
      %v839 = vld [vmem:[%s815 + $0x24] sm:$0xf]
      %v840 = vsel %vm817, %v552, %v839
      %841 = vst [vmem:[%s815 + $0x24] sm:$0xf] %v840
      %842 = vst.msk [vmem:[%s815 + $0x28] sm:$0xf] %vm341, %v561
      %v843 = vld [vmem:[%s815 + $0x2c] sm:$0x1]
      %v844 = vsel %vm351, %v562, %v843
      %845 = vst [vmem:[%s815 + $0x2c] sm:$0x1] %v844
      %v846 = vld [vmem:[%s815 + $0x30] sm:$0xf]
      %v847 = vsel %vm817, %v569, %v846
      %848 = vst [vmem:[%s815 + $0x30] sm:$0xf] %v847
      %849 = vst.msk [vmem:[%s815 + $0x34] sm:$0xf] %vm341, %v578
      %v850 = vld [vmem:[%s815 + $0x38] sm:$0x1]
      %v851 = vsel %vm351, %v579, %v850
      %852 = vst [vmem:[%s815 + $0x38] sm:$0x1] %v851
      %v853 = vld [vmem:[%s815 + $0x3c] sm:$0xf]
      %v854 = vsel %vm817, %v586, %v853
      %855 = vst [vmem:[%s815 + $0x3c] sm:$0xf] %v854
      %856 = vst.msk [vmem:[%s815 + $0x40] sm:$0xf] %vm341, %v595
      %v857 = vld [vmem:[%s815 + $0x44] sm:$0x1]
      %v858 = vsel %vm351, %v596, %v857
      %859 = vst [vmem:[%s815 + $0x44] sm:$0x1] %v858
      %v860 = vld [vmem:[%s815 + $0x48] sm:$0xf]
      %v861 = vsel %vm817, %v603, %v860
      %862 = vst [vmem:[%s815 + $0x48] sm:$0xf] %v861
      %863 = vst.msk [vmem:[%s815 + $0x4c] sm:$0xf] %vm341, %v612
      %v864 = vld [vmem:[%s815 + $0x50] sm:$0x1]
      %v865 = vsel %vm351, %v613, %v864
      %866 = vst [vmem:[%s815 + $0x50] sm:$0x1] %v865
      %v867 = vld [vmem:[%s815 + $0x54] sm:$0xf]
      %v868 = vsel %vm817, %v620, %v867
      %869 = vst [vmem:[%s815 + $0x54] sm:$0xf] %v868
      %870 = vst.msk [vmem:[%s815 + $0x58] sm:$0xf] %vm341, %v629
      %v871 = vld [vmem:[%s815 + $0x5c] sm:$0x1]
      %v872 = vsel %vm351, %v630, %v871
      %873 = vst [vmem:[%s815 + $0x5c] sm:$0x1] %v872
      %v874 = vld [vmem:[%s815 + $0x60] sm:$0xf]
      %v875 = vsel %vm817, %v637, %v874
      %876 = vst [vmem:[%s815 + $0x60] sm:$0xf] %v875
      %877 = vst.msk [vmem:[%s815 + $0x64] sm:$0xf] %vm341, %v646
      %v878 = vld [vmem:[%s815 + $0x68] sm:$0x1]
      %v879 = vsel %vm351, %v647, %v878
      %880 = vst [vmem:[%s815 + $0x68] sm:$0x1] %v879
      %v881 = vld [vmem:[%s815 + $0x6c] sm:$0xf]
      %v882 = vsel %vm817, %v654, %v881
      %883 = vst [vmem:[%s815 + $0x6c] sm:$0xf] %v882
      %884 = vst.msk [vmem:[%s815 + $0x70] sm:$0xf] %vm341, %v663
      %v885 = vld [vmem:[%s815 + $0x74] sm:$0x1]
      %v886 = vsel %vm351, %v664, %v885
      %887 = vst [vmem:[%s815 + $0x74] sm:$0x1] %v886
      %v888 = vld [vmem:[%s815 + $0x78] sm:$0xf]
      %v889 = vsel %vm817, %v671, %v888
      %890 = vst [vmem:[%s815 + $0x78] sm:$0xf] %v889
      %891 = vst.msk [vmem:[%s815 + $0x7c] sm:$0xf] %vm341, %v680
      %v892 = vld [vmem:[%s815 + $0x80] sm:$0x1]
      %v893 = vsel %vm351, %v681, %v892
      %894 = vst [vmem:[%s815 + $0x80] sm:$0x1] %v893
      %v895 = vld [vmem:[%s815 + $0x84] sm:$0xf]
      %v896 = vsel %vm817, %v688, %v895
      %897 = vst [vmem:[%s815 + $0x84] sm:$0xf] %v896
      %898 = vst.msk [vmem:[%s815 + $0x88] sm:$0xf] %vm341, %v697
      %v899 = vld [vmem:[%s815 + $0x8c] sm:$0x1]
      %v900 = vsel %vm351, %v698, %v899
      %901 = vst [vmem:[%s815 + $0x8c] sm:$0x1] %v900
      %v902 = vld [vmem:[%s815 + $0x90] sm:$0xf]
      %v903 = vsel %vm817, %v705, %v902
      %904 = vst [vmem:[%s815 + $0x90] sm:$0xf] %v903
      %905 = vst.msk [vmem:[%s815 + $0x94] sm:$0xf] %vm341, %v714
      %v906 = vld [vmem:[%s815 + $0x98] sm:$0x1]
      %v907 = vsel %vm351, %v715, %v906
      %908 = vst [vmem:[%s815 + $0x98] sm:$0x1] %v907
      %v909 = vld [vmem:[%s815 + $0x9c] sm:$0xf]
      %v910 = vsel %vm817, %v722, %v909
      %911 = vst [vmem:[%s815 + $0x9c] sm:$0xf] %v910
      %912 = vst.msk [vmem:[%s815 + $0xa0] sm:$0xf] %vm341, %v731
      %v913 = vld [vmem:[%s815 + $0xa4] sm:$0x1]
      %v914 = vsel %vm351, %v732, %v913
      %915 = vst [vmem:[%s815 + $0xa4] sm:$0x1] %v914
      %v916 = vld [vmem:[%s815 + $0xa8] sm:$0xf]
      %v917 = vsel %vm817, %v739, %v916
      %918 = vst [vmem:[%s815 + $0xa8] sm:$0xf] %v917
      %919 = vst.msk [vmem:[%s815 + $0xac] sm:$0xf] %vm341, %v748
      %v920 = vld [vmem:[%s815 + $0xb0] sm:$0x1]
      %v921 = vsel %vm351, %v749, %v920
      %922 = vst [vmem:[%s815 + $0xb0] sm:$0x1] %v921
      %v923 = vld [vmem:[%s815 + $0xb4] sm:$0xf]
      %v924 = vsel %vm817, %v756, %v923
      %925 = vst [vmem:[%s815 + $0xb4] sm:$0xf] %v924
      %926 = vst.msk [vmem:[%s815 + $0xb8] sm:$0xf] %vm341, %v765
      %v927 = vld [vmem:[%s815 + $0xbc] sm:$0x1]
      %v928 = vsel %vm351, %v766, %v927
      %929 = vst [vmem:[%s815 + $0xbc] sm:$0x1] %v928
      %v930 = vld [vmem:[%s212] sm:$0xf]
      %v931 = vld [vmem:[%s212 + $0x4] sm:$0xf]
      %v932 = vld [vmem:[%s212 + $0x8] sm:$0xf]
      %v933 = vld [vmem:[%s212 + $0xc] sm:$0xf]
      %v934 = vld [vmem:[%s212 + $0x10] sm:$0xf]
      %v935 = vld [vmem:[%s212 + $0x14] sm:$0xf]
      %v936 = vld [vmem:[%s212 + $0x18] sm:$0xf]
      %v937 = vld [vmem:[%s212 + $0x1c] sm:$0xf]
      %v938 = vld [vmem:[%s212 + $0x20] sm:$0xf]
      %v939 = vld [vmem:[%s212 + $0x24] sm:$0xf]
      %v940 = vld [vmem:[%s212 + $0x28] sm:$0xf]
      %v941 = vld [vmem:[%s212 + $0x2c] sm:$0xf]
      %v942 = vld [vmem:[%s212 + $0x30] sm:$0xf]
      %v943 = vld [vmem:[%s212 + $0x34] sm:$0xf]
      %v944 = vld [vmem:[%s212 + $0x38] sm:$0xf]
      %v945 = vld [vmem:[%s212 + $0x3c] sm:$0xf]
      %v946 = vld [vmem:[%s212 + $0x40] sm:$0xf]
      %v947 = vld [vmem:[%s212 + $0x44] sm:$0xf]
      %v948 = vld [vmem:[%s212 + $0x48] sm:$0xf]
      %v949 = vld [vmem:[%s212 + $0x4c] sm:$0xf]
      %v950 = vld [vmem:[%s212 + $0x50] sm:$0xf]
      %v951 = vld [vmem:[%s212 + $0x54] sm:$0xf]
      %v952 = vld [vmem:[%s212 + $0x58] sm:$0xf]
      %v953 = vld [vmem:[%s212 + $0x5c] sm:$0xf]
      %v954 = vld [vmem:[%s212 + $0x60] sm:$0xf]
      %v955 = vld [vmem:[%s212 + $0x64] sm:$0xf]
      %v956 = vld [vmem:[%s212 + $0x68] sm:$0xf]
      %v957 = vld [vmem:[%s212 + $0x6c] sm:$0xf]
      %v958 = vld [vmem:[%s212 + $0x70] sm:$0xf]
      %v959 = vld [vmem:[%s212 + $0x74] sm:$0xf]
      %v960 = vld [vmem:[%s212 + $0x78] sm:$0xf]
      %v961 = vld [vmem:[%s212 + $0x7c] sm:$0xf]
      %v963 = vshrl.u32 %v930, 16
      %v965 = vrot.slane %v963, 7
      %v966 = vshll.u32 %v930, 16
      %v968 = vor.u32 %v965, %v966
      %v969 = vrot.slane %v965, 4
      %v971 = vshrl.u32 %v931, 16
      %v973 = vrot.slane %v971, 7
      %v974 = vshll.u32 %v931, 16
      %v976 = vor.u32 %v973, %v974
      %v977 = vsel %vm494, %v969, %v976
      %v978 = vrot.slane %v973, 4
      %v980 = vshrl.u32 %v932, 16
      %v982 = vrot.slane %v980, 7
      %v983 = vshll.u32 %v932, 16
      %v985 = vor.u32 %v982, %v983
      %v986 = vrot.slane %v982, 4
      %v988 = vshrl.u32 %v933, 16
      %v990 = vrot.slane %v988, 7
      %v991 = vshll.u32 %v933, 16
      %v993 = vor.u32 %v990, %v991
      %v994 = vsel %vm494, %v986, %v993
      %v995 = vrot.slane %v990, 4
      %v997 = vshrl.u32 %v934, 16
      %v999 = vrot.slane %v997, 7
      %v1000 = vshll.u32 %v934, 16
      %v1002 = vor.u32 %v999, %v1000
      %v1003 = vrot.slane %v999, 4
      %v1005 = vshrl.u32 %v935, 16
      %v1007 = vrot.slane %v1005, 7
      %v1008 = vshll.u32 %v935, 16
      %v1010 = vor.u32 %v1007, %v1008
      %v1011 = vsel %vm494, %v1003, %v1010
      %v1012 = vrot.slane %v1007, 4
      %v1014 = vshrl.u32 %v936, 16
      %v1016 = vrot.slane %v1014, 7
      %v1017 = vshll.u32 %v936, 16
      %v1019 = vor.u32 %v1016, %v1017
      %v1020 = vrot.slane %v1016, 4
      %v1022 = vshrl.u32 %v937, 16
      %v1024 = vrot.slane %v1022, 7
      %v1025 = vshll.u32 %v937, 16
      %v1027 = vor.u32 %v1024, %v1025
      %v1028 = vsel %vm494, %v1020, %v1027
      %v1029 = vrot.slane %v1024, 4
      %v1031 = vshrl.u32 %v938, 16
      %v1033 = vrot.slane %v1031, 7
      %v1034 = vshll.u32 %v938, 16
      %v1036 = vor.u32 %v1033, %v1034
      %v1037 = vrot.slane %v1033, 4
      %v1039 = vshrl.u32 %v939, 16
      %v1041 = vrot.slane %v1039, 7
      %v1042 = vshll.u32 %v939, 16
      %v1044 = vor.u32 %v1041, %v1042
      %v1045 = vsel %vm494, %v1037, %v1044
      %v1046 = vrot.slane %v1041, 4
      %v1048 = vshrl.u32 %v940, 16
      %v1050 = vrot.slane %v1048, 7
      %v1051 = vshll.u32 %v940, 16
      %v1053 = vor.u32 %v1050, %v1051
      %v1054 = vrot.slane %v1050, 4
      %v1056 = vshrl.u32 %v941, 16
      %v1058 = vrot.slane %v1056, 7
      %v1059 = vshll.u32 %v941, 16
      %v1061 = vor.u32 %v1058, %v1059
      %v1062 = vsel %vm494, %v1054, %v1061
      %v1063 = vrot.slane %v1058, 4
      %v1065 = vshrl.u32 %v942, 16
      %v1067 = vrot.slane %v1065, 7
      %v1068 = vshll.u32 %v942, 16
      %v1070 = vor.u32 %v1067, %v1068
      %v1071 = vrot.slane %v1067, 4
      %v1073 = vshrl.u32 %v943, 16
      %v1075 = vrot.slane %v1073, 7
      %v1076 = vshll.u32 %v943, 16
      %v1078 = vor.u32 %v1075, %v1076
      %v1079 = vsel %vm494, %v1071, %v1078
      %v1080 = vrot.slane %v1075, 4
      %v1082 = vshrl.u32 %v944, 16
      %v1084 = vrot.slane %v1082, 7
      %v1085 = vshll.u32 %v944, 16
      %v1087 = vor.u32 %v1084, %v1085
      %v1088 = vrot.slane %v1084, 4
      %v1090 = vshrl.u32 %v945, 16
      %v1092 = vrot.slane %v1090, 7
      %v1093 = vshll.u32 %v945, 16
      %v1095 = vor.u32 %v1092, %v1093
      %v1096 = vsel %vm494, %v1088, %v1095
      %v1097 = vrot.slane %v1092, 4
      %v1099 = vshrl.u32 %v946, 16
      %v1101 = vrot.slane %v1099, 7
      %v1102 = vshll.u32 %v946, 16
      %v1104 = vor.u32 %v1101, %v1102
      %v1105 = vrot.slane %v1101, 4
      %v1107 = vshrl.u32 %v947, 16
      %v1109 = vrot.slane %v1107, 7
      %v1110 = vshll.u32 %v947, 16
      %v1112 = vor.u32 %v1109, %v1110
      %v1113 = vsel %vm494, %v1105, %v1112
      %v1114 = vrot.slane %v1109, 4
      %v1116 = vshrl.u32 %v948, 16
      %v1118 = vrot.slane %v1116, 7
      %v1119 = vshll.u32 %v948, 16
      %v1121 = vor.u32 %v1118, %v1119
      %v1122 = vrot.slane %v1118, 4
      %v1124 = vshrl.u32 %v949, 16
      %v1126 = vrot.slane %v1124, 7
      %v1127 = vshll.u32 %v949, 16
      %v1129 = vor.u32 %v1126, %v1127
      %v1130 = vsel %vm494, %v1122, %v1129
      %v1131 = vrot.slane %v1126, 4
      %v1133 = vshrl.u32 %v950, 16
      %v1135 = vrot.slane %v1133, 7
      %v1136 = vshll.u32 %v950, 16
      %v1138 = vor.u32 %v1135, %v1136
      %v1139 = vrot.slane %v1135, 4
      %v1141 = vshrl.u32 %v951, 16
      %v1143 = vrot.slane %v1141, 7
      %v1144 = vshll.u32 %v951, 16
      %v1146 = vor.u32 %v1143, %v1144
      %v1147 = vsel %vm494, %v1139, %v1146
      %v1148 = vrot.slane %v1143, 4
      %v1150 = vshrl.u32 %v952, 16
      %v1152 = vrot.slane %v1150, 7
      %v1153 = vshll.u32 %v952, 16
      %v1155 = vor.u32 %v1152, %v1153
      %v1156 = vrot.slane %v1152, 4
      %v1158 = vshrl.u32 %v953, 16
      %v1160 = vrot.slane %v1158, 7
      %v1161 = vshll.u32 %v953, 16
      %v1163 = vor.u32 %v1160, %v1161
      %v1164 = vsel %vm494, %v1156, %v1163
      %v1165 = vrot.slane %v1160, 4
      %v1167 = vshrl.u32 %v954, 16
      %v1169 = vrot.slane %v1167, 7
      %v1170 = vshll.u32 %v954, 16
      %v1172 = vor.u32 %v1169, %v1170
      %v1173 = vrot.slane %v1169, 4
      %v1175 = vshrl.u32 %v955, 16
      %v1177 = vrot.slane %v1175, 7
      %v1178 = vshll.u32 %v955, 16
      %v1180 = vor.u32 %v1177, %v1178
      %v1181 = vsel %vm494, %v1173, %v1180
      %v1182 = vrot.slane %v1177, 4
      %v1184 = vshrl.u32 %v956, 16
      %v1186 = vrot.slane %v1184, 7
      %v1187 = vshll.u32 %v956, 16
      %v1189 = vor.u32 %v1186, %v1187
      %v1190 = vrot.slane %v1186, 4
      %v1192 = vshrl.u32 %v957, 16
      %v1194 = vrot.slane %v1192, 7
      %v1195 = vshll.u32 %v957, 16
      %v1197 = vor.u32 %v1194, %v1195
      %v1198 = vsel %vm494, %v1190, %v1197
      %v1199 = vrot.slane %v1194, 4
      %v1201 = vshrl.u32 %v958, 16
      %v1203 = vrot.slane %v1201, 7
      %v1204 = vshll.u32 %v958, 16
      %v1206 = vor.u32 %v1203, %v1204
      %v1207 = vrot.slane %v1203, 4
      %v1209 = vshrl.u32 %v959, 16
      %v1211 = vrot.slane %v1209, 7
      %v1212 = vshll.u32 %v959, 16
      %v1214 = vor.u32 %v1211, %v1212
      %v1215 = vsel %vm494, %v1207, %v1214
      %v1216 = vrot.slane %v1211, 4
      %v1218 = vshrl.u32 %v960, 16
      %v1220 = vrot.slane %v1218, 7
      %v1221 = vshll.u32 %v960, 16
      %v1223 = vor.u32 %v1220, %v1221
      %v1224 = vrot.slane %v1220, 4
      %v1226 = vshrl.u32 %v961, 16
      %v1228 = vrot.slane %v1226, 7
      %v1229 = vshll.u32 %v961, 16
      %v1231 = vor.u32 %v1228, %v1229
      %v1232 = vsel %vm494, %v1224, %v1231
      %v1233 = vrot.slane %v1228, 4
      %1234 = vrot.lane.b32.xlu0 %v968, 32
      %v1235 = vpop.permute.xlu0 %1234
      %1236 = vrot.lane.b32.xlu0 %v977, 32
      %v1237 = vpop.permute.xlu0 %1236
      %1238 = vrot.lane.b32.xlu0 %v978, 32
      %v1239 = vpop.permute.xlu0 %1238
      %1240 = vrot.lane.b32.xlu0 %v985, 32
      %v1241 = vpop.permute.xlu0 %1240
      %1242 = vrot.lane.b32.xlu0 %v994, 32
      %v1243 = vpop.permute.xlu0 %1242
      %1244 = vrot.lane.b32.xlu0 %v995, 32
      %v1245 = vpop.permute.xlu0 %1244
      %1246 = vrot.lane.b32.xlu0 %v1002, 32
      %v1247 = vpop.permute.xlu0 %1246
      %1248 = vrot.lane.b32.xlu0 %v1011, 32
      %v1249 = vpop.permute.xlu0 %1248
      %1250 = vrot.lane.b32.xlu0 %v1012, 32
      %v1251 = vpop.permute.xlu0 %1250
      %1252 = vrot.lane.b32.xlu0 %v1019, 32
      %v1253 = vpop.permute.xlu0 %1252
      %1254 = vrot.lane.b32.xlu0 %v1028, 32
      %v1255 = vpop.permute.xlu0 %1254
      %1256 = vrot.lane.b32.xlu0 %v1029, 32
      %v1257 = vpop.permute.xlu0 %1256
      %1258 = vrot.lane.b32.xlu0 %v1036, 32
      %v1259 = vpop.permute.xlu0 %1258
      %1260 = vrot.lane.b32.xlu0 %v1045, 32
      %v1261 = vpop.permute.xlu0 %1260
      %1262 = vrot.lane.b32.xlu0 %v1046, 32
      %v1263 = vpop.permute.xlu0 %1262
      %1264 = vrot.lane.b32.xlu0 %v1053, 32
      %v1265 = vpop.permute.xlu0 %1264
      %1266 = vrot.lane.b32.xlu0 %v1062, 32
      %v1267 = vpop.permute.xlu0 %1266
      %1268 = vrot.lane.b32.xlu0 %v1063, 32
      %v1269 = vpop.permute.xlu0 %1268
      %1270 = vrot.lane.b32.xlu0 %v1070, 32
      %v1271 = vpop.permute.xlu0 %1270
      %1272 = vrot.lane.b32.xlu0 %v1079, 32
      %v1273 = vpop.permute.xlu0 %1272
      %1274 = vrot.lane.b32.xlu0 %v1080, 32
      %v1275 = vpop.permute.xlu0 %1274
      %1276 = vrot.lane.b32.xlu0 %v1087, 32
      %v1277 = vpop.permute.xlu0 %1276
      %1278 = vrot.lane.b32.xlu0 %v1096, 32
      %v1279 = vpop.permute.xlu0 %1278
      %1280 = vrot.lane.b32.xlu0 %v1097, 32
      %v1281 = vpop.permute.xlu0 %1280
      %1282 = vrot.lane.b32.xlu0 %v1104, 32
      %v1283 = vpop.permute.xlu0 %1282
      %1284 = vrot.lane.b32.xlu0 %v1113, 32
      %v1285 = vpop.permute.xlu0 %1284
      %1286 = vrot.lane.b32.xlu0 %v1114, 32
      %v1287 = vpop.permute.xlu0 %1286
      %1288 = vrot.lane.b32.xlu0 %v1121, 32
      %v1289 = vpop.permute.xlu0 %1288
      %1290 = vrot.lane.b32.xlu0 %v1130, 32
      %v1291 = vpop.permute.xlu0 %1290
      %1292 = vrot.lane.b32.xlu0 %v1131, 32
      %v1293 = vpop.permute.xlu0 %1292
      %1294 = vrot.lane.b32.xlu0 %v1138, 32
      %v1295 = vpop.permute.xlu0 %1294
      %1296 = vrot.lane.b32.xlu0 %v1147, 32
      %v1297 = vpop.permute.xlu0 %1296
      %1298 = vrot.lane.b32.xlu0 %v1148, 32
      %v1299 = vpop.permute.xlu0 %1298
      %1300 = vrot.lane.b32.xlu0 %v1155, 32
      %v1301 = vpop.permute.xlu0 %1300
      %1302 = vrot.lane.b32.xlu0 %v1164, 32
      %v1303 = vpop.permute.xlu0 %1302
      %1304 = vrot.lane.b32.xlu0 %v1165, 32
      %v1305 = vpop.permute.xlu0 %1304
      %1306 = vrot.lane.b32.xlu0 %v1172, 32
      %v1307 = vpop.permute.xlu0 %1306
      %1308 = vrot.lane.b32.xlu0 %v1181, 32
      %v1309 = vpop.permute.xlu0 %1308
      %1310 = vrot.lane.b32.xlu0 %v1182, 32
      %v1311 = vpop.permute.xlu0 %1310
      %1312 = vrot.lane.b32.xlu0 %v1189, 32
      %v1313 = vpop.permute.xlu0 %1312
      %1314 = vrot.lane.b32.xlu0 %v1198, 32
      %v1315 = vpop.permute.xlu0 %1314
      %1316 = vrot.lane.b32.xlu0 %v1199, 32
      %v1317 = vpop.permute.xlu0 %1316
      %1318 = vrot.lane.b32.xlu0 %v1206, 32
      %v1319 = vpop.permute.xlu0 %1318
      %1320 = vrot.lane.b32.xlu0 %v1215, 32
      %v1321 = vpop.permute.xlu0 %1320
      %1322 = vrot.lane.b32.xlu0 %v1216, 32
      %v1323 = vpop.permute.xlu0 %1322
      %1324 = vrot.lane.b32.xlu0 %v1223, 32
      %v1325 = vpop.permute.xlu0 %1324
      %1326 = vrot.lane.b32.xlu0 %v1232, 32
      %v1327 = vpop.permute.xlu0 %1326
      %1328 = vrot.lane.b32.xlu0 %v1233, 32
      %v1329 = vpop.permute.xlu0 %1328
      %vm1378 = vcmask 519424
      %vm1379 = vmand %vm1378, %vm285
      %v1380 = vld [vmem:[%s815] sm:$0xf]
      %v1381 = vsel %vm1379, %v1235, %v1380
      %1382 = vst [vmem:[%s815] sm:$0xf] %v1381
      %vm1383 = vcmask 519424
      %1384 = vst.msk [vmem:[%s815 + $0x4] sm:$0xf] %vm1383, %v1237
      %vm1385 = vcmask 516352
      %vm1386 = vmand %vm1385, %vm229
      %v1387 = vld [vmem:[%s815 + $0x8] sm:$0x1]
      %v1388 = vsel %vm1386, %v1239, %v1387
      %1389 = vst [vmem:[%s815 + $0x8] sm:$0x1] %v1388
      %v1390 = vld [vmem:[%s815 + $0xc] sm:$0xf]
      %v1391 = vsel %vm1379, %v1241, %v1390
      %1392 = vst [vmem:[%s815 + $0xc] sm:$0xf] %v1391
      %1393 = vst.msk [vmem:[%s815 + $0x10] sm:$0xf] %vm1383, %v1243
      %v1394 = vld [vmem:[%s815 + $0x14] sm:$0x1]
      %v1395 = vsel %vm1386, %v1245, %v1394
      %1396 = vst [vmem:[%s815 + $0x14] sm:$0x1] %v1395
      %v1397 = vld [vmem:[%s815 + $0x18] sm:$0xf]
      %v1398 = vsel %vm1379, %v1247, %v1397
      %1399 = vst [vmem:[%s815 + $0x18] sm:$0xf] %v1398
      %1400 = vst.msk [vmem:[%s815 + $0x1c] sm:$0xf] %vm1383, %v1249
      %v1401 = vld [vmem:[%s815 + $0x20] sm:$0x1]
      %v1402 = vsel %vm1386, %v1251, %v1401
      %1403 = vst [vmem:[%s815 + $0x20] sm:$0x1] %v1402
      %v1404 = vld [vmem:[%s815 + $0x24] sm:$0xf]
      %v1405 = vsel %vm1379, %v1253, %v1404
      %1406 = vst [vmem:[%s815 + $0x24] sm:$0xf] %v1405
      %1407 = vst.msk [vmem:[%s815 + $0x28] sm:$0xf] %vm1383, %v1255
      %v1408 = vld [vmem:[%s815 + $0x2c] sm:$0x1]
      %v1409 = vsel %vm1386, %v1257, %v1408
      %1410 = vst [vmem:[%s815 + $0x2c] sm:$0x1] %v1409
      %v1411 = vld [vmem:[%s815 + $0x30] sm:$0xf]
      %v1412 = vsel %vm1379, %v1259, %v1411
      %1413 = vst [vmem:[%s815 + $0x30] sm:$0xf] %v1412
      %1414 = vst.msk [vmem:[%s815 + $0x34] sm:$0xf] %vm1383, %v1261
      %v1415 = vld [vmem:[%s815 + $0x38] sm:$0x1]
      %v1416 = vsel %vm1386, %v1263, %v1415
      %1417 = vst [vmem:[%s815 + $0x38] sm:$0x1] %v1416
      %v1418 = vld [vmem:[%s815 + $0x3c] sm:$0xf]
      %v1419 = vsel %vm1379, %v1265, %v1418
      %1420 = vst [vmem:[%s815 + $0x3c] sm:$0xf] %v1419
      %1421 = vst.msk [vmem:[%s815 + $0x40] sm:$0xf] %vm1383, %v1267
      %v1422 = vld [vmem:[%s815 + $0x44] sm:$0x1]
      %v1423 = vsel %vm1386, %v1269, %v1422
      %1424 = vst [vmem:[%s815 + $0x44] sm:$0x1] %v1423
      %v1425 = vld [vmem:[%s815 + $0x48] sm:$0xf]
      %v1426 = vsel %vm1379, %v1271, %v1425
      %1427 = vst [vmem:[%s815 + $0x48] sm:$0xf] %v1426
      %1428 = vst.msk [vmem:[%s815 + $0x4c] sm:$0xf] %vm1383, %v1273
      %v1429 = vld [vmem:[%s815 + $0x50] sm:$0x1]
      %v1430 = vsel %vm1386, %v1275, %v1429
      %1431 = vst [vmem:[%s815 + $0x50] sm:$0x1] %v1430
      %v1432 = vld [vmem:[%s815 + $0x54] sm:$0xf]
      %v1433 = vsel %vm1379, %v1277, %v1432
      %1434 = vst [vmem:[%s815 + $0x54] sm:$0xf] %v1433
      %1435 = vst.msk [vmem:[%s815 + $0x58] sm:$0xf] %vm1383, %v1279
      %v1436 = vld [vmem:[%s815 + $0x5c] sm:$0x1]
      %v1437 = vsel %vm1386, %v1281, %v1436
      %1438 = vst [vmem:[%s815 + $0x5c] sm:$0x1] %v1437
      %v1439 = vld [vmem:[%s815 + $0x60] sm:$0xf]
      %v1440 = vsel %vm1379, %v1283, %v1439
      %1441 = vst [vmem:[%s815 + $0x60] sm:$0xf] %v1440
      %1442 = vst.msk [vmem:[%s815 + $0x64] sm:$0xf] %vm1383, %v1285
      %v1443 = vld [vmem:[%s815 + $0x68] sm:$0x1]
      %v1444 = vsel %vm1386, %v1287, %v1443
      %1445 = vst [vmem:[%s815 + $0x68] sm:$0x1] %v1444
      %v1446 = vld [vmem:[%s815 + $0x6c] sm:$0xf]
      %v1447 = vsel %vm1379, %v1289, %v1446
      %1448 = vst [vmem:[%s815 + $0x6c] sm:$0xf] %v1447
      %1449 = vst.msk [vmem:[%s815 + $0x70] sm:$0xf] %vm1383, %v1291
      %v1450 = vld [vmem:[%s815 + $0x74] sm:$0x1]
      %v1451 = vsel %vm1386, %v1293, %v1450
      %1452 = vst [vmem:[%s815 + $0x74] sm:$0x1] %v1451
      %v1453 = vld [vmem:[%s815 + $0x78] sm:$0xf]
      %v1454 = vsel %vm1379, %v1295, %v1453
      %1455 = vst [vmem:[%s815 + $0x78] sm:$0xf] %v1454
      %1456 = vst.msk [vmem:[%s815 + $0x7c] sm:$0xf] %vm1383, %v1297
      %v1457 = vld [vmem:[%s815 + $0x80] sm:$0x1]
      %v1458 = vsel %vm1386, %v1299, %v1457
      %1459 = vst [vmem:[%s815 + $0x80] sm:$0x1] %v1458
      %v1460 = vld [vmem:[%s815 + $0x84] sm:$0xf]
      %v1461 = vsel %vm1379, %v1301, %v1460
      %1462 = vst [vmem:[%s815 + $0x84] sm:$0xf] %v1461
      %1463 = vst.msk [vmem:[%s815 + $0x88] sm:$0xf] %vm1383, %v1303
      %v1464 = vld [vmem:[%s815 + $0x8c] sm:$0x1]
      %v1465 = vsel %vm1386, %v1305, %v1464
      %1466 = vst [vmem:[%s815 + $0x8c] sm:$0x1] %v1465
      %v1467 = vld [vmem:[%s815 + $0x90] sm:$0xf]
      %v1468 = vsel %vm1379, %v1307, %v1467
      %1469 = vst [vmem:[%s815 + $0x90] sm:$0xf] %v1468
      %1470 = vst.msk [vmem:[%s815 + $0x94] sm:$0xf] %vm1383, %v1309
      %v1471 = vld [vmem:[%s815 + $0x98] sm:$0x1]
      %v1472 = vsel %vm1386, %v1311, %v1471
      %1473 = vst [vmem:[%s815 + $0x98] sm:$0x1] %v1472
      %v1474 = vld [vmem:[%s815 + $0x9c] sm:$0xf]
      %v1475 = vsel %vm1379, %v1313, %v1474
      %1476 = vst [vmem:[%s815 + $0x9c] sm:$0xf] %v1475
      %1477 = vst.msk [vmem:[%s815 + $0xa0] sm:$0xf] %vm1383, %v1315
      %v1478 = vld [vmem:[%s815 + $0xa4] sm:$0x1]
      %v1479 = vsel %vm1386, %v1317, %v1478
      %1480 = vst [vmem:[%s815 + $0xa4] sm:$0x1] %v1479
      %v1481 = vld [vmem:[%s815 + $0xa8] sm:$0xf]
      %v1482 = vsel %vm1379, %v1319, %v1481
      %1483 = vst [vmem:[%s815 + $0xa8] sm:$0xf] %v1482
      %1484 = vst.msk [vmem:[%s815 + $0xac] sm:$0xf] %vm1383, %v1321
      %v1485 = vld [vmem:[%s815 + $0xb0] sm:$0x1]
      %v1486 = vsel %vm1386, %v1323, %v1485
      %1487 = vst [vmem:[%s815 + $0xb0] sm:$0x1] %v1486
      %v1488 = vld [vmem:[%s815 + $0xb4] sm:$0xf]
      %v1489 = vsel %vm1379, %v1325, %v1488
      %1490 = vst [vmem:[%s815 + $0xb4] sm:$0xf] %v1489
      %1491 = vst.msk [vmem:[%s815 + $0xb8] sm:$0xf] %vm1383, %v1327
      %v1492 = vld [vmem:[%s815 + $0xbc] sm:$0x1]
      %v1493 = vsel %vm1386, %v1329, %v1492
      %1494 = vst [vmem:[%s815 + $0xbc] sm:$0x1] %v1493
      %v1495 = vld [vmem:[#allocation2] sm:$0xf]
      %v1496 = vld [vmem:[#allocation2 + $0x4] sm:$0xf]
      %v1497 = vld [vmem:[#allocation2 + $0xc] sm:$0xf]
      %v1498 = vld [vmem:[#allocation2 + $0x10] sm:$0xf]
      %v1499 = vld [vmem:[#allocation2 + $0x18] sm:$0xf]
      %v1500 = vld [vmem:[#allocation2 + $0x1c] sm:$0xf]
      %v1501 = vld [vmem:[#allocation2 + $0x24] sm:$0xf]
      %v1502 = vld [vmem:[#allocation2 + $0x28] sm:$0xf]
      %v1503 = vld [vmem:[#allocation2 + $0x30] sm:$0xf]
      %v1504 = vld [vmem:[#allocation2 + $0x34] sm:$0xf]
      %v1505 = vld [vmem:[#allocation2 + $0x3c] sm:$0xf]
      %v1506 = vld [vmem:[#allocation2 + $0x40] sm:$0xf]
      %v1507 = vld [vmem:[#allocation2 + $0x48] sm:$0xf]
      %v1508 = vld [vmem:[#allocation2 + $0x4c] sm:$0xf]
      %v1509 = vld [vmem:[#allocation2 + $0x54] sm:$0xf]
      %v1510 = vld [vmem:[#allocation2 + $0x58] sm:$0xf]
      %v1511 = vld [vmem:[#allocation2 + $0x60] sm:$0xf]
      %v1512 = vld [vmem:[#allocation2 + $0x64] sm:$0xf]
      %v1513 = vld [vmem:[#allocation2 + $0x6c] sm:$0xf]
      %v1514 = vld [vmem:[#allocation2 + $0x70] sm:$0xf]
      %v1515 = vld [vmem:[#allocation2 + $0x78] sm:$0xf]
      %v1516 = vld [vmem:[#allocation2 + $0x7c] sm:$0xf]
      %v1517 = vld [vmem:[#allocation2 + $0x84] sm:$0xf]
      %v1518 = vld [vmem:[#allocation2 + $0x88] sm:$0xf]
      %v1519 = vld [vmem:[#allocation2 + $0x90] sm:$0xf]
      %v1520 = vld [vmem:[#allocation2 + $0x94] sm:$0xf]
      %v1521 = vld [vmem:[#allocation2 + $0x9c] sm:$0xf]
      %v1522 = vld [vmem:[#allocation2 + $0xa0] sm:$0xf]
      %v1523 = vld [vmem:[#allocation2 + $0xa8] sm:$0xf]
      %v1524 = vld [vmem:[#allocation2 + $0xac] sm:$0xf]
      %v1525 = vld [vmem:[#allocation2 + $0xb4] sm:$0xf]
      %v1526 = vld [vmem:[#allocation2 + $0xb8] sm:$0xf]
      %v1527 = vld [vmem:[%s2] sm:$0xf]
      %v1528 = vld [vmem:[%s2 + $0x4] sm:$0xf]
      %v1529 = vld [vmem:[%s2 + $0x8] sm:$0xf]
      %v1530 = vld [vmem:[%s2 + $0xc] sm:$0xf]
      %v1531 = vld [vmem:[%s2 + $0x10] sm:$0xf]
      %v1532 = vld [vmem:[%s2 + $0x14] sm:$0xf]
      %v1533 = vld [vmem:[%s2 + $0x18] sm:$0xf]
      %v1534 = vld [vmem:[%s2 + $0x1c] sm:$0xf]
      %v1535 = vld [vmem:[#allocation2 + $0x8] sm:$0x1]
      %v1536 = vld [vmem:[#allocation2 + $0x14] sm:$0x1]
      %v1537 = vld [vmem:[#allocation2 + $0x20] sm:$0x1]
      %v1538 = vld [vmem:[#allocation2 + $0x2c] sm:$0x1]
      %v1539 = vld [vmem:[#allocation2 + $0x38] sm:$0x1]
      %v1540 = vld [vmem:[#allocation2 + $0x44] sm:$0x1]
      %v1541 = vld [vmem:[#allocation2 + $0x50] sm:$0x1]
      %v1542 = vld [vmem:[#allocation2 + $0x5c] sm:$0x1]
      %v1543 = vld [vmem:[#allocation2 + $0x68] sm:$0x1]
      %v1544 = vld [vmem:[#allocation2 + $0x74] sm:$0x1]
      %v1545 = vld [vmem:[#allocation2 + $0x80] sm:$0x1]
      %v1546 = vld [vmem:[#allocation2 + $0x8c] sm:$0x1]
      %v1547 = vld [vmem:[#allocation2 + $0x98] sm:$0x1]
      %v1548 = vld [vmem:[#allocation2 + $0xa4] sm:$0x1]
      %v1549 = vld [vmem:[#allocation2 + $0xb0] sm:$0x1]
      %v1550 = vld [vmem:[#allocation2 + $0xbc] sm:$0x1]
      %vm1551 = vsmask.f32 3328
      %vm1552 = vsmask.f32 7440
      %vm1553 = vmor %vm1551, %vm1552
      %v1555 = vshrl.u32 %v1495, 16
      %v1557 = vrot.slane %v1555, 4
      %v1558 = vshll.u32 %v1495, 16
      %v1560 = vrot.slane %v1558, 5
      %v1561 = vor.u32 %v1557, %v1560
      %v1562 = vrot.slane %v1561, 4
      %v1564 = vshll.u32 %v1496, 16
      %v1566 = vrot.slane %v1564, 5
      %v1567 = vsel %vm1553, %v1562, %v1566
      %v1568 = vshrl.u32 %v1496, 16
      %v1570 = vrot.slane %v1568, 4
      %v1571 = vor.u32 %v1570, %v1566
      %v1572 = vrot.slane %v1571, 4
      %v1574 = vshll.u32 %v1535, 16
      %v1576 = vrot.slane %v1574, 5
      %v1577 = vsel %vm1553, %v1572, %v1576
      %v1579 = vshrl.u32 %v1497, 16
      %v1581 = vrot.slane %v1579, 4
      %v1582 = vshll.u32 %v1497, 16
      %v1584 = vrot.slane %v1582, 5
      %v1585 = vor.u32 %v1581, %v1584
      %v1586 = vrot.slane %v1585, 4
      %v1588 = vshll.u32 %v1498, 16
      %v1590 = vrot.slane %v1588, 5
      %v1591 = vsel %vm1553, %v1586, %v1590
      %v1592 = vshrl.u32 %v1498, 16
      %v1594 = vrot.slane %v1592, 4
      %v1595 = vor.u32 %v1594, %v1590
      %v1596 = vrot.slane %v1595, 4
      %v1598 = vshll.u32 %v1536, 16
      %v1600 = vrot.slane %v1598, 5
      %v1601 = vsel %vm1553, %v1596, %v1600
      %v1603 = vshrl.u32 %v1499, 16
      %v1605 = vrot.slane %v1603, 4
      %v1606 = vshll.u32 %v1499, 16
      %v1608 = vrot.slane %v1606, 5
      %v1609 = vor.u32 %v1605, %v1608
      %v1610 = vrot.slane %v1609, 4
      %v1612 = vshll.u32 %v1500, 16
      %v1614 = vrot.slane %v1612, 5
      %v1615 = vsel %vm1553, %v1610, %v1614
      %v1616 = vshrl.u32 %v1500, 16
      %v1618 = vrot.slane %v1616, 4
      %v1619 = vor.u32 %v1618, %v1614
      %v1620 = vrot.slane %v1619, 4
      %v1622 = vshll.u32 %v1537, 16
      %v1624 = vrot.slane %v1622, 5
      %v1625 = vsel %vm1553, %v1620, %v1624
      %v1627 = vshrl.u32 %v1501, 16
      %v1629 = vrot.slane %v1627, 4
      %v1630 = vshll.u32 %v1501, 16
      %v1632 = vrot.slane %v1630, 5
      %v1633 = vor.u32 %v1629, %v1632
      %v1634 = vrot.slane %v1633, 4
      %v1636 = vshll.u32 %v1502, 16
      %v1638 = vrot.slane %v1636, 5
      %v1639 = vsel %vm1553, %v1634, %v1638
      %v1640 = vshrl.u32 %v1502, 16
      %v1642 = vrot.slane %v1640, 4
      %v1643 = vor.u32 %v1642, %v1638
      %v1644 = vrot.slane %v1643, 4
      %v1646 = vshll.u32 %v1538, 16
      %v1648 = vrot.slane %v1646, 5
      %v1649 = vsel %vm1553, %v1644, %v1648
      %v1651 = vshrl.u32 %v1503, 16
      %v1653 = vrot.slane %v1651, 4
      %v1654 = vshll.u32 %v1503, 16
      %v1656 = vrot.slane %v1654, 5
      %v1657 = vor.u32 %v1653, %v1656
      %v1658 = vrot.slane %v1657, 4
      %v1660 = vshll.u32 %v1504, 16
      %v1662 = vrot.slane %v1660, 5
      %v1663 = vsel %vm1553, %v1658, %v1662
      %v1664 = vshrl.u32 %v1504, 16
      %v1666 = vrot.slane %v1664, 4
      %v1667 = vor.u32 %v1666, %v1662
      %v1668 = vrot.slane %v1667, 4
      %v1670 = vshll.u32 %v1539, 16
      %v1672 = vrot.slane %v1670, 5
      %v1673 = vsel %vm1553, %v1668, %v1672
      %v1675 = vshrl.u32 %v1505, 16
      %v1677 = vrot.slane %v1675, 4
      %v1678 = vshll.u32 %v1505, 16
      %v1680 = vrot.slane %v1678, 5
      %v1681 = vor.u32 %v1677, %v1680
      %v1682 = vrot.slane %v1681, 4
      %v1684 = vshll.u32 %v1506, 16
      %v1686 = vrot.slane %v1684, 5
      %v1687 = vsel %vm1553, %v1682, %v1686
      %v1688 = vshrl.u32 %v1506, 16
      %v1690 = vrot.slane %v1688, 4
      %v1691 = vor.u32 %v1690, %v1686
      %v1692 = vrot.slane %v1691, 4
      %v1694 = vshll.u32 %v1540, 16
      %v1696 = vrot.slane %v1694, 5
      %v1697 = vsel %vm1553, %v1692, %v1696
      %v1699 = vshrl.u32 %v1507, 16
      %v1701 = vrot.slane %v1699, 4
      %v1702 = vshll.u32 %v1507, 16
      %v1704 = vrot.slane %v1702, 5
      %v1705 = vor.u32 %v1701, %v1704
      %v1706 = vrot.slane %v1705, 4
      %v1708 = vshll.u32 %v1508, 16
      %v1710 = vrot.slane %v1708, 5
      %v1711 = vsel %vm1553, %v1706, %v1710
      %v1712 = vshrl.u32 %v1508, 16
      %v1714 = vrot.slane %v1712, 4
      %v1715 = vor.u32 %v1714, %v1710
      %v1716 = vrot.slane %v1715, 4
      %v1718 = vshll.u32 %v1541, 16
      %v1720 = vrot.slane %v1718, 5
      %v1721 = vsel %vm1553, %v1716, %v1720
      %v1723 = vshrl.u32 %v1509, 16
      %v1725 = vrot.slane %v1723, 4
      %v1726 = vshll.u32 %v1509, 16
      %v1728 = vrot.slane %v1726, 5
      %v1729 = vor.u32 %v1725, %v1728
      %v1730 = vrot.slane %v1729, 4
      %v1732 = vshll.u32 %v1510, 16
      %v1734 = vrot.slane %v1732, 5
      %v1735 = vsel %vm1553, %v1730, %v1734
      %v1736 = vshrl.u32 %v1510, 16
      %v1738 = vrot.slane %v1736, 4
      %v1739 = vor.u32 %v1738, %v1734
      %v1740 = vrot.slane %v1739, 4
      %v1742 = vshll.u32 %v1542, 16
      %v1744 = vrot.slane %v1742, 5
      %v1745 = vsel %vm1553, %v1740, %v1744
      %v1747 = vshrl.u32 %v1511, 16
      %v1749 = vrot.slane %v1747, 4
      %v1750 = vshll.u32 %v1511, 16
      %v1752 = vrot.slane %v1750, 5
      %v1753 = vor.u32 %v1749, %v1752
      %v1754 = vrot.slane %v1753, 4
      %v1756 = vshll.u32 %v1512, 16
      %v1758 = vrot.slane %v1756, 5
      %v1759 = vsel %vm1553, %v1754, %v1758
      %v1760 = vshrl.u32 %v1512, 16
      %v1762 = vrot.slane %v1760, 4
      %v1763 = vor.u32 %v1762, %v1758
      %v1764 = vrot.slane %v1763, 4
      %v1766 = vshll.u32 %v1543, 16
      %v1768 = vrot.slane %v1766, 5
      %v1769 = vsel %vm1553, %v1764, %v1768
      %v1771 = vshrl.u32 %v1513, 16
      %v1773 = vrot.slane %v1771, 4
      %v1774 = vshll.u32 %v1513, 16
      %v1776 = vrot.slane %v1774, 5
      %v1777 = vor.u32 %v1773, %v1776
      %v1778 = vrot.slane %v1777, 4
      %v1780 = vshll.u32 %v1514, 16
      %v1782 = vrot.slane %v1780, 5
      %v1783 = vsel %vm1553, %v1778, %v1782
      %v1784 = vshrl.u32 %v1514, 16
      %v1786 = vrot.slane %v1784, 4
      %v1787 = vor.u32 %v1786, %v1782
      %v1788 = vrot.slane %v1787, 4
      %v1790 = vshll.u32 %v1544, 16
      %v1792 = vrot.slane %v1790, 5
      %v1793 = vsel %vm1553, %v1788, %v1792
      %v1795 = vshrl.u32 %v1515, 16
      %v1797 = vrot.slane %v1795, 4
      %v1798 = vshll.u32 %v1515, 16
      %v1800 = vrot.slane %v1798, 5
      %v1801 = vor.u32 %v1797, %v1800
      %v1802 = vrot.slane %v1801, 4
      %v1804 = vshll.u32 %v1516, 16
      %v1806 = vrot.slane %v1804, 5
      %v1807 = vsel %vm1553, %v1802, %v1806
      %v1808 = vshrl.u32 %v1516, 16
      %v1810 = vrot.slane %v1808, 4
      %v1811 = vor.u32 %v1810, %v1806
      %v1812 = vrot.slane %v1811, 4
      %v1814 = vshll.u32 %v1545, 16
      %v1816 = vrot.slane %v1814, 5
      %v1817 = vsel %vm1553, %v1812, %v1816
      %v1819 = vshrl.u32 %v1517, 16
      %v1821 = vrot.slane %v1819, 4
      %v1822 = vshll.u32 %v1517, 16
      %v1824 = vrot.slane %v1822, 5
      %v1825 = vor.u32 %v1821, %v1824
      %v1826 = vrot.slane %v1825, 4
      %v1828 = vshll.u32 %v1518, 16
      %v1830 = vrot.slane %v1828, 5
      %v1831 = vsel %vm1553, %v1826, %v1830
      %v1832 = vshrl.u32 %v1518, 16
      %v1834 = vrot.slane %v1832, 4
      %v1835 = vor.u32 %v1834, %v1830
      %v1836 = vrot.slane %v1835, 4
      %v1838 = vshll.u32 %v1546, 16
      %v1840 = vrot.slane %v1838, 5
      %v1841 = vsel %vm1553, %v1836, %v1840
      %v1843 = vshrl.u32 %v1519, 16
      %v1845 = vrot.slane %v1843, 4
      %v1846 = vshll.u32 %v1519, 16
      %v1848 = vrot.slane %v1846, 5
      %v1849 = vor.u32 %v1845, %v1848
      %v1850 = vrot.slane %v1849, 4
      %v1852 = vshll.u32 %v1520, 16
      %v1854 = vrot.slane %v1852, 5
      %v1855 = vsel %vm1553, %v1850, %v1854
      %v1856 = vshrl.u32 %v1520, 16
      %v1858 = vrot.slane %v1856, 4
      %v1859 = vor.u32 %v1858, %v1854
      %v1860 = vrot.slane %v1859, 4
      %v1862 = vshll.u32 %v1547, 16
      %v1864 = vrot.slane %v1862, 5
      %v1865 = vsel %vm1553, %v1860, %v1864
      %v1867 = vshrl.u32 %v1521, 16
      %v1869 = vrot.slane %v1867, 4
      %v1870 = vshll.u32 %v1521, 16
      %v1872 = vrot.slane %v1870, 5
      %v1873 = vor.u32 %v1869, %v1872
      %v1874 = vrot.slane %v1873, 4
      %v1876 = vshll.u32 %v1522, 16
      %v1878 = vrot.slane %v1876, 5
      %v1879 = vsel %vm1553, %v1874, %v1878
      %v1880 = vshrl.u32 %v1522, 16
      %v1882 = vrot.slane %v1880, 4
      %v1883 = vor.u32 %v1882, %v1878
      %v1884 = vrot.slane %v1883, 4
      %v1886 = vshll.u32 %v1548, 16
      %v1888 = vrot.slane %v1886, 5
      %v1889 = vsel %vm1553, %v1884, %v1888
      %v1891 = vshrl.u32 %v1523, 16
      %v1893 = vrot.slane %v1891, 4
      %v1894 = vshll.u32 %v1523, 16
      %v1896 = vrot.slane %v1894, 5
      %v1897 = vor.u32 %v1893, %v1896
      %v1898 = vrot.slane %v1897, 4
      %v1900 = vshll.u32 %v1524, 16
      %v1902 = vrot.slane %v1900, 5
      %v1903 = vsel %vm1553, %v1898, %v1902
      %v1904 = vshrl.u32 %v1524, 16
      %v1906 = vrot.slane %v1904, 4
      %v1907 = vor.u32 %v1906, %v1902
      %v1908 = vrot.slane %v1907, 4
      %v1910 = vshll.u32 %v1549, 16
      %v1912 = vrot.slane %v1910, 5
      %v1913 = vsel %vm1553, %v1908, %v1912
      %v1915 = vshrl.u32 %v1525, 16
      %v1917 = vrot.slane %v1915, 4
      %v1918 = vshll.u32 %v1525, 16
      %v1920 = vrot.slane %v1918, 5
      %v1921 = vor.u32 %v1917, %v1920
      %v1922 = vrot.slane %v1921, 4
      %v1924 = vshll.u32 %v1526, 16
      %v1926 = vrot.slane %v1924, 5
      %v1927 = vsel %vm1553, %v1922, %v1926
      %v1928 = vshrl.u32 %v1526, 16
      %v1930 = vrot.slane %v1928, 4
      %v1931 = vor.u32 %v1930, %v1926
      %v1932 = vrot.slane %v1931, 4
      %v1934 = vshll.u32 %v1550, 16
      %v1936 = vrot.slane %v1934, 5
      %v1937 = vsel %vm1553, %v1932, %v1936
      %s1938 = scalar_lea.vmem %s2, 32
      %v1939 = vld [vmem:[%s1938] sm:$0xf]
      %v1940 = vld [vmem:[%s1938 + $0x4] sm:$0xf]
      %v1941 = vld [vmem:[%s1938 + $0x8] sm:$0xf]
      %v1942 = vld [vmem:[%s1938 + $0xc] sm:$0xf]
      %v1943 = vld [vmem:[%s1938 + $0x10] sm:$0xf]
      %v1944 = vld [vmem:[%s1938 + $0x14] sm:$0xf]
      %v1945 = vld [vmem:[%s1938 + $0x18] sm:$0xf]
      %v1946 = vld [vmem:[%s1938 + $0x1c] sm:$0xf]
      %v1947 = vunpack.c.l.b16 %v1567
      %v1948 = vunpack.c.l.b16 %v1577
      %v1949 = vunpack.c.l.b16 %v1591
      %v1950 = vunpack.c.l.b16 %v1601
      %v1951 = vunpack.c.l.b16 %v1615
      %v1952 = vunpack.c.l.b16 %v1625
      %v1953 = vunpack.c.l.b16 %v1639
      %v1954 = vunpack.c.l.b16 %v1649
      %v1955 = vunpack.c.l.b16 %v1663
      %v1956 = vunpack.c.l.b16 %v1673
      %v1957 = vunpack.c.l.b16 %v1687
      %v1958 = vunpack.c.l.b16 %v1697
      %v1959 = vunpack.c.l.b16 %v1711
      %v1960 = vunpack.c.l.b16 %v1721
      %v1961 = vunpack.c.l.b16 %v1735
      %v1962 = vunpack.c.l.b16 %v1745
      %v1963 = vunpack.c.l.b16 %v1759
      %v1964 = vunpack.c.l.b16 %v1769
      %v1965 = vunpack.c.l.b16 %v1783
      %v1966 = vunpack.c.l.b16 %v1793
      %v1967 = vunpack.c.l.b16 %v1807
      %v1968 = vunpack.c.l.b16 %v1817
      %v1969 = vunpack.c.l.b16 %v1831
      %v1970 = vunpack.c.l.b16 %v1841
      %v1971 = vunpack.c.l.b16 %v1855
      %v1972 = vunpack.c.l.b16 %v1865
      %v1973 = vunpack.c.l.b16 %v1879
      %v1974 = vunpack.c.l.b16 %v1889
      %v1975 = vunpack.c.l.b16 %v1903
      %v1976 = vunpack.c.l.b16 %v1913
      %v1977 = vunpack.c.l.b16 %v1927
      %v1978 = vunpack.c.l.b16 %v1937
      %v1979 = vpack.c.b16 %v1948, %v1947
      %v1980 = vpack.c.b16 %v1950, %v1949
      %v1981 = vpack.c.b16 %v1952, %v1951
      %v1982 = vpack.c.b16 %v1954, %v1953
      %v1983 = vpack.c.b16 %v1956, %v1955
      %v1984 = vpack.c.b16 %v1958, %v1957
      %v1985 = vpack.c.b16 %v1960, %v1959
      %v1986 = vpack.c.b16 %v1962, %v1961
      %v1987 = vpack.c.b16 %v1964, %v1963
      %v1988 = vpack.c.b16 %v1966, %v1965
      %v1989 = vpack.c.b16 %v1968, %v1967
      %v1990 = vpack.c.b16 %v1970, %v1969
      %v1991 = vpack.c.b16 %v1972, %v1971
      %v1992 = vpack.c.b16 %v1974, %v1973
      %v1993 = vpack.c.b16 %v1976, %v1975
      %v1994 = vpack.c.b16 %v1978, %v1977
      %v2003 = vunpack.c.l.b16 %v1939
      %v2004 = vunpack.c.l.b16 %v1940
      %v2005 = vunpack.c.l.b16 %v1941
      %v2006 = vunpack.c.l.b16 %v1942
      %v2007 = vunpack.c.l.b16 %v1943
      %v2008 = vunpack.c.l.b16 %v1944
      %v2009 = vunpack.c.l.b16 %v1945
      %v2010 = vunpack.c.l.b16 %v1946
      %v2011 = vpack.c.b16 %v2004, %v2003
      %v2012 = vpack.c.b16 %v2006, %v2005
      %v2013 = vpack.c.b16 %v2008, %v2007
      %v2014 = vpack.c.b16 %v2010, %v2009
      %vm2019 = vcmask 523264
      %v2021 = vsel %vm2019, %v1979, 0
      %v2024 = vsel %vm2019, %v1980, 0
      %v2027 = vsel %vm2019, %v1981, 0
      %v2030 = vsel %vm2019, %v1982, 0
      %v2033 = vsel %vm2019, %v1983, 0
      %v2036 = vsel %vm2019, %v1984, 0
      %v2039 = vsel %vm2019, %v1985, 0
      %v2042 = vsel %vm2019, %v1986, 0
      %v2045 = vsel %vm2019, %v1987, 0
      %v2048 = vsel %vm2019, %v1988, 0
      %v2051 = vsel %vm2019, %v1989, 0
      %v2054 = vsel %vm2019, %v1990, 0
      %v2057 = vsel %vm2019, %v1991, 0
      %v2060 = vsel %vm2019, %v1992, 0
      %v2063 = vsel %vm2019, %v1993, 0
      %v2066 = vsel %vm2019, %v1994, 0
      %2068 = vmatprep.subr.bf16.mxu0 0
      %2069 = vmatpush1.bf16.msra.mxu0 0
      %2070 = vmatprep.subr.bf16.mxu0 0
      %2071 = vmatpush1.bf16.msra.mxu0 0
      %2072 = vmatprep.subr.bf16.mxu0 0
      %2073 = vmatpush1.bf16.msra.mxu0 0
      %2074 = vmatprep.subr.bf16.mxu0 0
      %2075 = vmatpush1.bf16.msra.mxu0 0
      %2076 = vmatprep.subr.bf16.mxu0 0
      %2077 = vmatpush1.bf16.msra.mxu0 %v2014
      %2078 = vmatprep.subr.bf16.mxu0 0
      %2079 = vmatpush1.bf16.msra.mxu0 %v2013
      %2080 = vmatprep.subr.bf16.mxu0 0
      %2081 = vmatpush1.bf16.msra.mxu0 %v2012
      %2082 = vmatprep.subr.bf16.mxu0 0
      %2083 = vmatpush1.bf16.msra.mxu0 %v2011
      %2084 = vmatprep.subr.bf16.mxu0 0
      %2085 = vmatpush2.bf16.msra.mxu0 0
      %2086 = vmatprep.subr.bf16.mxu0 0
      %2087 = vmatpush2.bf16.msra.mxu0 0
      %2088 = vmatprep.subr.bf16.mxu0 0
      %2089 = vmatpush2.bf16.msra.mxu0 0
      %2090 = vmatprep.subr.bf16.mxu0 0
      %2091 = vmatpush2.bf16.msra.mxu0 0
      %2092 = vmatprep.subr.bf16.mxu0 0
      %2093 = vmatpush2.bf16.msra.mxu0 0
      %2094 = vmatprep.subr.bf16.mxu0 0
      %2095 = vmatpush2.bf16.msra.mxu0 0
      %2096 = vmatprep.subr.bf16.mxu0 0
      %2097 = vmatpush2.bf16.msra.mxu0 0
      %2098 = vmatprep.subr.bf16.mxu0 0
      %2099 = vmatpush2.bf16.msra.mxu0 0
      %2100 = vmatprep.mubr.bf16.mxu0 0
      %2101 = vmatmul.mubr.bf16.gmra.mxu0 %v2021
      %v2102 = vpop.f32.mrf.mxu0
      %v2103 = vadd.f32 0.0, %v2102
      %v2104 = vpop.f32.mrf.mxu0
      %v2105 = vpop.f32.mrf.mxu0
      %v2106 = vadd.f32 0.0, %v2105
      %v2107 = vpop.f32.mrf.mxu0
      %2108 = vmatprep.mubr.bf16.mxu0 0
      %2109 = vmatmul.mubr.bf16.gmra.mxu0 %v2024
      %v2110 = vpop.f32.mrf.mxu0
      %v2111 = vadd.f32 0.0, %v2110
      %v2112 = vpop.f32.mrf.mxu0
      %v2113 = vpop.f32.mrf.mxu0
      %v2114 = vadd.f32 0.0, %v2113
      %v2115 = vpop.f32.mrf.mxu0
      %2116 = vmatprep.mubr.bf16.mxu0 0
      %2117 = vmatmul.mubr.bf16.gmra.mxu0 %v2027
      %v2118 = vpop.f32.mrf.mxu0
      %v2119 = vadd.f32 0.0, %v2118
      %v2120 = vpop.f32.mrf.mxu0
      %v2121 = vpop.f32.mrf.mxu0
      %v2122 = vadd.f32 0.0, %v2121
      %v2123 = vpop.f32.mrf.mxu0
      %2124 = vmatprep.mubr.bf16.mxu0 0
      %2125 = vmatmul.mubr.bf16.gmra.mxu0 %v2030
      %v2126 = vpop.f32.mrf.mxu0
      %v2127 = vadd.f32 0.0, %v2126
      %v2128 = vpop.f32.mrf.mxu0
      %v2129 = vpop.f32.mrf.mxu0
      %v2130 = vadd.f32 0.0, %v2129
      %v2131 = vpop.f32.mrf.mxu0
      %2132 = vmatprep.mubr.bf16.mxu0 0
      %2133 = vmatmul.mubr.bf16.gmra.mxu0 %v2033
      %v2134 = vpop.f32.mrf.mxu0
      %v2135 = vadd.f32 0.0, %v2134
      %v2136 = vpop.f32.mrf.mxu0
      %v2137 = vpop.f32.mrf.mxu0
      %v2138 = vadd.f32 0.0, %v2137
      %v2139 = vpop.f32.mrf.mxu0
      %2140 = vmatprep.mubr.bf16.mxu0 0
      %2141 = vmatmul.mubr.bf16.gmra.mxu0 %v2036
      %v2142 = vpop.f32.mrf.mxu0
      %v2143 = vadd.f32 0.0, %v2142
      %v2144 = vpop.f32.mrf.mxu0
      %v2145 = vpop.f32.mrf.mxu0
      %v2146 = vadd.f32 0.0, %v2145
      %v2147 = vpop.f32.mrf.mxu0
      %2148 = vmatprep.mubr.bf16.mxu0 0
      %2149 = vmatmul.mubr.bf16.gmra.mxu0 %v2039
      %v2150 = vpop.f32.mrf.mxu0
      %v2151 = vadd.f32 0.0, %v2150
      %v2152 = vpop.f32.mrf.mxu0
      %v2153 = vpop.f32.mrf.mxu0
      %v2154 = vadd.f32 0.0, %v2153
      %v2155 = vpop.f32.mrf.mxu0
      %2156 = vmatprep.mubr.bf16.mxu0 0
      %2157 = vmatmul.mubr.bf16.gmra.mxu0 %v2042
      %v2158 = vpop.f32.mrf.mxu0
      %v2159 = vadd.f32 0.0, %v2158
      %v2160 = vpop.f32.mrf.mxu0
      %v2161 = vpop.f32.mrf.mxu0
      %v2162 = vadd.f32 0.0, %v2161
      %v2163 = vpop.f32.mrf.mxu0
      %2164 = vmatprep.mubr.bf16.mxu0 0
      %2165 = vmatmul.mubr.bf16.gmra.mxu0 %v2045
      %v2166 = vpop.f32.mrf.mxu0
      %v2167 = vadd.f32 0.0, %v2166
      %v2168 = vpop.f32.mrf.mxu0
      %v2169 = vpop.f32.mrf.mxu0
      %v2170 = vadd.f32 0.0, %v2169
      %v2171 = vpop.f32.mrf.mxu0
      %2172 = vmatprep.mubr.bf16.mxu0 0
      %2173 = vmatmul.mubr.bf16.gmra.mxu0 %v2048
      %v2174 = vpop.f32.mrf.mxu0
      %v2175 = vadd.f32 0.0, %v2174
      %v2176 = vpop.f32.mrf.mxu0
      %v2177 = vpop.f32.mrf.mxu0
      %v2178 = vadd.f32 0.0, %v2177
      %v2179 = vpop.f32.mrf.mxu0
      %2180 = vmatprep.mubr.bf16.mxu0 0
      %2181 = vmatmul.mubr.bf16.gmra.mxu0 %v2051
      %v2182 = vpop.f32.mrf.mxu0
      %v2183 = vadd.f32 0.0, %v2182
      %v2184 = vpop.f32.mrf.mxu0
      %v2185 = vpop.f32.mrf.mxu0
      %v2186 = vadd.f32 0.0, %v2185
      %v2187 = vpop.f32.mrf.mxu0
      %2188 = vmatprep.mubr.bf16.mxu0 0
      %2189 = vmatmul.mubr.bf16.gmra.mxu0 %v2054
      %v2190 = vpop.f32.mrf.mxu0
      %v2191 = vadd.f32 0.0, %v2190
      %v2192 = vpop.f32.mrf.mxu0
      %v2193 = vpop.f32.mrf.mxu0
      %v2194 = vadd.f32 0.0, %v2193
      %v2195 = vpop.f32.mrf.mxu0
      %2196 = vmatprep.mubr.bf16.mxu0 0
      %2197 = vmatmul.mubr.bf16.gmra.mxu0 %v2057
      %v2198 = vpop.f32.mrf.mxu0
      %v2199 = vadd.f32 0.0, %v2198
      %v2200 = vpop.f32.mrf.mxu0
      %v2201 = vpop.f32.mrf.mxu0
      %v2202 = vadd.f32 0.0, %v2201
      %v2203 = vpop.f32.mrf.mxu0
      %2204 = vmatprep.mubr.bf16.mxu0 0
      %2205 = vmatmul.mubr.bf16.gmra.mxu0 %v2060
      %v2206 = vpop.f32.mrf.mxu0
      %v2207 = vadd.f32 0.0, %v2206
      %v2208 = vpop.f32.mrf.mxu0
      %v2209 = vpop.f32.mrf.mxu0
      %v2210 = vadd.f32 0.0, %v2209
      %v2211 = vpop.f32.mrf.mxu0
      %2212 = vmatprep.mubr.bf16.mxu0 0
      %2213 = vmatmul.mubr.bf16.gmra.mxu0 %v2063
      %v2214 = vpop.f32.mrf.mxu0
      %v2215 = vadd.f32 0.0, %v2214
      %v2216 = vpop.f32.mrf.mxu0
      %v2217 = vpop.f32.mrf.mxu0
      %v2218 = vadd.f32 0.0, %v2217
      %v2219 = vpop.f32.mrf.mxu0
      %2220 = vmatprep.mubr.bf16.mxu0 0
      %2221 = vmatmul.mubr.bf16.gmra.mxu0 %v2066
      %v2222 = vpop.f32.mrf.mxu0
      %v2223 = vadd.f32 0.0, %v2222
      %v2224 = vpop.f32.mrf.mxu0
      %v2225 = vpop.f32.mrf.mxu0
      %v2226 = vadd.f32 0.0, %v2225
      %v2227 = vpop.f32.mrf.mxu0
      %2228 = vdwg.mxu0
      %v2261 = vunpack.c.l.b16 %v1495
      %v2262 = vunpack.c.l.b16 %v1496
      %v2263 = vunpack.c.l.b16 %v1497
      %v2264 = vunpack.c.l.b16 %v1498
      %v2265 = vunpack.c.l.b16 %v1499
      %v2266 = vunpack.c.l.b16 %v1500
      %v2267 = vunpack.c.l.b16 %v1501
      %v2268 = vunpack.c.l.b16 %v1502
      %v2269 = vunpack.c.l.b16 %v1503
      %v2270 = vunpack.c.l.b16 %v1504
      %v2271 = vunpack.c.l.b16 %v1505
      %v2272 = vunpack.c.l.b16 %v1506
      %v2273 = vunpack.c.l.b16 %v1507
      %v2274 = vunpack.c.l.b16 %v1508
      %v2275 = vunpack.c.l.b16 %v1509
      %v2276 = vunpack.c.l.b16 %v1510
      %v2277 = vunpack.c.l.b16 %v1511
      %v2278 = vunpack.c.l.b16 %v1512
      %v2279 = vunpack.c.l.b16 %v1513
      %v2280 = vunpack.c.l.b16 %v1514
      %v2281 = vunpack.c.l.b16 %v1515
      %v2282 = vunpack.c.l.b16 %v1516
      %v2283 = vunpack.c.l.b16 %v1517
      %v2284 = vunpack.c.l.b16 %v1518
      %v2285 = vunpack.c.l.b16 %v1519
      %v2286 = vunpack.c.l.b16 %v1520
      %v2287 = vunpack.c.l.b16 %v1521
      %v2288 = vunpack.c.l.b16 %v1522
      %v2289 = vunpack.c.l.b16 %v1523
      %v2290 = vunpack.c.l.b16 %v1524
      %v2291 = vunpack.c.l.b16 %v1525
      %v2292 = vunpack.c.l.b16 %v1526
      %v2293 = vpack.c.b16 %v2262, %v2261
      %v2294 = vpack.c.b16 %v2264, %v2263
      %v2295 = vpack.c.b16 %v2266, %v2265
      %v2296 = vpack.c.b16 %v2268, %v2267
      %v2297 = vpack.c.b16 %v2270, %v2269
      %v2298 = vpack.c.b16 %v2272, %v2271
      %v2299 = vpack.c.b16 %v2274, %v2273
      %v2300 = vpack.c.b16 %v2276, %v2275
      %v2301 = vpack.c.b16 %v2278, %v2277
      %v2302 = vpack.c.b16 %v2280, %v2279
      %v2303 = vpack.c.b16 %v2282, %v2281
      %v2304 = vpack.c.b16 %v2284, %v2283
      %v2305 = vpack.c.b16 %v2286, %v2285
      %v2306 = vpack.c.b16 %v2288, %v2287
      %v2307 = vpack.c.b16 %v2290, %v2289
      %v2308 = vpack.c.b16 %v2292, %v2291
      %v2317 = vunpack.c.l.b16 %v1527
      %v2318 = vunpack.c.l.b16 %v1528
      %v2319 = vunpack.c.l.b16 %v1529
      %v2320 = vunpack.c.l.b16 %v1530
      %v2321 = vunpack.c.l.b16 %v1531
      %v2322 = vunpack.c.l.b16 %v1532
      %v2323 = vunpack.c.l.b16 %v1533
      %v2324 = vunpack.c.l.b16 %v1534
      %v2325 = vpack.c.b16 %v2318, %v2317
      %v2326 = vpack.c.b16 %v2320, %v2319
      %v2327 = vpack.c.b16 %v2322, %v2321
      %v2328 = vpack.c.b16 %v2324, %v2323
      %v2334 = vsel %vm2019, %v2293, 0
      %v2337 = vsel %vm2019, %v2294, 0
      %v2340 = vsel %vm2019, %v2295, 0
      %v2343 = vsel %vm2019, %v2296, 0
      %v2346 = vsel %vm2019, %v2297, 0
      %v2349 = vsel %vm2019, %v2298, 0
      %v2352 = vsel %vm2019, %v2299, 0
      %v2355 = vsel %vm2019, %v2300, 0
      %v2358 = vsel %vm2019, %v2301, 0
      %v2361 = vsel %vm2019, %v2302, 0
      %v2364 = vsel %vm2019, %v2303, 0
      %v2367 = vsel %vm2019, %v2304, 0
      %v2370 = vsel %vm2019, %v2305, 0
      %v2373 = vsel %vm2019, %v2306, 0
      %v2376 = vsel %vm2019, %v2307, 0
      %v2379 = vsel %vm2019, %v2308, 0
      %2381 = vmatprep.subr.bf16.mxu0 0
      %2382 = vmatpush1.bf16.msra.mxu0 0
      %2383 = vmatprep.subr.bf16.mxu0 0
      %2384 = vmatpush1.bf16.msra.mxu0 0
      %2385 = vmatprep.subr.bf16.mxu0 0
      %2386 = vmatpush1.bf16.msra.mxu0 0
      %2387 = vmatprep.subr.bf16.mxu0 0
      %2388 = vmatpush1.bf16.msra.mxu0 0
      %2389 = vmatprep.subr.bf16.mxu0 0
      %2390 = vmatpush1.bf16.msra.mxu0 %v2328
      %2391 = vmatprep.subr.bf16.mxu0 0
      %2392 = vmatpush1.bf16.msra.mxu0 %v2327
      %2393 = vmatprep.subr.bf16.mxu0 0
      %2394 = vmatpush1.bf16.msra.mxu0 %v2326
      %2395 = vmatprep.subr.bf16.mxu0 0
      %2396 = vmatpush1.bf16.msra.mxu0 %v2325
      %2397 = vmatprep.subr.bf16.mxu0 0
      %2398 = vmatpush2.bf16.msra.mxu0 0
      %2399 = vmatprep.subr.bf16.mxu0 0
      %2400 = vmatpush2.bf16.msra.mxu0 0
      %2401 = vmatprep.subr.bf16.mxu0 0
      %2402 = vmatpush2.bf16.msra.mxu0 0
      %2403 = vmatprep.subr.bf16.mxu0 0
      %2404 = vmatpush2.bf16.msra.mxu0 0
      %2405 = vmatprep.subr.bf16.mxu0 0
      %2406 = vmatpush2.bf16.msra.mxu0 0
      %2407 = vmatprep.subr.bf16.mxu0 0
      %2408 = vmatpush2.bf16.msra.mxu0 0
      %2409 = vmatprep.subr.bf16.mxu0 0
      %2410 = vmatpush2.bf16.msra.mxu0 0
      %2411 = vmatprep.subr.bf16.mxu0 0
      %2412 = vmatpush2.bf16.msra.mxu0 0
      %2413 = vmatprep.mubr.bf16.mxu0 0
      %2414 = vmatmul.mubr.bf16.gmra.mxu0 %v2334
      %v2415 = vpop.f32.mrf.mxu0
      %v2416 = vadd.f32 %v2103, %v2415
      %v2417 = vpop.f32.mrf.mxu0
      %v2418 = vpop.f32.mrf.mxu0
      %v2419 = vadd.f32 %v2106, %v2418
      %v2420 = vpop.f32.mrf.mxu0
      %2421 = vmatprep.mubr.bf16.mxu0 0
      %2422 = vmatmul.mubr.bf16.gmra.mxu0 %v2337
      %v2423 = vpop.f32.mrf.mxu0
      %v2424 = vadd.f32 %v2111, %v2423
      %v2425 = vpop.f32.mrf.mxu0
      %v2426 = vpop.f32.mrf.mxu0
      %v2427 = vadd.f32 %v2114, %v2426
      %v2428 = vpop.f32.mrf.mxu0
      %2429 = vmatprep.mubr.bf16.mxu0 0
      %2430 = vmatmul.mubr.bf16.gmra.mxu0 %v2340
      %v2431 = vpop.f32.mrf.mxu0
      %v2432 = vadd.f32 %v2119, %v2431
      %v2433 = vpop.f32.mrf.mxu0
      %v2434 = vpop.f32.mrf.mxu0
      %v2435 = vadd.f32 %v2122, %v2434
      %v2436 = vpop.f32.mrf.mxu0
      %2437 = vmatprep.mubr.bf16.mxu0 0
      %2438 = vmatmul.mubr.bf16.gmra.mxu0 %v2343
      %v2439 = vpop.f32.mrf.mxu0
      %v2440 = vadd.f32 %v2127, %v2439
      %v2441 = vpop.f32.mrf.mxu0
      %v2442 = vpop.f32.mrf.mxu0
      %v2443 = vadd.f32 %v2130, %v2442
      %v2444 = vpop.f32.mrf.mxu0
      %2445 = vmatprep.mubr.bf16.mxu0 0
      %2446 = vmatmul.mubr.bf16.gmra.mxu0 %v2346
      %v2447 = vpop.f32.mrf.mxu0
      %v2448 = vadd.f32 %v2135, %v2447
      %v2449 = vpop.f32.mrf.mxu0
      %v2450 = vpop.f32.mrf.mxu0
      %v2451 = vadd.f32 %v2138, %v2450
      %v2452 = vpop.f32.mrf.mxu0
      %2453 = vmatprep.mubr.bf16.mxu0 0
      %2454 = vmatmul.mubr.bf16.gmra.mxu0 %v2349
      %v2455 = vpop.f32.mrf.mxu0
      %v2456 = vadd.f32 %v2143, %v2455
      %v2457 = vpop.f32.mrf.mxu0
      %v2458 = vpop.f32.mrf.mxu0
      %v2459 = vadd.f32 %v2146, %v2458
      %v2460 = vpop.f32.mrf.mxu0
      %2461 = vmatprep.mubr.bf16.mxu0 0
      %2462 = vmatmul.mubr.bf16.gmra.mxu0 %v2352
      %v2463 = vpop.f32.mrf.mxu0
      %v2464 = vadd.f32 %v2151, %v2463
      %v2465 = vpop.f32.mrf.mxu0
      %v2466 = vpop.f32.mrf.mxu0
      %v2467 = vadd.f32 %v2154, %v2466
      %v2468 = vpop.f32.mrf.mxu0
      %2469 = vmatprep.mubr.bf16.mxu0 0
      %2470 = vmatmul.mubr.bf16.gmra.mxu0 %v2355
      %v2471 = vpop.f32.mrf.mxu0
      %v2472 = vadd.f32 %v2159, %v2471
      %v2473 = vpop.f32.mrf.mxu0
      %v2474 = vpop.f32.mrf.mxu0
      %v2475 = vadd.f32 %v2162, %v2474
      %v2476 = vpop.f32.mrf.mxu0
      %2477 = vmatprep.mubr.bf16.mxu0 0
      %2478 = vmatmul.mubr.bf16.gmra.mxu0 %v2358
      %v2479 = vpop.f32.mrf.mxu0
      %v2480 = vadd.f32 %v2167, %v2479
      %v2481 = vpop.f32.mrf.mxu0
      %v2482 = vpop.f32.mrf.mxu0
      %v2483 = vadd.f32 %v2170, %v2482
      %v2484 = vpop.f32.mrf.mxu0
      %2485 = vmatprep.mubr.bf16.mxu0 0
      %2486 = vmatmul.mubr.bf16.gmra.mxu0 %v2361
      %v2487 = vpop.f32.mrf.mxu0
      %v2488 = vadd.f32 %v2175, %v2487
      %v2489 = vpop.f32.mrf.mxu0
      %v2490 = vpop.f32.mrf.mxu0
      %v2491 = vadd.f32 %v2178, %v2490
      %v2492 = vpop.f32.mrf.mxu0
      %2493 = vmatprep.mubr.bf16.mxu0 0
      %2494 = vmatmul.mubr.bf16.gmra.mxu0 %v2364
      %v2495 = vpop.f32.mrf.mxu0
      %v2496 = vadd.f32 %v2183, %v2495
      %v2497 = vpop.f32.mrf.mxu0
      %v2498 = vpop.f32.mrf.mxu0
      %v2499 = vadd.f32 %v2186, %v2498
      %v2500 = vpop.f32.mrf.mxu0
      %2501 = vmatprep.mubr.bf16.mxu0 0
      %2502 = vmatmul.mubr.bf16.gmra.mxu0 %v2367
      %v2503 = vpop.f32.mrf.mxu0
      %v2504 = vadd.f32 %v2191, %v2503
      %v2505 = vpop.f32.mrf.mxu0
      %v2506 = vpop.f32.mrf.mxu0
      %v2507 = vadd.f32 %v2194, %v2506
      %v2508 = vpop.f32.mrf.mxu0
      %2509 = vmatprep.mubr.bf16.mxu0 0
      %2510 = vmatmul.mubr.bf16.gmra.mxu0 %v2370
      %v2511 = vpop.f32.mrf.mxu0
      %v2512 = vadd.f32 %v2199, %v2511
      %v2513 = vpop.f32.mrf.mxu0
      %v2514 = vpop.f32.mrf.mxu0
      %v2515 = vadd.f32 %v2202, %v2514
      %v2516 = vpop.f32.mrf.mxu0
      %2517 = vmatprep.mubr.bf16.mxu0 0
      %2518 = vmatmul.mubr.bf16.gmra.mxu0 %v2373
      %v2519 = vpop.f32.mrf.mxu0
      %v2520 = vadd.f32 %v2207, %v2519
      %v2521 = vpop.f32.mrf.mxu0
      %v2522 = vpop.f32.mrf.mxu0
      %v2523 = vadd.f32 %v2210, %v2522
      %v2524 = vpop.f32.mrf.mxu0
      %2525 = vmatprep.mubr.bf16.mxu0 0
      %2526 = vmatmul.mubr.bf16.gmra.mxu0 %v2376
      %v2527 = vpop.f32.mrf.mxu0
      %v2528 = vadd.f32 %v2215, %v2527
      %v2529 = vpop.f32.mrf.mxu0
      %v2530 = vpop.f32.mrf.mxu0
      %v2531 = vadd.f32 %v2218, %v2530
      %v2532 = vpop.f32.mrf.mxu0
      %2533 = vmatprep.mubr.bf16.mxu0 0
      %2534 = vmatmul.mubr.bf16.gmra.mxu0 %v2379
      %v2535 = vpop.f32.mrf.mxu0
      %v2536 = vadd.f32 %v2223, %v2535
      %v2537 = vpop.f32.mrf.mxu0
      %v2538 = vpop.f32.mrf.mxu0
      %v2539 = vadd.f32 %v2226, %v2538
      %v2540 = vpop.f32.mrf.mxu0
      %2541 = vdwg.mxu0
      %v2542 = vld [vmem:[#allocation2] sm:$0xe]
      %v2543 = vld [vmem:[#allocation2 + $0xc] sm:$0xe]
      %v2544 = vld [vmem:[#allocation2 + $0x18] sm:$0xe]
      %v2545 = vld [vmem:[#allocation2 + $0x24] sm:$0xe]
      %v2546 = vld [vmem:[#allocation2 + $0x30] sm:$0xe]
      %v2547 = vld [vmem:[#allocation2 + $0x3c] sm:$0xe]
      %v2548 = vld [vmem:[#allocation2 + $0x48] sm:$0xe]
      %v2549 = vld [vmem:[#allocation2 + $0x54] sm:$0xe]
      %v2550 = vld [vmem:[#allocation2 + $0x60] sm:$0xe]
      %v2551 = vld [vmem:[#allocation2 + $0x6c] sm:$0xe]
      %v2552 = vld [vmem:[#allocation2 + $0x78] sm:$0xe]
      %v2553 = vld [vmem:[#allocation2 + $0x84] sm:$0xe]
      %v2554 = vld [vmem:[#allocation2 + $0x90] sm:$0xe]
      %v2555 = vld [vmem:[#allocation2 + $0x9c] sm:$0xe]
      %v2556 = vld [vmem:[#allocation2 + $0xa8] sm:$0xe]
      %v2557 = vld [vmem:[#allocation2 + $0xb4] sm:$0xe]
      %vm2590 = vcmask 1042432
      %vm2591 = vcmask 1046532
      %vm2592 = vmor %vm2590, %vm2591
      %v2593 = vrot.slane %v2542, 5
      %v2594 = vrot.slane %v2593, 4
      %v2595 = vrot.slane %v1496, 5
      %v2596 = vsel %vm2592, %v2594, %v2595
      %v2597 = vrot.slane %v2595, 4
      %v2598 = vrot.slane %v1535, 5
      %v2599 = vsel %vm2592, %v2597, %v2598
      %v2600 = vrot.slane %v2543, 5
      %v2601 = vrot.slane %v2600, 4
      %v2602 = vrot.slane %v1498, 5
      %v2603 = vsel %vm2592, %v2601, %v2602
      %v2604 = vrot.slane %v2602, 4
      %v2605 = vrot.slane %v1536, 5
      %v2606 = vsel %vm2592, %v2604, %v2605
      %v2607 = vrot.slane %v2544, 5
      %v2608 = vrot.slane %v2607, 4
      %v2609 = vrot.slane %v1500, 5
      %v2610 = vsel %vm2592, %v2608, %v2609
      %v2611 = vrot.slane %v2609, 4
      %v2612 = vrot.slane %v1537, 5
      %v2613 = vsel %vm2592, %v2611, %v2612
      %v2614 = vrot.slane %v2545, 5
      %v2615 = vrot.slane %v2614, 4
      %v2616 = vrot.slane %v1502, 5
      %v2617 = vsel %vm2592, %v2615, %v2616
      %v2618 = vrot.slane %v2616, 4
      %v2619 = vrot.slane %v1538, 5
      %v2620 = vsel %vm2592, %v2618, %v2619
      %v2621 = vrot.slane %v2546, 5
      %v2622 = vrot.slane %v2621, 4
      %v2623 = vrot.slane %v1504, 5
      %v2624 = vsel %vm2592, %v2622, %v2623
      %v2625 = vrot.slane %v2623, 4
      %v2626 = vrot.slane %v1539, 5
      %v2627 = vsel %vm2592, %v2625, %v2626
      %v2628 = vrot.slane %v2547, 5
      %v2629 = vrot.slane %v2628, 4
      %v2630 = vrot.slane %v1506, 5
      %v2631 = vsel %vm2592, %v2629, %v2630
      %v2632 = vrot.slane %v2630, 4
      %v2633 = vrot.slane %v1540, 5
      %v2634 = vsel %vm2592, %v2632, %v2633
      %v2635 = vrot.slane %v2548, 5
      %v2636 = vrot.slane %v2635, 4
      %v2637 = vrot.slane %v1508, 5
      %v2638 = vsel %vm2592, %v2636, %v2637
      %v2639 = vrot.slane %v2637, 4
      %v2640 = vrot.slane %v1541, 5
      %v2641 = vsel %vm2592, %v2639, %v2640
      %v2642 = vrot.slane %v2549, 5
      %v2643 = vrot.slane %v2642, 4
      %v2644 = vrot.slane %v1510, 5
      %v2645 = vsel %vm2592, %v2643, %v2644
      %v2646 = vrot.slane %v2644, 4
      %v2647 = vrot.slane %v1542, 5
      %v2648 = vsel %vm2592, %v2646, %v2647
      %v2649 = vrot.slane %v2550, 5
      %v2650 = vrot.slane %v2649, 4
      %v2651 = vrot.slane %v1512, 5
      %v2652 = vsel %vm2592, %v2650, %v2651
      %v2653 = vrot.slane %v2651, 4
      %v2654 = vrot.slane %v1543, 5
      %v2655 = vsel %vm2592, %v2653, %v2654
      %v2656 = vrot.slane %v2551, 5
      %v2657 = vrot.slane %v2656, 4
      %v2658 = vrot.slane %v1514, 5
      %v2659 = vsel %vm2592, %v2657, %v2658
      %v2660 = vrot.slane %v2658, 4
      %v2661 = vrot.slane %v1544, 5
      %v2662 = vsel %vm2592, %v2660, %v2661
      %v2663 = vrot.slane %v2552, 5
      %v2664 = vrot.slane %v2663, 4
      %v2665 = vrot.slane %v1516, 5
      %v2666 = vsel %vm2592, %v2664, %v2665
      %v2667 = vrot.slane %v2665, 4
      %v2668 = vrot.slane %v1545, 5
      %v2669 = vsel %vm2592, %v2667, %v2668
      %v2670 = vrot.slane %v2553, 5
      %v2671 = vrot.slane %v2670, 4
      %v2672 = vrot.slane %v1518, 5
      %v2673 = vsel %vm2592, %v2671, %v2672
      %v2674 = vrot.slane %v2672, 4
      %v2675 = vrot.slane %v1546, 5
      %v2676 = vsel %vm2592, %v2674, %v2675
      %v2677 = vrot.slane %v2554, 5
      %v2678 = vrot.slane %v2677, 4
      %v2679 = vrot.slane %v1520, 5
      %v2680 = vsel %vm2592, %v2678, %v2679
      %v2681 = vrot.slane %v2679, 4
      %v2682 = vrot.slane %v1547, 5
      %v2683 = vsel %vm2592, %v2681, %v2682
      %v2684 = vrot.slane %v2555, 5
      %v2685 = vrot.slane %v2684, 4
      %v2686 = vrot.slane %v1522, 5
      %v2687 = vsel %vm2592, %v2685, %v2686
      %v2688 = vrot.slane %v2686, 4
      %v2689 = vrot.slane %v1548, 5
      %v2690 = vsel %vm2592, %v2688, %v2689
      %v2691 = vrot.slane %v2556, 5
      %v2692 = vrot.slane %v2691, 4
      %v2693 = vrot.slane %v1524, 5
      %v2694 = vsel %vm2592, %v2692, %v2693
      %v2695 = vrot.slane %v2693, 4
      %v2696 = vrot.slane %v1549, 5
      %v2697 = vsel %vm2592, %v2695, %v2696
      %v2698 = vrot.slane %v2557, 5
      %v2699 = vrot.slane %v2698, 4
      %v2700 = vrot.slane %v1526, 5
      %v2701 = vsel %vm2592, %v2699, %v2700
      %v2702 = vrot.slane %v2700, 4
      %v2703 = vrot.slane %v1550, 5
      %v2704 = vsel %vm2592, %v2702, %v2703
      %s2705 = scalar_lea.vmem %s2, 64
      %v2706 = vld [vmem:[%s2705] sm:$0xf]
      %v2707 = vld [vmem:[%s2705 + $0x4] sm:$0xf]
      %v2708 = vld [vmem:[%s2705 + $0x8] sm:$0xf]
      %v2709 = vld [vmem:[%s2705 + $0xc] sm:$0xf]
      %v2710 = vld [vmem:[%s2705 + $0x10] sm:$0xf]
      %v2711 = vld [vmem:[%s2705 + $0x14] sm:$0xf]
      %v2712 = vld [vmem:[%s2705 + $0x18] sm:$0xf]
      %v2713 = vld [vmem:[%s2705 + $0x1c] sm:$0xf]
      %v2714 = vunpack.c.l.b16 %v2596
      %v2715 = vunpack.c.l.b16 %v2599
      %v2716 = vunpack.c.l.b16 %v2603
      %v2717 = vunpack.c.l.b16 %v2606
      %v2718 = vunpack.c.l.b16 %v2610
      %v2719 = vunpack.c.l.b16 %v2613
      %v2720 = vunpack.c.l.b16 %v2617
      %v2721 = vunpack.c.l.b16 %v2620
      %v2722 = vunpack.c.l.b16 %v2624
      %v2723 = vunpack.c.l.b16 %v2627
      %v2724 = vunpack.c.l.b16 %v2631
      %v2725 = vunpack.c.l.b16 %v2634
      %v2726 = vunpack.c.l.b16 %v2638
      %v2727 = vunpack.c.l.b16 %v2641
      %v2728 = vunpack.c.l.b16 %v2645
      %v2729 = vunpack.c.l.b16 %v2648
      %v2730 = vunpack.c.l.b16 %v2652
      %v2731 = vunpack.c.l.b16 %v2655
      %v2732 = vunpack.c.l.b16 %v2659
      %v2733 = vunpack.c.l.b16 %v2662
      %v2734 = vunpack.c.l.b16 %v2666
      %v2735 = vunpack.c.l.b16 %v2669
      %v2736 = vunpack.c.l.b16 %v2673
      %v2737 = vunpack.c.l.b16 %v2676
      %v2738 = vunpack.c.l.b16 %v2680
      %v2739 = vunpack.c.l.b16 %v2683
      %v2740 = vunpack.c.l.b16 %v2687
      %v2741 = vunpack.c.l.b16 %v2690
      %v2742 = vunpack.c.l.b16 %v2694
      %v2743 = vunpack.c.l.b16 %v2697
      %v2744 = vunpack.c.l.b16 %v2701
      %v2745 = vunpack.c.l.b16 %v2704
      %v2746 = vpack.c.b16 %v2715, %v2714
      %v2747 = vpack.c.b16 %v2717, %v2716
      %v2748 = vpack.c.b16 %v2719, %v2718
      %v2749 = vpack.c.b16 %v2721, %v2720
      %v2750 = vpack.c.b16 %v2723, %v2722
      %v2751 = vpack.c.b16 %v2725, %v2724
      %v2752 = vpack.c.b16 %v2727, %v2726
      %v2753 = vpack.c.b16 %v2729, %v2728
      %v2754 = vpack.c.b16 %v2731, %v2730
      %v2755 = vpack.c.b16 %v2733, %v2732
      %v2756 = vpack.c.b16 %v2735, %v2734
      %v2757 = vpack.c.b16 %v2737, %v2736
      %v2758 = vpack.c.b16 %v2739, %v2738
      %v2759 = vpack.c.b16 %v2741, %v2740
      %v2760 = vpack.c.b16 %v2743, %v2742
      %v2761 = vpack.c.b16 %v2745, %v2744
      %v2770 = vunpack.c.l.b16 %v2706
      %v2771 = vunpack.c.l.b16 %v2707
      %v2772 = vunpack.c.l.b16 %v2708
      %v2773 = vunpack.c.l.b16 %v2709
      %v2774 = vunpack.c.l.b16 %v2710
      %v2775 = vunpack.c.l.b16 %v2711
      %v2776 = vunpack.c.l.b16 %v2712
      %v2777 = vunpack.c.l.b16 %v2713
      %v2778 = vpack.c.b16 %v2771, %v2770
      %v2779 = vpack.c.b16 %v2773, %v2772
      %v2780 = vpack.c.b16 %v2775, %v2774
      %v2781 = vpack.c.b16 %v2777, %v2776
      %v2787 = vsel %vm2019, %v2746, 0
      %v2790 = vsel %vm2019, %v2747, 0
      %v2793 = vsel %vm2019, %v2748, 0
      %v2796 = vsel %vm2019, %v2749, 0
      %v2799 = vsel %vm2019, %v2750, 0
      %v2802 = vsel %vm2019, %v2751, 0
      %v2805 = vsel %vm2019, %v2752, 0
      %v2808 = vsel %vm2019, %v2753, 0
      %v2811 = vsel %vm2019, %v2754, 0
      %v2814 = vsel %vm2019, %v2755, 0
      %v2817 = vsel %vm2019, %v2756, 0
      %v2820 = vsel %vm2019, %v2757, 0
      %v2823 = vsel %vm2019, %v2758, 0
      %v2826 = vsel %vm2019, %v2759, 0
      %v2829 = vsel %vm2019, %v2760, 0
      %v2832 = vsel %vm2019, %v2761, 0
      %2834 = vmatprep.subr.bf16.mxu0 0
      %2835 = vmatpush1.bf16.msra.mxu0 0
      %2836 = vmatprep.subr.bf16.mxu0 0
      %2837 = vmatpush1.bf16.msra.mxu0 0
      %2838 = vmatprep.subr.bf16.mxu0 0
      %2839 = vmatpush1.bf16.msra.mxu0 0
      %2840 = vmatprep.subr.bf16.mxu0 0
      %2841 = vmatpush1.bf16.msra.mxu0 0
      %2842 = vmatprep.subr.bf16.mxu0 0
      %2843 = vmatpush1.bf16.msra.mxu0 %v2781
      %2844 = vmatprep.subr.bf16.mxu0 0
      %2845 = vmatpush1.bf16.msra.mxu0 %v2780
      %2846 = vmatprep.subr.bf16.mxu0 0
      %2847 = vmatpush1.bf16.msra.mxu0 %v2779
      %2848 = vmatprep.subr.bf16.mxu0 0
      %2849 = vmatpush1.bf16.msra.mxu0 %v2778
      %2850 = vmatprep.subr.bf16.mxu0 0
      %2851 = vmatpush2.bf16.msra.mxu0 0
      %2852 = vmatprep.subr.bf16.mxu0 0
      %2853 = vmatpush2.bf16.msra.mxu0 0
      %2854 = vmatprep.subr.bf16.mxu0 0
      %2855 = vmatpush2.bf16.msra.mxu0 0
      %2856 = vmatprep.subr.bf16.mxu0 0
      %2857 = vmatpush2.bf16.msra.mxu0 0
      %2858 = vmatprep.subr.bf16.mxu0 0
      %2859 = vmatpush2.bf16.msra.mxu0 0
      %2860 = vmatprep.subr.bf16.mxu0 0
      %2861 = vmatpush2.bf16.msra.mxu0 0
      %2862 = vmatprep.subr.bf16.mxu0 0
      %2863 = vmatpush2.bf16.msra.mxu0 0
      %2864 = vmatprep.subr.bf16.mxu0 0
      %2865 = vmatpush2.bf16.msra.mxu0 0
      %2866 = vmatprep.mubr.bf16.mxu0 0
      %2867 = vmatmul.mubr.bf16.gmra.mxu0 %v2787
      %v2868 = vpop.f32.mrf.mxu0
      %v2869 = vadd.f32 0.0, %v2868
      %v2870 = vpop.f32.mrf.mxu0
      %v2871 = vpop.f32.mrf.mxu0
      %v2872 = vadd.f32 0.0, %v2871
      %v2873 = vpop.f32.mrf.mxu0
      %2874 = vmatprep.mubr.bf16.mxu0 0
      %2875 = vmatmul.mubr.bf16.gmra.mxu0 %v2790
      %v2876 = vpop.f32.mrf.mxu0
      %v2877 = vadd.f32 0.0, %v2876
      %v2878 = vpop.f32.mrf.mxu0
      %v2879 = vpop.f32.mrf.mxu0
      %v2880 = vadd.f32 0.0, %v2879
      %v2881 = vpop.f32.mrf.mxu0
      %2882 = vmatprep.mubr.bf16.mxu0 0
      %2883 = vmatmul.mubr.bf16.gmra.mxu0 %v2793
      %v2884 = vpop.f32.mrf.mxu0
      %v2885 = vadd.f32 0.0, %v2884
      %v2886 = vpop.f32.mrf.mxu0
      %v2887 = vpop.f32.mrf.mxu0
      %v2888 = vadd.f32 0.0, %v2887
      %v2889 = vpop.f32.mrf.mxu0
      %2890 = vmatprep.mubr.bf16.mxu0 0
      %2891 = vmatmul.mubr.bf16.gmra.mxu0 %v2796
      %v2892 = vpop.f32.mrf.mxu0
      %v2893 = vadd.f32 0.0, %v2892
      %v2894 = vpop.f32.mrf.mxu0
      %v2895 = vpop.f32.mrf.mxu0
      %v2896 = vadd.f32 0.0, %v2895
      %v2897 = vpop.f32.mrf.mxu0
      %2898 = vmatprep.mubr.bf16.mxu0 0
      %2899 = vmatmul.mubr.bf16.gmra.mxu0 %v2799
      %v2900 = vpop.f32.mrf.mxu0
      %v2901 = vadd.f32 0.0, %v2900
      %v2902 = vpop.f32.mrf.mxu0
      %v2903 = vpop.f32.mrf.mxu0
      %v2904 = vadd.f32 0.0, %v2903
      %v2905 = vpop.f32.mrf.mxu0
      %2906 = vmatprep.mubr.bf16.mxu0 0
      %2907 = vmatmul.mubr.bf16.gmra.mxu0 %v2802
      %v2908 = vpop.f32.mrf.mxu0
      %v2909 = vadd.f32 0.0, %v2908
      %v2910 = vpop.f32.mrf.mxu0
      %v2911 = vpop.f32.mrf.mxu0
      %v2912 = vadd.f32 0.0, %v2911
      %v2913 = vpop.f32.mrf.mxu0
      %2914 = vmatprep.mubr.bf16.mxu0 0
      %2915 = vmatmul.mubr.bf16.gmra.mxu0 %v2805
      %v2916 = vpop.f32.mrf.mxu0
      %v2917 = vadd.f32 0.0, %v2916
      %v2918 = vpop.f32.mrf.mxu0
      %v2919 = vpop.f32.mrf.mxu0
      %v2920 = vadd.f32 0.0, %v2919
      %v2921 = vpop.f32.mrf.mxu0
      %2922 = vmatprep.mubr.bf16.mxu0 0
      %2923 = vmatmul.mubr.bf16.gmra.mxu0 %v2808
      %v2924 = vpop.f32.mrf.mxu0
      %v2925 = vadd.f32 0.0, %v2924
      %v2926 = vpop.f32.mrf.mxu0
      %v2927 = vpop.f32.mrf.mxu0
      %v2928 = vadd.f32 0.0, %v2927
      %v2929 = vpop.f32.mrf.mxu0
      %2930 = vmatprep.mubr.bf16.mxu0 0
      %2931 = vmatmul.mubr.bf16.gmra.mxu0 %v2811
      %v2932 = vpop.f32.mrf.mxu0
      %v2933 = vadd.f32 0.0, %v2932
      %v2934 = vpop.f32.mrf.mxu0
      %v2935 = vpop.f32.mrf.mxu0
      %v2936 = vadd.f32 0.0, %v2935
      %v2937 = vpop.f32.mrf.mxu0
      %2938 = vmatprep.mubr.bf16.mxu0 0
      %2939 = vmatmul.mubr.bf16.gmra.mxu0 %v2814
      %v2940 = vpop.f32.mrf.mxu0
      %v2941 = vadd.f32 0.0, %v2940
      %v2942 = vpop.f32.mrf.mxu0
      %v2943 = vpop.f32.mrf.mxu0
      %v2944 = vadd.f32 0.0, %v2943
      %v2945 = vpop.f32.mrf.mxu0
      %2946 = vmatprep.mubr.bf16.mxu0 0
      %2947 = vmatmul.mubr.bf16.gmra.mxu0 %v2817
      %v2948 = vpop.f32.mrf.mxu0
      %v2949 = vadd.f32 0.0, %v2948
      %v2950 = vpop.f32.mrf.mxu0
      %v2951 = vpop.f32.mrf.mxu0
      %v2952 = vadd.f32 0.0, %v2951
      %v2953 = vpop.f32.mrf.mxu0
      %2954 = vmatprep.mubr.bf16.mxu0 0
      %2955 = vmatmul.mubr.bf16.gmra.mxu0 %v2820
      %v2956 = vpop.f32.mrf.mxu0
      %v2957 = vadd.f32 0.0, %v2956
      %v2958 = vpop.f32.mrf.mxu0
      %v2959 = vpop.f32.mrf.mxu0
      %v2960 = vadd.f32 0.0, %v2959
      %v2961 = vpop.f32.mrf.mxu0
      %2962 = vmatprep.mubr.bf16.mxu0 0
      %2963 = vmatmul.mubr.bf16.gmra.mxu0 %v2823
      %v2964 = vpop.f32.mrf.mxu0
      %v2965 = vadd.f32 0.0, %v2964
      %v2966 = vpop.f32.mrf.mxu0
      %v2967 = vpop.f32.mrf.mxu0
      %v2968 = vadd.f32 0.0, %v2967
      %v2969 = vpop.f32.mrf.mxu0
      %2970 = vmatprep.mubr.bf16.mxu0 0
      %2971 = vmatmul.mubr.bf16.gmra.mxu0 %v2826
      %v2972 = vpop.f32.mrf.mxu0
      %v2973 = vadd.f32 0.0, %v2972
      %v2974 = vpop.f32.mrf.mxu0
      %v2975 = vpop.f32.mrf.mxu0
      %v2976 = vadd.f32 0.0, %v2975
      %v2977 = vpop.f32.mrf.mxu0
      %2978 = vmatprep.mubr.bf16.mxu0 0
      %2979 = vmatmul.mubr.bf16.gmra.mxu0 %v2829
      %v2980 = vpop.f32.mrf.mxu0
      %v2981 = vadd.f32 0.0, %v2980
      %v2982 = vpop.f32.mrf.mxu0
      %v2983 = vpop.f32.mrf.mxu0
      %v2984 = vadd.f32 0.0, %v2983
      %v2985 = vpop.f32.mrf.mxu0
      %2986 = vmatprep.mubr.bf16.mxu0 0
      %2987 = vmatmul.mubr.bf16.gmra.mxu0 %v2832
      %v2988 = vpop.f32.mrf.mxu0
      %v2989 = vadd.f32 0.0, %v2988
      %v2990 = vpop.f32.mrf.mxu0
      %v2991 = vpop.f32.mrf.mxu0
      %v2992 = vadd.f32 0.0, %v2991
      %v2993 = vpop.f32.mrf.mxu0
      %2994 = vdwg.mxu0
      %v2995 = vadd.f32 %v2416, %v2869
      %v2996 = vadd.f32 %v2419, %v2872
      %v2997 = vadd.f32 %v2424, %v2877
      %v2998 = vadd.f32 %v2427, %v2880
      %v2999 = vadd.f32 %v2432, %v2885
      %v3000 = vadd.f32 %v2435, %v2888
      %v3001 = vadd.f32 %v2440, %v2893
      %v3002 = vadd.f32 %v2443, %v2896
      %v3003 = vadd.f32 %v2448, %v2901
      %v3004 = vadd.f32 %v2451, %v2904
      %v3005 = vadd.f32 %v2456, %v2909
      %v3006 = vadd.f32 %v2459, %v2912
      %v3007 = vadd.f32 %v2464, %v2917
      %v3008 = vadd.f32 %v2467, %v2920
      %v3009 = vadd.f32 %v2472, %v2925
      %v3010 = vadd.f32 %v2475, %v2928
      %v3011 = vadd.f32 %v2480, %v2933
      %v3012 = vadd.f32 %v2483, %v2936
      %v3013 = vadd.f32 %v2488, %v2941
      %v3014 = vadd.f32 %v2491, %v2944
      %v3015 = vadd.f32 %v2496, %v2949
      %v3016 = vadd.f32 %v2499, %v2952
      %v3017 = vadd.f32 %v2504, %v2957
      %v3018 = vadd.f32 %v2507, %v2960
      %v3019 = vadd.f32 %v2512, %v2965
      %v3020 = vadd.f32 %v2515, %v2968
      %v3021 = vadd.f32 %v2520, %v2973
      %v3022 = vadd.f32 %v2523, %v2976
      %v3023 = vadd.f32 %v2528, %v2981
      %v3024 = vadd.f32 %v2531, %v2984
      %v3025 = vadd.f32 %v2536, %v2989
      %v3026 = vadd.f32 %v2539, %v2992
      %v3027 = vld [vmem:[%s815] sm:$0xf]
      %v3028 = vld [vmem:[%s815 + $0x4] sm:$0xf]
      %v3029 = vld [vmem:[%s815 + $0xc] sm:$0xf]
      %v3030 = vld [vmem:[%s815 + $0x10] sm:$0xf]
      %v3031 = vld [vmem:[%s815 + $0x18] sm:$0xf]
      %v3032 = vld [vmem:[%s815 + $0x1c] sm:$0xf]
      %v3033 = vld [vmem:[%s815 + $0x24] sm:$0xf]
      %v3034 = vld [vmem:[%s815 + $0x28] sm:$0xf]
      %v3035 = vld [vmem:[%s815 + $0x30] sm:$0xf]
      %v3036 = vld [vmem:[%s815 + $0x34] sm:$0xf]
      %v3037 = vld [vmem:[%s815 + $0x3c] sm:$0xf]
      %v3038 = vld [vmem:[%s815 + $0x40] sm:$0xf]
      %v3039 = vld [vmem:[%s815 + $0x48] sm:$0xf]
      %v3040 = vld [vmem:[%s815 + $0x4c] sm:$0xf]
      %v3041 = vld [vmem:[%s815 + $0x54] sm:$0xf]
      %v3042 = vld [vmem:[%s815 + $0x58] sm:$0xf]
      %v3043 = vld [vmem:[%s815 + $0x60] sm:$0xf]
      %v3044 = vld [vmem:[%s815 + $0x64] sm:$0xf]
      %v3045 = vld [vmem:[%s815 + $0x6c] sm:$0xf]
      %v3046 = vld [vmem:[%s815 + $0x70] sm:$0xf]
      %v3047 = vld [vmem:[%s815 + $0x78] sm:$0xf]
      %v3048 = vld [vmem:[%s815 + $0x7c] sm:$0xf]
      %v3049 = vld [vmem:[%s815 + $0x84] sm:$0xf]
      %v3050 = vld [vmem:[%s815 + $0x88] sm:$0xf]
      %v3051 = vld [vmem:[%s815 + $0x90] sm:$0xf]
      %v3052 = vld [vmem:[%s815 + $0x94] sm:$0xf]
      %v3053 = vld [vmem:[%s815 + $0x9c] sm:$0xf]
      %v3054 = vld [vmem:[%s815 + $0xa0] sm:$0xf]
      %v3055 = vld [vmem:[%s815 + $0xa8] sm:$0xf]
      %v3056 = vld [vmem:[%s815 + $0xac] sm:$0xf]
      %v3057 = vld [vmem:[%s815 + $0xb4] sm:$0xf]
      %v3058 = vld [vmem:[%s815 + $0xb8] sm:$0xf]
      %s3059 = scalar_lea.vmem %s2, 96
      %v3060 = vld [vmem:[%s3059] sm:$0xf]
      %v3061 = vld [vmem:[%s3059 + $0x4] sm:$0xf]
      %v3062 = vld [vmem:[%s3059 + $0x8] sm:$0xf]
      %v3063 = vld [vmem:[%s3059 + $0xc] sm:$0xf]
      %v3064 = vld [vmem:[%s3059 + $0x10] sm:$0xf]
      %v3065 = vld [vmem:[%s3059 + $0x14] sm:$0xf]
      %v3066 = vld [vmem:[%s3059 + $0x18] sm:$0xf]
      %v3067 = vld [vmem:[%s3059 + $0x1c] sm:$0xf]
      %v3100 = vunpack.c.l.b16 %v3027
      %v3101 = vunpack.c.l.b16 %v3028
      %v3102 = vunpack.c.l.b16 %v3029
      %v3103 = vunpack.c.l.b16 %v3030
      %v3104 = vunpack.c.l.b16 %v3031
      %v3105 = vunpack.c.l.b16 %v3032
      %v3106 = vunpack.c.l.b16 %v3033
      %v3107 = vunpack.c.l.b16 %v3034
      %v3108 = vunpack.c.l.b16 %v3035
      %v3109 = vunpack.c.l.b16 %v3036
      %v3110 = vunpack.c.l.b16 %v3037
      %v3111 = vunpack.c.l.b16 %v3038
      %v3112 = vunpack.c.l.b16 %v3039
      %v3113 = vunpack.c.l.b16 %v3040
      %v3114 = vunpack.c.l.b16 %v3041
      %v3115 = vunpack.c.l.b16 %v3042
      %v3116 = vunpack.c.l.b16 %v3043
      %v3117 = vunpack.c.l.b16 %v3044
      %v3118 = vunpack.c.l.b16 %v3045
      %v3119 = vunpack.c.l.b16 %v3046
      %v3120 = vunpack.c.l.b16 %v3047
      %v3121 = vunpack.c.l.b16 %v3048
      %v3122 = vunpack.c.l.b16 %v3049
      %v3123 = vunpack.c.l.b16 %v3050
      %v3124 = vunpack.c.l.b16 %v3051
      %v3125 = vunpack.c.l.b16 %v3052
      %v3126 = vunpack.c.l.b16 %v3053
      %v3127 = vunpack.c.l.b16 %v3054
      %v3128 = vunpack.c.l.b16 %v3055
      %v3129 = vunpack.c.l.b16 %v3056
      %v3130 = vunpack.c.l.b16 %v3057
      %v3131 = vunpack.c.l.b16 %v3058
      %v3132 = vpack.c.b16 %v3101, %v3100
      %v3133 = vpack.c.b16 %v3103, %v3102
      %v3134 = vpack.c.b16 %v3105, %v3104
      %v3135 = vpack.c.b16 %v3107, %v3106
      %v3136 = vpack.c.b16 %v3109, %v3108
      %v3137 = vpack.c.b16 %v3111, %v3110
      %v3138 = vpack.c.b16 %v3113, %v3112
      %v3139 = vpack.c.b16 %v3115, %v3114
      %v3140 = vpack.c.b16 %v3117, %v3116
      %v3141 = vpack.c.b16 %v3119, %v3118
      %v3142 = vpack.c.b16 %v3121, %v3120
      %v3143 = vpack.c.b16 %v3123, %v3122
      %v3144 = vpack.c.b16 %v3125, %v3124
      %v3145 = vpack.c.b16 %v3127, %v3126
      %v3146 = vpack.c.b16 %v3129, %v3128
      %v3147 = vpack.c.b16 %v3131, %v3130
      %v3156 = vunpack.c.l.b16 %v3060
      %v3157 = vunpack.c.l.b16 %v3061
      %v3158 = vunpack.c.l.b16 %v3062
      %v3159 = vunpack.c.l.b16 %v3063
      %v3160 = vunpack.c.l.b16 %v3064
      %v3161 = vunpack.c.l.b16 %v3065
      %v3162 = vunpack.c.l.b16 %v3066
      %v3163 = vunpack.c.l.b16 %v3067
      %v3164 = vpack.c.b16 %v3157, %v3156
      %v3165 = vpack.c.b16 %v3159, %v3158
      %v3166 = vpack.c.b16 %v3161, %v3160
      %v3167 = vpack.c.b16 %v3163, %v3162
      %v3173 = vsel %vm2019, %v3132, 0
      %v3176 = vsel %vm2019, %v3133, 0
      %v3179 = vsel %vm2019, %v3134, 0
      %v3182 = vsel %vm2019, %v3135, 0
      %v3185 = vsel %vm2019, %v3136, 0
      %v3188 = vsel %vm2019, %v3137, 0
      %v3191 = vsel %vm2019, %v3138, 0
      %v3194 = vsel %vm2019, %v3139, 0
      %v3197 = vsel %vm2019, %v3140, 0
      %v3200 = vsel %vm2019, %v3141, 0
      %v3203 = vsel %vm2019, %v3142, 0
      %v3206 = vsel %vm2019, %v3143, 0
      %v3209 = vsel %vm2019, %v3144, 0
      %v3212 = vsel %vm2019, %v3145, 0
      %v3215 = vsel %vm2019, %v3146, 0
      %v3218 = vsel %vm2019, %v3147, 0
      %3220 = vmatprep.subr.bf16.mxu0 0
      %3221 = vmatpush1.bf16.msra.mxu0 0
      %3222 = vmatprep.subr.bf16.mxu0 0
      %3223 = vmatpush1.bf16.msra.mxu0 0
      %3224 = vmatprep.subr.bf16.mxu0 0
      %3225 = vmatpush1.bf16.msra.mxu0 0
      %3226 = vmatprep.subr.bf16.mxu0 0
      %3227 = vmatpush1.bf16.msra.mxu0 0
      %3228 = vmatprep.subr.bf16.mxu0 0
      %3229 = vmatpush1.bf16.msra.mxu0 %v3167
      %3230 = vmatprep.subr.bf16.mxu0 0
      %3231 = vmatpush1.bf16.msra.mxu0 %v3166
      %3232 = vmatprep.subr.bf16.mxu0 0
      %3233 = vmatpush1.bf16.msra.mxu0 %v3165
      %3234 = vmatprep.subr.bf16.mxu0 0
      %3235 = vmatpush1.bf16.msra.mxu0 %v3164
      %3236 = vmatprep.subr.bf16.mxu0 0
      %3237 = vmatpush2.bf16.msra.mxu0 0
      %3238 = vmatprep.subr.bf16.mxu0 0
      %3239 = vmatpush2.bf16.msra.mxu0 0
      %3240 = vmatprep.subr.bf16.mxu0 0
      %3241 = vmatpush2.bf16.msra.mxu0 0
      %3242 = vmatprep.subr.bf16.mxu0 0
      %3243 = vmatpush2.bf16.msra.mxu0 0
      %3244 = vmatprep.subr.bf16.mxu0 0
      %3245 = vmatpush2.bf16.msra.mxu0 0
      %3246 = vmatprep.subr.bf16.mxu0 0
      %3247 = vmatpush2.bf16.msra.mxu0 0
      %3248 = vmatprep.subr.bf16.mxu0 0
      %3249 = vmatpush2.bf16.msra.mxu0 0
      %3250 = vmatprep.subr.bf16.mxu0 0
      %3251 = vmatpush2.bf16.msra.mxu0 0
      %3252 = vmatprep.mubr.bf16.mxu0 0
      %3253 = vmatmul.mubr.bf16.gmra.mxu0 %v3173
      %v3254 = vpop.f32.mrf.mxu0
      %v3255 = vadd.f32 0.0, %v3254
      %v3256 = vpop.f32.mrf.mxu0
      %v3257 = vpop.f32.mrf.mxu0
      %v3258 = vadd.f32 0.0, %v3257
      %v3259 = vpop.f32.mrf.mxu0
      %3260 = vmatprep.mubr.bf16.mxu0 0
      %3261 = vmatmul.mubr.bf16.gmra.mxu0 %v3176
      %v3262 = vpop.f32.mrf.mxu0
      %v3263 = vadd.f32 0.0, %v3262
      %v3264 = vpop.f32.mrf.mxu0
      %v3265 = vpop.f32.mrf.mxu0
      %v3266 = vadd.f32 0.0, %v3265
      %v3267 = vpop.f32.mrf.mxu0
      %3268 = vmatprep.mubr.bf16.mxu0 0
      %3269 = vmatmul.mubr.bf16.gmra.mxu0 %v3179
      %v3270 = vpop.f32.mrf.mxu0
      %v3271 = vadd.f32 0.0, %v3270
      %v3272 = vpop.f32.mrf.mxu0
      %v3273 = vpop.f32.mrf.mxu0
      %v3274 = vadd.f32 0.0, %v3273
      %v3275 = vpop.f32.mrf.mxu0
      %3276 = vmatprep.mubr.bf16.mxu0 0
      %3277 = vmatmul.mubr.bf16.gmra.mxu0 %v3182
      %v3278 = vpop.f32.mrf.mxu0
      %v3279 = vadd.f32 0.0, %v3278
      %v3280 = vpop.f32.mrf.mxu0
      %v3281 = vpop.f32.mrf.mxu0
      %v3282 = vadd.f32 0.0, %v3281
      %v3283 = vpop.f32.mrf.mxu0
      %3284 = vmatprep.mubr.bf16.mxu0 0
      %3285 = vmatmul.mubr.bf16.gmra.mxu0 %v3185
      %v3286 = vpop.f32.mrf.mxu0
      %v3287 = vadd.f32 0.0, %v3286
      %v3288 = vpop.f32.mrf.mxu0
      %v3289 = vpop.f32.mrf.mxu0
      %v3290 = vadd.f32 0.0, %v3289
      %v3291 = vpop.f32.mrf.mxu0
      %3292 = vmatprep.mubr.bf16.mxu0 0
      %3293 = vmatmul.mubr.bf16.gmra.mxu0 %v3188
      %v3294 = vpop.f32.mrf.mxu0
      %v3295 = vadd.f32 0.0, %v3294
      %v3296 = vpop.f32.mrf.mxu0
      %v3297 = vpop.f32.mrf.mxu0
      %v3298 = vadd.f32 0.0, %v3297
      %v3299 = vpop.f32.mrf.mxu0
      %3300 = vmatprep.mubr.bf16.mxu0 0
      %3301 = vmatmul.mubr.bf16.gmra.mxu0 %v3191
      %v3302 = vpop.f32.mrf.mxu0
      %v3303 = vadd.f32 0.0, %v3302
      %v3304 = vpop.f32.mrf.mxu0
      %v3305 = vpop.f32.mrf.mxu0
      %v3306 = vadd.f32 0.0, %v3305
      %v3307 = vpop.f32.mrf.mxu0
      %3308 = vmatprep.mubr.bf16.mxu0 0
      %3309 = vmatmul.mubr.bf16.gmra.mxu0 %v3194
      %v3310 = vpop.f32.mrf.mxu0
      %v3311 = vadd.f32 0.0, %v3310
      %v3312 = vpop.f32.mrf.mxu0
      %v3313 = vpop.f32.mrf.mxu0
      %v3314 = vadd.f32 0.0, %v3313
      %v3315 = vpop.f32.mrf.mxu0
      %3316 = vmatprep.mubr.bf16.mxu0 0
      %3317 = vmatmul.mubr.bf16.gmra.mxu0 %v3197
      %v3318 = vpop.f32.mrf.mxu0
      %v3319 = vadd.f32 0.0, %v3318
      %v3320 = vpop.f32.mrf.mxu0
      %v3321 = vpop.f32.mrf.mxu0
      %v3322 = vadd.f32 0.0, %v3321
      %v3323 = vpop.f32.mrf.mxu0
      %3324 = vmatprep.mubr.bf16.mxu0 0
      %3325 = vmatmul.mubr.bf16.gmra.mxu0 %v3200
      %v3326 = vpop.f32.mrf.mxu0
      %v3327 = vadd.f32 0.0, %v3326
      %v3328 = vpop.f32.mrf.mxu0
      %v3329 = vpop.f32.mrf.mxu0
      %v3330 = vadd.f32 0.0, %v3329
      %v3331 = vpop.f32.mrf.mxu0
      %3332 = vmatprep.mubr.bf16.mxu0 0
      %3333 = vmatmul.mubr.bf16.gmra.mxu0 %v3203
      %v3334 = vpop.f32.mrf.mxu0
      %v3335 = vadd.f32 0.0, %v3334
      %v3336 = vpop.f32.mrf.mxu0
      %v3337 = vpop.f32.mrf.mxu0
      %v3338 = vadd.f32 0.0, %v3337
      %v3339 = vpop.f32.mrf.mxu0
      %3340 = vmatprep.mubr.bf16.mxu0 0
      %3341 = vmatmul.mubr.bf16.gmra.mxu0 %v3206
      %v3342 = vpop.f32.mrf.mxu0
      %v3343 = vadd.f32 0.0, %v3342
      %v3344 = vpop.f32.mrf.mxu0
      %v3345 = vpop.f32.mrf.mxu0
      %v3346 = vadd.f32 0.0, %v3345
      %v3347 = vpop.f32.mrf.mxu0
      %3348 = vmatprep.mubr.bf16.mxu0 0
      %3349 = vmatmul.mubr.bf16.gmra.mxu0 %v3209
      %v3350 = vpop.f32.mrf.mxu0
      %v3351 = vadd.f32 0.0, %v3350
      %v3352 = vpop.f32.mrf.mxu0
      %v3353 = vpop.f32.mrf.mxu0
      %v3354 = vadd.f32 0.0, %v3353
      %v3355 = vpop.f32.mrf.mxu0
      %3356 = vmatprep.mubr.bf16.mxu0 0
      %3357 = vmatmul.mubr.bf16.gmra.mxu0 %v3212
      %v3358 = vpop.f32.mrf.mxu0
      %v3359 = vadd.f32 0.0, %v3358
      %v3360 = vpop.f32.mrf.mxu0
      %v3361 = vpop.f32.mrf.mxu0
      %v3362 = vadd.f32 0.0, %v3361
      %v3363 = vpop.f32.mrf.mxu0
      %3364 = vmatprep.mubr.bf16.mxu0 0
      %3365 = vmatmul.mubr.bf16.gmra.mxu0 %v3215
      %v3366 = vpop.f32.mrf.mxu0
      %v3367 = vadd.f32 0.0, %v3366
      %v3368 = vpop.f32.mrf.mxu0
      %v3369 = vpop.f32.mrf.mxu0
      %v3370 = vadd.f32 0.0, %v3369
      %v3371 = vpop.f32.mrf.mxu0
      %3372 = vmatprep.mubr.bf16.mxu0 0
      %3373 = vmatmul.mubr.bf16.gmra.mxu0 %v3218
      %v3374 = vpop.f32.mrf.mxu0
      %v3375 = vadd.f32 0.0, %v3374
      %v3376 = vpop.f32.mrf.mxu0
      %v3377 = vpop.f32.mrf.mxu0
      %v3378 = vadd.f32 0.0, %v3377
      %v3379 = vpop.f32.mrf.mxu0
      %3380 = vdwg.mxu0
      %v3381 = vadd.f32 %v2995, %v3255
      %v3382 = vadd.f32 %v2996, %v3258
      %v3383 = vadd.f32 %v2997, %v3263
      %v3384 = vadd.f32 %v2998, %v3266
      %v3385 = vadd.f32 %v2999, %v3271
      %v3386 = vadd.f32 %v3000, %v3274
      %v3387 = vadd.f32 %v3001, %v3279
      %v3388 = vadd.f32 %v3002, %v3282
      %v3389 = vadd.f32 %v3003, %v3287
      %v3390 = vadd.f32 %v3004, %v3290
      %v3391 = vadd.f32 %v3005, %v3295
      %v3392 = vadd.f32 %v3006, %v3298
      %v3393 = vadd.f32 %v3007, %v3303
      %v3394 = vadd.f32 %v3008, %v3306
      %v3395 = vadd.f32 %v3009, %v3311
      %v3396 = vadd.f32 %v3010, %v3314
      %v3397 = vadd.f32 %v3011, %v3319
      %v3398 = vadd.f32 %v3012, %v3322
      %v3399 = vadd.f32 %v3013, %v3327
      %v3400 = vadd.f32 %v3014, %v3330
      %v3401 = vadd.f32 %v3015, %v3335
      %v3402 = vadd.f32 %v3016, %v3338
      %v3403 = vadd.f32 %v3017, %v3343
      %v3404 = vadd.f32 %v3018, %v3346
      %v3405 = vadd.f32 %v3019, %v3351
      %v3406 = vadd.f32 %v3020, %v3354
      %v3407 = vadd.f32 %v3021, %v3359
      %v3408 = vadd.f32 %v3022, %v3362
      %v3409 = vadd.f32 %v3023, %v3367
      %v3410 = vadd.f32 %v3024, %v3370
      %v3411 = vadd.f32 %v3025, %v3375
      %v3412 = vadd.f32 %v3026, %v3378
      %v3413 = vld [vmem:[%s815] sm:$0xf]
      %v3414 = vld [vmem:[%s815 + $0x4] sm:$0xf]
      %v3415 = vld [vmem:[%s815 + $0x8] sm:$0x1]
      %v3416 = vld [vmem:[%s815 + $0xc] sm:$0xf]
      %v3417 = vld [vmem:[%s815 + $0x10] sm:$0xf]
      %v3418 = vld [vmem:[%s815 + $0x14] sm:$0x1]
      %v3419 = vld [vmem:[%s815 + $0x18] sm:$0xf]
      %v3420 = vld [vmem:[%s815 + $0x1c] sm:$0xf]
      %v3421 = vld [vmem:[%s815 + $0x20] sm:$0x1]
      %v3422 = vld [vmem:[%s815 + $0x24] sm:$0xf]
      %v3423 = vld [vmem:[%s815 + $0x28] sm:$0xf]
      %v3424 = vld [vmem:[%s815 + $0x2c] sm:$0x1]
      %v3425 = vld [vmem:[%s815 + $0x30] sm:$0xf]
      %v3426 = vld [vmem:[%s815 + $0x34] sm:$0xf]
      %v3427 = vld [vmem:[%s815 + $0x38] sm:$0x1]
      %v3428 = vld [vmem:[%s815 + $0x3c] sm:$0xf]
      %v3429 = vld [vmem:[%s815 + $0x40] sm:$0xf]
      %v3430 = vld [vmem:[%s815 + $0x44] sm:$0x1]
      %v3431 = vld [vmem:[%s815 + $0x48] sm:$0xf]
      %v3432 = vld [vmem:[%s815 + $0x4c] sm:$0xf]
      %v3433 = vld [vmem:[%s815 + $0x50] sm:$0x1]
      %v3434 = vld [vmem:[%s815 + $0x54] sm:$0xf]
      %v3435 = vld [vmem:[%s815 + $0x58] sm:$0xf]
      %v3436 = vld [vmem:[%s815 + $0x5c] sm:$0x1]
      %v3437 = vld [vmem:[%s815 + $0x60] sm:$0xf]
      %v3438 = vld [vmem:[%s815 + $0x64] sm:$0xf]
      %v3439 = vld [vmem:[%s815 + $0x68] sm:$0x1]
      %v3440 = vld [vmem:[%s815 + $0x6c] sm:$0xf]
      %v3441 = vld [vmem:[%s815 + $0x70] sm:$0xf]
      %v3442 = vld [vmem:[%s815 + $0x74] sm:$0x1]
      %v3443 = vld [vmem:[%s815 + $0x78] sm:$0xf]
      %v3444 = vld [vmem:[%s815 + $0x7c] sm:$0xf]
      %v3445 = vld [vmem:[%s815 + $0x80] sm:$0x1]
      %v3446 = vld [vmem:[%s815 + $0x84] sm:$0xf]
      %v3447 = vld [vmem:[%s815 + $0x88] sm:$0xf]
      %v3448 = vld [vmem:[%s815 + $0x8c] sm:$0x1]
      %v3449 = vld [vmem:[%s815 + $0x90] sm:$0xf]
      %v3450 = vld [vmem:[%s815 + $0x94] sm:$0xf]
      %v3451 = vld [vmem:[%s815 + $0x98] sm:$0x1]
      %v3452 = vld [vmem:[%s815 + $0x9c] sm:$0xf]
      %v3453 = vld [vmem:[%s815 + $0xa0] sm:$0xf]
      %v3454 = vld [vmem:[%s815 + $0xa4] sm:$0x1]
      %v3455 = vld [vmem:[%s815 + $0xa8] sm:$0xf]
      %v3456 = vld [vmem:[%s815 + $0xac] sm:$0xf]
      %v3457 = vld [vmem:[%s815 + $0xb0] sm:$0x1]
      %v3458 = vld [vmem:[%s815 + $0xb4] sm:$0xf]
      %v3459 = vld [vmem:[%s815 + $0xb8] sm:$0xf]
      %v3460 = vld [vmem:[%s815 + $0xbc] sm:$0x1]
      %v3462 = vshrl.u32 %v3413, 16
      %v3464 = vrot.slane %v3462, 4
      %v3465 = vshll.u32 %v3413, 16
      %v3467 = vrot.slane %v3465, 5
      %v3468 = vor.u32 %v3464, %v3467
      %v3469 = vrot.slane %v3468, 4
      %v3471 = vshll.u32 %v3414, 16
      %v3473 = vrot.slane %v3471, 5
      %v3474 = vsel %vm1553, %v3469, %v3473
      %v3475 = vshrl.u32 %v3414, 16
      %v3477 = vrot.slane %v3475, 4
      %v3478 = vor.u32 %v3477, %v3473
      %v3479 = vrot.slane %v3478, 4
      %v3481 = vshll.u32 %v3415, 16
      %v3483 = vrot.slane %v3481, 5
      %v3484 = vsel %vm1553, %v3479, %v3483
      %v3486 = vshrl.u32 %v3416, 16
      %v3488 = vrot.slane %v3486, 4
      %v3489 = vshll.u32 %v3416, 16
      %v3491 = vrot.slane %v3489, 5
      %v3492 = vor.u32 %v3488, %v3491
      %v3493 = vrot.slane %v3492, 4
      %v3495 = vshll.u32 %v3417, 16
      %v3497 = vrot.slane %v3495, 5
      %v3498 = vsel %vm1553, %v3493, %v3497
      %v3499 = vshrl.u32 %v3417, 16
      %v3501 = vrot.slane %v3499, 4
      %v3502 = vor.u32 %v3501, %v3497
      %v3503 = vrot.slane %v3502, 4
      %v3505 = vshll.u32 %v3418, 16
      %v3507 = vrot.slane %v3505, 5
      %v3508 = vsel %vm1553, %v3503, %v3507
      %v3510 = vshrl.u32 %v3419, 16
      %v3512 = vrot.slane %v3510, 4
      %v3513 = vshll.u32 %v3419, 16
      %v3515 = vrot.slane %v3513, 5
      %v3516 = vor.u32 %v3512, %v3515
      %v3517 = vrot.slane %v3516, 4
      %v3519 = vshll.u32 %v3420, 16
      %v3521 = vrot.slane %v3519, 5
      %v3522 = vsel %vm1553, %v3517, %v3521
      %v3523 = vshrl.u32 %v3420, 16
      %v3525 = vrot.slane %v3523, 4
      %v3526 = vor.u32 %v3525, %v3521
      %v3527 = vrot.slane %v3526, 4
      %v3529 = vshll.u32 %v3421, 16
      %v3531 = vrot.slane %v3529, 5
      %v3532 = vsel %vm1553, %v3527, %v3531
      %v3534 = vshrl.u32 %v3422, 16
      %v3536 = vrot.slane %v3534, 4
      %v3537 = vshll.u32 %v3422, 16
      %v3539 = vrot.slane %v3537, 5
      %v3540 = vor.u32 %v3536, %v3539
      %v3541 = vrot.slane %v3540, 4
      %v3543 = vshll.u32 %v3423, 16
      %v3545 = vrot.slane %v3543, 5
      %v3546 = vsel %vm1553, %v3541, %v3545
      %v3547 = vshrl.u32 %v3423, 16
      %v3549 = vrot.slane %v3547, 4
      %v3550 = vor.u32 %v3549, %v3545
      %v3551 = vrot.slane %v3550, 4
      %v3553 = vshll.u32 %v3424, 16
      %v3555 = vrot.slane %v3553, 5
      %v3556 = vsel %vm1553, %v3551, %v3555
      %v3558 = vshrl.u32 %v3425, 16
      %v3560 = vrot.slane %v3558, 4
      %v3561 = vshll.u32 %v3425, 16
      %v3563 = vrot.slane %v3561, 5
      %v3564 = vor.u32 %v3560, %v3563
      %v3565 = vrot.slane %v3564, 4
      %v3567 = vshll.u32 %v3426, 16
      %v3569 = vrot.slane %v3567, 5
      %v3570 = vsel %vm1553, %v3565, %v3569
      %v3571 = vshrl.u32 %v3426, 16
      %v3573 = vrot.slane %v3571, 4
      %v3574 = vor.u32 %v3573, %v3569
      %v3575 = vrot.slane %v3574, 4
      %v3577 = vshll.u32 %v3427, 16
      %v3579 = vrot.slane %v3577, 5
      %v3580 = vsel %vm1553, %v3575, %v3579
      %v3582 = vshrl.u32 %v3428, 16
      %v3584 = vrot.slane %v3582, 4
      %v3585 = vshll.u32 %v3428, 16
      %v3587 = vrot.slane %v3585, 5
      %v3588 = vor.u32 %v3584, %v3587
      %v3589 = vrot.slane %v3588, 4
      %v3591 = vshll.u32 %v3429, 16
      %v3593 = vrot.slane %v3591, 5
      %v3594 = vsel %vm1553, %v3589, %v3593
      %v3595 = vshrl.u32 %v3429, 16
      %v3597 = vrot.slane %v3595, 4
      %v3598 = vor.u32 %v3597, %v3593
      %v3599 = vrot.slane %v3598, 4
      %v3601 = vshll.u32 %v3430, 16
      %v3603 = vrot.slane %v3601, 5
      %v3604 = vsel %vm1553, %v3599, %v3603
      %v3606 = vshrl.u32 %v3431, 16
      %v3608 = vrot.slane %v3606, 4
      %v3609 = vshll.u32 %v3431, 16
      %v3611 = vrot.slane %v3609, 5
      %v3612 = vor.u32 %v3608, %v3611
      %v3613 = vrot.slane %v3612, 4
      %v3615 = vshll.u32 %v3432, 16
      %v3617 = vrot.slane %v3615, 5
      %v3618 = vsel %vm1553, %v3613, %v3617
      %v3619 = vshrl.u32 %v3432, 16
      %v3621 = vrot.slane %v3619, 4
      %v3622 = vor.u32 %v3621, %v3617
      %v3623 = vrot.slane %v3622, 4
      %v3625 = vshll.u32 %v3433, 16
      %v3627 = vrot.slane %v3625, 5
      %v3628 = vsel %vm1553, %v3623, %v3627
      %v3630 = vshrl.u32 %v3434, 16
      %v3632 = vrot.slane %v3630, 4
      %v3633 = vshll.u32 %v3434, 16
      %v3635 = vrot.slane %v3633, 5
      %v3636 = vor.u32 %v3632, %v3635
      %v3637 = vrot.slane %v3636, 4
      %v3639 = vshll.u32 %v3435, 16
      %v3641 = vrot.slane %v3639, 5
      %v3642 = vsel %vm1553, %v3637, %v3641
      %v3643 = vshrl.u32 %v3435, 16
      %v3645 = vrot.slane %v3643, 4
      %v3646 = vor.u32 %v3645, %v3641
      %v3647 = vrot.slane %v3646, 4
      %v3649 = vshll.u32 %v3436, 16
      %v3651 = vrot.slane %v3649, 5
      %v3652 = vsel %vm1553, %v3647, %v3651
      %v3654 = vshrl.u32 %v3437, 16
      %v3656 = vrot.slane %v3654, 4
      %v3657 = vshll.u32 %v3437, 16
      %v3659 = vrot.slane %v3657, 5
      %v3660 = vor.u32 %v3656, %v3659
      %v3661 = vrot.slane %v3660, 4
      %v3663 = vshll.u32 %v3438, 16
      %v3665 = vrot.slane %v3663, 5
      %v3666 = vsel %vm1553, %v3661, %v3665
      %v3667 = vshrl.u32 %v3438, 16
      %v3669 = vrot.slane %v3667, 4
      %v3670 = vor.u32 %v3669, %v3665
      %v3671 = vrot.slane %v3670, 4
      %v3673 = vshll.u32 %v3439, 16
      %v3675 = vrot.slane %v3673, 5
      %v3676 = vsel %vm1553, %v3671, %v3675
      %v3678 = vshrl.u32 %v3440, 16
      %v3680 = vrot.slane %v3678, 4
      %v3681 = vshll.u32 %v3440, 16
      %v3683 = vrot.slane %v3681, 5
      %v3684 = vor.u32 %v3680, %v3683
      %v3685 = vrot.slane %v3684, 4
      %v3687 = vshll.u32 %v3441, 16
      %v3689 = vrot.slane %v3687, 5
      %v3690 = vsel %vm1553, %v3685, %v3689
      %v3691 = vshrl.u32 %v3441, 16
      %v3693 = vrot.slane %v3691, 4
      %v3694 = vor.u32 %v3693, %v3689
      %v3695 = vrot.slane %v3694, 4
      %v3697 = vshll.u32 %v3442, 16
      %v3699 = vrot.slane %v3697, 5
      %v3700 = vsel %vm1553, %v3695, %v3699
      %v3702 = vshrl.u32 %v3443, 16
      %v3704 = vrot.slane %v3702, 4
      %v3705 = vshll.u32 %v3443, 16
      %v3707 = vrot.slane %v3705, 5
      %v3708 = vor.u32 %v3704, %v3707
      %v3709 = vrot.slane %v3708, 4
      %v3711 = vshll.u32 %v3444, 16
      %v3713 = vrot.slane %v3711, 5
      %v3714 = vsel %vm1553, %v3709, %v3713
      %v3715 = vshrl.u32 %v3444, 16
      %v3717 = vrot.slane %v3715, 4
      %v3718 = vor.u32 %v3717, %v3713
      %v3719 = vrot.slane %v3718, 4
      %v3721 = vshll.u32 %v3445, 16
      %v3723 = vrot.slane %v3721, 5
      %v3724 = vsel %vm1553, %v3719, %v3723
      %v3726 = vshrl.u32 %v3446, 16
      %v3728 = vrot.slane %v3726, 4
      %v3729 = vshll.u32 %v3446, 16
      %v3731 = vrot.slane %v3729, 5
      %v3732 = vor.u32 %v3728, %v3731
      %v3733 = vrot.slane %v3732, 4
      %v3735 = vshll.u32 %v3447, 16
      %v3737 = vrot.slane %v3735, 5
      %v3738 = vsel %vm1553, %v3733, %v3737
      %v3739 = vshrl.u32 %v3447, 16
      %v3741 = vrot.slane %v3739, 4
      %v3742 = vor.u32 %v3741, %v3737
      %v3743 = vrot.slane %v3742, 4
      %v3745 = vshll.u32 %v3448, 16
      %v3747 = vrot.slane %v3745, 5
      %v3748 = vsel %vm1553, %v3743, %v3747
      %v3750 = vshrl.u32 %v3449, 16
      %v3752 = vrot.slane %v3750, 4
      %v3753 = vshll.u32 %v3449, 16
      %v3755 = vrot.slane %v3753, 5
      %v3756 = vor.u32 %v3752, %v3755
      %v3757 = vrot.slane %v3756, 4
      %v3759 = vshll.u32 %v3450, 16
      %v3761 = vrot.slane %v3759, 5
      %v3762 = vsel %vm1553, %v3757, %v3761
      %v3763 = vshrl.u32 %v3450, 16
      %v3765 = vrot.slane %v3763, 4
      %v3766 = vor.u32 %v3765, %v3761
      %v3767 = vrot.slane %v3766, 4
      %v3769 = vshll.u32 %v3451, 16
      %v3771 = vrot.slane %v3769, 5
      %v3772 = vsel %vm1553, %v3767, %v3771
      %v3774 = vshrl.u32 %v3452, 16
      %v3776 = vrot.slane %v3774, 4
      %v3777 = vshll.u32 %v3452, 16
      %v3779 = vrot.slane %v3777, 5
      %v3780 = vor.u32 %v3776, %v3779
      %v3781 = vrot.slane %v3780, 4
      %v3783 = vshll.u32 %v3453, 16
      %v3785 = vrot.slane %v3783, 5
      %v3786 = vsel %vm1553, %v3781, %v3785
      %v3787 = vshrl.u32 %v3453, 16
      %v3789 = vrot.slane %v3787, 4
      %v3790 = vor.u32 %v3789, %v3785
      %v3791 = vrot.slane %v3790, 4
      %v3793 = vshll.u32 %v3454, 16
      %v3795 = vrot.slane %v3793, 5
      %v3796 = vsel %vm1553, %v3791, %v3795
      %v3798 = vshrl.u32 %v3455, 16
      %v3800 = vrot.slane %v3798, 4
      %v3801 = vshll.u32 %v3455, 16
      %v3803 = vrot.slane %v3801, 5
      %v3804 = vor.u32 %v3800, %v3803
      %v3805 = vrot.slane %v3804, 4
      %v3807 = vshll.u32 %v3456, 16
      %v3809 = vrot.slane %v3807, 5
      %v3810 = vsel %vm1553, %v3805, %v3809
      %v3811 = vshrl.u32 %v3456, 16
      %v3813 = vrot.slane %v3811, 4
      %v3814 = vor.u32 %v3813, %v3809
      %v3815 = vrot.slane %v3814, 4
      %v3817 = vshll.u32 %v3457, 16
      %v3819 = vrot.slane %v3817, 5
      %v3820 = vsel %vm1553, %v3815, %v3819
      %v3822 = vshrl.u32 %v3458, 16
      %v3824 = vrot.slane %v3822, 4
      %v3825 = vshll.u32 %v3458, 16
      %v3827 = vrot.slane %v3825, 5
      %v3828 = vor.u32 %v3824, %v3827
      %v3829 = vrot.slane %v3828, 4
      %v3831 = vshll.u32 %v3459, 16
      %v3833 = vrot.slane %v3831, 5
      %v3834 = vsel %vm1553, %v3829, %v3833
      %v3835 = vshrl.u32 %v3459, 16
      %v3837 = vrot.slane %v3835, 4
      %v3838 = vor.u32 %v3837, %v3833
      %v3839 = vrot.slane %v3838, 4
      %v3841 = vshll.u32 %v3460, 16
      %v3843 = vrot.slane %v3841, 5
      %v3844 = vsel %vm1553, %v3839, %v3843
      %s3845 = scalar_lea.vmem %s2, 128
      %v3846 = vld [vmem:[%s3845] sm:$0xf]
      %v3847 = vld [vmem:[%s3845 + $0x4] sm:$0xf]
      %v3848 = vld [vmem:[%s3845 + $0x8] sm:$0xf]
      %v3849 = vld [vmem:[%s3845 + $0xc] sm:$0xf]
      %v3850 = vld [vmem:[%s3845 + $0x10] sm:$0xf]
      %v3851 = vld [vmem:[%s3845 + $0x14] sm:$0xf]
      %v3852 = vld [vmem:[%s3845 + $0x18] sm:$0xf]
      %v3853 = vld [vmem:[%s3845 + $0x1c] sm:$0xf]
      %v3854 = vunpack.c.l.b16 %v3474
      %v3855 = vunpack.c.l.b16 %v3484
      %v3856 = vunpack.c.l.b16 %v3498
      %v3857 = vunpack.c.l.b16 %v3508
      %v3858 = vunpack.c.l.b16 %v3522
      %v3859 = vunpack.c.l.b16 %v3532
      %v3860 = vunpack.c.l.b16 %v3546
      %v3861 = vunpack.c.l.b16 %v3556
      %v3862 = vunpack.c.l.b16 %v3570
      %v3863 = vunpack.c.l.b16 %v3580
      %v3864 = vunpack.c.l.b16 %v3594
      %v3865 = vunpack.c.l.b16 %v3604
      %v3866 = vunpack.c.l.b16 %v3618
      %v3867 = vunpack.c.l.b16 %v3628
      %v3868 = vunpack.c.l.b16 %v3642
      %v3869 = vunpack.c.l.b16 %v3652
      %v3870 = vunpack.c.l.b16 %v3666
      %v3871 = vunpack.c.l.b16 %v3676
      %v3872 = vunpack.c.l.b16 %v3690
      %v3873 = vunpack.c.l.b16 %v3700
      %v3874 = vunpack.c.l.b16 %v3714
      %v3875 = vunpack.c.l.b16 %v3724
      %v3876 = vunpack.c.l.b16 %v3738
      %v3877 = vunpack.c.l.b16 %v3748
      %v3878 = vunpack.c.l.b16 %v3762
      %v3879 = vunpack.c.l.b16 %v3772
      %v3880 = vunpack.c.l.b16 %v3786
      %v3881 = vunpack.c.l.b16 %v3796
      %v3882 = vunpack.c.l.b16 %v3810
      %v3883 = vunpack.c.l.b16 %v3820
      %v3884 = vunpack.c.l.b16 %v3834
      %v3885 = vunpack.c.l.b16 %v3844
      %v3886 = vpack.c.b16 %v3855, %v3854
      %v3887 = vpack.c.b16 %v3857, %v3856
      %v3888 = vpack.c.b16 %v3859, %v3858
      %v3889 = vpack.c.b16 %v3861, %v3860
      %v3890 = vpack.c.b16 %v3863, %v3862
      %v3891 = vpack.c.b16 %v3865, %v3864
      %v3892 = vpack.c.b16 %v3867, %v3866
      %v3893 = vpack.c.b16 %v3869, %v3868
      %v3894 = vpack.c.b16 %v3871, %v3870
      %v3895 = vpack.c.b16 %v3873, %v3872
      %v3896 = vpack.c.b16 %v3875, %v3874
      %v3897 = vpack.c.b16 %v3877, %v3876
      %v3898 = vpack.c.b16 %v3879, %v3878
      %v3899 = vpack.c.b16 %v3881, %v3880
      %v3900 = vpack.c.b16 %v3883, %v3882
      %v3901 = vpack.c.b16 %v3885, %v3884
      %v3910 = vunpack.c.l.b16 %v3846
      %v3911 = vunpack.c.l.b16 %v3847
      %v3912 = vunpack.c.l.b16 %v3848
      %v3913 = vunpack.c.l.b16 %v3849
      %v3914 = vunpack.c.l.b16 %v3850
      %v3915 = vunpack.c.l.b16 %v3851
      %v3916 = vunpack.c.l.b16 %v3852
      %v3917 = vunpack.c.l.b16 %v3853
      %v3918 = vpack.c.b16 %v3911, %v3910
      %v3919 = vpack.c.b16 %v3913, %v3912
      %v3920 = vpack.c.b16 %v3915, %v3914
      %v3921 = vpack.c.b16 %v3917, %v3916
      %v3927 = vsel %vm2019, %v3886, 0
      %v3930 = vsel %vm2019, %v3887, 0
      %v3933 = vsel %vm2019, %v3888, 0
      %v3936 = vsel %vm2019, %v3889, 0
      %v3939 = vsel %vm2019, %v3890, 0
      %v3942 = vsel %vm2019, %v3891, 0
      %v3945 = vsel %vm2019, %v3892, 0
      %v3948 = vsel %vm2019, %v3893, 0
      %v3951 = vsel %vm2019, %v3894, 0
      %v3954 = vsel %vm2019, %v3895, 0
      %v3957 = vsel %vm2019, %v3896, 0
      %v3960 = vsel %vm2019, %v3897, 0
      %v3963 = vsel %vm2019, %v3898, 0
      %v3966 = vsel %vm2019, %v3899, 0
      %v3969 = vsel %vm2019, %v3900, 0
      %v3972 = vsel %vm2019, %v3901, 0
      %3974 = vmatprep.subr.bf16.mxu0 0
      %3975 = vmatpush1.bf16.msra.mxu0 0
      %3976 = vmatprep.subr.bf16.mxu0 0
      %3977 = vmatpush1.bf16.msra.mxu0 0
      %3978 = vmatprep.subr.bf16.mxu0 0
      %3979 = vmatpush1.bf16.msra.mxu0 0
      %3980 = vmatprep.subr.bf16.mxu0 0
      %3981 = vmatpush1.bf16.msra.mxu0 0
      %3982 = vmatprep.subr.bf16.mxu0 0
      %3983 = vmatpush1.bf16.msra.mxu0 %v3921
      %3984 = vmatprep.subr.bf16.mxu0 0
      %3985 = vmatpush1.bf16.msra.mxu0 %v3920
      %3986 = vmatprep.subr.bf16.mxu0 0
      %3987 = vmatpush1.bf16.msra.mxu0 %v3919
      %3988 = vmatprep.subr.bf16.mxu0 0
      %3989 = vmatpush1.bf16.msra.mxu0 %v3918
      %3990 = vmatprep.subr.bf16.mxu0 0
      %3991 = vmatpush2.bf16.msra.mxu0 0
      %3992 = vmatprep.subr.bf16.mxu0 0
      %3993 = vmatpush2.bf16.msra.mxu0 0
      %3994 = vmatprep.subr.bf16.mxu0 0
      %3995 = vmatpush2.bf16.msra.mxu0 0
      %3996 = vmatprep.subr.bf16.mxu0 0
      %3997 = vmatpush2.bf16.msra.mxu0 0
      %3998 = vmatprep.subr.bf16.mxu0 0
      %3999 = vmatpush2.bf16.msra.mxu0 0
      %4000 = vmatprep.subr.bf16.mxu0 0
      %4001 = vmatpush2.bf16.msra.mxu0 0
      %4002 = vmatprep.subr.bf16.mxu0 0
      %4003 = vmatpush2.bf16.msra.mxu0 0
      %4004 = vmatprep.subr.bf16.mxu0 0
      %4005 = vmatpush2.bf16.msra.mxu0 0
      %4006 = vmatprep.mubr.bf16.mxu0 0
      %4007 = vmatmul.mubr.bf16.gmra.mxu0 %v3927
      %v4008 = vpop.f32.mrf.mxu0
      %v4009 = vadd.f32 0.0, %v4008
      %v4010 = vpop.f32.mrf.mxu0
      %v4011 = vpop.f32.mrf.mxu0
      %v4012 = vadd.f32 0.0, %v4011
      %v4013 = vpop.f32.mrf.mxu0
      %4014 = vmatprep.mubr.bf16.mxu0 0
      %4015 = vmatmul.mubr.bf16.gmra.mxu0 %v3930
      %v4016 = vpop.f32.mrf.mxu0
      %v4017 = vadd.f32 0.0, %v4016
      %v4018 = vpop.f32.mrf.mxu0
      %v4019 = vpop.f32.mrf.mxu0
      %v4020 = vadd.f32 0.0, %v4019
      %v4021 = vpop.f32.mrf.mxu0
      %4022 = vmatprep.mubr.bf16.mxu0 0
      %4023 = vmatmul.mubr.bf16.gmra.mxu0 %v3933
      %v4024 = vpop.f32.mrf.mxu0
      %v4025 = vadd.f32 0.0, %v4024
      %v4026 = vpop.f32.mrf.mxu0
      %v4027 = vpop.f32.mrf.mxu0
      %v4028 = vadd.f32 0.0, %v4027
      %v4029 = vpop.f32.mrf.mxu0
      %4030 = vmatprep.mubr.bf16.mxu0 0
      %4031 = vmatmul.mubr.bf16.gmra.mxu0 %v3936
      %v4032 = vpop.f32.mrf.mxu0
      %v4033 = vadd.f32 0.0, %v4032
      %v4034 = vpop.f32.mrf.mxu0
      %v4035 = vpop.f32.mrf.mxu0
      %v4036 = vadd.f32 0.0, %v4035
      %v4037 = vpop.f32.mrf.mxu0
      %4038 = vmatprep.mubr.bf16.mxu0 0
      %4039 = vmatmul.mubr.bf16.gmra.mxu0 %v3939
      %v4040 = vpop.f32.mrf.mxu0
      %v4041 = vadd.f32 0.0, %v4040
      %v4042 = vpop.f32.mrf.mxu0
      %v4043 = vpop.f32.mrf.mxu0
      %v4044 = vadd.f32 0.0, %v4043
      %v4045 = vpop.f32.mrf.mxu0
      %4046 = vmatprep.mubr.bf16.mxu0 0
      %4047 = vmatmul.mubr.bf16.gmra.mxu0 %v3942
      %v4048 = vpop.f32.mrf.mxu0
      %v4049 = vadd.f32 0.0, %v4048
      %v4050 = vpop.f32.mrf.mxu0
      %v4051 = vpop.f32.mrf.mxu0
      %v4052 = vadd.f32 0.0, %v4051
      %v4053 = vpop.f32.mrf.mxu0
      %4054 = vmatprep.mubr.bf16.mxu0 0
      %4055 = vmatmul.mubr.bf16.gmra.mxu0 %v3945
      %v4056 = vpop.f32.mrf.mxu0
      %v4057 = vadd.f32 0.0, %v4056
      %v4058 = vpop.f32.mrf.mxu0
      %v4059 = vpop.f32.mrf.mxu0
      %v4060 = vadd.f32 0.0, %v4059
      %v4061 = vpop.f32.mrf.mxu0
      %4062 = vmatprep.mubr.bf16.mxu0 0
      %4063 = vmatmul.mubr.bf16.gmra.mxu0 %v3948
      %v4064 = vpop.f32.mrf.mxu0
      %v4065 = vadd.f32 0.0, %v4064
      %v4066 = vpop.f32.mrf.mxu0
      %v4067 = vpop.f32.mrf.mxu0
      %v4068 = vadd.f32 0.0, %v4067
      %v4069 = vpop.f32.mrf.mxu0
      %4070 = vmatprep.mubr.bf16.mxu0 0
      %4071 = vmatmul.mubr.bf16.gmra.mxu0 %v3951
      %v4072 = vpop.f32.mrf.mxu0
      %v4073 = vadd.f32 0.0, %v4072
      %v4074 = vpop.f32.mrf.mxu0
      %v4075 = vpop.f32.mrf.mxu0
      %v4076 = vadd.f32 0.0, %v4075
      %v4077 = vpop.f32.mrf.mxu0
      %4078 = vmatprep.mubr.bf16.mxu0 0
      %4079 = vmatmul.mubr.bf16.gmra.mxu0 %v3954
      %v4080 = vpop.f32.mrf.mxu0
      %v4081 = vadd.f32 0.0, %v4080
      %v4082 = vpop.f32.mrf.mxu0
      %v4083 = vpop.f32.mrf.mxu0
      %v4084 = vadd.f32 0.0, %v4083
      %v4085 = vpop.f32.mrf.mxu0
      %4086 = vmatprep.mubr.bf16.mxu0 0
      %4087 = vmatmul.mubr.bf16.gmra.mxu0 %v3957
      %v4088 = vpop.f32.mrf.mxu0
      %v4089 = vadd.f32 0.0, %v4088
      %v4090 = vpop.f32.mrf.mxu0
      %v4091 = vpop.f32.mrf.mxu0
      %v4092 = vadd.f32 0.0, %v4091
      %v4093 = vpop.f32.mrf.mxu0
      %4094 = vmatprep.mubr.bf16.mxu0 0
      %4095 = vmatmul.mubr.bf16.gmra.mxu0 %v3960
      %v4096 = vpop.f32.mrf.mxu0
      %v4097 = vadd.f32 0.0, %v4096
      %v4098 = vpop.f32.mrf.mxu0
      %v4099 = vpop.f32.mrf.mxu0
      %v4100 = vadd.f32 0.0, %v4099
      %v4101 = vpop.f32.mrf.mxu0
      %4102 = vmatprep.mubr.bf16.mxu0 0
      %4103 = vmatmul.mubr.bf16.gmra.mxu0 %v3963
      %v4104 = vpop.f32.mrf.mxu0
      %v4105 = vadd.f32 0.0, %v4104
      %v4106 = vpop.f32.mrf.mxu0
      %v4107 = vpop.f32.mrf.mxu0
      %v4108 = vadd.f32 0.0, %v4107
      %v4109 = vpop.f32.mrf.mxu0
      %4110 = vmatprep.mubr.bf16.mxu0 0
      %4111 = vmatmul.mubr.bf16.gmra.mxu0 %v3966
      %v4112 = vpop.f32.mrf.mxu0
      %v4113 = vadd.f32 0.0, %v4112
      %v4114 = vpop.f32.mrf.mxu0
      %v4115 = vpop.f32.mrf.mxu0
      %v4116 = vadd.f32 0.0, %v4115
      %v4117 = vpop.f32.mrf.mxu0
      %4118 = vmatprep.mubr.bf16.mxu0 0
      %4119 = vmatmul.mubr.bf16.gmra.mxu0 %v3969
      %v4120 = vpop.f32.mrf.mxu0
      %v4121 = vadd.f32 0.0, %v4120
      %v4122 = vpop.f32.mrf.mxu0
      %v4123 = vpop.f32.mrf.mxu0
      %v4124 = vadd.f32 0.0, %v4123
      %v4125 = vpop.f32.mrf.mxu0
      %4126 = vmatprep.mubr.bf16.mxu0 0
      %4127 = vmatmul.mubr.bf16.gmra.mxu0 %v3972
      %v4128 = vpop.f32.mrf.mxu0
      %v4129 = vadd.f32 0.0, %v4128
      %v4130 = vpop.f32.mrf.mxu0
      %v4131 = vpop.f32.mrf.mxu0
      %v4132 = vadd.f32 0.0, %v4131
      %v4133 = vpop.f32.mrf.mxu0
      %4134 = vdwg.mxu0
      %v4135 = vadd.f32 %v3381, %v4009
      %v4136 = vadd.f32 %v3382, %v4012
      %v4137 = vadd.f32 %v3383, %v4017
      %v4138 = vadd.f32 %v3384, %v4020
      %v4139 = vadd.f32 %v3385, %v4025
      %v4140 = vadd.f32 %v3386, %v4028
      %v4141 = vadd.f32 %v3387, %v4033
      %v4142 = vadd.f32 %v3388, %v4036
      %v4143 = vadd.f32 %v3389, %v4041
      %v4144 = vadd.f32 %v3390, %v4044
      %v4145 = vadd.f32 %v3391, %v4049
      %v4146 = vadd.f32 %v3392, %v4052
      %v4147 = vadd.f32 %v3393, %v4057
      %v4148 = vadd.f32 %v3394, %v4060
      %v4149 = vadd.f32 %v3395, %v4065
      %v4150 = vadd.f32 %v3396, %v4068
      %v4151 = vadd.f32 %v3397, %v4073
      %v4152 = vadd.f32 %v3398, %v4076
      %v4153 = vadd.f32 %v3399, %v4081
      %v4154 = vadd.f32 %v3400, %v4084
      %v4155 = vadd.f32 %v3401, %v4089
      %v4156 = vadd.f32 %v3402, %v4092
      %v4157 = vadd.f32 %v3403, %v4097
      %v4158 = vadd.f32 %v3404, %v4100
      %v4159 = vadd.f32 %v3405, %v4105
      %v4160 = vadd.f32 %v3406, %v4108
      %v4161 = vadd.f32 %v3407, %v4113
      %v4162 = vadd.f32 %v3408, %v4116
      %v4163 = vadd.f32 %v3409, %v4121
      %v4164 = vadd.f32 %v3410, %v4124
      %v4165 = vadd.f32 %v3411, %v4129
      %v4166 = vadd.f32 %v3412, %v4132
      %v4167 = vld [vmem:[%s815] sm:$0xe]
      %v4168 = vld [vmem:[%s815 + $0xc] sm:$0xe]
      %v4169 = vld [vmem:[%s815 + $0x18] sm:$0xe]
      %v4170 = vld [vmem:[%s815 + $0x24] sm:$0xe]
      %v4171 = vld [vmem:[%s815 + $0x30] sm:$0xe]
      %v4172 = vld [vmem:[%s815 + $0x3c] sm:$0xe]
      %v4173 = vld [vmem:[%s815 + $0x48] sm:$0xe]
      %v4174 = vld [vmem:[%s815 + $0x54] sm:$0xe]
      %v4175 = vld [vmem:[%s815 + $0x60] sm:$0xe]
      %v4176 = vld [vmem:[%s815 + $0x6c] sm:$0xe]
      %v4177 = vld [vmem:[%s815 + $0x78] sm:$0xe]
      %v4178 = vld [vmem:[%s815 + $0x84] sm:$0xe]
      %v4179 = vld [vmem:[%s815 + $0x90] sm:$0xe]
      %v4180 = vld [vmem:[%s815 + $0x9c] sm:$0xe]
      %v4181 = vld [vmem:[%s815 + $0xa8] sm:$0xe]
      %v4182 = vld [vmem:[%s815 + $0xb4] sm:$0xe]
      %v4231 = vrot.slane %v4167, 5
      %v4232 = vrot.slane %v4231, 4
      %v4233 = vrot.slane %v3414, 5
      %v4234 = vsel %vm2592, %v4232, %v4233
      %v4235 = vrot.slane %v4233, 4
      %v4236 = vrot.slane %v3415, 5
      %v4237 = vsel %vm2592, %v4235, %v4236
      %v4238 = vrot.slane %v4168, 5
      %v4239 = vrot.slane %v4238, 4
      %v4240 = vrot.slane %v3417, 5
      %v4241 = vsel %vm2592, %v4239, %v4240
      %v4242 = vrot.slane %v4240, 4
      %v4243 = vrot.slane %v3418, 5
      %v4244 = vsel %vm2592, %v4242, %v4243
      %v4245 = vrot.slane %v4169, 5
      %v4246 = vrot.slane %v4245, 4
      %v4247 = vrot.slane %v3420, 5
      %v4248 = vsel %vm2592, %v4246, %v4247
      %v4249 = vrot.slane %v4247, 4
      %v4250 = vrot.slane %v3421, 5
      %v4251 = vsel %vm2592, %v4249, %v4250
      %v4252 = vrot.slane %v4170, 5
      %v4253 = vrot.slane %v4252, 4
      %v4254 = vrot.slane %v3423, 5
      %v4255 = vsel %vm2592, %v4253, %v4254
      %v4256 = vrot.slane %v4254, 4
      %v4257 = vrot.slane %v3424, 5
      %v4258 = vsel %vm2592, %v4256, %v4257
      %v4259 = vrot.slane %v4171, 5
      %v4260 = vrot.slane %v4259, 4
      %v4261 = vrot.slane %v3426, 5
      %v4262 = vsel %vm2592, %v4260, %v4261
      %v4263 = vrot.slane %v4261, 4
      %v4264 = vrot.slane %v3427, 5
      %v4265 = vsel %vm2592, %v4263, %v4264
      %v4266 = vrot.slane %v4172, 5
      %v4267 = vrot.slane %v4266, 4
      %v4268 = vrot.slane %v3429, 5
      %v4269 = vsel %vm2592, %v4267, %v4268
      %v4270 = vrot.slane %v4268, 4
      %v4271 = vrot.slane %v3430, 5
      %v4272 = vsel %vm2592, %v4270, %v4271
      %v4273 = vrot.slane %v4173, 5
      %v4274 = vrot.slane %v4273, 4
      %v4275 = vrot.slane %v3432, 5
      %v4276 = vsel %vm2592, %v4274, %v4275
      %v4277 = vrot.slane %v4275, 4
      %v4278 = vrot.slane %v3433, 5
      %v4279 = vsel %vm2592, %v4277, %v4278
      %v4280 = vrot.slane %v4174, 5
      %v4281 = vrot.slane %v4280, 4
      %v4282 = vrot.slane %v3435, 5
      %v4283 = vsel %vm2592, %v4281, %v4282
      %v4284 = vrot.slane %v4282, 4
      %v4285 = vrot.slane %v3436, 5
      %v4286 = vsel %vm2592, %v4284, %v4285
      %v4287 = vrot.slane %v4175, 5
      %v4288 = vrot.slane %v4287, 4
      %v4289 = vrot.slane %v3438, 5
      %v4290 = vsel %vm2592, %v4288, %v4289
      %v4291 = vrot.slane %v4289, 4
      %v4292 = vrot.slane %v3439, 5
      %v4293 = vsel %vm2592, %v4291, %v4292
      %v4294 = vrot.slane %v4176, 5
      %v4295 = vrot.slane %v4294, 4
      %v4296 = vrot.slane %v3441, 5
      %v4297 = vsel %vm2592, %v4295, %v4296
      %v4298 = vrot.slane %v4296, 4
      %v4299 = vrot.slane %v3442, 5
      %v4300 = vsel %vm2592, %v4298, %v4299
      %v4301 = vrot.slane %v4177, 5
      %v4302 = vrot.slane %v4301, 4
      %v4303 = vrot.slane %v3444, 5
      %v4304 = vsel %vm2592, %v4302, %v4303
      %v4305 = vrot.slane %v4303, 4
      %v4306 = vrot.slane %v3445, 5
      %v4307 = vsel %vm2592, %v4305, %v4306
      %v4308 = vrot.slane %v4178, 5
      %v4309 = vrot.slane %v4308, 4
      %v4310 = vrot.slane %v3447, 5
      %v4311 = vsel %vm2592, %v4309, %v4310
      %v4312 = vrot.slane %v4310, 4
      %v4313 = vrot.slane %v3448, 5
      %v4314 = vsel %vm2592, %v4312, %v4313
      %v4315 = vrot.slane %v4179, 5
      %v4316 = vrot.slane %v4315, 4
      %v4317 = vrot.slane %v3450, 5
      %v4318 = vsel %vm2592, %v4316, %v4317
      %v4319 = vrot.slane %v4317, 4
      %v4320 = vrot.slane %v3451, 5
      %v4321 = vsel %vm2592, %v4319, %v4320
      %v4322 = vrot.slane %v4180, 5
      %v4323 = vrot.slane %v4322, 4
      %v4324 = vrot.slane %v3453, 5
      %v4325 = vsel %vm2592, %v4323, %v4324
      %v4326 = vrot.slane %v4324, 4
      %v4327 = vrot.slane %v3454, 5
      %v4328 = vsel %vm2592, %v4326, %v4327
      %v4329 = vrot.slane %v4181, 5
      %v4330 = vrot.slane %v4329, 4
      %v4331 = vrot.slane %v3456, 5
      %v4332 = vsel %vm2592, %v4330, %v4331
      %v4333 = vrot.slane %v4331, 4
      %v4334 = vrot.slane %v3457, 5
      %v4335 = vsel %vm2592, %v4333, %v4334
      %v4336 = vrot.slane %v4182, 5
      %v4337 = vrot.slane %v4336, 4
      %v4338 = vrot.slane %v3459, 5
      %v4339 = vsel %vm2592, %v4337, %v4338
      %v4340 = vrot.slane %v4338, 4
      %v4341 = vrot.slane %v3460, 5
      %v4342 = vsel %vm2592, %v4340, %v4341
      %s4343 = scalar_lea.vmem %s2, 160
      %v4344 = vld [vmem:[%s4343] sm:$0xf]
      %v4345 = vld [vmem:[%s4343 + $0x4] sm:$0xf]
      %v4346 = vld [vmem:[%s4343 + $0x8] sm:$0xf]
      %v4347 = vld [vmem:[%s4343 + $0xc] sm:$0xf]
      %v4348 = vld [vmem:[%s4343 + $0x10] sm:$0xf]
      %v4349 = vld [vmem:[%s4343 + $0x14] sm:$0xf]
      %v4350 = vld [vmem:[%s4343 + $0x18] sm:$0xf]
      %v4351 = vld [vmem:[%s4343 + $0x1c] sm:$0xf]
      %v4352 = vunpack.c.l.b16 %v4234
      %v4353 = vunpack.c.l.b16 %v4237
      %v4354 = vunpack.c.l.b16 %v4241
      %v4355 = vunpack.c.l.b16 %v4244
      %v4356 = vunpack.c.l.b16 %v4248
      %v4357 = vunpack.c.l.b16 %v4251
      %v4358 = vunpack.c.l.b16 %v4255
      %v4359 = vunpack.c.l.b16 %v4258
      %v4360 = vunpack.c.l.b16 %v4262
      %v4361 = vunpack.c.l.b16 %v4265
      %v4362 = vunpack.c.l.b16 %v4269
      %v4363 = vunpack.c.l.b16 %v4272
      %v4364 = vunpack.c.l.b16 %v4276
      %v4365 = vunpack.c.l.b16 %v4279
      %v4366 = vunpack.c.l.b16 %v4283
      %v4367 = vunpack.c.l.b16 %v4286
      %v4368 = vunpack.c.l.b16 %v4290
      %v4369 = vunpack.c.l.b16 %v4293
      %v4370 = vunpack.c.l.b16 %v4297
      %v4371 = vunpack.c.l.b16 %v4300
      %v4372 = vunpack.c.l.b16 %v4304
      %v4373 = vunpack.c.l.b16 %v4307
      %v4374 = vunpack.c.l.b16 %v4311
      %v4375 = vunpack.c.l.b16 %v4314
      %v4376 = vunpack.c.l.b16 %v4318
      %v4377 = vunpack.c.l.b16 %v4321
      %v4378 = vunpack.c.l.b16 %v4325
      %v4379 = vunpack.c.l.b16 %v4328
      %v4380 = vunpack.c.l.b16 %v4332
      %v4381 = vunpack.c.l.b16 %v4335
      %v4382 = vunpack.c.l.b16 %v4339
      %v4383 = vunpack.c.l.b16 %v4342
      %v4384 = vpack.c.b16 %v4353, %v4352
      %v4385 = vpack.c.b16 %v4355, %v4354
      %v4386 = vpack.c.b16 %v4357, %v4356
      %v4387 = vpack.c.b16 %v4359, %v4358
      %v4388 = vpack.c.b16 %v4361, %v4360
      %v4389 = vpack.c.b16 %v4363, %v4362
      %v4390 = vpack.c.b16 %v4365, %v4364
      %v4391 = vpack.c.b16 %v4367, %v4366
      %v4392 = vpack.c.b16 %v4369, %v4368
      %v4393 = vpack.c.b16 %v4371, %v4370
      %v4394 = vpack.c.b16 %v4373, %v4372
      %v4395 = vpack.c.b16 %v4375, %v4374
      %v4396 = vpack.c.b16 %v4377, %v4376
      %v4397 = vpack.c.b16 %v4379, %v4378
      %v4398 = vpack.c.b16 %v4381, %v4380
      %v4399 = vpack.c.b16 %v4383, %v4382
      %v4408 = vunpack.c.l.b16 %v4344
      %v4409 = vunpack.c.l.b16 %v4345
      %v4410 = vunpack.c.l.b16 %v4346
      %v4411 = vunpack.c.l.b16 %v4347
      %v4412 = vunpack.c.l.b16 %v4348
      %v4413 = vunpack.c.l.b16 %v4349
      %v4414 = vunpack.c.l.b16 %v4350
      %v4415 = vunpack.c.l.b16 %v4351
      %v4416 = vpack.c.b16 %v4409, %v4408
      %v4417 = vpack.c.b16 %v4411, %v4410
      %v4418 = vpack.c.b16 %v4413, %v4412
      %v4419 = vpack.c.b16 %v4415, %v4414
      %v4425 = vsel %vm2019, %v4384, 0
      %v4428 = vsel %vm2019, %v4385, 0
      %v4431 = vsel %vm2019, %v4386, 0
      %v4434 = vsel %vm2019, %v4387, 0
      %v4437 = vsel %vm2019, %v4388, 0
      %v4440 = vsel %vm2019, %v4389, 0
      %v4443 = vsel %vm2019, %v4390, 0
      %v4446 = vsel %vm2019, %v4391, 0
      %v4449 = vsel %vm2019, %v4392, 0
      %v4452 = vsel %vm2019, %v4393, 0
      %v4455 = vsel %vm2019, %v4394, 0
      %v4458 = vsel %vm2019, %v4395, 0
      %v4461 = vsel %vm2019, %v4396, 0
      %v4464 = vsel %vm2019, %v4397, 0
      %v4467 = vsel %vm2019, %v4398, 0
      %v4470 = vsel %vm2019, %v4399, 0
      %4472 = vmatprep.subr.bf16.mxu0 0
      %4473 = vmatpush1.bf16.msra.mxu0 0
      %4474 = vmatprep.subr.bf16.mxu0 0
      %4475 = vmatpush1.bf16.msra.mxu0 0
      %4476 = vmatprep.subr.bf16.mxu0 0
      %4477 = vmatpush1.bf16.msra.mxu0 0
      %4478 = vmatprep.subr.bf16.mxu0 0
      %4479 = vmatpush1.bf16.msra.mxu0 0
      %4480 = vmatprep.subr.bf16.mxu0 0
      %4481 = vmatpush1.bf16.msra.mxu0 %v4419
      %4482 = vmatprep.subr.bf16.mxu0 0
      %4483 = vmatpush1.bf16.msra.mxu0 %v4418
      %4484 = vmatprep.subr.bf16.mxu0 0
      %4485 = vmatpush1.bf16.msra.mxu0 %v4417
      %4486 = vmatprep.subr.bf16.mxu0 0
      %4487 = vmatpush1.bf16.msra.mxu0 %v4416
      %4488 = vmatprep.subr.bf16.mxu0 0
      %4489 = vmatpush2.bf16.msra.mxu0 0
      %4490 = vmatprep.subr.bf16.mxu0 0
      %4491 = vmatpush2.bf16.msra.mxu0 0
      %4492 = vmatprep.subr.bf16.mxu0 0
      %4493 = vmatpush2.bf16.msra.mxu0 0
      %4494 = vmatprep.subr.bf16.mxu0 0
      %4495 = vmatpush2.bf16.msra.mxu0 0
      %4496 = vmatprep.subr.bf16.mxu0 0
      %4497 = vmatpush2.bf16.msra.mxu0 0
      %4498 = vmatprep.subr.bf16.mxu0 0
      %4499 = vmatpush2.bf16.msra.mxu0 0
      %4500 = vmatprep.subr.bf16.mxu0 0
      %4501 = vmatpush2.bf16.msra.mxu0 0
      %4502 = vmatprep.subr.bf16.mxu0 0
      %4503 = vmatpush2.bf16.msra.mxu0 0
      %4504 = vmatprep.mubr.bf16.mxu0 0
      %4505 = vmatmul.mubr.bf16.gmra.mxu0 %v4425
      %v4506 = vpop.f32.mrf.mxu0
      %v4507 = vadd.f32 0.0, %v4506
      %v4508 = vpop.f32.mrf.mxu0
      %v4509 = vpop.f32.mrf.mxu0
      %v4510 = vadd.f32 0.0, %v4509
      %v4511 = vpop.f32.mrf.mxu0
      %4512 = vmatprep.mubr.bf16.mxu0 0
      %4513 = vmatmul.mubr.bf16.gmra.mxu0 %v4428
      %v4514 = vpop.f32.mrf.mxu0
      %v4515 = vadd.f32 0.0, %v4514
      %v4516 = vpop.f32.mrf.mxu0
      %v4517 = vpop.f32.mrf.mxu0
      %v4518 = vadd.f32 0.0, %v4517
      %v4519 = vpop.f32.mrf.mxu0
      %4520 = vmatprep.mubr.bf16.mxu0 0
      %4521 = vmatmul.mubr.bf16.gmra.mxu0 %v4431
      %v4522 = vpop.f32.mrf.mxu0
      %v4523 = vadd.f32 0.0, %v4522
      %v4524 = vpop.f32.mrf.mxu0
      %v4525 = vpop.f32.mrf.mxu0
      %v4526 = vadd.f32 0.0, %v4525
      %v4527 = vpop.f32.mrf.mxu0
      %4528 = vmatprep.mubr.bf16.mxu0 0
      %4529 = vmatmul.mubr.bf16.gmra.mxu0 %v4434
      %v4530 = vpop.f32.mrf.mxu0
      %v4531 = vadd.f32 0.0, %v4530
      %v4532 = vpop.f32.mrf.mxu0
      %v4533 = vpop.f32.mrf.mxu0
      %v4534 = vadd.f32 0.0, %v4533
      %v4535 = vpop.f32.mrf.mxu0
      %4536 = vmatprep.mubr.bf16.mxu0 0
      %4537 = vmatmul.mubr.bf16.gmra.mxu0 %v4437
      %v4538 = vpop.f32.mrf.mxu0
      %v4539 = vadd.f32 0.0, %v4538
      %v4540 = vpop.f32.mrf.mxu0
      %v4541 = vpop.f32.mrf.mxu0
      %v4542 = vadd.f32 0.0, %v4541
      %v4543 = vpop.f32.mrf.mxu0
      %4544 = vmatprep.mubr.bf16.mxu0 0
      %4545 = vmatmul.mubr.bf16.gmra.mxu0 %v4440
      %v4546 = vpop.f32.mrf.mxu0
      %v4547 = vadd.f32 0.0, %v4546
      %v4548 = vpop.f32.mrf.mxu0
      %v4549 = vpop.f32.mrf.mxu0
      %v4550 = vadd.f32 0.0, %v4549
      %v4551 = vpop.f32.mrf.mxu0
      %4552 = vmatprep.mubr.bf16.mxu0 0
      %4553 = vmatmul.mubr.bf16.gmra.mxu0 %v4443
      %v4554 = vpop.f32.mrf.mxu0
      %v4555 = vadd.f32 0.0, %v4554
      %v4556 = vpop.f32.mrf.mxu0
      %v4557 = vpop.f32.mrf.mxu0
      %v4558 = vadd.f32 0.0, %v4557
      %v4559 = vpop.f32.mrf.mxu0
      %4560 = vmatprep.mubr.bf16.mxu0 0
      %4561 = vmatmul.mubr.bf16.gmra.mxu0 %v4446
      %v4562 = vpop.f32.mrf.mxu0
      %v4563 = vadd.f32 0.0, %v4562
      %v4564 = vpop.f32.mrf.mxu0
      %v4565 = vpop.f32.mrf.mxu0
      %v4566 = vadd.f32 0.0, %v4565
      %v4567 = vpop.f32.mrf.mxu0
      %4568 = vmatprep.mubr.bf16.mxu0 0
      %4569 = vmatmul.mubr.bf16.gmra.mxu0 %v4449
      %v4570 = vpop.f32.mrf.mxu0
      %v4571 = vadd.f32 0.0, %v4570
      %v4572 = vpop.f32.mrf.mxu0
      %v4573 = vpop.f32.mrf.mxu0
      %v4574 = vadd.f32 0.0, %v4573
      %v4575 = vpop.f32.mrf.mxu0
      %4576 = vmatprep.mubr.bf16.mxu0 0
      %4577 = vmatmul.mubr.bf16.gmra.mxu0 %v4452
      %v4578 = vpop.f32.mrf.mxu0
      %v4579 = vadd.f32 0.0, %v4578
      %v4580 = vpop.f32.mrf.mxu0
      %v4581 = vpop.f32.mrf.mxu0
      %v4582 = vadd.f32 0.0, %v4581
      %v4583 = vpop.f32.mrf.mxu0
      %4584 = vmatprep.mubr.bf16.mxu0 0
      %4585 = vmatmul.mubr.bf16.gmra.mxu0 %v4455
      %v4586 = vpop.f32.mrf.mxu0
      %v4587 = vadd.f32 0.0, %v4586
      %v4588 = vpop.f32.mrf.mxu0
      %v4589 = vpop.f32.mrf.mxu0
      %v4590 = vadd.f32 0.0, %v4589
      %v4591 = vpop.f32.mrf.mxu0
      %4592 = vmatprep.mubr.bf16.mxu0 0
      %4593 = vmatmul.mubr.bf16.gmra.mxu0 %v4458
      %v4594 = vpop.f32.mrf.mxu0
      %v4595 = vadd.f32 0.0, %v4594
      %v4596 = vpop.f32.mrf.mxu0
      %v4597 = vpop.f32.mrf.mxu0
      %v4598 = vadd.f32 0.0, %v4597
      %v4599 = vpop.f32.mrf.mxu0
      %4600 = vmatprep.mubr.bf16.mxu0 0
      %4601 = vmatmul.mubr.bf16.gmra.mxu0 %v4461
      %v4602 = vpop.f32.mrf.mxu0
      %v4603 = vadd.f32 0.0, %v4602
      %v4604 = vpop.f32.mrf.mxu0
      %v4605 = vpop.f32.mrf.mxu0
      %v4606 = vadd.f32 0.0, %v4605
      %v4607 = vpop.f32.mrf.mxu0
      %4608 = vmatprep.mubr.bf16.mxu0 0
      %4609 = vmatmul.mubr.bf16.gmra.mxu0 %v4464
      %v4610 = vpop.f32.mrf.mxu0
      %v4611 = vadd.f32 0.0, %v4610
      %v4612 = vpop.f32.mrf.mxu0
      %v4613 = vpop.f32.mrf.mxu0
      %v4614 = vadd.f32 0.0, %v4613
      %v4615 = vpop.f32.mrf.mxu0
      %4616 = vmatprep.mubr.bf16.mxu0 0
      %4617 = vmatmul.mubr.bf16.gmra.mxu0 %v4467
      %v4618 = vpop.f32.mrf.mxu0
      %v4619 = vadd.f32 0.0, %v4618
      %v4620 = vpop.f32.mrf.mxu0
      %v4621 = vpop.f32.mrf.mxu0
      %v4622 = vadd.f32 0.0, %v4621
      %v4623 = vpop.f32.mrf.mxu0
      %4624 = vmatprep.mubr.bf16.mxu0 0
      %4625 = vmatmul.mubr.bf16.gmra.mxu0 %v4470
      %v4626 = vpop.f32.mrf.mxu0
      %v4627 = vadd.f32 0.0, %v4626
      %v4628 = vpop.f32.mrf.mxu0
      %v4629 = vpop.f32.mrf.mxu0
      %v4630 = vadd.f32 0.0, %v4629
      %v4631 = vpop.f32.mrf.mxu0
      %4632 = vdwg.mxu0
      %v4633 = vadd.f32 %v4135, %v4507
      %v4634 = vadd.f32 %v4136, %v4510
      %v4635 = vadd.f32 %v4137, %v4515
      %v4636 = vadd.f32 %v4138, %v4518
      %v4637 = vadd.f32 %v4139, %v4523
      %v4638 = vadd.f32 %v4140, %v4526
      %v4639 = vadd.f32 %v4141, %v4531
      %v4640 = vadd.f32 %v4142, %v4534
      %v4641 = vadd.f32 %v4143, %v4539
      %v4642 = vadd.f32 %v4144, %v4542
      %v4643 = vadd.f32 %v4145, %v4547
      %v4644 = vadd.f32 %v4146, %v4550
      %v4645 = vadd.f32 %v4147, %v4555
      %v4646 = vadd.f32 %v4148, %v4558
      %v4647 = vadd.f32 %v4149, %v4563
      %v4648 = vadd.f32 %v4150, %v4566
      %v4649 = vadd.f32 %v4151, %v4571
      %v4650 = vadd.f32 %v4152, %v4574
      %v4651 = vadd.f32 %v4153, %v4579
      %v4652 = vadd.f32 %v4154, %v4582
      %v4653 = vadd.f32 %v4155, %v4587
      %v4654 = vadd.f32 %v4156, %v4590
      %v4655 = vadd.f32 %v4157, %v4595
      %v4656 = vadd.f32 %v4158, %v4598
      %v4657 = vadd.f32 %v4159, %v4603
      %v4658 = vadd.f32 %v4160, %v4606
      %v4659 = vadd.f32 %v4161, %v4611
      %v4660 = vadd.f32 %v4162, %v4614
      %v4661 = vadd.f32 %v4163, %v4619
      %v4662 = vadd.f32 %v4164, %v4622
      %v4663 = vadd.f32 %v4165, %v4627
      %v4664 = vadd.f32 %v4166, %v4630
      %s4665 = scalar_lea.vmem [#allocation2], 24
      %v4666 = vld [vmem:[%s4665] sm:$0xf]
      %v4667 = vld [vmem:[%s4665 + $0x4] sm:$0xf]
      %v4668 = vld [vmem:[%s4665 + $0xc] sm:$0xf]
      %v4669 = vld [vmem:[%s4665 + $0x10] sm:$0xf]
      %v4670 = vld [vmem:[%s4665 + $0x18] sm:$0xf]
      %v4671 = vld [vmem:[%s4665 + $0x1c] sm:$0xf]
      %v4672 = vld [vmem:[%s4665 + $0x24] sm:$0xf]
      %v4673 = vld [vmem:[%s4665 + $0x28] sm:$0xf]
      %v4674 = vld [vmem:[%s4665 + $0x30] sm:$0xf]
      %v4675 = vld [vmem:[%s4665 + $0x34] sm:$0xf]
      %v4676 = vld [vmem:[%s4665 + $0x3c] sm:$0xf]
      %v4677 = vld [vmem:[%s4665 + $0x40] sm:$0xf]
      %v4678 = vld [vmem:[%s4665 + $0x48] sm:$0xf]
      %v4679 = vld [vmem:[%s4665 + $0x4c] sm:$0xf]
      %v4680 = vld [vmem:[%s4665 + $0x54] sm:$0xf]
      %v4681 = vld [vmem:[%s4665 + $0x58] sm:$0xf]
      %v4682 = vld [vmem:[%s4665 + $0x60] sm:$0xf]
      %v4683 = vld [vmem:[%s4665 + $0x64] sm:$0xf]
      %v4684 = vld [vmem:[%s4665 + $0x6c] sm:$0xf]
      %v4685 = vld [vmem:[%s4665 + $0x70] sm:$0xf]
      %v4686 = vld [vmem:[%s4665 + $0x78] sm:$0xf]
      %v4687 = vld [vmem:[%s4665 + $0x7c] sm:$0xf]
      %v4688 = vld [vmem:[%s4665 + $0x84] sm:$0xf]
      %v4689 = vld [vmem:[%s4665 + $0x88] sm:$0xf]
      %v4690 = vld [vmem:[%s4665 + $0x90] sm:$0xf]
      %v4691 = vld [vmem:[%s4665 + $0x94] sm:$0xf]
      %v4692 = vld [vmem:[%s4665 + $0x9c] sm:$0xf]
      %v4693 = vld [vmem:[%s4665 + $0xa0] sm:$0xf]
      %v4694 = vld [vmem:[%s4665 + $0xa8] sm:$0xf]
      %v4695 = vld [vmem:[%s4665 + $0xac] sm:$0xf]
      %v4696 = vld [vmem:[%s4665 + $0xb4] sm:$0xf]
      %v4697 = vld [vmem:[%s4665 + $0xb8] sm:$0xf]
      %s4698 = scalar_lea.vmem %s2, 192
      %v4699 = vld [vmem:[%s4698] sm:$0xf]
      %v4700 = vld [vmem:[%s4698 + $0x4] sm:$0xf]
      %v4701 = vld [vmem:[%s4698 + $0x8] sm:$0xf]
      %v4702 = vld [vmem:[%s4698 + $0xc] sm:$0xf]
      %v4703 = vld [vmem:[%s4698 + $0x10] sm:$0xf]
      %v4704 = vld [vmem:[%s4698 + $0x14] sm:$0xf]
      %v4705 = vld [vmem:[%s4698 + $0x18] sm:$0xf]
      %v4706 = vld [vmem:[%s4698 + $0x1c] sm:$0xf]
      %v4739 = vunpack.c.l.b16 %v4666
      %v4740 = vunpack.c.l.b16 %v4667
      %v4741 = vunpack.c.l.b16 %v4668
      %v4742 = vunpack.c.l.b16 %v4669
      %v4743 = vunpack.c.l.b16 %v4670
      %v4744 = vunpack.c.l.b16 %v4671
      %v4745 = vunpack.c.l.b16 %v4672
      %v4746 = vunpack.c.l.b16 %v4673
      %v4747 = vunpack.c.l.b16 %v4674
      %v4748 = vunpack.c.l.b16 %v4675
      %v4749 = vunpack.c.l.b16 %v4676
      %v4750 = vunpack.c.l.b16 %v4677
      %v4751 = vunpack.c.l.b16 %v4678
      %v4752 = vunpack.c.l.b16 %v4679
      %v4753 = vunpack.c.l.b16 %v4680
      %v4754 = vunpack.c.l.b16 %v4681
      %v4755 = vunpack.c.l.b16 %v4682
      %v4756 = vunpack.c.l.b16 %v4683
      %v4757 = vunpack.c.l.b16 %v4684
      %v4758 = vunpack.c.l.b16 %v4685
      %v4759 = vunpack.c.l.b16 %v4686
      %v4760 = vunpack.c.l.b16 %v4687
      %v4761 = vunpack.c.l.b16 %v4688
      %v4762 = vunpack.c.l.b16 %v4689
      %v4763 = vunpack.c.l.b16 %v4690
      %v4764 = vunpack.c.l.b16 %v4691
      %v4765 = vunpack.c.l.b16 %v4692
      %v4766 = vunpack.c.l.b16 %v4693
      %v4767 = vunpack.c.l.b16 %v4694
      %v4768 = vunpack.c.l.b16 %v4695
      %v4769 = vunpack.c.l.b16 %v4696
      %v4770 = vunpack.c.l.b16 %v4697
      %v4771 = vpack.c.b16 %v4740, %v4739
      %v4772 = vpack.c.b16 %v4742, %v4741
      %v4773 = vpack.c.b16 %v4744, %v4743
      %v4774 = vpack.c.b16 %v4746, %v4745
      %v4775 = vpack.c.b16 %v4748, %v4747
      %v4776 = vpack.c.b16 %v4750, %v4749
      %v4777 = vpack.c.b16 %v4752, %v4751
      %v4778 = vpack.c.b16 %v4754, %v4753
      %v4779 = vpack.c.b16 %v4756, %v4755
      %v4780 = vpack.c.b16 %v4758, %v4757
      %v4781 = vpack.c.b16 %v4760, %v4759
      %v4782 = vpack.c.b16 %v4762, %v4761
      %v4783 = vpack.c.b16 %v4764, %v4763
      %v4784 = vpack.c.b16 %v4766, %v4765
      %v4785 = vpack.c.b16 %v4768, %v4767
      %v4786 = vpack.c.b16 %v4770, %v4769
      %v4795 = vunpack.c.l.b16 %v4699
      %v4796 = vunpack.c.l.b16 %v4700
      %v4797 = vunpack.c.l.b16 %v4701
      %v4798 = vunpack.c.l.b16 %v4702
      %v4799 = vunpack.c.l.b16 %v4703
      %v4800 = vunpack.c.l.b16 %v4704
      %v4801 = vunpack.c.l.b16 %v4705
      %v4802 = vunpack.c.l.b16 %v4706
      %v4803 = vpack.c.b16 %v4796, %v4795
      %v4804 = vpack.c.b16 %v4798, %v4797
      %v4805 = vpack.c.b16 %v4800, %v4799
      %v4806 = vpack.c.b16 %v4802, %v4801
      %v4812 = vsel %vm2019, %v4771, 0
      %v4815 = vsel %vm2019, %v4772, 0
      %v4818 = vsel %vm2019, %v4773, 0
      %v4821 = vsel %vm2019, %v4774, 0
      %v4824 = vsel %vm2019, %v4775, 0
      %v4827 = vsel %vm2019, %v4776, 0
      %v4830 = vsel %vm2019, %v4777, 0
      %v4833 = vsel %vm2019, %v4778, 0
      %v4836 = vsel %vm2019, %v4779, 0
      %v4839 = vsel %vm2019, %v4780, 0
      %v4842 = vsel %vm2019, %v4781, 0
      %v4845 = vsel %vm2019, %v4782, 0
      %v4848 = vsel %vm2019, %v4783, 0
      %v4851 = vsel %vm2019, %v4784, 0
      %v4854 = vsel %vm2019, %v4785, 0
      %v4857 = vsel %vm2019, %v4786, 0
      %4859 = vmatprep.subr.bf16.mxu0 0
      %4860 = vmatpush1.bf16.msra.mxu0 0
      %4861 = vmatprep.subr.bf16.mxu0 0
      %4862 = vmatpush1.bf16.msra.mxu0 0
      %4863 = vmatprep.subr.bf16.mxu0 0
      %4864 = vmatpush1.bf16.msra.mxu0 0
      %4865 = vmatprep.subr.bf16.mxu0 0
      %4866 = vmatpush1.bf16.msra.mxu0 0
      %4867 = vmatprep.subr.bf16.mxu0 0
      %4868 = vmatpush1.bf16.msra.mxu0 %v4806
      %4869 = vmatprep.subr.bf16.mxu0 0
      %4870 = vmatpush1.bf16.msra.mxu0 %v4805
      %4871 = vmatprep.subr.bf16.mxu0 0
      %4872 = vmatpush1.bf16.msra.mxu0 %v4804
      %4873 = vmatprep.subr.bf16.mxu0 0
      %4874 = vmatpush1.bf16.msra.mxu0 %v4803
      %4875 = vmatprep.subr.bf16.mxu0 0
      %4876 = vmatpush2.bf16.msra.mxu0 0
      %4877 = vmatprep.subr.bf16.mxu0 0
      %4878 = vmatpush2.bf16.msra.mxu0 0
      %4879 = vmatprep.subr.bf16.mxu0 0
      %4880 = vmatpush2.bf16.msra.mxu0 0
      %4881 = vmatprep.subr.bf16.mxu0 0
      %4882 = vmatpush2.bf16.msra.mxu0 0
      %4883 = vmatprep.subr.bf16.mxu0 0
      %4884 = vmatpush2.bf16.msra.mxu0 0
      %4885 = vmatprep.subr.bf16.mxu0 0
      %4886 = vmatpush2.bf16.msra.mxu0 0
      %4887 = vmatprep.subr.bf16.mxu0 0
      %4888 = vmatpush2.bf16.msra.mxu0 0
      %4889 = vmatprep.subr.bf16.mxu0 0
      %4890 = vmatpush2.bf16.msra.mxu0 0
      %4891 = vmatprep.mubr.bf16.mxu0 0
      %4892 = vmatmul.mubr.bf16.gmra.mxu0 %v4812
      %v4893 = vpop.f32.mrf.mxu0
      %v4894 = vadd.f32 0.0, %v4893
      %v4895 = vpop.f32.mrf.mxu0
      %v4896 = vpop.f32.mrf.mxu0
      %v4897 = vadd.f32 0.0, %v4896
      %v4898 = vpop.f32.mrf.mxu0
      %4899 = vmatprep.mubr.bf16.mxu0 0
      %4900 = vmatmul.mubr.bf16.gmra.mxu0 %v4815
      %v4901 = vpop.f32.mrf.mxu0
      %v4902 = vadd.f32 0.0, %v4901
      %v4903 = vpop.f32.mrf.mxu0
      %v4904 = vpop.f32.mrf.mxu0
      %v4905 = vadd.f32 0.0, %v4904
      %v4906 = vpop.f32.mrf.mxu0
      %4907 = vmatprep.mubr.bf16.mxu0 0
      %4908 = vmatmul.mubr.bf16.gmra.mxu0 %v4818
      %v4909 = vpop.f32.mrf.mxu0
      %v4910 = vadd.f32 0.0, %v4909
      %v4911 = vpop.f32.mrf.mxu0
      %v4912 = vpop.f32.mrf.mxu0
      %v4913 = vadd.f32 0.0, %v4912
      %v4914 = vpop.f32.mrf.mxu0
      %4915 = vmatprep.mubr.bf16.mxu0 0
      %4916 = vmatmul.mubr.bf16.gmra.mxu0 %v4821
      %v4917 = vpop.f32.mrf.mxu0
      %v4918 = vadd.f32 0.0, %v4917
      %v4919 = vpop.f32.mrf.mxu0
      %v4920 = vpop.f32.mrf.mxu0
      %v4921 = vadd.f32 0.0, %v4920
      %v4922 = vpop.f32.mrf.mxu0
      %4923 = vmatprep.mubr.bf16.mxu0 0
      %4924 = vmatmul.mubr.bf16.gmra.mxu0 %v4824
      %v4925 = vpop.f32.mrf.mxu0
      %v4926 = vadd.f32 0.0, %v4925
      %v4927 = vpop.f32.mrf.mxu0
      %v4928 = vpop.f32.mrf.mxu0
      %v4929 = vadd.f32 0.0, %v4928
      %v4930 = vpop.f32.mrf.mxu0
      %4931 = vmatprep.mubr.bf16.mxu0 0
      %4932 = vmatmul.mubr.bf16.gmra.mxu0 %v4827
      %v4933 = vpop.f32.mrf.mxu0
      %v4934 = vadd.f32 0.0, %v4933
      %v4935 = vpop.f32.mrf.mxu0
      %v4936 = vpop.f32.mrf.mxu0
      %v4937 = vadd.f32 0.0, %v4936
      %v4938 = vpop.f32.mrf.mxu0
      %4939 = vmatprep.mubr.bf16.mxu0 0
      %4940 = vmatmul.mubr.bf16.gmra.mxu0 %v4830
      %v4941 = vpop.f32.mrf.mxu0
      %v4942 = vadd.f32 0.0, %v4941
      %v4943 = vpop.f32.mrf.mxu0
      %v4944 = vpop.f32.mrf.mxu0
      %v4945 = vadd.f32 0.0, %v4944
      %v4946 = vpop.f32.mrf.mxu0
      %4947 = vmatprep.mubr.bf16.mxu0 0
      %4948 = vmatmul.mubr.bf16.gmra.mxu0 %v4833
      %v4949 = vpop.f32.mrf.mxu0
      %v4950 = vadd.f32 0.0, %v4949
      %v4951 = vpop.f32.mrf.mxu0
      %v4952 = vpop.f32.mrf.mxu0
      %v4953 = vadd.f32 0.0, %v4952
      %v4954 = vpop.f32.mrf.mxu0
      %4955 = vmatprep.mubr.bf16.mxu0 0
      %4956 = vmatmul.mubr.bf16.gmra.mxu0 %v4836
      %v4957 = vpop.f32.mrf.mxu0
      %v4958 = vadd.f32 0.0, %v4957
      %v4959 = vpop.f32.mrf.mxu0
      %v4960 = vpop.f32.mrf.mxu0
      %v4961 = vadd.f32 0.0, %v4960
      %v4962 = vpop.f32.mrf.mxu0
      %4963 = vmatprep.mubr.bf16.mxu0 0
      %4964 = vmatmul.mubr.bf16.gmra.mxu0 %v4839
      %v4965 = vpop.f32.mrf.mxu0
      %v4966 = vadd.f32 0.0, %v4965
      %v4967 = vpop.f32.mrf.mxu0
      %v4968 = vpop.f32.mrf.mxu0
      %v4969 = vadd.f32 0.0, %v4968
      %v4970 = vpop.f32.mrf.mxu0
      %4971 = vmatprep.mubr.bf16.mxu0 0
      %4972 = vmatmul.mubr.bf16.gmra.mxu0 %v4842
      %v4973 = vpop.f32.mrf.mxu0
      %v4974 = vadd.f32 0.0, %v4973
      %v4975 = vpop.f32.mrf.mxu0
      %v4976 = vpop.f32.mrf.mxu0
      %v4977 = vadd.f32 0.0, %v4976
      %v4978 = vpop.f32.mrf.mxu0
      %4979 = vmatprep.mubr.bf16.mxu0 0
      %4980 = vmatmul.mubr.bf16.gmra.mxu0 %v4845
      %v4981 = vpop.f32.mrf.mxu0
      %v4982 = vadd.f32 0.0, %v4981
      %v4983 = vpop.f32.mrf.mxu0
      %v4984 = vpop.f32.mrf.mxu0
      %v4985 = vadd.f32 0.0, %v4984
      %v4986 = vpop.f32.mrf.mxu0
      %4987 = vmatprep.mubr.bf16.mxu0 0
      %4988 = vmatmul.mubr.bf16.gmra.mxu0 %v4848
      %v4989 = vpop.f32.mrf.mxu0
      %v4990 = vadd.f32 0.0, %v4989
      %v4991 = vpop.f32.mrf.mxu0
      %v4992 = vpop.f32.mrf.mxu0
      %v4993 = vadd.f32 0.0, %v4992
      %v4994 = vpop.f32.mrf.mxu0
      %4995 = vmatprep.mubr.bf16.mxu0 0
      %4996 = vmatmul.mubr.bf16.gmra.mxu0 %v4851
      %v4997 = vpop.f32.mrf.mxu0
      %v4998 = vadd.f32 0.0, %v4997
      %v4999 = vpop.f32.mrf.mxu0
      %v5000 = vpop.f32.mrf.mxu0
      %v5001 = vadd.f32 0.0, %v5000
      %v5002 = vpop.f32.mrf.mxu0
      %5003 = vmatprep.mubr.bf16.mxu0 0
      %5004 = vmatmul.mubr.bf16.gmra.mxu0 %v4854
      %v5005 = vpop.f32.mrf.mxu0
      %v5006 = vadd.f32 0.0, %v5005
      %v5007 = vpop.f32.mrf.mxu0
      %v5008 = vpop.f32.mrf.mxu0
      %v5009 = vadd.f32 0.0, %v5008
      %v5010 = vpop.f32.mrf.mxu0
      %5011 = vmatprep.mubr.bf16.mxu0 0
      %5012 = vmatmul.mubr.bf16.gmra.mxu0 %v4857
      %v5013 = vpop.f32.mrf.mxu0
      %v5014 = vadd.f32 0.0, %v5013
      %v5015 = vpop.f32.mrf.mxu0
      %v5016 = vpop.f32.mrf.mxu0
      %v5017 = vadd.f32 0.0, %v5016
      %v5018 = vpop.f32.mrf.mxu0
      %5019 = vdwg.mxu0
      %v5020 = vadd.f32 %v4633, %v4894
      %v5021 = vadd.f32 %v4634, %v4897
      %v5022 = vadd.f32 %v4635, %v4902
      %v5023 = vadd.f32 %v4636, %v4905
      %v5024 = vadd.f32 %v4637, %v4910
      %v5025 = vadd.f32 %v4638, %v4913
      %v5026 = vadd.f32 %v4639, %v4918
      %v5027 = vadd.f32 %v4640, %v4921
      %v5028 = vadd.f32 %v4641, %v4926
      %v5029 = vadd.f32 %v4642, %v4929
      %v5030 = vadd.f32 %v4643, %v4934
      %v5031 = vadd.f32 %v4644, %v4937
      %v5032 = vadd.f32 %v4645, %v4942
      %v5033 = vadd.f32 %v4646, %v4945
      %v5034 = vadd.f32 %v4647, %v4950
      %v5035 = vadd.f32 %v4648, %v4953
      %v5036 = vadd.f32 %v4649, %v4958
      %v5037 = vadd.f32 %v4650, %v4961
      %v5038 = vadd.f32 %v4651, %v4966
      %v5039 = vadd.f32 %v4652, %v4969
      %v5040 = vadd.f32 %v4653, %v4974
      %v5041 = vadd.f32 %v4654, %v4977
      %v5042 = vadd.f32 %v4655, %v4982
      %v5043 = vadd.f32 %v4656, %v4985
      %v5044 = vadd.f32 %v4657, %v4990
      %v5045 = vadd.f32 %v4658, %v4993
      %v5046 = vadd.f32 %v4659, %v4998
      %v5047 = vadd.f32 %v4660, %v5001
      %v5048 = vadd.f32 %v4661, %v5006
      %v5049 = vadd.f32 %v4662, %v5009
      %v5050 = vadd.f32 %v4663, %v5014
      %v5051 = vadd.f32 %v4664, %v5017
      %v5052 = vld [vmem:[%s4665] sm:$0xf]
      %v5053 = vld [vmem:[%s4665 + $0x4] sm:$0xf]
      %v5054 = vld [vmem:[%s4665 + $0x8] sm:$0x1]
      %v5055 = vld [vmem:[%s4665 + $0xc] sm:$0xf]
      %v5056 = vld [vmem:[%s4665 + $0x10] sm:$0xf]
      %v5057 = vld [vmem:[%s4665 + $0x14] sm:$0x1]
      %v5058 = vld [vmem:[%s4665 + $0x18] sm:$0xf]
      %v5059 = vld [vmem:[%s4665 + $0x1c] sm:$0xf]
      %v5060 = vld [vmem:[%s4665 + $0x20] sm:$0x1]
      %v5061 = vld [vmem:[%s4665 + $0x24] sm:$0xf]
      %v5062 = vld [vmem:[%s4665 + $0x28] sm:$0xf]
      %v5063 = vld [vmem:[%s4665 + $0x2c] sm:$0x1]
      %v5064 = vld [vmem:[%s4665 + $0x30] sm:$0xf]
      %v5065 = vld [vmem:[%s4665 + $0x34] sm:$0xf]
      %v5066 = vld [vmem:[%s4665 + $0x38] sm:$0x1]
      %v5067 = vld [vmem:[%s4665 + $0x3c] sm:$0xf]
      %v5068 = vld [vmem:[%s4665 + $0x40] sm:$0xf]
      %v5069 = vld [vmem:[%s4665 + $0x44] sm:$0x1]
      %v5070 = vld [vmem:[%s4665 + $0x48] sm:$0xf]
      %v5071 = vld [vmem:[%s4665 + $0x4c] sm:$0xf]
      %v5072 = vld [vmem:[%s4665 + $0x50] sm:$0x1]
      %v5073 = vld [vmem:[%s4665 + $0x54] sm:$0xf]
      %v5074 = vld [vmem:[%s4665 + $0x58] sm:$0xf]
      %v5075 = vld [vmem:[%s4665 + $0x5c] sm:$0x1]
      %v5076 = vld [vmem:[%s4665 + $0x60] sm:$0xf]
      %v5077 = vld [vmem:[%s4665 + $0x64] sm:$0xf]
      %v5078 = vld [vmem:[%s4665 + $0x68] sm:$0x1]
      %v5079 = vld [vmem:[%s4665 + $0x6c] sm:$0xf]
      %v5080 = vld [vmem:[%s4665 + $0x70] sm:$0xf]
      %v5081 = vld [vmem:[%s4665 + $0x74] sm:$0x1]
      %v5082 = vld [vmem:[%s4665 + $0x78] sm:$0xf]
      %v5083 = vld [vmem:[%s4665 + $0x7c] sm:$0xf]
      %v5084 = vld [vmem:[%s4665 + $0x80] sm:$0x1]
      %v5085 = vld [vmem:[%s4665 + $0x84] sm:$0xf]
      %v5086 = vld [vmem:[%s4665 + $0x88] sm:$0xf]
      %v5087 = vld [vmem:[%s4665 + $0x8c] sm:$0x1]
      %v5088 = vld [vmem:[%s4665 + $0x90] sm:$0xf]
      %v5089 = vld [vmem:[%s4665 + $0x94] sm:$0xf]
      %v5090 = vld [vmem:[%s4665 + $0x98] sm:$0x1]
      %v5091 = vld [vmem:[%s4665 + $0x9c] sm:$0xf]
      %v5092 = vld [vmem:[%s4665 + $0xa0] sm:$0xf]
      %v5093 = vld [vmem:[%s4665 + $0xa4] sm:$0x1]
      %v5094 = vld [vmem:[%s4665 + $0xa8] sm:$0xf]
      %v5095 = vld [vmem:[%s4665 + $0xac] sm:$0xf]
      %v5096 = vld [vmem:[%s4665 + $0xb0] sm:$0x1]
      %v5097 = vld [vmem:[%s4665 + $0xb4] sm:$0xf]
      %v5098 = vld [vmem:[%s4665 + $0xb8] sm:$0xf]
      %v5099 = vld [vmem:[%s4665 + $0xbc] sm:$0x1]
      %v5101 = vshrl.u32 %v5052, 16
      %v5103 = vrot.slane %v5101, 4
      %v5104 = vshll.u32 %v5052, 16
      %v5106 = vrot.slane %v5104, 5
      %v5107 = vor.u32 %v5103, %v5106
      %v5108 = vrot.slane %v5107, 4
      %v5110 = vshll.u32 %v5053, 16
      %v5112 = vrot.slane %v5110, 5
      %v5113 = vsel %vm1553, %v5108, %v5112
      %v5114 = vshrl.u32 %v5053, 16
      %v5116 = vrot.slane %v5114, 4
      %v5117 = vor.u32 %v5116, %v5112
      %v5118 = vrot.slane %v5117, 4
      %v5120 = vshll.u32 %v5054, 16
      %v5122 = vrot.slane %v5120, 5
      %v5123 = vsel %vm1553, %v5118, %v5122
      %v5125 = vshrl.u32 %v5055, 16
      %v5127 = vrot.slane %v5125, 4
      %v5128 = vshll.u32 %v5055, 16
      %v5130 = vrot.slane %v5128, 5
      %v5131 = vor.u32 %v5127, %v5130
      %v5132 = vrot.slane %v5131, 4
      %v5134 = vshll.u32 %v5056, 16
      %v5136 = vrot.slane %v5134, 5
      %v5137 = vsel %vm1553, %v5132, %v5136
      %v5138 = vshrl.u32 %v5056, 16
      %v5140 = vrot.slane %v5138, 4
      %v5141 = vor.u32 %v5140, %v5136
      %v5142 = vrot.slane %v5141, 4
      %v5144 = vshll.u32 %v5057, 16
      %v5146 = vrot.slane %v5144, 5
      %v5147 = vsel %vm1553, %v5142, %v5146
      %v5149 = vshrl.u32 %v5058, 16
      %v5151 = vrot.slane %v5149, 4
      %v5152 = vshll.u32 %v5058, 16
      %v5154 = vrot.slane %v5152, 5
      %v5155 = vor.u32 %v5151, %v5154
      %v5156 = vrot.slane %v5155, 4
      %v5158 = vshll.u32 %v5059, 16
      %v5160 = vrot.slane %v5158, 5
      %v5161 = vsel %vm1553, %v5156, %v5160
      %v5162 = vshrl.u32 %v5059, 16
      %v5164 = vrot.slane %v5162, 4
      %v5165 = vor.u32 %v5164, %v5160
      %v5166 = vrot.slane %v5165, 4
      %v5168 = vshll.u32 %v5060, 16
      %v5170 = vrot.slane %v5168, 5
      %v5171 = vsel %vm1553, %v5166, %v5170
      %v5173 = vshrl.u32 %v5061, 16
      %v5175 = vrot.slane %v5173, 4
      %v5176 = vshll.u32 %v5061, 16
      %v5178 = vrot.slane %v5176, 5
      %v5179 = vor.u32 %v5175, %v5178
      %v5180 = vrot.slane %v5179, 4
      %v5182 = vshll.u32 %v5062, 16
      %v5184 = vrot.slane %v5182, 5
      %v5185 = vsel %vm1553, %v5180, %v5184
      %v5186 = vshrl.u32 %v5062, 16
      %v5188 = vrot.slane %v5186, 4
      %v5189 = vor.u32 %v5188, %v5184
      %v5190 = vrot.slane %v5189, 4
      %v5192 = vshll.u32 %v5063, 16
      %v5194 = vrot.slane %v5192, 5
      %v5195 = vsel %vm1553, %v5190, %v5194
      %v5197 = vshrl.u32 %v5064, 16
      %v5199 = vrot.slane %v5197, 4
      %v5200 = vshll.u32 %v5064, 16
      %v5202 = vrot.slane %v5200, 5
      %v5203 = vor.u32 %v5199, %v5202
      %v5204 = vrot.slane %v5203, 4
      %v5206 = vshll.u32 %v5065, 16
      %v5208 = vrot.slane %v5206, 5
      %v5209 = vsel %vm1553, %v5204, %v5208
      %v5210 = vshrl.u32 %v5065, 16
      %v5212 = vrot.slane %v5210, 4
      %v5213 = vor.u32 %v5212, %v5208
      %v5214 = vrot.slane %v5213, 4
      %v5216 = vshll.u32 %v5066, 16
      %v5218 = vrot.slane %v5216, 5
      %v5219 = vsel %vm1553, %v5214, %v5218
      %v5221 = vshrl.u32 %v5067, 16
      %v5223 = vrot.slane %v5221, 4
      %v5224 = vshll.u32 %v5067, 16
      %v5226 = vrot.slane %v5224, 5
      %v5227 = vor.u32 %v5223, %v5226
      %v5228 = vrot.slane %v5227, 4
      %v5230 = vshll.u32 %v5068, 16
      %v5232 = vrot.slane %v5230, 5
      %v5233 = vsel %vm1553, %v5228, %v5232
      %v5234 = vshrl.u32 %v5068, 16
      %v5236 = vrot.slane %v5234, 4
      %v5237 = vor.u32 %v5236, %v5232
      %v5238 = vrot.slane %v5237, 4
      %v5240 = vshll.u32 %v5069, 16
      %v5242 = vrot.slane %v5240, 5
      %v5243 = vsel %vm1553, %v5238, %v5242
      %v5245 = vshrl.u32 %v5070, 16
      %v5247 = vrot.slane %v5245, 4
      %v5248 = vshll.u32 %v5070, 16
      %v5250 = vrot.slane %v5248, 5
      %v5251 = vor.u32 %v5247, %v5250
      %v5252 = vrot.slane %v5251, 4
      %v5254 = vshll.u32 %v5071, 16
      %v5256 = vrot.slane %v5254, 5
      %v5257 = vsel %vm1553, %v5252, %v5256
      %v5258 = vshrl.u32 %v5071, 16
      %v5260 = vrot.slane %v5258, 4
      %v5261 = vor.u32 %v5260, %v5256
      %v5262 = vrot.slane %v5261, 4
      %v5264 = vshll.u32 %v5072, 16
      %v5266 = vrot.slane %v5264, 5
      %v5267 = vsel %vm1553, %v5262, %v5266
      %v5269 = vshrl.u32 %v5073, 16
      %v5271 = vrot.slane %v5269, 4
      %v5272 = vshll.u32 %v5073, 16
      %v5274 = vrot.slane %v5272, 5
      %v5275 = vor.u32 %v5271, %v5274
      %v5276 = vrot.slane %v5275, 4
      %v5278 = vshll.u32 %v5074, 16
      %v5280 = vrot.slane %v5278, 5
      %v5281 = vsel %vm1553, %v5276, %v5280
      %v5282 = vshrl.u32 %v5074, 16
      %v5284 = vrot.slane %v5282, 4
      %v5285 = vor.u32 %v5284, %v5280
      %v5286 = vrot.slane %v5285, 4
      %v5288 = vshll.u32 %v5075, 16
      %v5290 = vrot.slane %v5288, 5
      %v5291 = vsel %vm1553, %v5286, %v5290
      %v5293 = vshrl.u32 %v5076, 16
      %v5295 = vrot.slane %v5293, 4
      %v5296 = vshll.u32 %v5076, 16
      %v5298 = vrot.slane %v5296, 5
      %v5299 = vor.u32 %v5295, %v5298
      %v5300 = vrot.slane %v5299, 4
      %v5302 = vshll.u32 %v5077, 16
      %v5304 = vrot.slane %v5302, 5
      %v5305 = vsel %vm1553, %v5300, %v5304
      %v5306 = vshrl.u32 %v5077, 16
      %v5308 = vrot.slane %v5306, 4
      %v5309 = vor.u32 %v5308, %v5304
      %v5310 = vrot.slane %v5309, 4
      %v5312 = vshll.u32 %v5078, 16
      %v5314 = vrot.slane %v5312, 5
      %v5315 = vsel %vm1553, %v5310, %v5314
      %v5317 = vshrl.u32 %v5079, 16
      %v5319 = vrot.slane %v5317, 4
      %v5320 = vshll.u32 %v5079, 16
      %v5322 = vrot.slane %v5320, 5
      %v5323 = vor.u32 %v5319, %v5322
      %v5324 = vrot.slane %v5323, 4
      %v5326 = vshll.u32 %v5080, 16
      %v5328 = vrot.slane %v5326, 5
      %v5329 = vsel %vm1553, %v5324, %v5328
      %v5330 = vshrl.u32 %v5080, 16
      %v5332 = vrot.slane %v5330, 4
      %v5333 = vor.u32 %v5332, %v5328
      %v5334 = vrot.slane %v5333, 4
      %v5336 = vshll.u32 %v5081, 16
      %v5338 = vrot.slane %v5336, 5
      %v5339 = vsel %vm1553, %v5334, %v5338
      %v5341 = vshrl.u32 %v5082, 16
      %v5343 = vrot.slane %v5341, 4
      %v5344 = vshll.u32 %v5082, 16
      %v5346 = vrot.slane %v5344, 5
      %v5347 = vor.u32 %v5343, %v5346
      %v5348 = vrot.slane %v5347, 4
      %v5350 = vshll.u32 %v5083, 16
      %v5352 = vrot.slane %v5350, 5
      %v5353 = vsel %vm1553, %v5348, %v5352
      %v5354 = vshrl.u32 %v5083, 16
      %v5356 = vrot.slane %v5354, 4
      %v5357 = vor.u32 %v5356, %v5352
      %v5358 = vrot.slane %v5357, 4
      %v5360 = vshll.u32 %v5084, 16
      %v5362 = vrot.slane %v5360, 5
      %v5363 = vsel %vm1553, %v5358, %v5362
      %v5365 = vshrl.u32 %v5085, 16
      %v5367 = vrot.slane %v5365, 4
      %v5368 = vshll.u32 %v5085, 16
      %v5370 = vrot.slane %v5368, 5
      %v5371 = vor.u32 %v5367, %v5370
      %v5372 = vrot.slane %v5371, 4
      %v5374 = vshll.u32 %v5086, 16
      %v5376 = vrot.slane %v5374, 5
      %v5377 = vsel %vm1553, %v5372, %v5376
      %v5378 = vshrl.u32 %v5086, 16
      %v5380 = vrot.slane %v5378, 4
      %v5381 = vor.u32 %v5380, %v5376
      %v5382 = vrot.slane %v5381, 4
      %v5384 = vshll.u32 %v5087, 16
      %v5386 = vrot.slane %v5384, 5
      %v5387 = vsel %vm1553, %v5382, %v5386
      %v5389 = vshrl.u32 %v5088, 16
      %v5391 = vrot.slane %v5389, 4
      %v5392 = vshll.u32 %v5088, 16
      %v5394 = vrot.slane %v5392, 5
      %v5395 = vor.u32 %v5391, %v5394
      %v5396 = vrot.slane %v5395, 4
      %v5398 = vshll.u32 %v5089, 16
      %v5400 = vrot.slane %v5398, 5
      %v5401 = vsel %vm1553, %v5396, %v5400
      %v5402 = vshrl.u32 %v5089, 16
      %v5404 = vrot.slane %v5402, 4
      %v5405 = vor.u32 %v5404, %v5400
      %v5406 = vrot.slane %v5405, 4
      %v5408 = vshll.u32 %v5090, 16
      %v5410 = vrot.slane %v5408, 5
      %v5411 = vsel %vm1553, %v5406, %v5410
      %v5413 = vshrl.u32 %v5091, 16
      %v5415 = vrot.slane %v5413, 4
      %v5416 = vshll.u32 %v5091, 16
      %v5418 = vrot.slane %v5416, 5
      %v5419 = vor.u32 %v5415, %v5418
      %v5420 = vrot.slane %v5419, 4
      %v5422 = vshll.u32 %v5092, 16
      %v5424 = vrot.slane %v5422, 5
      %v5425 = vsel %vm1553, %v5420, %v5424
      %v5426 = vshrl.u32 %v5092, 16
      %v5428 = vrot.slane %v5426, 4
      %v5429 = vor.u32 %v5428, %v5424
      %v5430 = vrot.slane %v5429, 4
      %v5432 = vshll.u32 %v5093, 16
      %v5434 = vrot.slane %v5432, 5
      %v5435 = vsel %vm1553, %v5430, %v5434
      %v5437 = vshrl.u32 %v5094, 16
      %v5439 = vrot.slane %v5437, 4
      %v5440 = vshll.u32 %v5094, 16
      %v5442 = vrot.slane %v5440, 5
      %v5443 = vor.u32 %v5439, %v5442
      %v5444 = vrot.slane %v5443, 4
      %v5446 = vshll.u32 %v5095, 16
      %v5448 = vrot.slane %v5446, 5
      %v5449 = vsel %vm1553, %v5444, %v5448
      %v5450 = vshrl.u32 %v5095, 16
      %v5452 = vrot.slane %v5450, 4
      %v5453 = vor.u32 %v5452, %v5448
      %v5454 = vrot.slane %v5453, 4
      %v5456 = vshll.u32 %v5096, 16
      %v5458 = vrot.slane %v5456, 5
      %v5459 = vsel %vm1553, %v5454, %v5458
      %v5461 = vshrl.u32 %v5097, 16
      %v5463 = vrot.slane %v5461, 4
      %v5464 = vshll.u32 %v5097, 16
      %v5466 = vrot.slane %v5464, 5
      %v5467 = vor.u32 %v5463, %v5466
      %v5468 = vrot.slane %v5467, 4
      %v5470 = vshll.u32 %v5098, 16
      %v5472 = vrot.slane %v5470, 5
      %v5473 = vsel %vm1553, %v5468, %v5472
      %v5474 = vshrl.u32 %v5098, 16
      %v5476 = vrot.slane %v5474, 4
      %v5477 = vor.u32 %v5476, %v5472
      %v5478 = vrot.slane %v5477, 4
      %v5480 = vshll.u32 %v5099, 16
      %v5482 = vrot.slane %v5480, 5
      %v5483 = vsel %vm1553, %v5478, %v5482
      %s5484 = scalar_lea.vmem %s2, 224
      %v5485 = vld [vmem:[%s5484] sm:$0xf]
      %v5486 = vld [vmem:[%s5484 + $0x4] sm:$0xf]
      %v5487 = vld [vmem:[%s5484 + $0x8] sm:$0xf]
      %v5488 = vld [vmem:[%s5484 + $0xc] sm:$0xf]
      %v5489 = vld [vmem:[%s5484 + $0x10] sm:$0xf]
      %v5490 = vld [vmem:[%s5484 + $0x14] sm:$0xf]
      %v5491 = vld [vmem:[%s5484 + $0x18] sm:$0xf]
      %v5492 = vld [vmem:[%s5484 + $0x1c] sm:$0xf]
      %v5493 = vunpack.c.l.b16 %v5113
      %v5494 = vunpack.c.l.b16 %v5123
      %v5495 = vunpack.c.l.b16 %v5137
      %v5496 = vunpack.c.l.b16 %v5147
      %v5497 = vunpack.c.l.b16 %v5161
      %v5498 = vunpack.c.l.b16 %v5171
      %v5499 = vunpack.c.l.b16 %v5185
      %v5500 = vunpack.c.l.b16 %v5195
      %v5501 = vunpack.c.l.b16 %v5209
      %v5502 = vunpack.c.l.b16 %v5219
      %v5503 = vunpack.c.l.b16 %v5233
      %v5504 = vunpack.c.l.b16 %v5243
      %v5505 = vunpack.c.l.b16 %v5257
      %v5506 = vunpack.c.l.b16 %v5267
      %v5507 = vunpack.c.l.b16 %v5281
      %v5508 = vunpack.c.l.b16 %v5291
      %v5509 = vunpack.c.l.b16 %v5305
      %v5510 = vunpack.c.l.b16 %v5315
      %v5511 = vunpack.c.l.b16 %v5329
      %v5512 = vunpack.c.l.b16 %v5339
      %v5513 = vunpack.c.l.b16 %v5353
      %v5514 = vunpack.c.l.b16 %v5363
      %v5515 = vunpack.c.l.b16 %v5377
      %v5516 = vunpack.c.l.b16 %v5387
      %v5517 = vunpack.c.l.b16 %v5401
      %v5518 = vunpack.c.l.b16 %v5411
      %v5519 = vunpack.c.l.b16 %v5425
      %v5520 = vunpack.c.l.b16 %v5435
      %v5521 = vunpack.c.l.b16 %v5449
      %v5522 = vunpack.c.l.b16 %v5459
      %v5523 = vunpack.c.l.b16 %v5473
      %v5524 = vunpack.c.l.b16 %v5483
      %v5525 = vpack.c.b16 %v5494, %v5493
      %v5526 = vpack.c.b16 %v5496, %v5495
      %v5527 = vpack.c.b16 %v5498, %v5497
      %v5528 = vpack.c.b16 %v5500, %v5499
      %v5529 = vpack.c.b16 %v5502, %v5501
      %v5530 = vpack.c.b16 %v5504, %v5503
      %v5531 = vpack.c.b16 %v5506, %v5505
      %v5532 = vpack.c.b16 %v5508, %v5507
      %v5533 = vpack.c.b16 %v5510, %v5509
      %v5534 = vpack.c.b16 %v5512, %v5511
      %v5535 = vpack.c.b16 %v5514, %v5513
      %v5536 = vpack.c.b16 %v5516, %v5515
      %v5537 = vpack.c.b16 %v5518, %v5517
      %v5538 = vpack.c.b16 %v5520, %v5519
      %v5539 = vpack.c.b16 %v5522, %v5521
      %v5540 = vpack.c.b16 %v5524, %v5523
      %v5549 = vunpack.c.l.b16 %v5485
      %v5550 = vunpack.c.l.b16 %v5486
      %v5551 = vunpack.c.l.b16 %v5487
      %v5552 = vunpack.c.l.b16 %v5488
      %v5553 = vunpack.c.l.b16 %v5489
      %v5554 = vunpack.c.l.b16 %v5490
      %v5555 = vunpack.c.l.b16 %v5491
      %v5556 = vunpack.c.l.b16 %v5492
      %v5557 = vpack.c.b16 %v5550, %v5549
      %v5558 = vpack.c.b16 %v5552, %v5551
      %v5559 = vpack.c.b16 %v5554, %v5553
      %v5560 = vpack.c.b16 %v5556, %v5555
      %v5566 = vsel %vm2019, %v5525, 0
      %v5569 = vsel %vm2019, %v5526, 0
      %v5572 = vsel %vm2019, %v5527, 0
      %v5575 = vsel %vm2019, %v5528, 0
      %v5578 = vsel %vm2019, %v5529, 0
      %v5581 = vsel %vm2019, %v5530, 0
      %v5584 = vsel %vm2019, %v5531, 0
      %v5587 = vsel %vm2019, %v5532, 0
      %v5590 = vsel %vm2019, %v5533, 0
      %v5593 = vsel %vm2019, %v5534, 0
      %v5596 = vsel %vm2019, %v5535, 0
      %v5599 = vsel %vm2019, %v5536, 0
      %v5602 = vsel %vm2019, %v5537, 0
      %v5605 = vsel %vm2019, %v5538, 0
      %v5608 = vsel %vm2019, %v5539, 0
      %v5611 = vsel %vm2019, %v5540, 0
      %5613 = vmatprep.subr.bf16.mxu0 0
      %5614 = vmatpush1.bf16.msra.mxu0 0
      %5615 = vmatprep.subr.bf16.mxu0 0
      %5616 = vmatpush1.bf16.msra.mxu0 0
      %5617 = vmatprep.subr.bf16.mxu0 0
      %5618 = vmatpush1.bf16.msra.mxu0 0
      %5619 = vmatprep.subr.bf16.mxu0 0
      %5620 = vmatpush1.bf16.msra.mxu0 0
      %5621 = vmatprep.subr.bf16.mxu0 0
      %5622 = vmatpush1.bf16.msra.mxu0 %v5560
      %5623 = vmatprep.subr.bf16.mxu0 0
      %5624 = vmatpush1.bf16.msra.mxu0 %v5559
      %5625 = vmatprep.subr.bf16.mxu0 0
      %5626 = vmatpush1.bf16.msra.mxu0 %v5558
      %5627 = vmatprep.subr.bf16.mxu0 0
      %5628 = vmatpush1.bf16.msra.mxu0 %v5557
      %5629 = vmatprep.subr.bf16.mxu0 0
      %5630 = vmatpush2.bf16.msra.mxu0 0
      %5631 = vmatprep.subr.bf16.mxu0 0
      %5632 = vmatpush2.bf16.msra.mxu0 0
      %5633 = vmatprep.subr.bf16.mxu0 0
      %5634 = vmatpush2.bf16.msra.mxu0 0
      %5635 = vmatprep.subr.bf16.mxu0 0
      %5636 = vmatpush2.bf16.msra.mxu0 0
      %5637 = vmatprep.subr.bf16.mxu0 0
      %5638 = vmatpush2.bf16.msra.mxu0 0
      %5639 = vmatprep.subr.bf16.mxu0 0
      %5640 = vmatpush2.bf16.msra.mxu0 0
      %5641 = vmatprep.subr.bf16.mxu0 0
      %5642 = vmatpush2.bf16.msra.mxu0 0
      %5643 = vmatprep.subr.bf16.mxu0 0
      %5644 = vmatpush2.bf16.msra.mxu0 0
      %5645 = vmatprep.mubr.bf16.mxu0 0
      %5646 = vmatmul.mubr.bf16.gmra.mxu0 %v5566
      %v5647 = vpop.f32.mrf.mxu0
      %v5648 = vadd.f32 0.0, %v5647
      %v5649 = vpop.f32.mrf.mxu0
      %v5650 = vpop.f32.mrf.mxu0
      %v5651 = vadd.f32 0.0, %v5650
      %v5652 = vpop.f32.mrf.mxu0
      %5653 = vmatprep.mubr.bf16.mxu0 0
      %5654 = vmatmul.mubr.bf16.gmra.mxu0 %v5569
      %v5655 = vpop.f32.mrf.mxu0
      %v5656 = vadd.f32 0.0, %v5655
      %v5657 = vpop.f32.mrf.mxu0
      %v5658 = vpop.f32.mrf.mxu0
      %v5659 = vadd.f32 0.0, %v5658
      %v5660 = vpop.f32.mrf.mxu0
      %5661 = vmatprep.mubr.bf16.mxu0 0
      %5662 = vmatmul.mubr.bf16.gmra.mxu0 %v5572
      %v5663 = vpop.f32.mrf.mxu0
      %v5664 = vadd.f32 0.0, %v5663
      %v5665 = vpop.f32.mrf.mxu0
      %v5666 = vpop.f32.mrf.mxu0
      %v5667 = vadd.f32 0.0, %v5666
      %v5668 = vpop.f32.mrf.mxu0
      %5669 = vmatprep.mubr.bf16.mxu0 0
      %5670 = vmatmul.mubr.bf16.gmra.mxu0 %v5575
      %v5671 = vpop.f32.mrf.mxu0
      %v5672 = vadd.f32 0.0, %v5671
      %v5673 = vpop.f32.mrf.mxu0
      %v5674 = vpop.f32.mrf.mxu0
      %v5675 = vadd.f32 0.0, %v5674
      %v5676 = vpop.f32.mrf.mxu0
      %5677 = vmatprep.mubr.bf16.mxu0 0
      %5678 = vmatmul.mubr.bf16.gmra.mxu0 %v5578
      %v5679 = vpop.f32.mrf.mxu0
      %v5680 = vadd.f32 0.0, %v5679
      %v5681 = vpop.f32.mrf.mxu0
      %v5682 = vpop.f32.mrf.mxu0
      %v5683 = vadd.f32 0.0, %v5682
      %v5684 = vpop.f32.mrf.mxu0
      %5685 = vmatprep.mubr.bf16.mxu0 0
      %5686 = vmatmul.mubr.bf16.gmra.mxu0 %v5581
      %v5687 = vpop.f32.mrf.mxu0
      %v5688 = vadd.f32 0.0, %v5687
      %v5689 = vpop.f32.mrf.mxu0
      %v5690 = vpop.f32.mrf.mxu0
      %v5691 = vadd.f32 0.0, %v5690
      %v5692 = vpop.f32.mrf.mxu0
      %5693 = vmatprep.mubr.bf16.mxu0 0
      %5694 = vmatmul.mubr.bf16.gmra.mxu0 %v5584
      %v5695 = vpop.f32.mrf.mxu0
      %v5696 = vadd.f32 0.0, %v5695
      %v5697 = vpop.f32.mrf.mxu0
      %v5698 = vpop.f32.mrf.mxu0
      %v5699 = vadd.f32 0.0, %v5698
      %v5700 = vpop.f32.mrf.mxu0
      %5701 = vmatprep.mubr.bf16.mxu0 0
      %5702 = vmatmul.mubr.bf16.gmra.mxu0 %v5587
      %v5703 = vpop.f32.mrf.mxu0
      %v5704 = vadd.f32 0.0, %v5703
      %v5705 = vpop.f32.mrf.mxu0
      %v5706 = vpop.f32.mrf.mxu0
      %v5707 = vadd.f32 0.0, %v5706
      %v5708 = vpop.f32.mrf.mxu0
      %5709 = vmatprep.mubr.bf16.mxu0 0
      %5710 = vmatmul.mubr.bf16.gmra.mxu0 %v5590
      %v5711 = vpop.f32.mrf.mxu0
      %v5712 = vadd.f32 0.0, %v5711
      %v5713 = vpop.f32.mrf.mxu0
      %v5714 = vpop.f32.mrf.mxu0
      %v5715 = vadd.f32 0.0, %v5714
      %v5716 = vpop.f32.mrf.mxu0
      %5717 = vmatprep.mubr.bf16.mxu0 0
      %5718 = vmatmul.mubr.bf16.gmra.mxu0 %v5593
      %v5719 = vpop.f32.mrf.mxu0
      %v5720 = vadd.f32 0.0, %v5719
      %v5721 = vpop.f32.mrf.mxu0
      %v5722 = vpop.f32.mrf.mxu0
      %v5723 = vadd.f32 0.0, %v5722
      %v5724 = vpop.f32.mrf.mxu0
      %5725 = vmatprep.mubr.bf16.mxu0 0
      %5726 = vmatmul.mubr.bf16.gmra.mxu0 %v5596
      %v5727 = vpop.f32.mrf.mxu0
      %v5728 = vadd.f32 0.0, %v5727
      %v5729 = vpop.f32.mrf.mxu0
      %v5730 = vpop.f32.mrf.mxu0
      %v5731 = vadd.f32 0.0, %v5730
      %v5732 = vpop.f32.mrf.mxu0
      %5733 = vmatprep.mubr.bf16.mxu0 0
      %5734 = vmatmul.mubr.bf16.gmra.mxu0 %v5599
      %v5735 = vpop.f32.mrf.mxu0
      %v5736 = vadd.f32 0.0, %v5735
      %v5737 = vpop.f32.mrf.mxu0
      %v5738 = vpop.f32.mrf.mxu0
      %v5739 = vadd.f32 0.0, %v5738
      %v5740 = vpop.f32.mrf.mxu0
      %5741 = vmatprep.mubr.bf16.mxu0 0
      %5742 = vmatmul.mubr.bf16.gmra.mxu0 %v5602
      %v5743 = vpop.f32.mrf.mxu0
      %v5744 = vadd.f32 0.0, %v5743
      %v5745 = vpop.f32.mrf.mxu0
      %v5746 = vpop.f32.mrf.mxu0
      %v5747 = vadd.f32 0.0, %v5746
      %v5748 = vpop.f32.mrf.mxu0
      %5749 = vmatprep.mubr.bf16.mxu0 0
      %5750 = vmatmul.mubr.bf16.gmra.mxu0 %v5605
      %v5751 = vpop.f32.mrf.mxu0
      %v5752 = vadd.f32 0.0, %v5751
      %v5753 = vpop.f32.mrf.mxu0
      %v5754 = vpop.f32.mrf.mxu0
      %v5755 = vadd.f32 0.0, %v5754
      %v5756 = vpop.f32.mrf.mxu0
      %5757 = vmatprep.mubr.bf16.mxu0 0
      %5758 = vmatmul.mubr.bf16.gmra.mxu0 %v5608
      %v5759 = vpop.f32.mrf.mxu0
      %v5760 = vadd.f32 0.0, %v5759
      %v5761 = vpop.f32.mrf.mxu0
      %v5762 = vpop.f32.mrf.mxu0
      %v5763 = vadd.f32 0.0, %v5762
      %v5764 = vpop.f32.mrf.mxu0
      %5765 = vmatprep.mubr.bf16.mxu0 0
      %5766 = vmatmul.mubr.bf16.gmra.mxu0 %v5611
      %v5767 = vpop.f32.mrf.mxu0
      %v5768 = vadd.f32 0.0, %v5767
      %v5769 = vpop.f32.mrf.mxu0
      %v5770 = vpop.f32.mrf.mxu0
      %v5771 = vadd.f32 0.0, %v5770
      %v5772 = vpop.f32.mrf.mxu0
      %5773 = vdwg.mxu0
      %v5774 = vadd.f32 %v5020, %v5648
      %v5775 = vadd.f32 %v5021, %v5651
      %v5776 = vadd.f32 %v5022, %v5656
      %v5777 = vadd.f32 %v5023, %v5659
      %v5778 = vadd.f32 %v5024, %v5664
      %v5779 = vadd.f32 %v5025, %v5667
      %v5780 = vadd.f32 %v5026, %v5672
      %v5781 = vadd.f32 %v5027, %v5675
      %v5782 = vadd.f32 %v5028, %v5680
      %v5783 = vadd.f32 %v5029, %v5683
      %v5784 = vadd.f32 %v5030, %v5688
      %v5785 = vadd.f32 %v5031, %v5691
      %v5786 = vadd.f32 %v5032, %v5696
      %v5787 = vadd.f32 %v5033, %v5699
      %v5788 = vadd.f32 %v5034, %v5704
      %v5789 = vadd.f32 %v5035, %v5707
      %v5790 = vadd.f32 %v5036, %v5712
      %v5791 = vadd.f32 %v5037, %v5715
      %v5792 = vadd.f32 %v5038, %v5720
      %v5793 = vadd.f32 %v5039, %v5723
      %v5794 = vadd.f32 %v5040, %v5728
      %v5795 = vadd.f32 %v5041, %v5731
      %v5796 = vadd.f32 %v5042, %v5736
      %v5797 = vadd.f32 %v5043, %v5739
      %v5798 = vadd.f32 %v5044, %v5744
      %v5799 = vadd.f32 %v5045, %v5747
      %v5800 = vadd.f32 %v5046, %v5752
      %v5801 = vadd.f32 %v5047, %v5755
      %v5802 = vadd.f32 %v5048, %v5760
      %v5803 = vadd.f32 %v5049, %v5763
      %v5804 = vadd.f32 %v5050, %v5768
      %v5805 = vadd.f32 %v5051, %v5771
      %v5806 = vld [vmem:[%s4665] sm:$0xe]
      %v5807 = vld [vmem:[%s4665 + $0xc] sm:$0xe]
      %v5808 = vld [vmem:[%s4665 + $0x18] sm:$0xe]
      %v5809 = vld [vmem:[%s4665 + $0x24] sm:$0xe]
      %v5810 = vld [vmem:[%s4665 + $0x30] sm:$0xe]
      %v5811 = vld [vmem:[%s4665 + $0x3c] sm:$0xe]
      %v5812 = vld [vmem:[%s4665 + $0x48] sm:$0xe]
      %v5813 = vld [vmem:[%s4665 + $0x54] sm:$0xe]
      %v5814 = vld [vmem:[%s4665 + $0x60] sm:$0xe]
      %v5815 = vld [vmem:[%s4665 + $0x6c] sm:$0xe]
      %v5816 = vld [vmem:[%s4665 + $0x78] sm:$0xe]
      %v5817 = vld [vmem:[%s4665 + $0x84] sm:$0xe]
      %v5818 = vld [vmem:[%s4665 + $0x90] sm:$0xe]
      %v5819 = vld [vmem:[%s4665 + $0x9c] sm:$0xe]
      %v5820 = vld [vmem:[%s4665 + $0xa8] sm:$0xe]
      %v5821 = vld [vmem:[%s4665 + $0xb4] sm:$0xe]
      %v5870 = vrot.slane %v5806, 5
      %v5871 = vrot.slane %v5870, 4
      %v5872 = vrot.slane %v5053, 5
      %v5873 = vsel %vm2592, %v5871, %v5872
      %v5874 = vrot.slane %v5872, 4
      %v5875 = vrot.slane %v5054, 5
      %v5876 = vsel %vm2592, %v5874, %v5875
      %v5877 = vrot.slane %v5807, 5
      %v5878 = vrot.slane %v5877, 4
      %v5879 = vrot.slane %v5056, 5
      %v5880 = vsel %vm2592, %v5878, %v5879
      %v5881 = vrot.slane %v5879, 4
      %v5882 = vrot.slane %v5057, 5
      %v5883 = vsel %vm2592, %v5881, %v5882
      %v5884 = vrot.slane %v5808, 5
      %v5885 = vrot.slane %v5884, 4
      %v5886 = vrot.slane %v5059, 5
      %v5887 = vsel %vm2592, %v5885, %v5886
      %v5888 = vrot.slane %v5886, 4
      %v5889 = vrot.slane %v5060, 5
      %v5890 = vsel %vm2592, %v5888, %v5889
      %v5891 = vrot.slane %v5809, 5
      %v5892 = vrot.slane %v5891, 4
      %v5893 = vrot.slane %v5062, 5
      %v5894 = vsel %vm2592, %v5892, %v5893
      %v5895 = vrot.slane %v5893, 4
      %v5896 = vrot.slane %v5063, 5
      %v5897 = vsel %vm2592, %v5895, %v5896
      %v5898 = vrot.slane %v5810, 5
      %v5899 = vrot.slane %v5898, 4
      %v5900 = vrot.slane %v5065, 5
      %v5901 = vsel %vm2592, %v5899, %v5900
      %v5902 = vrot.slane %v5900, 4
      %v5903 = vrot.slane %v5066, 5
      %v5904 = vsel %vm2592, %v5902, %v5903
      %v5905 = vrot.slane %v5811, 5
      %v5906 = vrot.slane %v5905, 4
      %v5907 = vrot.slane %v5068, 5
      %v5908 = vsel %vm2592, %v5906, %v5907
      %v5909 = vrot.slane %v5907, 4
      %v5910 = vrot.slane %v5069, 5
      %v5911 = vsel %vm2592, %v5909, %v5910
      %v5912 = vrot.slane %v5812, 5
      %v5913 = vrot.slane %v5912, 4
      %v5914 = vrot.slane %v5071, 5
      %v5915 = vsel %vm2592, %v5913, %v5914
      %v5916 = vrot.slane %v5914, 4
      %v5917 = vrot.slane %v5072, 5
      %v5918 = vsel %vm2592, %v5916, %v5917
      %v5919 = vrot.slane %v5813, 5
      %v5920 = vrot.slane %v5919, 4
      %v5921 = vrot.slane %v5074, 5
      %v5922 = vsel %vm2592, %v5920, %v5921
      %v5923 = vrot.slane %v5921, 4
      %v5924 = vrot.slane %v5075, 5
      %v5925 = vsel %vm2592, %v5923, %v5924
      %v5926 = vrot.slane %v5814, 5
      %v5927 = vrot.slane %v5926, 4
      %v5928 = vrot.slane %v5077, 5
      %v5929 = vsel %vm2592, %v5927, %v5928
      %v5930 = vrot.slane %v5928, 4
      %v5931 = vrot.slane %v5078, 5
      %v5932 = vsel %vm2592, %v5930, %v5931
      %v5933 = vrot.slane %v5815, 5
      %v5934 = vrot.slane %v5933, 4
      %v5935 = vrot.slane %v5080, 5
      %v5936 = vsel %vm2592, %v5934, %v5935
      %v5937 = vrot.slane %v5935, 4
      %v5938 = vrot.slane %v5081, 5
      %v5939 = vsel %vm2592, %v5937, %v5938
      %v5940 = vrot.slane %v5816, 5
      %v5941 = vrot.slane %v5940, 4
      %v5942 = vrot.slane %v5083, 5
      %v5943 = vsel %vm2592, %v5941, %v5942
      %v5944 = vrot.slane %v5942, 4
      %v5945 = vrot.slane %v5084, 5
      %v5946 = vsel %vm2592, %v5944, %v5945
      %v5947 = vrot.slane %v5817, 5
      %v5948 = vrot.slane %v5947, 4
      %v5949 = vrot.slane %v5086, 5
      %v5950 = vsel %vm2592, %v5948, %v5949
      %v5951 = vrot.slane %v5949, 4
      %v5952 = vrot.slane %v5087, 5
      %v5953 = vsel %vm2592, %v5951, %v5952
      %v5954 = vrot.slane %v5818, 5
      %v5955 = vrot.slane %v5954, 4
      %v5956 = vrot.slane %v5089, 5
      %v5957 = vsel %vm2592, %v5955, %v5956
      %v5958 = vrot.slane %v5956, 4
      %v5959 = vrot.slane %v5090, 5
      %v5960 = vsel %vm2592, %v5958, %v5959
      %v5961 = vrot.slane %v5819, 5
      %v5962 = vrot.slane %v5961, 4
      %v5963 = vrot.slane %v5092, 5
      %v5964 = vsel %vm2592, %v5962, %v5963
      %v5965 = vrot.slane %v5963, 4
      %v5966 = vrot.slane %v5093, 5
      %v5967 = vsel %vm2592, %v5965, %v5966
      %v5968 = vrot.slane %v5820, 5
      %v5969 = vrot.slane %v5968, 4
      %v5970 = vrot.slane %v5095, 5
      %v5971 = vsel %vm2592, %v5969, %v5970
      %v5972 = vrot.slane %v5970, 4
      %v5973 = vrot.slane %v5096, 5
      %v5974 = vsel %vm2592, %v5972, %v5973
      %v5975 = vrot.slane %v5821, 5
      %v5976 = vrot.slane %v5975, 4
      %v5977 = vrot.slane %v5098, 5
      %v5978 = vsel %vm2592, %v5976, %v5977
      %v5979 = vrot.slane %v5977, 4
      %v5980 = vrot.slane %v5099, 5
      %v5981 = vsel %vm2592, %v5979, %v5980
      %s5982 = scalar_lea.vmem %s2, 256
      %v5983 = vld [vmem:[%s5982] sm:$0xf]
      %v5984 = vld [vmem:[%s5982 + $0x4] sm:$0xf]
      %v5985 = vld [vmem:[%s5982 + $0x8] sm:$0xf]
      %v5986 = vld [vmem:[%s5982 + $0xc] sm:$0xf]
      %v5987 = vld [vmem:[%s5982 + $0x10] sm:$0xf]
      %v5988 = vld [vmem:[%s5982 + $0x14] sm:$0xf]
      %v5989 = vld [vmem:[%s5982 + $0x18] sm:$0xf]
      %v5990 = vld [vmem:[%s5982 + $0x1c] sm:$0xf]
      %v5991 = vunpack.c.l.b16 %v5873
      %v5992 = vunpack.c.l.b16 %v5876
      %v5993 = vunpack.c.l.b16 %v5880
      %v5994 = vunpack.c.l.b16 %v5883
      %v5995 = vunpack.c.l.b16 %v5887
      %v5996 = vunpack.c.l.b16 %v5890
      %v5997 = vunpack.c.l.b16 %v5894
      %v5998 = vunpack.c.l.b16 %v5897
      %v5999 = vunpack.c.l.b16 %v5901
      %v6000 = vunpack.c.l.b16 %v5904
      %v6001 = vunpack.c.l.b16 %v5908
      %v6002 = vunpack.c.l.b16 %v5911
      %v6003 = vunpack.c.l.b16 %v5915
      %v6004 = vunpack.c.l.b16 %v5918
      %v6005 = vunpack.c.l.b16 %v5922
      %v6006 = vunpack.c.l.b16 %v5925
      %v6007 = vunpack.c.l.b16 %v5929
      %v6008 = vunpack.c.l.b16 %v5932
      %v6009 = vunpack.c.l.b16 %v5936
      %v6010 = vunpack.c.l.b16 %v5939
      %v6011 = vunpack.c.l.b16 %v5943
      %v6012 = vunpack.c.l.b16 %v5946
      %v6013 = vunpack.c.l.b16 %v5950
      %v6014 = vunpack.c.l.b16 %v5953
      %v6015 = vunpack.c.l.b16 %v5957
      %v6016 = vunpack.c.l.b16 %v5960
      %v6017 = vunpack.c.l.b16 %v5964
      %v6018 = vunpack.c.l.b16 %v5967
      %v6019 = vunpack.c.l.b16 %v5971
      %v6020 = vunpack.c.l.b16 %v5974
      %v6021 = vunpack.c.l.b16 %v5978
      %v6022 = vunpack.c.l.b16 %v5981
      %v6023 = vpack.c.b16 %v5992, %v5991
      %v6024 = vpack.c.b16 %v5994, %v5993
      %v6025 = vpack.c.b16 %v5996, %v5995
      %v6026 = vpack.c.b16 %v5998, %v5997
      %v6027 = vpack.c.b16 %v6000, %v5999
      %v6028 = vpack.c.b16 %v6002, %v6001
      %v6029 = vpack.c.b16 %v6004, %v6003
      %v6030 = vpack.c.b16 %v6006, %v6005
      %v6031 = vpack.c.b16 %v6008, %v6007
      %v6032 = vpack.c.b16 %v6010, %v6009
      %v6033 = vpack.c.b16 %v6012, %v6011
      %v6034 = vpack.c.b16 %v6014, %v6013
      %v6035 = vpack.c.b16 %v6016, %v6015
      %v6036 = vpack.c.b16 %v6018, %v6017
      %v6037 = vpack.c.b16 %v6020, %v6019
      %v6038 = vpack.c.b16 %v6022, %v6021
      %v6047 = vunpack.c.l.b16 %v5983
      %v6048 = vunpack.c.l.b16 %v5984
      %v6049 = vunpack.c.l.b16 %v5985
      %v6050 = vunpack.c.l.b16 %v5986
      %v6051 = vunpack.c.l.b16 %v5987
      %v6052 = vunpack.c.l.b16 %v5988
      %v6053 = vunpack.c.l.b16 %v5989
      %v6054 = vunpack.c.l.b16 %v5990
      %v6055 = vpack.c.b16 %v6048, %v6047
      %v6056 = vpack.c.b16 %v6050, %v6049
      %v6057 = vpack.c.b16 %v6052, %v6051
      %v6058 = vpack.c.b16 %v6054, %v6053
      %v6064 = vsel %vm2019, %v6023, 0
      %v6067 = vsel %vm2019, %v6024, 0
      %v6070 = vsel %vm2019, %v6025, 0
      %v6073 = vsel %vm2019, %v6026, 0
      %v6076 = vsel %vm2019, %v6027, 0
      %v6079 = vsel %vm2019, %v6028, 0
      %v6082 = vsel %vm2019, %v6029, 0
      %v6085 = vsel %vm2019, %v6030, 0
      %v6088 = vsel %vm2019, %v6031, 0
      %v6091 = vsel %vm2019, %v6032, 0
      %v6094 = vsel %vm2019, %v6033, 0
      %v6097 = vsel %vm2019, %v6034, 0
      %v6100 = vsel %vm2019, %v6035, 0
      %v6103 = vsel %vm2019, %v6036, 0
      %v6106 = vsel %vm2019, %v6037, 0
      %v6109 = vsel %vm2019, %v6038, 0
      %6111 = vmatprep.subr.bf16.mxu0 0
      %6112 = vmatpush1.bf16.msra.mxu0 0
      %6113 = vmatprep.subr.bf16.mxu0 0
      %6114 = vmatpush1.bf16.msra.mxu0 0
      %6115 = vmatprep.subr.bf16.mxu0 0
      %6116 = vmatpush1.bf16.msra.mxu0 0
      %6117 = vmatprep.subr.bf16.mxu0 0
      %6118 = vmatpush1.bf16.msra.mxu0 0
      %6119 = vmatprep.subr.bf16.mxu0 0
      %6120 = vmatpush1.bf16.msra.mxu0 %v6058
      %6121 = vmatprep.subr.bf16.mxu0 0
      %6122 = vmatpush1.bf16.msra.mxu0 %v6057
      %6123 = vmatprep.subr.bf16.mxu0 0
      %6124 = vmatpush1.bf16.msra.mxu0 %v6056
      %6125 = vmatprep.subr.bf16.mxu0 0
      %6126 = vmatpush1.bf16.msra.mxu0 %v6055
      %6127 = vmatprep.subr.bf16.mxu0 0
      %6128 = vmatpush2.bf16.msra.mxu0 0
      %6129 = vmatprep.subr.bf16.mxu0 0
      %6130 = vmatpush2.bf16.msra.mxu0 0
      %6131 = vmatprep.subr.bf16.mxu0 0
      %6132 = vmatpush2.bf16.msra.mxu0 0
      %6133 = vmatprep.subr.bf16.mxu0 0
      %6134 = vmatpush2.bf16.msra.mxu0 0
      %6135 = vmatprep.subr.bf16.mxu0 0
      %6136 = vmatpush2.bf16.msra.mxu0 0
      %6137 = vmatprep.subr.bf16.mxu0 0
      %6138 = vmatpush2.bf16.msra.mxu0 0
      %6139 = vmatprep.subr.bf16.mxu0 0
      %6140 = vmatpush2.bf16.msra.mxu0 0
      %6141 = vmatprep.subr.bf16.mxu0 0
      %6142 = vmatpush2.bf16.msra.mxu0 0
      %6143 = vmatprep.mubr.bf16.mxu0 0
      %6144 = vmatmul.mubr.bf16.gmra.mxu0 %v6064
      %v6145 = vpop.f32.mrf.mxu0
      %v6146 = vadd.f32 0.0, %v6145
      %v6147 = vpop.f32.mrf.mxu0
      %v6148 = vpop.f32.mrf.mxu0
      %v6149 = vadd.f32 0.0, %v6148
      %v6150 = vpop.f32.mrf.mxu0
      %6151 = vmatprep.mubr.bf16.mxu0 0
      %6152 = vmatmul.mubr.bf16.gmra.mxu0 %v6067
      %v6153 = vpop.f32.mrf.mxu0
      %v6154 = vadd.f32 0.0, %v6153
      %v6155 = vpop.f32.mrf.mxu0
      %v6156 = vpop.f32.mrf.mxu0
      %v6157 = vadd.f32 0.0, %v6156
      %v6158 = vpop.f32.mrf.mxu0
      %6159 = vmatprep.mubr.bf16.mxu0 0
      %6160 = vmatmul.mubr.bf16.gmra.mxu0 %v6070
      %v6161 = vpop.f32.mrf.mxu0
      %v6162 = vadd.f32 0.0, %v6161
      %v6163 = vpop.f32.mrf.mxu0
      %v6164 = vpop.f32.mrf.mxu0
      %v6165 = vadd.f32 0.0, %v6164
      %v6166 = vpop.f32.mrf.mxu0
      %6167 = vmatprep.mubr.bf16.mxu0 0
      %6168 = vmatmul.mubr.bf16.gmra.mxu0 %v6073
      %v6169 = vpop.f32.mrf.mxu0
      %v6170 = vadd.f32 0.0, %v6169
      %v6171 = vpop.f32.mrf.mxu0
      %v6172 = vpop.f32.mrf.mxu0
      %v6173 = vadd.f32 0.0, %v6172
      %v6174 = vpop.f32.mrf.mxu0
      %6175 = vmatprep.mubr.bf16.mxu0 0
      %6176 = vmatmul.mubr.bf16.gmra.mxu0 %v6076
      %v6177 = vpop.f32.mrf.mxu0
      %v6178 = vadd.f32 0.0, %v6177
      %v6179 = vpop.f32.mrf.mxu0
      %v6180 = vpop.f32.mrf.mxu0
      %v6181 = vadd.f32 0.0, %v6180
      %v6182 = vpop.f32.mrf.mxu0
      %6183 = vmatprep.mubr.bf16.mxu0 0
      %6184 = vmatmul.mubr.bf16.gmra.mxu0 %v6079
      %v6185 = vpop.f32.mrf.mxu0
      %v6186 = vadd.f32 0.0, %v6185
      %v6187 = vpop.f32.mrf.mxu0
      %v6188 = vpop.f32.mrf.mxu0
      %v6189 = vadd.f32 0.0, %v6188
      %v6190 = vpop.f32.mrf.mxu0
      %6191 = vmatprep.mubr.bf16.mxu0 0
      %6192 = vmatmul.mubr.bf16.gmra.mxu0 %v6082
      %v6193 = vpop.f32.mrf.mxu0
      %v6194 = vadd.f32 0.0, %v6193
      %v6195 = vpop.f32.mrf.mxu0
      %v6196 = vpop.f32.mrf.mxu0
      %v6197 = vadd.f32 0.0, %v6196
      %v6198 = vpop.f32.mrf.mxu0
      %6199 = vmatprep.mubr.bf16.mxu0 0
      %6200 = vmatmul.mubr.bf16.gmra.mxu0 %v6085
      %v6201 = vpop.f32.mrf.mxu0
      %v6202 = vadd.f32 0.0, %v6201
      %v6203 = vpop.f32.mrf.mxu0
      %v6204 = vpop.f32.mrf.mxu0
      %v6205 = vadd.f32 0.0, %v6204
      %v6206 = vpop.f32.mrf.mxu0
      %6207 = vmatprep.mubr.bf16.mxu0 0
      %6208 = vmatmul.mubr.bf16.gmra.mxu0 %v6088
      %v6209 = vpop.f32.mrf.mxu0
      %v6210 = vadd.f32 0.0, %v6209
      %v6211 = vpop.f32.mrf.mxu0
      %v6212 = vpop.f32.mrf.mxu0
      %v6213 = vadd.f32 0.0, %v6212
      %v6214 = vpop.f32.mrf.mxu0
      %6215 = vmatprep.mubr.bf16.mxu0 0
      %6216 = vmatmul.mubr.bf16.gmra.mxu0 %v6091
      %v6217 = vpop.f32.mrf.mxu0
      %v6218 = vadd.f32 0.0, %v6217
      %v6219 = vpop.f32.mrf.mxu0
      %v6220 = vpop.f32.mrf.mxu0
      %v6221 = vadd.f32 0.0, %v6220
      %v6222 = vpop.f32.mrf.mxu0
      %6223 = vmatprep.mubr.bf16.mxu0 0
      %6224 = vmatmul.mubr.bf16.gmra.mxu0 %v6094
      %v6225 = vpop.f32.mrf.mxu0
      %v6226 = vadd.f32 0.0, %v6225
      %v6227 = vpop.f32.mrf.mxu0
      %v6228 = vpop.f32.mrf.mxu0
      %v6229 = vadd.f32 0.0, %v6228
      %v6230 = vpop.f32.mrf.mxu0
      %6231 = vmatprep.mubr.bf16.mxu0 0
      %6232 = vmatmul.mubr.bf16.gmra.mxu0 %v6097
      %v6233 = vpop.f32.mrf.mxu0
      %v6234 = vadd.f32 0.0, %v6233
      %v6235 = vpop.f32.mrf.mxu0
      %v6236 = vpop.f32.mrf.mxu0
      %v6237 = vadd.f32 0.0, %v6236
      %v6238 = vpop.f32.mrf.mxu0
      %6239 = vmatprep.mubr.bf16.mxu0 0
      %6240 = vmatmul.mubr.bf16.gmra.mxu0 %v6100
      %v6241 = vpop.f32.mrf.mxu0
      %v6242 = vadd.f32 0.0, %v6241
      %v6243 = vpop.f32.mrf.mxu0
      %v6244 = vpop.f32.mrf.mxu0
      %v6245 = vadd.f32 0.0, %v6244
      %v6246 = vpop.f32.mrf.mxu0
      %6247 = vmatprep.mubr.bf16.mxu0 0
      %6248 = vmatmul.mubr.bf16.gmra.mxu0 %v6103
      %v6249 = vpop.f32.mrf.mxu0
      %v6250 = vadd.f32 0.0, %v6249
      %v6251 = vpop.f32.mrf.mxu0
      %v6252 = vpop.f32.mrf.mxu0
      %v6253 = vadd.f32 0.0, %v6252
      %v6254 = vpop.f32.mrf.mxu0
      %6255 = vmatprep.mubr.bf16.mxu0 0
      %6256 = vmatmul.mubr.bf16.gmra.mxu0 %v6106
      %v6257 = vpop.f32.mrf.mxu0
      %v6258 = vadd.f32 0.0, %v6257
      %v6259 = vpop.f32.mrf.mxu0
      %v6260 = vpop.f32.mrf.mxu0
      %v6261 = vadd.f32 0.0, %v6260
      %v6262 = vpop.f32.mrf.mxu0
      %6263 = vmatprep.mubr.bf16.mxu0 0
      %6264 = vmatmul.mubr.bf16.gmra.mxu0 %v6109
      %v6265 = vpop.f32.mrf.mxu0
      %v6266 = vadd.f32 0.0, %v6265
      %v6267 = vpop.f32.mrf.mxu0
      %v6268 = vpop.f32.mrf.mxu0
      %v6269 = vadd.f32 0.0, %v6268
      %v6270 = vpop.f32.mrf.mxu0
      %6271 = vdwg.mxu0
      %v6272 = vadd.f32 %v5774, %v6146
      %v6273 = vadd.f32 %v5775, %v6149
      %v6274 = vadd.f32 %v5776, %v6154
      %v6275 = vadd.f32 %v5777, %v6157
      %v6276 = vadd.f32 %v5778, %v6162
      %v6277 = vadd.f32 %v5779, %v6165
      %v6278 = vadd.f32 %v5780, %v6170
      %v6279 = vadd.f32 %v5781, %v6173
      %v6280 = vadd.f32 %v5782, %v6178
      %v6281 = vadd.f32 %v5783, %v6181
      %v6282 = vadd.f32 %v5784, %v6186
      %v6283 = vadd.f32 %v5785, %v6189
      %v6284 = vadd.f32 %v5786, %v6194
      %v6285 = vadd.f32 %v5787, %v6197
      %v6286 = vadd.f32 %v5788, %v6202
      %v6287 = vadd.f32 %v5789, %v6205
      %v6288 = vadd.f32 %v5790, %v6210
      %v6289 = vadd.f32 %v5791, %v6213
      %v6290 = vadd.f32 %v5792, %v6218
      %v6291 = vadd.f32 %v5793, %v6221
      %v6292 = vadd.f32 %v5794, %v6226
      %v6293 = vadd.f32 %v5795, %v6229
      %v6294 = vadd.f32 %v5796, %v6234
      %v6295 = vadd.f32 %v5797, %v6237
      %v6296 = vadd.f32 %v5798, %v6242
      %v6297 = vadd.f32 %v5799, %v6245
      %v6298 = vadd.f32 %v5800, %v6250
      %v6299 = vadd.f32 %v5801, %v6253
      %v6300 = vadd.f32 %v5802, %v6258
      %v6301 = vadd.f32 %v5803, %v6261
      %v6302 = vadd.f32 %v5804, %v6266
      %v6303 = vadd.f32 %v5805, %v6269
      %vm6304 = vcmask 261120
      %v6305 = vsel %vm6304, %v6272, 0.0
      %v6306 = vsel %vm6304, %v6273, 0.0
      %v6307 = vadd.f32 %v6305, %v6306
      %v6308 = vsel %vm6304, %v6274, 0.0
      %v6309 = vadd.f32 %v6307, %v6308
      %v6310 = vsel %vm6304, %v6275, 0.0
      %v6311 = vadd.f32 %v6309, %v6310
      %v6312 = vsel %vm6304, %v6276, 0.0
      %v6313 = vadd.f32 %v6311, %v6312
      %v6314 = vsel %vm6304, %v6277, 0.0
      %v6315 = vadd.f32 %v6313, %v6314
      %v6316 = vsel %vm6304, %v6278, 0.0
      %v6317 = vadd.f32 %v6315, %v6316
      %v6318 = vsel %vm6304, %v6279, 0.0
      %v6319 = vadd.f32 %v6317, %v6318
      %v6320 = vsel %vm6304, %v6280, 0.0
      %v6321 = vadd.f32 %v6319, %v6320
      %v6322 = vsel %vm6304, %v6281, 0.0
      %v6323 = vadd.f32 %v6321, %v6322
      %v6324 = vsel %vm6304, %v6282, 0.0
      %v6325 = vadd.f32 %v6323, %v6324
      %v6326 = vsel %vm6304, %v6283, 0.0
      %v6327 = vadd.f32 %v6325, %v6326
      %v6328 = vsel %vm6304, %v6284, 0.0
      %v6329 = vadd.f32 %v6327, %v6328
      %v6330 = vsel %vm6304, %v6285, 0.0
      %v6331 = vadd.f32 %v6329, %v6330
      %v6332 = vsel %vm6304, %v6286, 0.0
      %v6333 = vadd.f32 %v6331, %v6332
      %v6334 = vsel %vm6304, %v6287, 0.0
      %v6335 = vadd.f32 %v6333, %v6334
      %v6336 = vsel %vm6304, %v6288, 0.0
      %v6337 = vadd.f32 %v6335, %v6336
      %v6338 = vsel %vm6304, %v6289, 0.0
      %v6339 = vadd.f32 %v6337, %v6338
      %v6340 = vsel %vm6304, %v6290, 0.0
      %v6341 = vadd.f32 %v6339, %v6340
      %v6342 = vsel %vm6304, %v6291, 0.0
      %v6343 = vadd.f32 %v6341, %v6342
      %v6344 = vsel %vm6304, %v6292, 0.0
      %v6345 = vadd.f32 %v6343, %v6344
      %v6346 = vsel %vm6304, %v6293, 0.0
      %v6347 = vadd.f32 %v6345, %v6346
      %v6348 = vsel %vm6304, %v6294, 0.0
      %v6349 = vadd.f32 %v6347, %v6348
      %v6350 = vsel %vm6304, %v6295, 0.0
      %v6351 = vadd.f32 %v6349, %v6350
      %v6352 = vsel %vm6304, %v6296, 0.0
      %v6353 = vadd.f32 %v6351, %v6352
      %v6354 = vsel %vm6304, %v6297, 0.0
      %v6355 = vadd.f32 %v6353, %v6354
      %v6356 = vsel %vm6304, %v6298, 0.0
      %v6357 = vadd.f32 %v6355, %v6356
      %v6358 = vsel %vm6304, %v6299, 0.0
      %v6359 = vadd.f32 %v6357, %v6358
      %v6360 = vsel %vm6304, %v6300, 0.0
      %v6361 = vadd.f32 %v6359, %v6360
      %v6362 = vsel %vm6304, %v6301, 0.0
      %v6363 = vadd.f32 %v6361, %v6362
      %v6364 = vsel %vm6304, %v6302, 0.0
      %v6365 = vadd.f32 %v6363, %v6364
      %v6366 = vsel %vm6304, %v6303, 0.0
      %v6367 = vadd.f32 %v6365, %v6366
      %v6368 = vrot.slane %v6367, 4
      %v6369 = vadd.f32 %v6367, %v6368
      %v6370 = vrot.slane %v6369, 2
      %v6371 = vadd.f32 %v6369, %v6370
      %v6372 = vrot.slane %v6371, 1
      %v6373 = vadd.f32 %v6371, %v6372
      %v6374 = vrcp.pop 256.0
      %v6375 = vmul.f32 %v6373, %v6374
      %v6376 = vsub.f32 %v6272, %v6375
      %v6377 = vsub.f32 %v6273, %v6375
      %v6378 = vsub.f32 %v6274, %v6375
      %v6379 = vsub.f32 %v6275, %v6375
      %v6380 = vsub.f32 %v6276, %v6375
      %v6381 = vsub.f32 %v6277, %v6375
      %v6382 = vsub.f32 %v6278, %v6375
      %v6383 = vsub.f32 %v6279, %v6375
      %v6384 = vsub.f32 %v6280, %v6375
      %v6385 = vsub.f32 %v6281, %v6375
      %v6386 = vsub.f32 %v6282, %v6375
      %v6387 = vsub.f32 %v6283, %v6375
      %v6388 = vsub.f32 %v6284, %v6375
      %v6389 = vsub.f32 %v6285, %v6375
      %v6390 = vsub.f32 %v6286, %v6375
      %v6391 = vsub.f32 %v6287, %v6375
      %v6392 = vsub.f32 %v6288, %v6375
      %v6393 = vsub.f32 %v6289, %v6375
      %v6394 = vsub.f32 %v6290, %v6375
      %v6395 = vsub.f32 %v6291, %v6375
      %v6396 = vsub.f32 %v6292, %v6375
      %v6397 = vsub.f32 %v6293, %v6375
      %v6398 = vsub.f32 %v6294, %v6375
      %v6399 = vsub.f32 %v6295, %v6375
      %v6400 = vsub.f32 %v6296, %v6375
      %v6401 = vsub.f32 %v6297, %v6375
      %v6402 = vsub.f32 %v6298, %v6375
      %v6403 = vsub.f32 %v6299, %v6375
      %v6404 = vsub.f32 %v6300, %v6375
      %v6405 = vsub.f32 %v6301, %v6375
      %v6406 = vsub.f32 %v6302, %v6375
      %v6407 = vsub.f32 %v6303, %v6375
      %v6408 = vmul.f32 %v6376, %v6376
      %v6409 = vmul.f32 %v6377, %v6377
      %v6410 = vmul.f32 %v6378, %v6378
      %v6411 = vmul.f32 %v6379, %v6379
      %v6412 = vmul.f32 %v6380, %v6380
      %v6413 = vmul.f32 %v6381, %v6381
      %v6414 = vmul.f32 %v6382, %v6382
      %v6415 = vmul.f32 %v6383, %v6383
      %v6416 = vmul.f32 %v6384, %v6384
      %v6417 = vmul.f32 %v6385, %v6385
      %v6418 = vmul.f32 %v6386, %v6386
      %v6419 = vmul.f32 %v6387, %v6387
      %v6420 = vmul.f32 %v6388, %v6388
      %v6421 = vmul.f32 %v6389, %v6389
      %v6422 = vmul.f32 %v6390, %v6390
      %v6423 = vmul.f32 %v6391, %v6391
      %v6424 = vmul.f32 %v6392, %v6392
      %v6425 = vmul.f32 %v6393, %v6393
      %v6426 = vmul.f32 %v6394, %v6394
      %v6427 = vmul.f32 %v6395, %v6395
      %v6428 = vmul.f32 %v6396, %v6396
      %v6429 = vmul.f32 %v6397, %v6397
      %v6430 = vmul.f32 %v6398, %v6398
      %v6431 = vmul.f32 %v6399, %v6399
      %v6432 = vmul.f32 %v6400, %v6400
      %v6433 = vmul.f32 %v6401, %v6401
      %v6434 = vmul.f32 %v6402, %v6402
      %v6435 = vmul.f32 %v6403, %v6403
      %v6436 = vmul.f32 %v6404, %v6404
      %v6437 = vmul.f32 %v6405, %v6405
      %v6438 = vmul.f32 %v6406, %v6406
      %v6439 = vmul.f32 %v6407, %v6407
      %v6440 = vsel %vm6304, %v6408, 0.0
      %v6441 = vsel %vm6304, %v6409, 0.0
      %v6442 = vadd.f32 %v6440, %v6441
      %v6443 = vsel %vm6304, %v6410, 0.0
      %v6444 = vadd.f32 %v6442, %v6443
      %v6445 = vsel %vm6304, %v6411, 0.0
      %v6446 = vadd.f32 %v6444, %v6445
      %v6447 = vsel %vm6304, %v6412, 0.0
      %v6448 = vadd.f32 %v6446, %v6447
      %v6449 = vsel %vm6304, %v6413, 0.0
      %v6450 = vadd.f32 %v6448, %v6449
      %v6451 = vsel %vm6304, %v6414, 0.0
      %v6452 = vadd.f32 %v6450, %v6451
      %v6453 = vsel %vm6304, %v6415, 0.0
      %v6454 = vadd.f32 %v6452, %v6453
      %v6455 = vsel %vm6304, %v6416, 0.0
      %v6456 = vadd.f32 %v6454, %v6455
      %v6457 = vsel %vm6304, %v6417, 0.0
      %v6458 = vadd.f32 %v6456, %v6457
      %v6459 = vsel %vm6304, %v6418, 0.0
      %v6460 = vadd.f32 %v6458, %v6459
      %v6461 = vsel %vm6304, %v6419, 0.0
      %v6462 = vadd.f32 %v6460, %v6461
      %v6463 = vsel %vm6304, %v6420, 0.0
      %v6464 = vadd.f32 %v6462, %v6463
      %v6465 = vsel %vm6304, %v6421, 0.0
      %v6466 = vadd.f32 %v6464, %v6465
      %v6467 = vsel %vm6304, %v6422, 0.0
      %v6468 = vadd.f32 %v6466, %v6467
      %v6469 = vsel %vm6304, %v6423, 0.0
      %v6470 = vadd.f32 %v6468, %v6469
      %v6471 = vsel %vm6304, %v6424, 0.0
      %v6472 = vadd.f32 %v6470, %v6471
      %v6473 = vsel %vm6304, %v6425, 0.0
      %v6474 = vadd.f32 %v6472, %v6473
      %v6475 = vsel %vm6304, %v6426, 0.0
      %v6476 = vadd.f32 %v6474, %v6475
      %v6477 = vsel %vm6304, %v6427, 0.0
      %v6478 = vadd.f32 %v6476, %v6477
      %v6479 = vsel %vm6304, %v6428, 0.0
      %v6480 = vadd.f32 %v6478, %v6479
      %v6481 = vsel %vm6304, %v6429, 0.0
      %v6482 = vadd.f32 %v6480, %v6481
      %v6483 = vsel %vm6304, %v6430, 0.0
      %v6484 = vadd.f32 %v6482, %v6483
      %v6485 = vsel %vm6304, %v6431, 0.0
      %v6486 = vadd.f32 %v6484, %v6485
      %v6487 = vsel %vm6304, %v6432, 0.0
      %v6488 = vadd.f32 %v6486, %v6487
      %v6489 = vsel %vm6304, %v6433, 0.0
      %v6490 = vadd.f32 %v6488, %v6489
      %v6491 = vsel %vm6304, %v6434, 0.0
      %v6492 = vadd.f32 %v6490, %v6491
      %v6493 = vsel %vm6304, %v6435, 0.0
      %v6494 = vadd.f32 %v6492, %v6493
      %v6495 = vsel %vm6304, %v6436, 0.0
      %v6496 = vadd.f32 %v6494, %v6495
      %v6497 = vsel %vm6304, %v6437, 0.0
      %v6498 = vadd.f32 %v6496, %v6497
      %v6499 = vsel %vm6304, %v6438, 0.0
      %v6500 = vadd.f32 %v6498, %v6499
      %v6501 = vsel %vm6304, %v6439, 0.0
      %v6502 = vadd.f32 %v6500, %v6501
      %v6503 = vrot.slane %v6502, 4
      %v6504 = vadd.f32 %v6502, %v6503
      %v6505 = vrot.slane %v6504, 2
      %v6506 = vadd.f32 %v6504, %v6505
      %v6507 = vrot.slane %v6506, 1
      %v6508 = vadd.f32 %v6506, %v6507
      %v6509 = vmul.f32 %v6508, %v6374
      %v6510 = vadd.f32 %v6509, 1e-05
      %v6511 = vrsqrt.pop %v6510
      %v6512 = vmul.f32 %v6376, %v6511
      %v6513 = vmul.f32 %v6377, %v6511
      %v6514 = vmul.f32 %v6378, %v6511
      %v6515 = vmul.f32 %v6379, %v6511
      %v6516 = vmul.f32 %v6380, %v6511
      %v6517 = vmul.f32 %v6381, %v6511
      %v6518 = vmul.f32 %v6382, %v6511
      %v6519 = vmul.f32 %v6383, %v6511
      %v6520 = vmul.f32 %v6384, %v6511
      %v6521 = vmul.f32 %v6385, %v6511
      %v6522 = vmul.f32 %v6386, %v6511
      %v6523 = vmul.f32 %v6387, %v6511
      %v6524 = vmul.f32 %v6388, %v6511
      %v6525 = vmul.f32 %v6389, %v6511
      %v6526 = vmul.f32 %v6390, %v6511
      %v6527 = vmul.f32 %v6391, %v6511
      %v6528 = vmul.f32 %v6392, %v6511
      %v6529 = vmul.f32 %v6393, %v6511
      %v6530 = vmul.f32 %v6394, %v6511
      %v6531 = vmul.f32 %v6395, %v6511
      %v6532 = vmul.f32 %v6396, %v6511
      %v6533 = vmul.f32 %v6397, %v6511
      %v6534 = vmul.f32 %v6398, %v6511
      %v6535 = vmul.f32 %v6399, %v6511
      %v6536 = vmul.f32 %v6400, %v6511
      %v6537 = vmul.f32 %v6401, %v6511
      %v6538 = vmul.f32 %v6402, %v6511
      %v6539 = vmul.f32 %v6403, %v6511
      %v6540 = vmul.f32 %v6404, %v6511
      %v6541 = vmul.f32 %v6405, %v6511
      %v6542 = vmul.f32 %v6406, %v6511
      %v6543 = vmul.f32 %v6407, %v6511
      %v6544 = vmax.f32 %v6512, 0.0
      %v6545 = vmax.f32 %v6513, 0.0
      %v6546 = vmax.f32 %v6514, 0.0
      %v6547 = vmax.f32 %v6515, 0.0
      %v6548 = vmax.f32 %v6516, 0.0
      %v6549 = vmax.f32 %v6517, 0.0
      %v6550 = vmax.f32 %v6518, 0.0
      %v6551 = vmax.f32 %v6519, 0.0
      %v6552 = vmax.f32 %v6520, 0.0
      %v6553 = vmax.f32 %v6521, 0.0
      %v6554 = vmax.f32 %v6522, 0.0
      %v6555 = vmax.f32 %v6523, 0.0
      %v6556 = vmax.f32 %v6524, 0.0
      %v6557 = vmax.f32 %v6525, 0.0
      %v6558 = vmax.f32 %v6526, 0.0
      %v6559 = vmax.f32 %v6527, 0.0
      %v6560 = vmax.f32 %v6528, 0.0
      %v6561 = vmax.f32 %v6529, 0.0
      %v6562 = vmax.f32 %v6530, 0.0
      %v6563 = vmax.f32 %v6531, 0.0
      %v6564 = vmax.f32 %v6532, 0.0
      %v6565 = vmax.f32 %v6533, 0.0
      %v6566 = vmax.f32 %v6534, 0.0
      %v6567 = vmax.f32 %v6535, 0.0
      %v6568 = vmax.f32 %v6536, 0.0
      %v6569 = vmax.f32 %v6537, 0.0
      %v6570 = vmax.f32 %v6538, 0.0
      %v6571 = vmax.f32 %v6539, 0.0
      %v6572 = vmax.f32 %v6540, 0.0
      %v6573 = vmax.f32 %v6541, 0.0
      %v6574 = vmax.f32 %v6542, 0.0
      %v6575 = vmax.f32 %v6543, 0.0
      %v6576 = vpack.c.bf16 %v6545, %v6544
      %v6577 = vpack.c.bf16 %v6547, %v6546
      %v6578 = vpack.c.bf16 %v6549, %v6548
      %v6579 = vpack.c.bf16 %v6551, %v6550
      %v6580 = vpack.c.bf16 %v6553, %v6552
      %v6581 = vpack.c.bf16 %v6555, %v6554
      %v6582 = vpack.c.bf16 %v6557, %v6556
      %v6583 = vpack.c.bf16 %v6559, %v6558
      %v6584 = vpack.c.bf16 %v6561, %v6560
      %v6585 = vpack.c.bf16 %v6563, %v6562
      %v6586 = vpack.c.bf16 %v6565, %v6564
      %v6587 = vpack.c.bf16 %v6567, %v6566
      %v6588 = vpack.c.bf16 %v6569, %v6568
      %v6589 = vpack.c.bf16 %v6571, %v6570
      %v6590 = vpack.c.bf16 %v6573, %v6572
      %v6591 = vpack.c.bf16 %v6575, %v6574
      %v6608 = vunpack.c.l.b16 %v6576
      %v6609 = vunpack.c.h.b16 %v6576
      %v6610 = vunpack.c.l.b16 %v6577
      %v6611 = vunpack.c.h.b16 %v6577
      %v6612 = vunpack.c.l.b16 %v6578
      %v6613 = vunpack.c.h.b16 %v6578
      %v6614 = vunpack.c.l.b16 %v6579
      %v6615 = vunpack.c.h.b16 %v6579
      %v6616 = vunpack.c.l.b16 %v6580
      %v6617 = vunpack.c.h.b16 %v6580
      %v6618 = vunpack.c.l.b16 %v6581
      %v6619 = vunpack.c.h.b16 %v6581
      %v6620 = vunpack.c.l.b16 %v6582
      %v6621 = vunpack.c.h.b16 %v6582
      %v6622 = vunpack.c.l.b16 %v6583
      %v6623 = vunpack.c.h.b16 %v6583
      %v6624 = vunpack.c.l.b16 %v6584
      %v6625 = vunpack.c.h.b16 %v6584
      %v6626 = vunpack.c.l.b16 %v6585
      %v6627 = vunpack.c.h.b16 %v6585
      %v6628 = vunpack.c.l.b16 %v6586
      %v6629 = vunpack.c.h.b16 %v6586
      %v6630 = vunpack.c.l.b16 %v6587
      %v6631 = vunpack.c.h.b16 %v6587
      %v6632 = vunpack.c.l.b16 %v6588
      %v6633 = vunpack.c.h.b16 %v6588
      %v6634 = vunpack.c.l.b16 %v6589
      %v6635 = vunpack.c.h.b16 %v6589
      %v6636 = vunpack.c.l.b16 %v6590
      %v6637 = vunpack.c.h.b16 %v6590
      %v6638 = vunpack.c.l.b16 %v6591
      %v6639 = vunpack.c.h.b16 %v6591
      %v6640 = vpack.c.b16 %v6608, %v6608
      %v6641 = vpack.c.b16 %v6609, %v6609
      %v6642 = vpack.c.b16 %v6610, %v6610
      %v6643 = vpack.c.b16 %v6611, %v6611
      %v6644 = vpack.c.b16 %v6612, %v6612
      %v6645 = vpack.c.b16 %v6613, %v6613
      %v6646 = vpack.c.b16 %v6614, %v6614
      %v6647 = vpack.c.b16 %v6615, %v6615
      %v6648 = vpack.c.b16 %v6616, %v6616
      %v6649 = vpack.c.b16 %v6617, %v6617
      %v6650 = vpack.c.b16 %v6618, %v6618
      %v6651 = vpack.c.b16 %v6619, %v6619
      %v6652 = vpack.c.b16 %v6620, %v6620
      %v6653 = vpack.c.b16 %v6621, %v6621
      %v6654 = vpack.c.b16 %v6622, %v6622
      %v6655 = vpack.c.b16 %v6623, %v6623
      %v6656 = vpack.c.b16 %v6624, %v6624
      %v6657 = vpack.c.b16 %v6625, %v6625
      %v6658 = vpack.c.b16 %v6626, %v6626
      %v6659 = vpack.c.b16 %v6627, %v6627
      %v6660 = vpack.c.b16 %v6628, %v6628
      %v6661 = vpack.c.b16 %v6629, %v6629
      %v6662 = vpack.c.b16 %v6630, %v6630
      %v6663 = vpack.c.b16 %v6631, %v6631
      %v6664 = vpack.c.b16 %v6632, %v6632
      %v6665 = vpack.c.b16 %v6633, %v6633
      %v6666 = vpack.c.b16 %v6634, %v6634
      %v6667 = vpack.c.b16 %v6635, %v6635
      %v6668 = vpack.c.b16 %v6636, %v6636
      %v6669 = vpack.c.b16 %v6637, %v6637
      %v6670 = vpack.c.b16 %v6638, %v6638
      %v6671 = vpack.c.b16 %v6639, %v6639
      %v6673 = vshrl.u32 %v6640, 16
      %v6675 = vrot.slane %v6673, 7
      %v6676 = vshll.u32 %v6640, 16
      %v6678 = vor.u32 %v6675, %v6676
      %v6679 = vrot.slane %v6675, 4
      %v6681 = vshrl.u32 %v6641, 16
      %v6683 = vrot.slane %v6681, 7
      %v6684 = vshll.u32 %v6641, 16
      %v6686 = vor.u32 %v6683, %v6684
      %v6687 = vsel %vm494, %v6679, %v6686
      %v6688 = vrot.slane %v6683, 4
      %v6690 = vshrl.u32 %v6642, 16
      %v6692 = vrot.slane %v6690, 7
      %v6693 = vshll.u32 %v6642, 16
      %v6695 = vor.u32 %v6692, %v6693
      %v6696 = vrot.slane %v6692, 4
      %v6698 = vshrl.u32 %v6643, 16
      %v6700 = vrot.slane %v6698, 7
      %v6701 = vshll.u32 %v6643, 16
      %v6703 = vor.u32 %v6700, %v6701
      %v6704 = vsel %vm494, %v6696, %v6703
      %v6705 = vrot.slane %v6700, 4
      %v6707 = vshrl.u32 %v6644, 16
      %v6709 = vrot.slane %v6707, 7
      %v6710 = vshll.u32 %v6644, 16
      %v6712 = vor.u32 %v6709, %v6710
      %v6713 = vrot.slane %v6709, 4
      %v6715 = vshrl.u32 %v6645, 16
      %v6717 = vrot.slane %v6715, 7
      %v6718 = vshll.u32 %v6645, 16
      %v6720 = vor.u32 %v6717, %v6718
      %v6721 = vsel %vm494, %v6713, %v6720
      %v6722 = vrot.slane %v6717, 4
      %v6724 = vshrl.u32 %v6646, 16
      %v6726 = vrot.slane %v6724, 7
      %v6727 = vshll.u32 %v6646, 16
      %v6729 = vor.u32 %v6726, %v6727
      %v6730 = vrot.slane %v6726, 4
      %v6732 = vshrl.u32 %v6647, 16
      %v6734 = vrot.slane %v6732, 7
      %v6735 = vshll.u32 %v6647, 16
      %v6737 = vor.u32 %v6734, %v6735
      %v6738 = vsel %vm494, %v6730, %v6737
      %v6739 = vrot.slane %v6734, 4
      %v6741 = vshrl.u32 %v6648, 16
      %v6743 = vrot.slane %v6741, 7
      %v6744 = vshll.u32 %v6648, 16
      %v6746 = vor.u32 %v6743, %v6744
      %v6747 = vrot.slane %v6743, 4
      %v6749 = vshrl.u32 %v6649, 16
      %v6751 = vrot.slane %v6749, 7
      %v6752 = vshll.u32 %v6649, 16
      %v6754 = vor.u32 %v6751, %v6752
      %v6755 = vsel %vm494, %v6747, %v6754
      %v6756 = vrot.slane %v6751, 4
      %v6758 = vshrl.u32 %v6650, 16
      %v6760 = vrot.slane %v6758, 7
      %v6761 = vshll.u32 %v6650, 16
      %v6763 = vor.u32 %v6760, %v6761
      %v6764 = vrot.slane %v6760, 4
      %v6766 = vshrl.u32 %v6651, 16
      %v6768 = vrot.slane %v6766, 7
      %v6769 = vshll.u32 %v6651, 16
      %v6771 = vor.u32 %v6768, %v6769
      %v6772 = vsel %vm494, %v6764, %v6771
      %v6773 = vrot.slane %v6768, 4
      %v6775 = vshrl.u32 %v6652, 16
      %v6777 = vrot.slane %v6775, 7
      %v6778 = vshll.u32 %v6652, 16
      %v6780 = vor.u32 %v6777, %v6778
      %v6781 = vrot.slane %v6777, 4
      %v6783 = vshrl.u32 %v6653, 16
      %v6785 = vrot.slane %v6783, 7
      %v6786 = vshll.u32 %v6653, 16
      %v6788 = vor.u32 %v6785, %v6786
      %v6789 = vsel %vm494, %v6781, %v6788
      %v6790 = vrot.slane %v6785, 4
      %v6792 = vshrl.u32 %v6654, 16
      %v6794 = vrot.slane %v6792, 7
      %v6795 = vshll.u32 %v6654, 16
      %v6797 = vor.u32 %v6794, %v6795
      %v6798 = vrot.slane %v6794, 4
      %v6800 = vshrl.u32 %v6655, 16
      %v6802 = vrot.slane %v6800, 7
      %v6803 = vshll.u32 %v6655, 16
      %v6805 = vor.u32 %v6802, %v6803
      %v6806 = vsel %vm494, %v6798, %v6805
      %v6807 = vrot.slane %v6802, 4
      %v6809 = vshrl.u32 %v6656, 16
      %v6811 = vrot.slane %v6809, 7
      %v6812 = vshll.u32 %v6656, 16
      %v6814 = vor.u32 %v6811, %v6812
      %v6815 = vrot.slane %v6811, 4
      %v6817 = vshrl.u32 %v6657, 16
      %v6819 = vrot.slane %v6817, 7
      %v6820 = vshll.u32 %v6657, 16
      %v6822 = vor.u32 %v6819, %v6820
      %v6823 = vsel %vm494, %v6815, %v6822
      %v6824 = vrot.slane %v6819, 4
      %v6826 = vshrl.u32 %v6658, 16
      %v6828 = vrot.slane %v6826, 7
      %v6829 = vshll.u32 %v6658, 16
      %v6831 = vor.u32 %v6828, %v6829
      %v6832 = vrot.slane %v6828, 4
      %v6834 = vshrl.u32 %v6659, 16
      %v6836 = vrot.slane %v6834, 7
      %v6837 = vshll.u32 %v6659, 16
      %v6839 = vor.u32 %v6836, %v6837
      %v6840 = vsel %vm494, %v6832, %v6839
      %v6841 = vrot.slane %v6836, 4
      %v6843 = vshrl.u32 %v6660, 16
      %v6845 = vrot.slane %v6843, 7
      %v6846 = vshll.u32 %v6660, 16
      %v6848 = vor.u32 %v6845, %v6846
      %v6849 = vrot.slane %v6845, 4
      %v6851 = vshrl.u32 %v6661, 16
      %v6853 = vrot.slane %v6851, 7
      %v6854 = vshll.u32 %v6661, 16
      %v6856 = vor.u32 %v6853, %v6854
      %v6857 = vsel %vm494, %v6849, %v6856
      %v6858 = vrot.slane %v6853, 4
      %v6860 = vshrl.u32 %v6662, 16
      %v6862 = vrot.slane %v6860, 7
      %v6863 = vshll.u32 %v6662, 16
      %v6865 = vor.u32 %v6862, %v6863
      %v6866 = vrot.slane %v6862, 4
      %v6868 = vshrl.u32 %v6663, 16
      %v6870 = vrot.slane %v6868, 7
      %v6871 = vshll.u32 %v6663, 16
      %v6873 = vor.u32 %v6870, %v6871
      %v6874 = vsel %vm494, %v6866, %v6873
      %v6875 = vrot.slane %v6870, 4
      %v6877 = vshrl.u32 %v6664, 16
      %v6879 = vrot.slane %v6877, 7
      %v6880 = vshll.u32 %v6664, 16
      %v6882 = vor.u32 %v6879, %v6880
      %v6883 = vrot.slane %v6879, 4
      %v6885 = vshrl.u32 %v6665, 16
      %v6887 = vrot.slane %v6885, 7
      %v6888 = vshll.u32 %v6665, 16
      %v6890 = vor.u32 %v6887, %v6888
      %v6891 = vsel %vm494, %v6883, %v6890
      %v6892 = vrot.slane %v6887, 4
      %v6894 = vshrl.u32 %v6666, 16
      %v6896 = vrot.slane %v6894, 7
      %v6897 = vshll.u32 %v6666, 16
      %v6899 = vor.u32 %v6896, %v6897
      %v6900 = vrot.slane %v6896, 4
      %v6902 = vshrl.u32 %v6667, 16
      %v6904 = vrot.slane %v6902, 7
      %v6905 = vshll.u32 %v6667, 16
      %v6907 = vor.u32 %v6904, %v6905
      %v6908 = vsel %vm494, %v6900, %v6907
      %v6909 = vrot.slane %v6904, 4
      %v6911 = vshrl.u32 %v6668, 16
      %v6913 = vrot.slane %v6911, 7
      %v6914 = vshll.u32 %v6668, 16
      %v6916 = vor.u32 %v6913, %v6914
      %v6917 = vrot.slane %v6913, 4
      %v6919 = vshrl.u32 %v6669, 16
      %v6921 = vrot.slane %v6919, 7
      %v6922 = vshll.u32 %v6669, 16
      %v6924 = vor.u32 %v6921, %v6922
      %v6925 = vsel %vm494, %v6917, %v6924
      %v6926 = vrot.slane %v6921, 4
      %v6928 = vshrl.u32 %v6670, 16
      %v6930 = vrot.slane %v6928, 7
      %v6931 = vshll.u32 %v6670, 16
      %v6933 = vor.u32 %v6930, %v6931
      %v6934 = vrot.slane %v6930, 4
      %v6936 = vshrl.u32 %v6671, 16
      %v6938 = vrot.slane %v6936, 7
      %v6939 = vshll.u32 %v6671, 16
      %v6941 = vor.u32 %v6938, %v6939
      %v6942 = vsel %vm494, %v6934, %v6941
      %v6943 = vrot.slane %v6938, 4
      %s6992 = scalar_lea.vmem [#allocation3], 12
      %v6993 = vld [vmem:[%s6992] sm:$0xf]
      %v6994 = vsel %vm817, %v6678, %v6993
      %6995 = vst [vmem:[%s6992] sm:$0xf] %v6994
      %6996 = vst.msk [vmem:[%s6992 + $0x4] sm:$0xf] %vm341, %v6687
      %v6997 = vld [vmem:[%s6992 + $0x8] sm:$0x1]
      %v6998 = vsel %vm351, %v6688, %v6997
      %6999 = vst [vmem:[%s6992 + $0x8] sm:$0x1] %v6998
      %v7000 = vld [vmem:[%s6992 + $0xc] sm:$0xf]
      %v7001 = vsel %vm817, %v6695, %v7000
      %7002 = vst [vmem:[%s6992 + $0xc] sm:$0xf] %v7001
      %7003 = vst.msk [vmem:[%s6992 + $0x10] sm:$0xf] %vm341, %v6704
      %v7004 = vld [vmem:[%s6992 + $0x14] sm:$0x1]
      %v7005 = vsel %vm351, %v6705, %v7004
      %7006 = vst [vmem:[%s6992 + $0x14] sm:$0x1] %v7005
      %v7007 = vld [vmem:[%s6992 + $0x18] sm:$0xf]
      %v7008 = vsel %vm817, %v6712, %v7007
      %7009 = vst [vmem:[%s6992 + $0x18] sm:$0xf] %v7008
      %7010 = vst.msk [vmem:[%s6992 + $0x1c] sm:$0xf] %vm341, %v6721
      %v7011 = vld [vmem:[%s6992 + $0x20] sm:$0x1]
      %v7012 = vsel %vm351, %v6722, %v7011
      %7013 = vst [vmem:[%s6992 + $0x20] sm:$0x1] %v7012
      %v7014 = vld [vmem:[%s6992 + $0x24] sm:$0xf]
      %v7015 = vsel %vm817, %v6729, %v7014
      %7016 = vst [vmem:[%s6992 + $0x24] sm:$0xf] %v7015
      %7017 = vst.msk [vmem:[%s6992 + $0x28] sm:$0xf] %vm341, %v6738
      %v7018 = vld [vmem:[%s6992 + $0x2c] sm:$0x1]
      %v7019 = vsel %vm351, %v6739, %v7018
      %7020 = vst [vmem:[%s6992 + $0x2c] sm:$0x1] %v7019
      %v7021 = vld [vmem:[%s6992 + $0x30] sm:$0xf]
      %v7022 = vsel %vm817, %v6746, %v7021
      %7023 = vst [vmem:[%s6992 + $0x30] sm:$0xf] %v7022
      %7024 = vst.msk [vmem:[%s6992 + $0x34] sm:$0xf] %vm341, %v6755
      %v7025 = vld [vmem:[%s6992 + $0x38] sm:$0x1]
      %v7026 = vsel %vm351, %v6756, %v7025
      %7027 = vst [vmem:[%s6992 + $0x38] sm:$0x1] %v7026
      %v7028 = vld [vmem:[%s6992 + $0x3c] sm:$0xf]
      %v7029 = vsel %vm817, %v6763, %v7028
      %7030 = vst [vmem:[%s6992 + $0x3c] sm:$0xf] %v7029
      %7031 = vst.msk [vmem:[%s6992 + $0x40] sm:$0xf] %vm341, %v6772
      %v7032 = vld [vmem:[%s6992 + $0x44] sm:$0x1]
      %v7033 = vsel %vm351, %v6773, %v7032
      %7034 = vst [vmem:[%s6992 + $0x44] sm:$0x1] %v7033
      %v7035 = vld [vmem:[%s6992 + $0x48] sm:$0xf]
      %v7036 = vsel %vm817, %v6780, %v7035
      %7037 = vst [vmem:[%s6992 + $0x48] sm:$0xf] %v7036
      %7038 = vst.msk [vmem:[%s6992 + $0x4c] sm:$0xf] %vm341, %v6789
      %v7039 = vld [vmem:[%s6992 + $0x50] sm:$0x1]
      %v7040 = vsel %vm351, %v6790, %v7039
      %7041 = vst [vmem:[%s6992 + $0x50] sm:$0x1] %v7040
      %v7042 = vld [vmem:[%s6992 + $0x54] sm:$0xf]
      %v7043 = vsel %vm817, %v6797, %v7042
      %7044 = vst [vmem:[%s6992 + $0x54] sm:$0xf] %v7043
      %7045 = vst.msk [vmem:[%s6992 + $0x58] sm:$0xf] %vm341, %v6806
      %v7046 = vld [vmem:[%s6992 + $0x5c] sm:$0x1]
      %v7047 = vsel %vm351, %v6807, %v7046
      %7048 = vst [vmem:[%s6992 + $0x5c] sm:$0x1] %v7047
      %v7049 = vld [vmem:[%s6992 + $0x60] sm:$0xf]
      %v7050 = vsel %vm817, %v6814, %v7049
      %7051 = vst [vmem:[%s6992 + $0x60] sm:$0xf] %v7050
      %7052 = vst.msk [vmem:[%s6992 + $0x64] sm:$0xf] %vm341, %v6823
      %v7053 = vld [vmem:[%s6992 + $0x68] sm:$0x1]
      %v7054 = vsel %vm351, %v6824, %v7053
      %7055 = vst [vmem:[%s6992 + $0x68] sm:$0x1] %v7054
      %v7056 = vld [vmem:[%s6992 + $0x6c] sm:$0xf]
      %v7057 = vsel %vm817, %v6831, %v7056
      %7058 = vst [vmem:[%s6992 + $0x6c] sm:$0xf] %v7057
      %7059 = vst.msk [vmem:[%s6992 + $0x70] sm:$0xf] %vm341, %v6840
      %v7060 = vld [vmem:[%s6992 + $0x74] sm:$0x1]
      %v7061 = vsel %vm351, %v6841, %v7060
      %7062 = vst [vmem:[%s6992 + $0x74] sm:$0x1] %v7061
      %v7063 = vld [vmem:[%s6992 + $0x78] sm:$0xf]
      %v7064 = vsel %vm817, %v6848, %v7063
      %7065 = vst [vmem:[%s6992 + $0x78] sm:$0xf] %v7064
      %7066 = vst.msk [vmem:[%s6992 + $0x7c] sm:$0xf] %vm341, %v6857
      %v7067 = vld [vmem:[%s6992 + $0x80] sm:$0x1]
      %v7068 = vsel %vm351, %v6858, %v7067
      %7069 = vst [vmem:[%s6992 + $0x80] sm:$0x1] %v7068
      %v7070 = vld [vmem:[%s6992 + $0x84] sm:$0xf]
      %v7071 = vsel %vm817, %v6865, %v7070
      %7072 = vst [vmem:[%s6992 + $0x84] sm:$0xf] %v7071
      %7073 = vst.msk [vmem:[%s6992 + $0x88] sm:$0xf] %vm341, %v6874
      %v7074 = vld [vmem:[%s6992 + $0x8c] sm:$0x1]
      %v7075 = vsel %vm351, %v6875, %v7074
      %7076 = vst [vmem:[%s6992 + $0x8c] sm:$0x1] %v7075
      %v7077 = vld [vmem:[%s6992 + $0x90] sm:$0xf]
      %v7078 = vsel %vm817, %v6882, %v7077
      %7079 = vst [vmem:[%s6992 + $0x90] sm:$0xf] %v7078
      %7080 = vst.msk [vmem:[%s6992 + $0x94] sm:$0xf] %vm341, %v6891
      %v7081 = vld [vmem:[%s6992 + $0x98] sm:$0x1]
      %v7082 = vsel %vm351, %v6892, %v7081
      %7083 = vst [vmem:[%s6992 + $0x98] sm:$0x1] %v7082
      %v7084 = vld [vmem:[%s6992 + $0x9c] sm:$0xf]
      %v7085 = vsel %vm817, %v6899, %v7084
      %7086 = vst [vmem:[%s6992 + $0x9c] sm:$0xf] %v7085
      %7087 = vst.msk [vmem:[%s6992 + $0xa0] sm:$0xf] %vm341, %v6908
      %v7088 = vld [vmem:[%s6992 + $0xa4] sm:$0x1]
      %v7089 = vsel %vm351, %v6909, %v7088
      %7090 = vst [vmem:[%s6992 + $0xa4] sm:$0x1] %v7089
      %v7091 = vld [vmem:[%s6992 + $0xa8] sm:$0xf]
      %v7092 = vsel %vm817, %v6916, %v7091
      %7093 = vst [vmem:[%s6992 + $0xa8] sm:$0xf] %v7092
      %7094 = vst.msk [vmem:[%s6992 + $0xac] sm:$0xf] %vm341, %v6925
      %v7095 = vld [vmem:[%s6992 + $0xb0] sm:$0x1]
      %v7096 = vsel %vm351, %v6926, %v7095
      %7097 = vst [vmem:[%s6992 + $0xb0] sm:$0x1] %v7096
      %v7098 = vld [vmem:[%s6992 + $0xb4] sm:$0xf]
      %v7099 = vsel %vm817, %v6933, %v7098
      %7100 = vst [vmem:[%s6992 + $0xb4] sm:$0xf] %v7099
      %7101 = vst.msk [vmem:[%s6992 + $0xb8] sm:$0xf] %vm341, %v6942
      %v7102 = vld [vmem:[%s6992 + $0xbc] sm:$0x1]
      %v7103 = vsel %vm351, %v6943, %v7102
      %7104 = vst [vmem:[%s6992 + $0xbc] sm:$0x1] %v7103
      %v7105 = vld [vmem:[#allocation3] sm:$0xf]
      %v7106 = vld [vmem:[#allocation3 + $0x4] sm:$0xf]
      %v7107 = vld [vmem:[#allocation3 + $0xc] sm:$0xf]
      %v7108 = vld [vmem:[#allocation3 + $0x10] sm:$0xf]
      %v7109 = vld [vmem:[#allocation3 + $0x18] sm:$0xf]
      %v7110 = vld [vmem:[#allocation3 + $0x1c] sm:$0xf]
      %v7111 = vld [vmem:[#allocation3 + $0x24] sm:$0xf]
      %v7112 = vld [vmem:[#allocation3 + $0x28] sm:$0xf]
      %v7113 = vld [vmem:[#allocation3 + $0x30] sm:$0xf]
      %v7114 = vld [vmem:[#allocation3 + $0x34] sm:$0xf]
      %v7115 = vld [vmem:[#allocation3 + $0x3c] sm:$0xf]
      %v7116 = vld [vmem:[#allocation3 + $0x40] sm:$0xf]
      %v7117 = vld [vmem:[#allocation3 + $0x48] sm:$0xf]
      %v7118 = vld [vmem:[#allocation3 + $0x4c] sm:$0xf]
      %v7119 = vld [vmem:[#allocation3 + $0x54] sm:$0xf]
      %v7120 = vld [vmem:[#allocation3 + $0x58] sm:$0xf]
      %v7121 = vld [vmem:[#allocation3 + $0x60] sm:$0xf]
      %v7122 = vld [vmem:[#allocation3 + $0x64] sm:$0xf]
      %v7123 = vld [vmem:[#allocation3 + $0x6c] sm:$0xf]
      %v7124 = vld [vmem:[#allocation3 + $0x70] sm:$0xf]
      %v7125 = vld [vmem:[#allocation3 + $0x78] sm:$0xf]
      %v7126 = vld [vmem:[#allocation3 + $0x7c] sm:$0xf]
      %v7127 = vld [vmem:[#allocation3 + $0x84] sm:$0xf]
      %v7128 = vld [vmem:[#allocation3 + $0x88] sm:$0xf]
      %v7129 = vld [vmem:[#allocation3 + $0x90] sm:$0xf]
      %v7130 = vld [vmem:[#allocation3 + $0x94] sm:$0xf]
      %v7131 = vld [vmem:[#allocation3 + $0x9c] sm:$0xf]
      %v7132 = vld [vmem:[#allocation3 + $0xa0] sm:$0xf]
      %v7133 = vld [vmem:[#allocation3 + $0xa8] sm:$0xf]
      %v7134 = vld [vmem:[#allocation3 + $0xac] sm:$0xf]
      %v7135 = vld [vmem:[#allocation3 + $0xb4] sm:$0xf]
      %v7136 = vld [vmem:[#allocation3 + $0xb8] sm:$0xf]
      %v7137 = vld [vmem:[%s3] sm:$0xf]
      %v7138 = vld [vmem:[%s3 + $0x4] sm:$0xf]
      %v7139 = vld [vmem:[%s3 + $0x8] sm:$0xf]
      %v7140 = vld [vmem:[%s3 + $0xc] sm:$0xf]
      %v7141 = vld [vmem:[#allocation3 + $0x8] sm:$0x1]
      %v7142 = vld [vmem:[#allocation3 + $0x14] sm:$0x1]
      %v7143 = vld [vmem:[#allocation3 + $0x20] sm:$0x1]
      %v7144 = vld [vmem:[#allocation3 + $0x2c] sm:$0x1]
      %v7145 = vld [vmem:[#allocation3 + $0x38] sm:$0x1]
      %v7146 = vld [vmem:[#allocation3 + $0x44] sm:$0x1]
      %v7147 = vld [vmem:[#allocation3 + $0x50] sm:$0x1]
      %v7148 = vld [vmem:[#allocation3 + $0x5c] sm:$0x1]
      %v7149 = vld [vmem:[#allocation3 + $0x68] sm:$0x1]
      %v7150 = vld [vmem:[#allocation3 + $0x74] sm:$0x1]
      %v7151 = vld [vmem:[#allocation3 + $0x80] sm:$0x1]
      %v7152 = vld [vmem:[#allocation3 + $0x8c] sm:$0x1]
      %v7153 = vld [vmem:[#allocation3 + $0x98] sm:$0x1]
      %v7154 = vld [vmem:[#allocation3 + $0xa4] sm:$0x1]
      %v7155 = vld [vmem:[#allocation3 + $0xb0] sm:$0x1]
      %v7156 = vld [vmem:[#allocation3 + $0xbc] sm:$0x1]
      %v7158 = vshrl.u32 %v7105, 16
      %v7160 = vrot.slane %v7158, 4
      %v7161 = vshll.u32 %v7105, 16
      %v7163 = vrot.slane %v7161, 5
      %v7164 = vor.u32 %v7160, %v7163
      %v7165 = vrot.slane %v7164, 4
      %v7167 = vshll.u32 %v7106, 16
      %v7169 = vrot.slane %v7167, 5
      %v7170 = vsel %vm1553, %v7165, %v7169
      %v7171 = vshrl.u32 %v7106, 16
      %v7173 = vrot.slane %v7171, 4
      %v7174 = vor.u32 %v7173, %v7169
      %v7175 = vrot.slane %v7174, 4
      %v7177 = vshll.u32 %v7141, 16
      %v7179 = vrot.slane %v7177, 5
      %v7180 = vsel %vm1553, %v7175, %v7179
      %v7182 = vshrl.u32 %v7107, 16
      %v7184 = vrot.slane %v7182, 4
      %v7185 = vshll.u32 %v7107, 16
      %v7187 = vrot.slane %v7185, 5
      %v7188 = vor.u32 %v7184, %v7187
      %v7189 = vrot.slane %v7188, 4
      %v7191 = vshll.u32 %v7108, 16
      %v7193 = vrot.slane %v7191, 5
      %v7194 = vsel %vm1553, %v7189, %v7193
      %v7195 = vshrl.u32 %v7108, 16
      %v7197 = vrot.slane %v7195, 4
      %v7198 = vor.u32 %v7197, %v7193
      %v7199 = vrot.slane %v7198, 4
      %v7201 = vshll.u32 %v7142, 16
      %v7203 = vrot.slane %v7201, 5
      %v7204 = vsel %vm1553, %v7199, %v7203
      %v7206 = vshrl.u32 %v7109, 16
      %v7208 = vrot.slane %v7206, 4
      %v7209 = vshll.u32 %v7109, 16
      %v7211 = vrot.slane %v7209, 5
      %v7212 = vor.u32 %v7208, %v7211
      %v7213 = vrot.slane %v7212, 4
      %v7215 = vshll.u32 %v7110, 16
      %v7217 = vrot.slane %v7215, 5
      %v7218 = vsel %vm1553, %v7213, %v7217
      %v7219 = vshrl.u32 %v7110, 16
      %v7221 = vrot.slane %v7219, 4
      %v7222 = vor.u32 %v7221, %v7217
      %v7223 = vrot.slane %v7222, 4
      %v7225 = vshll.u32 %v7143, 16
      %v7227 = vrot.slane %v7225, 5
      %v7228 = vsel %vm1553, %v7223, %v7227
      %v7230 = vshrl.u32 %v7111, 16
      %v7232 = vrot.slane %v7230, 4
      %v7233 = vshll.u32 %v7111, 16
      %v7235 = vrot.slane %v7233, 5
      %v7236 = vor.u32 %v7232, %v7235
      %v7237 = vrot.slane %v7236, 4
      %v7239 = vshll.u32 %v7112, 16
      %v7241 = vrot.slane %v7239, 5
      %v7242 = vsel %vm1553, %v7237, %v7241
      %v7243 = vshrl.u32 %v7112, 16
      %v7245 = vrot.slane %v7243, 4
      %v7246 = vor.u32 %v7245, %v7241
      %v7247 = vrot.slane %v7246, 4
      %v7249 = vshll.u32 %v7144, 16
      %v7251 = vrot.slane %v7249, 5
      %v7252 = vsel %vm1553, %v7247, %v7251
      %v7254 = vshrl.u32 %v7113, 16
      %v7256 = vrot.slane %v7254, 4
      %v7257 = vshll.u32 %v7113, 16
      %v7259 = vrot.slane %v7257, 5
      %v7260 = vor.u32 %v7256, %v7259
      %v7261 = vrot.slane %v7260, 4
      %v7263 = vshll.u32 %v7114, 16
      %v7265 = vrot.slane %v7263, 5
      %v7266 = vsel %vm1553, %v7261, %v7265
      %v7267 = vshrl.u32 %v7114, 16
      %v7269 = vrot.slane %v7267, 4
      %v7270 = vor.u32 %v7269, %v7265
      %v7271 = vrot.slane %v7270, 4
      %v7273 = vshll.u32 %v7145, 16
      %v7275 = vrot.slane %v7273, 5
      %v7276 = vsel %vm1553, %v7271, %v7275
      %v7278 = vshrl.u32 %v7115, 16
      %v7280 = vrot.slane %v7278, 4
      %v7281 = vshll.u32 %v7115, 16
      %v7283 = vrot.slane %v7281, 5
      %v7284 = vor.u32 %v7280, %v7283
      %v7285 = vrot.slane %v7284, 4
      %v7287 = vshll.u32 %v7116, 16
      %v7289 = vrot.slane %v7287, 5
      %v7290 = vsel %vm1553, %v7285, %v7289
      %v7291 = vshrl.u32 %v7116, 16
      %v7293 = vrot.slane %v7291, 4
      %v7294 = vor.u32 %v7293, %v7289
      %v7295 = vrot.slane %v7294, 4
      %v7297 = vshll.u32 %v7146, 16
      %v7299 = vrot.slane %v7297, 5
      %v7300 = vsel %vm1553, %v7295, %v7299
      %v7302 = vshrl.u32 %v7117, 16
      %v7304 = vrot.slane %v7302, 4
      %v7305 = vshll.u32 %v7117, 16
      %v7307 = vrot.slane %v7305, 5
      %v7308 = vor.u32 %v7304, %v7307
      %v7309 = vrot.slane %v7308, 4
      %v7311 = vshll.u32 %v7118, 16
      %v7313 = vrot.slane %v7311, 5
      %v7314 = vsel %vm1553, %v7309, %v7313
      %v7315 = vshrl.u32 %v7118, 16
      %v7317 = vrot.slane %v7315, 4
      %v7318 = vor.u32 %v7317, %v7313
      %v7319 = vrot.slane %v7318, 4
      %v7321 = vshll.u32 %v7147, 16
      %v7323 = vrot.slane %v7321, 5
      %v7324 = vsel %vm1553, %v7319, %v7323
      %v7326 = vshrl.u32 %v7119, 16
      %v7328 = vrot.slane %v7326, 4
      %v7329 = vshll.u32 %v7119, 16
      %v7331 = vrot.slane %v7329, 5
      %v7332 = vor.u32 %v7328, %v7331
      %v7333 = vrot.slane %v7332, 4
      %v7335 = vshll.u32 %v7120, 16
      %v7337 = vrot.slane %v7335, 5
      %v7338 = vsel %vm1553, %v7333, %v7337
      %v7339 = vshrl.u32 %v7120, 16
      %v7341 = vrot.slane %v7339, 4
      %v7342 = vor.u32 %v7341, %v7337
      %v7343 = vrot.slane %v7342, 4
      %v7345 = vshll.u32 %v7148, 16
      %v7347 = vrot.slane %v7345, 5
      %v7348 = vsel %vm1553, %v7343, %v7347
      %v7350 = vshrl.u32 %v7121, 16
      %v7352 = vrot.slane %v7350, 4
      %v7353 = vshll.u32 %v7121, 16
      %v7355 = vrot.slane %v7353, 5
      %v7356 = vor.u32 %v7352, %v7355
      %v7357 = vrot.slane %v7356, 4
      %v7359 = vshll.u32 %v7122, 16
      %v7361 = vrot.slane %v7359, 5
      %v7362 = vsel %vm1553, %v7357, %v7361
      %v7363 = vshrl.u32 %v7122, 16
      %v7365 = vrot.slane %v7363, 4
      %v7366 = vor.u32 %v7365, %v7361
      %v7367 = vrot.slane %v7366, 4
      %v7369 = vshll.u32 %v7149, 16
      %v7371 = vrot.slane %v7369, 5
      %v7372 = vsel %vm1553, %v7367, %v7371
      %v7374 = vshrl.u32 %v7123, 16
      %v7376 = vrot.slane %v7374, 4
      %v7377 = vshll.u32 %v7123, 16
      %v7379 = vrot.slane %v7377, 5
      %v7380 = vor.u32 %v7376, %v7379
      %v7381 = vrot.slane %v7380, 4
      %v7383 = vshll.u32 %v7124, 16
      %v7385 = vrot.slane %v7383, 5
      %v7386 = vsel %vm1553, %v7381, %v7385
      %v7387 = vshrl.u32 %v7124, 16
      %v7389 = vrot.slane %v7387, 4
      %v7390 = vor.u32 %v7389, %v7385
      %v7391 = vrot.slane %v7390, 4
      %v7393 = vshll.u32 %v7150, 16
      %v7395 = vrot.slane %v7393, 5
      %v7396 = vsel %vm1553, %v7391, %v7395
      %v7398 = vshrl.u32 %v7125, 16
      %v7400 = vrot.slane %v7398, 4
      %v7401 = vshll.u32 %v7125, 16
      %v7403 = vrot.slane %v7401, 5
      %v7404 = vor.u32 %v7400, %v7403
      %v7405 = vrot.slane %v7404, 4
      %v7407 = vshll.u32 %v7126, 16
      %v7409 = vrot.slane %v7407, 5
      %v7410 = vsel %vm1553, %v7405, %v7409
      %v7411 = vshrl.u32 %v7126, 16
      %v7413 = vrot.slane %v7411, 4
      %v7414 = vor.u32 %v7413, %v7409
      %v7415 = vrot.slane %v7414, 4
      %v7417 = vshll.u32 %v7151, 16
      %v7419 = vrot.slane %v7417, 5
      %v7420 = vsel %vm1553, %v7415, %v7419
      %v7422 = vshrl.u32 %v7127, 16
      %v7424 = vrot.slane %v7422, 4
      %v7425 = vshll.u32 %v7127, 16
      %v7427 = vrot.slane %v7425, 5
      %v7428 = vor.u32 %v7424, %v7427
      %v7429 = vrot.slane %v7428, 4
      %v7431 = vshll.u32 %v7128, 16
      %v7433 = vrot.slane %v7431, 5
      %v7434 = vsel %vm1553, %v7429, %v7433
      %v7435 = vshrl.u32 %v7128, 16
      %v7437 = vrot.slane %v7435, 4
      %v7438 = vor.u32 %v7437, %v7433
      %v7439 = vrot.slane %v7438, 4
      %v7441 = vshll.u32 %v7152, 16
      %v7443 = vrot.slane %v7441, 5
      %v7444 = vsel %vm1553, %v7439, %v7443
      %v7446 = vshrl.u32 %v7129, 16
      %v7448 = vrot.slane %v7446, 4
      %v7449 = vshll.u32 %v7129, 16
      %v7451 = vrot.slane %v7449, 5
      %v7452 = vor.u32 %v7448, %v7451
      %v7453 = vrot.slane %v7452, 4
      %v7455 = vshll.u32 %v7130, 16
      %v7457 = vrot.slane %v7455, 5
      %v7458 = vsel %vm1553, %v7453, %v7457
      %v7459 = vshrl.u32 %v7130, 16
      %v7461 = vrot.slane %v7459, 4
      %v7462 = vor.u32 %v7461, %v7457
      %v7463 = vrot.slane %v7462, 4
      %v7465 = vshll.u32 %v7153, 16
      %v7467 = vrot.slane %v7465, 5
      %v7468 = vsel %vm1553, %v7463, %v7467
      %v7470 = vshrl.u32 %v7131, 16
      %v7472 = vrot.slane %v7470, 4
      %v7473 = vshll.u32 %v7131, 16
      %v7475 = vrot.slane %v7473, 5
      %v7476 = vor.u32 %v7472, %v7475
      %v7477 = vrot.slane %v7476, 4
      %v7479 = vshll.u32 %v7132, 16
      %v7481 = vrot.slane %v7479, 5
      %v7482 = vsel %vm1553, %v7477, %v7481
      %v7483 = vshrl.u32 %v7132, 16
      %v7485 = vrot.slane %v7483, 4
      %v7486 = vor.u32 %v7485, %v7481
      %v7487 = vrot.slane %v7486, 4
      %v7489 = vshll.u32 %v7154, 16
      %v7491 = vrot.slane %v7489, 5
      %v7492 = vsel %vm1553, %v7487, %v7491
      %v7494 = vshrl.u32 %v7133, 16
      %v7496 = vrot.slane %v7494, 4
      %v7497 = vshll.u32 %v7133, 16
      %v7499 = vrot.slane %v7497, 5
      %v7500 = vor.u32 %v7496, %v7499
      %v7501 = vrot.slane %v7500, 4
      %v7503 = vshll.u32 %v7134, 16
      %v7505 = vrot.slane %v7503, 5
      %v7506 = vsel %vm1553, %v7501, %v7505
      %v7507 = vshrl.u32 %v7134, 16
      %v7509 = vrot.slane %v7507, 4
      %v7510 = vor.u32 %v7509, %v7505
      %v7511 = vrot.slane %v7510, 4
      %v7513 = vshll.u32 %v7155, 16
      %v7515 = vrot.slane %v7513, 5
      %v7516 = vsel %vm1553, %v7511, %v7515
      %v7518 = vshrl.u32 %v7135, 16
      %v7520 = vrot.slane %v7518, 4
      %v7521 = vshll.u32 %v7135, 16
      %v7523 = vrot.slane %v7521, 5
      %v7524 = vor.u32 %v7520, %v7523
      %v7525 = vrot.slane %v7524, 4
      %v7527 = vshll.u32 %v7136, 16
      %v7529 = vrot.slane %v7527, 5
      %v7530 = vsel %vm1553, %v7525, %v7529
      %v7531 = vshrl.u32 %v7136, 16
      %v7533 = vrot.slane %v7531, 4
      %v7534 = vor.u32 %v7533, %v7529
      %v7535 = vrot.slane %v7534, 4
      %v7537 = vshll.u32 %v7156, 16
      %v7539 = vrot.slane %v7537, 5
      %v7540 = vsel %vm1553, %v7535, %v7539
      %s7541 = scalar_lea.vmem %s3, 16
      %v7542 = vld [vmem:[%s7541] sm:$0xf]
      %v7543 = vld [vmem:[%s7541 + $0x4] sm:$0xf]
      %v7544 = vld [vmem:[%s7541 + $0x8] sm:$0xf]
      %v7545 = vld [vmem:[%s7541 + $0xc] sm:$0xf]
      %v7546 = vunpack.c.l.b16 %v7170
      %v7547 = vunpack.c.l.b16 %v7180
      %v7548 = vunpack.c.l.b16 %v7194
      %v7549 = vunpack.c.l.b16 %v7204
      %v7550 = vunpack.c.l.b16 %v7218
      %v7551 = vunpack.c.l.b16 %v7228
      %v7552 = vunpack.c.l.b16 %v7242
      %v7553 = vunpack.c.l.b16 %v7252
      %v7554 = vunpack.c.l.b16 %v7266
      %v7555 = vunpack.c.l.b16 %v7276
      %v7556 = vunpack.c.l.b16 %v7290
      %v7557 = vunpack.c.l.b16 %v7300
      %v7558 = vunpack.c.l.b16 %v7314
      %v7559 = vunpack.c.l.b16 %v7324
      %v7560 = vunpack.c.l.b16 %v7338
      %v7561 = vunpack.c.l.b16 %v7348
      %v7562 = vunpack.c.l.b16 %v7362
      %v7563 = vunpack.c.l.b16 %v7372
      %v7564 = vunpack.c.l.b16 %v7386
      %v7565 = vunpack.c.l.b16 %v7396
      %v7566 = vunpack.c.l.b16 %v7410
      %v7567 = vunpack.c.l.b16 %v7420
      %v7568 = vunpack.c.l.b16 %v7434
      %v7569 = vunpack.c.l.b16 %v7444
      %v7570 = vunpack.c.l.b16 %v7458
      %v7571 = vunpack.c.l.b16 %v7468
      %v7572 = vunpack.c.l.b16 %v7482
      %v7573 = vunpack.c.l.b16 %v7492
      %v7574 = vunpack.c.l.b16 %v7506
      %v7575 = vunpack.c.l.b16 %v7516
      %v7576 = vunpack.c.l.b16 %v7530
      %v7577 = vunpack.c.l.b16 %v7540
      %v7578 = vpack.c.b16 %v7547, %v7546
      %v7579 = vpack.c.b16 %v7549, %v7548
      %v7580 = vpack.c.b16 %v7551, %v7550
      %v7581 = vpack.c.b16 %v7553, %v7552
      %v7582 = vpack.c.b16 %v7555, %v7554
      %v7583 = vpack.c.b16 %v7557, %v7556
      %v7584 = vpack.c.b16 %v7559, %v7558
      %v7585 = vpack.c.b16 %v7561, %v7560
      %v7586 = vpack.c.b16 %v7563, %v7562
      %v7587 = vpack.c.b16 %v7565, %v7564
      %v7588 = vpack.c.b16 %v7567, %v7566
      %v7589 = vpack.c.b16 %v7569, %v7568
      %v7590 = vpack.c.b16 %v7571, %v7570
      %v7591 = vpack.c.b16 %v7573, %v7572
      %v7592 = vpack.c.b16 %v7575, %v7574
      %v7593 = vpack.c.b16 %v7577, %v7576
      %v7598 = vunpack.c.l.b16 %v7542
      %v7599 = vunpack.c.l.b16 %v7543
      %v7600 = vunpack.c.l.b16 %v7544
      %v7601 = vunpack.c.l.b16 %v7545
      %v7602 = vpack.c.b16 %v7599, %v7598
      %v7603 = vpack.c.b16 %v7601, %v7600
      %v7607 = vsel %vm6304, %v7578, 0
      %v7610 = vsel %vm6304, %v7579, 0
      %v7613 = vsel %vm6304, %v7580, 0
      %v7616 = vsel %vm6304, %v7581, 0
      %v7619 = vsel %vm6304, %v7582, 0
      %v7622 = vsel %vm6304, %v7583, 0
      %v7625 = vsel %vm6304, %v7584, 0
      %v7628 = vsel %vm6304, %v7585, 0
      %v7631 = vsel %vm6304, %v7586, 0
      %v7634 = vsel %vm6304, %v7587, 0
      %v7637 = vsel %vm6304, %v7588, 0
      %v7640 = vsel %vm6304, %v7589, 0
      %v7643 = vsel %vm6304, %v7590, 0
      %v7646 = vsel %vm6304, %v7591, 0
      %v7649 = vsel %vm6304, %v7592, 0
      %v7652 = vsel %vm6304, %v7593, 0
      %7654 = vmatprep.subr.bf16.mxu0 0
      %7655 = vmatpush1.bf16.msra.mxu0 0
      %7656 = vmatprep.subr.bf16.mxu0 0
      %7657 = vmatpush1.bf16.msra.mxu0 0
      %7658 = vmatprep.subr.bf16.mxu0 0
      %7659 = vmatpush1.bf16.msra.mxu0 0
      %7660 = vmatprep.subr.bf16.mxu0 0
      %7661 = vmatpush1.bf16.msra.mxu0 0
      %7662 = vmatprep.subr.bf16.mxu0 0
      %7663 = vmatpush1.bf16.msra.mxu0 0
      %7664 = vmatprep.subr.bf16.mxu0 0
      %7665 = vmatpush1.bf16.msra.mxu0 0
      %7666 = vmatprep.subr.bf16.mxu0 0
      %7667 = vmatpush1.bf16.msra.mxu0 %v7603
      %7668 = vmatprep.subr.bf16.mxu0 0
      %7669 = vmatpush1.bf16.msra.mxu0 %v7602
      %7670 = vmatprep.subr.bf16.mxu0 0
      %7671 = vmatpush2.bf16.msra.mxu0 0
      %7672 = vmatprep.subr.bf16.mxu0 0
      %7673 = vmatpush2.bf16.msra.mxu0 0
      %7674 = vmatprep.subr.bf16.mxu0 0
      %7675 = vmatpush2.bf16.msra.mxu0 0
      %7676 = vmatprep.subr.bf16.mxu0 0
      %7677 = vmatpush2.bf16.msra.mxu0 0
      %7678 = vmatprep.subr.bf16.mxu0 0
      %7679 = vmatpush2.bf16.msra.mxu0 0
      %7680 = vmatprep.subr.bf16.mxu0 0
      %7681 = vmatpush2.bf16.msra.mxu0 0
      %7682 = vmatprep.subr.bf16.mxu0 0
      %7683 = vmatpush2.bf16.msra.mxu0 0
      %7684 = vmatprep.subr.bf16.mxu0 0
      %7685 = vmatpush2.bf16.msra.mxu0 0
      %7686 = vmatprep.mubr.bf16.mxu0 0
      %7687 = vmatmul.mubr.bf16.gmra.mxu0 %v7607
      %v7688 = vpop.f32.mrf.mxu0
      %v7689 = vadd.f32 0.0, %v7688
      %v7690 = vpop.f32.mrf.mxu0
      %v7691 = vpop.f32.mrf.mxu0
      %v7692 = vadd.f32 0.0, %v7691
      %v7693 = vpop.f32.mrf.mxu0
      %7694 = vmatprep.mubr.bf16.mxu0 0
      %7695 = vmatmul.mubr.bf16.gmra.mxu0 %v7610
      %v7696 = vpop.f32.mrf.mxu0
      %v7697 = vadd.f32 0.0, %v7696
      %v7698 = vpop.f32.mrf.mxu0
      %v7699 = vpop.f32.mrf.mxu0
      %v7700 = vadd.f32 0.0, %v7699
      %v7701 = vpop.f32.mrf.mxu0
      %7702 = vmatprep.mubr.bf16.mxu0 0
      %7703 = vmatmul.mubr.bf16.gmra.mxu0 %v7613
      %v7704 = vpop.f32.mrf.mxu0
      %v7705 = vadd.f32 0.0, %v7704
      %v7706 = vpop.f32.mrf.mxu0
      %v7707 = vpop.f32.mrf.mxu0
      %v7708 = vadd.f32 0.0, %v7707
      %v7709 = vpop.f32.mrf.mxu0
      %7710 = vmatprep.mubr.bf16.mxu0 0
      %7711 = vmatmul.mubr.bf16.gmra.mxu0 %v7616
      %v7712 = vpop.f32.mrf.mxu0
      %v7713 = vadd.f32 0.0, %v7712
      %v7714 = vpop.f32.mrf.mxu0
      %v7715 = vpop.f32.mrf.mxu0
      %v7716 = vadd.f32 0.0, %v7715
      %v7717 = vpop.f32.mrf.mxu0
      %7718 = vmatprep.mubr.bf16.mxu0 0
      %7719 = vmatmul.mubr.bf16.gmra.mxu0 %v7619
      %v7720 = vpop.f32.mrf.mxu0
      %v7721 = vadd.f32 0.0, %v7720
      %v7722 = vpop.f32.mrf.mxu0
      %v7723 = vpop.f32.mrf.mxu0
      %v7724 = vadd.f32 0.0, %v7723
      %v7725 = vpop.f32.mrf.mxu0
      %7726 = vmatprep.mubr.bf16.mxu0 0
      %7727 = vmatmul.mubr.bf16.gmra.mxu0 %v7622
      %v7728 = vpop.f32.mrf.mxu0
      %v7729 = vadd.f32 0.0, %v7728
      %v7730 = vpop.f32.mrf.mxu0
      %v7731 = vpop.f32.mrf.mxu0
      %v7732 = vadd.f32 0.0, %v7731
      %v7733 = vpop.f32.mrf.mxu0
      %7734 = vmatprep.mubr.bf16.mxu0 0
      %7735 = vmatmul.mubr.bf16.gmra.mxu0 %v7625
      %v7736 = vpop.f32.mrf.mxu0
      %v7737 = vadd.f32 0.0, %v7736
      %v7738 = vpop.f32.mrf.mxu0
      %v7739 = vpop.f32.mrf.mxu0
      %v7740 = vadd.f32 0.0, %v7739
      %v7741 = vpop.f32.mrf.mxu0
      %7742 = vmatprep.mubr.bf16.mxu0 0
      %7743 = vmatmul.mubr.bf16.gmra.mxu0 %v7628
      %v7744 = vpop.f32.mrf.mxu0
      %v7745 = vadd.f32 0.0, %v7744
      %v7746 = vpop.f32.mrf.mxu0
      %v7747 = vpop.f32.mrf.mxu0
      %v7748 = vadd.f32 0.0, %v7747
      %v7749 = vpop.f32.mrf.mxu0
      %7750 = vmatprep.mubr.bf16.mxu0 0
      %7751 = vmatmul.mubr.bf16.gmra.mxu0 %v7631
      %v7752 = vpop.f32.mrf.mxu0
      %v7753 = vadd.f32 0.0, %v7752
      %v7754 = vpop.f32.mrf.mxu0
      %v7755 = vpop.f32.mrf.mxu0
      %v7756 = vadd.f32 0.0, %v7755
      %v7757 = vpop.f32.mrf.mxu0
      %7758 = vmatprep.mubr.bf16.mxu0 0
      %7759 = vmatmul.mubr.bf16.gmra.mxu0 %v7634
      %v7760 = vpop.f32.mrf.mxu0
      %v7761 = vadd.f32 0.0, %v7760
      %v7762 = vpop.f32.mrf.mxu0
      %v7763 = vpop.f32.mrf.mxu0
      %v7764 = vadd.f32 0.0, %v7763
      %v7765 = vpop.f32.mrf.mxu0
      %7766 = vmatprep.mubr.bf16.mxu0 0
      %7767 = vmatmul.mubr.bf16.gmra.mxu0 %v7637
      %v7768 = vpop.f32.mrf.mxu0
      %v7769 = vadd.f32 0.0, %v7768
      %v7770 = vpop.f32.mrf.mxu0
      %v7771 = vpop.f32.mrf.mxu0
      %v7772 = vadd.f32 0.0, %v7771
      %v7773 = vpop.f32.mrf.mxu0
      %7774 = vmatprep.mubr.bf16.mxu0 0
      %7775 = vmatmul.mubr.bf16.gmra.mxu0 %v7640
      %v7776 = vpop.f32.mrf.mxu0
      %v7777 = vadd.f32 0.0, %v7776
      %v7778 = vpop.f32.mrf.mxu0
      %v7779 = vpop.f32.mrf.mxu0
      %v7780 = vadd.f32 0.0, %v7779
      %v7781 = vpop.f32.mrf.mxu0
      %7782 = vmatprep.mubr.bf16.mxu0 0
      %7783 = vmatmul.mubr.bf16.gmra.mxu0 %v7643
      %v7784 = vpop.f32.mrf.mxu0
      %v7785 = vadd.f32 0.0, %v7784
      %v7786 = vpop.f32.mrf.mxu0
      %v7787 = vpop.f32.mrf.mxu0
      %v7788 = vadd.f32 0.0, %v7787
      %v7789 = vpop.f32.mrf.mxu0
      %7790 = vmatprep.mubr.bf16.mxu0 0
      %7791 = vmatmul.mubr.bf16.gmra.mxu0 %v7646
      %v7792 = vpop.f32.mrf.mxu0
      %v7793 = vadd.f32 0.0, %v7792
      %v7794 = vpop.f32.mrf.mxu0
      %v7795 = vpop.f32.mrf.mxu0
      %v7796 = vadd.f32 0.0, %v7795
      %v7797 = vpop.f32.mrf.mxu0
      %7798 = vmatprep.mubr.bf16.mxu0 0
      %7799 = vmatmul.mubr.bf16.gmra.mxu0 %v7649
      %v7800 = vpop.f32.mrf.mxu0
      %v7801 = vadd.f32 0.0, %v7800
      %v7802 = vpop.f32.mrf.mxu0
      %v7803 = vpop.f32.mrf.mxu0
      %v7804 = vadd.f32 0.0, %v7803
      %v7805 = vpop.f32.mrf.mxu0
      %7806 = vmatprep.mubr.bf16.mxu0 0
      %7807 = vmatmul.mubr.bf16.gmra.mxu0 %v7652
      %v7808 = vpop.f32.mrf.mxu0
      %v7809 = vadd.f32 0.0, %v7808
      %v7810 = vpop.f32.mrf.mxu0
      %v7811 = vpop.f32.mrf.mxu0
      %v7812 = vadd.f32 0.0, %v7811
      %v7813 = vpop.f32.mrf.mxu0
      %7814 = vdwg.mxu0
      %v7847 = vunpack.c.l.b16 %v7105
      %v7848 = vunpack.c.l.b16 %v7106
      %v7849 = vunpack.c.l.b16 %v7107
      %v7850 = vunpack.c.l.b16 %v7108
      %v7851 = vunpack.c.l.b16 %v7109
      %v7852 = vunpack.c.l.b16 %v7110
      %v7853 = vunpack.c.l.b16 %v7111
      %v7854 = vunpack.c.l.b16 %v7112
      %v7855 = vunpack.c.l.b16 %v7113
      %v7856 = vunpack.c.l.b16 %v7114
      %v7857 = vunpack.c.l.b16 %v7115
      %v7858 = vunpack.c.l.b16 %v7116
      %v7859 = vunpack.c.l.b16 %v7117
      %v7860 = vunpack.c.l.b16 %v7118
      %v7861 = vunpack.c.l.b16 %v7119
      %v7862 = vunpack.c.l.b16 %v7120
      %v7863 = vunpack.c.l.b16 %v7121
      %v7864 = vunpack.c.l.b16 %v7122
      %v7865 = vunpack.c.l.b16 %v7123
      %v7866 = vunpack.c.l.b16 %v7124
      %v7867 = vunpack.c.l.b16 %v7125
      %v7868 = vunpack.c.l.b16 %v7126
      %v7869 = vunpack.c.l.b16 %v7127
      %v7870 = vunpack.c.l.b16 %v7128
      %v7871 = vunpack.c.l.b16 %v7129
      %v7872 = vunpack.c.l.b16 %v7130
      %v7873 = vunpack.c.l.b16 %v7131
      %v7874 = vunpack.c.l.b16 %v7132
      %v7875 = vunpack.c.l.b16 %v7133
      %v7876 = vunpack.c.l.b16 %v7134
      %v7877 = vunpack.c.l.b16 %v7135
      %v7878 = vunpack.c.l.b16 %v7136
      %v7879 = vpack.c.b16 %v7848, %v7847
      %v7880 = vpack.c.b16 %v7850, %v7849
      %v7881 = vpack.c.b16 %v7852, %v7851
      %v7882 = vpack.c.b16 %v7854, %v7853
      %v7883 = vpack.c.b16 %v7856, %v7855
      %v7884 = vpack.c.b16 %v7858, %v7857
      %v7885 = vpack.c.b16 %v7860, %v7859
      %v7886 = vpack.c.b16 %v7862, %v7861
      %v7887 = vpack.c.b16 %v7864, %v7863
      %v7888 = vpack.c.b16 %v7866, %v7865
      %v7889 = vpack.c.b16 %v7868, %v7867
      %v7890 = vpack.c.b16 %v7870, %v7869
      %v7891 = vpack.c.b16 %v7872, %v7871
      %v7892 = vpack.c.b16 %v7874, %v7873
      %v7893 = vpack.c.b16 %v7876, %v7875
      %v7894 = vpack.c.b16 %v7878, %v7877
      %v7899 = vunpack.c.l.b16 %v7137
      %v7900 = vunpack.c.l.b16 %v7138
      %v7901 = vunpack.c.l.b16 %v7139
      %v7902 = vunpack.c.l.b16 %v7140
      %v7903 = vpack.c.b16 %v7900, %v7899
      %v7904 = vpack.c.b16 %v7902, %v7901
      %v7908 = vsel %vm6304, %v7879, 0
      %v7911 = vsel %vm6304, %v7880, 0
      %v7914 = vsel %vm6304, %v7881, 0
      %v7917 = vsel %vm6304, %v7882, 0
      %v7920 = vsel %vm6304, %v7883, 0
      %v7923 = vsel %vm6304, %v7884, 0
      %v7926 = vsel %vm6304, %v7885, 0
      %v7929 = vsel %vm6304, %v7886, 0
      %v7932 = vsel %vm6304, %v7887, 0
      %v7935 = vsel %vm6304, %v7888, 0
      %v7938 = vsel %vm6304, %v7889, 0
      %v7941 = vsel %vm6304, %v7890, 0
      %v7944 = vsel %vm6304, %v7891, 0
      %v7947 = vsel %vm6304, %v7892, 0
      %v7950 = vsel %vm6304, %v7893, 0
      %v7953 = vsel %vm6304, %v7894, 0
      %7955 = vmatprep.subr.bf16.mxu0 0
      %7956 = vmatpush1.bf16.msra.mxu0 0
      %7957 = vmatprep.subr.bf16.mxu0 0
      %7958 = vmatpush1.bf16.msra.mxu0 0
      %7959 = vmatprep.subr.bf16.mxu0 0
      %7960 = vmatpush1.bf16.msra.mxu0 0
      %7961 = vmatprep.subr.bf16.mxu0 0
      %7962 = vmatpush1.bf16.msra.mxu0 0
      %7963 = vmatprep.subr.bf16.mxu0 0
      %7964 = vmatpush1.bf16.msra.mxu0 0
      %7965 = vmatprep.subr.bf16.mxu0 0
      %7966 = vmatpush1.bf16.msra.mxu0 0
      %7967 = vmatprep.subr.bf16.mxu0 0
      %7968 = vmatpush1.bf16.msra.mxu0 %v7904
      %7969 = vmatprep.subr.bf16.mxu0 0
      %7970 = vmatpush1.bf16.msra.mxu0 %v7903
      %7971 = vmatprep.subr.bf16.mxu0 0
      %7972 = vmatpush2.bf16.msra.mxu0 0
      %7973 = vmatprep.subr.bf16.mxu0 0
      %7974 = vmatpush2.bf16.msra.mxu0 0
      %7975 = vmatprep.subr.bf16.mxu0 0
      %7976 = vmatpush2.bf16.msra.mxu0 0
      %7977 = vmatprep.subr.bf16.mxu0 0
      %7978 = vmatpush2.bf16.msra.mxu0 0
      %7979 = vmatprep.subr.bf16.mxu0 0
      %7980 = vmatpush2.bf16.msra.mxu0 0
      %7981 = vmatprep.subr.bf16.mxu0 0
      %7982 = vmatpush2.bf16.msra.mxu0 0
      %7983 = vmatprep.subr.bf16.mxu0 0
      %7984 = vmatpush2.bf16.msra.mxu0 0
      %7985 = vmatprep.subr.bf16.mxu0 0
      %7986 = vmatpush2.bf16.msra.mxu0 0
      %7987 = vmatprep.mubr.bf16.mxu0 0
      %7988 = vmatmul.mubr.bf16.gmra.mxu0 %v7908
      %v7989 = vpop.f32.mrf.mxu0
      %v7990 = vadd.f32 %v7689, %v7989
      %v7991 = vpop.f32.mrf.mxu0
      %v7992 = vpop.f32.mrf.mxu0
      %v7993 = vadd.f32 %v7692, %v7992
      %v7994 = vpop.f32.mrf.mxu0
      %7995 = vmatprep.mubr.bf16.mxu0 0
      %7996 = vmatmul.mubr.bf16.gmra.mxu0 %v7911
      %v7997 = vpop.f32.mrf.mxu0
      %v7998 = vadd.f32 %v7697, %v7997
      %v7999 = vpop.f32.mrf.mxu0
      %v8000 = vpop.f32.mrf.mxu0
      %v8001 = vadd.f32 %v7700, %v8000
      %v8002 = vpop.f32.mrf.mxu0
      %8003 = vmatprep.mubr.bf16.mxu0 0
      %8004 = vmatmul.mubr.bf16.gmra.mxu0 %v7914
      %v8005 = vpop.f32.mrf.mxu0
      %v8006 = vadd.f32 %v7705, %v8005
      %v8007 = vpop.f32.mrf.mxu0
      %v8008 = vpop.f32.mrf.mxu0
      %v8009 = vadd.f32 %v7708, %v8008
      %v8010 = vpop.f32.mrf.mxu0
      %8011 = vmatprep.mubr.bf16.mxu0 0
      %8012 = vmatmul.mubr.bf16.gmra.mxu0 %v7917
      %v8013 = vpop.f32.mrf.mxu0
      %v8014 = vadd.f32 %v7713, %v8013
      %v8015 = vpop.f32.mrf.mxu0
      %v8016 = vpop.f32.mrf.mxu0
      %v8017 = vadd.f32 %v7716, %v8016
      %v8018 = vpop.f32.mrf.mxu0
      %8019 = vmatprep.mubr.bf16.mxu0 0
      %8020 = vmatmul.mubr.bf16.gmra.mxu0 %v7920
      %v8021 = vpop.f32.mrf.mxu0
      %v8022 = vadd.f32 %v7721, %v8021
      %v8023 = vpop.f32.mrf.mxu0
      %v8024 = vpop.f32.mrf.mxu0
      %v8025 = vadd.f32 %v7724, %v8024
      %v8026 = vpop.f32.mrf.mxu0
      %8027 = vmatprep.mubr.bf16.mxu0 0
      %8028 = vmatmul.mubr.bf16.gmra.mxu0 %v7923
      %v8029 = vpop.f32.mrf.mxu0
      %v8030 = vadd.f32 %v7729, %v8029
      %v8031 = vpop.f32.mrf.mxu0
      %v8032 = vpop.f32.mrf.mxu0
      %v8033 = vadd.f32 %v7732, %v8032
      %v8034 = vpop.f32.mrf.mxu0
      %8035 = vmatprep.mubr.bf16.mxu0 0
      %8036 = vmatmul.mubr.bf16.gmra.mxu0 %v7926
      %v8037 = vpop.f32.mrf.mxu0
      %v8038 = vadd.f32 %v7737, %v8037
      %v8039 = vpop.f32.mrf.mxu0
      %v8040 = vpop.f32.mrf.mxu0
      %v8041 = vadd.f32 %v7740, %v8040
      %v8042 = vpop.f32.mrf.mxu0
      %8043 = vmatprep.mubr.bf16.mxu0 0
      %8044 = vmatmul.mubr.bf16.gmra.mxu0 %v7929
      %v8045 = vpop.f32.mrf.mxu0
      %v8046 = vadd.f32 %v7745, %v8045
      %v8047 = vpop.f32.mrf.mxu0
      %v8048 = vpop.f32.mrf.mxu0
      %v8049 = vadd.f32 %v7748, %v8048
      %v8050 = vpop.f32.mrf.mxu0
      %8051 = vmatprep.mubr.bf16.mxu0 0
      %8052 = vmatmul.mubr.bf16.gmra.mxu0 %v7932
      %v8053 = vpop.f32.mrf.mxu0
      %v8054 = vadd.f32 %v7753, %v8053
      %v8055 = vpop.f32.mrf.mxu0
      %v8056 = vpop.f32.mrf.mxu0
      %v8057 = vadd.f32 %v7756, %v8056
      %v8058 = vpop.f32.mrf.mxu0
      %8059 = vmatprep.mubr.bf16.mxu0 0
      %8060 = vmatmul.mubr.bf16.gmra.mxu0 %v7935
      %v8061 = vpop.f32.mrf.mxu0
      %v8062 = vadd.f32 %v7761, %v8061
      %v8063 = vpop.f32.mrf.mxu0
      %v8064 = vpop.f32.mrf.mxu0
      %v8065 = vadd.f32 %v7764, %v8064
      %v8066 = vpop.f32.mrf.mxu0
      %8067 = vmatprep.mubr.bf16.mxu0 0
      %8068 = vmatmul.mubr.bf16.gmra.mxu0 %v7938
      %v8069 = vpop.f32.mrf.mxu0
      %v8070 = vadd.f32 %v7769, %v8069
      %v8071 = vpop.f32.mrf.mxu0
      %v8072 = vpop.f32.mrf.mxu0
      %v8073 = vadd.f32 %v7772, %v8072
      %v8074 = vpop.f32.mrf.mxu0
      %8075 = vmatprep.mubr.bf16.mxu0 0
      %8076 = vmatmul.mubr.bf16.gmra.mxu0 %v7941
      %v8077 = vpop.f32.mrf.mxu0
      %v8078 = vadd.f32 %v7777, %v8077
      %v8079 = vpop.f32.mrf.mxu0
      %v8080 = vpop.f32.mrf.mxu0
      %v8081 = vadd.f32 %v7780, %v8080
      %v8082 = vpop.f32.mrf.mxu0
      %8083 = vmatprep.mubr.bf16.mxu0 0
      %8084 = vmatmul.mubr.bf16.gmra.mxu0 %v7944
      %v8085 = vpop.f32.mrf.mxu0
      %v8086 = vadd.f32 %v7785, %v8085
      %v8087 = vpop.f32.mrf.mxu0
      %v8088 = vpop.f32.mrf.mxu0
      %v8089 = vadd.f32 %v7788, %v8088
      %v8090 = vpop.f32.mrf.mxu0
      %8091 = vmatprep.mubr.bf16.mxu0 0
      %8092 = vmatmul.mubr.bf16.gmra.mxu0 %v7947
      %v8093 = vpop.f32.mrf.mxu0
      %v8094 = vadd.f32 %v7793, %v8093
      %v8095 = vpop.f32.mrf.mxu0
      %v8096 = vpop.f32.mrf.mxu0
      %v8097 = vadd.f32 %v7796, %v8096
      %v8098 = vpop.f32.mrf.mxu0
      %8099 = vmatprep.mubr.bf16.mxu0 0
      %8100 = vmatmul.mubr.bf16.gmra.mxu0 %v7950
      %v8101 = vpop.f32.mrf.mxu0
      %v8102 = vadd.f32 %v7801, %v8101
      %v8103 = vpop.f32.mrf.mxu0
      %v8104 = vpop.f32.mrf.mxu0
      %v8105 = vadd.f32 %v7804, %v8104
      %v8106 = vpop.f32.mrf.mxu0
      %8107 = vmatprep.mubr.bf16.mxu0 0
      %8108 = vmatmul.mubr.bf16.gmra.mxu0 %v7953
      %v8109 = vpop.f32.mrf.mxu0
      %v8110 = vadd.f32 %v7809, %v8109
      %v8111 = vpop.f32.mrf.mxu0
      %v8112 = vpop.f32.mrf.mxu0
      %v8113 = vadd.f32 %v7812, %v8112
      %v8114 = vpop.f32.mrf.mxu0
      %8115 = vdwg.mxu0
      %v8116 = vld [vmem:[#allocation3] sm:$0xe]
      %v8117 = vld [vmem:[#allocation3 + $0xc] sm:$0xe]
      %v8118 = vld [vmem:[#allocation3 + $0x18] sm:$0xe]
      %v8119 = vld [vmem:[#allocation3 + $0x24] sm:$0xe]
      %v8120 = vld [vmem:[#allocation3 + $0x30] sm:$0xe]
      %v8121 = vld [vmem:[#allocation3 + $0x3c] sm:$0xe]
      %v8122 = vld [vmem:[#allocation3 + $0x48] sm:$0xe]
      %v8123 = vld [vmem:[#allocation3 + $0x54] sm:$0xe]
      %v8124 = vld [vmem:[#allocation3 + $0x60] sm:$0xe]
      %v8125 = vld [vmem:[#allocation3 + $0x6c] sm:$0xe]
      %v8126 = vld [vmem:[#allocation3 + $0x78] sm:$0xe]
      %v8127 = vld [vmem:[#allocation3 + $0x84] sm:$0xe]
      %v8128 = vld [vmem:[#allocation3 + $0x90] sm:$0xe]
      %v8129 = vld [vmem:[#allocation3 + $0x9c] sm:$0xe]
      %v8130 = vld [vmem:[#allocation3 + $0xa8] sm:$0xe]
      %v8131 = vld [vmem:[#allocation3 + $0xb4] sm:$0xe]
      %v8164 = vrot.slane %v8116, 5
      %v8165 = vrot.slane %v8164, 4
      %v8166 = vrot.slane %v7106, 5
      %v8167 = vsel %vm2592, %v8165, %v8166
      %v8168 = vrot.slane %v8166, 4
      %v8169 = vrot.slane %v7141, 5
      %v8170 = vsel %vm2592, %v8168, %v8169
      %v8171 = vrot.slane %v8117, 5
      %v8172 = vrot.slane %v8171, 4
      %v8173 = vrot.slane %v7108, 5
      %v8174 = vsel %vm2592, %v8172, %v8173
      %v8175 = vrot.slane %v8173, 4
      %v8176 = vrot.slane %v7142, 5
      %v8177 = vsel %vm2592, %v8175, %v8176
      %v8178 = vrot.slane %v8118, 5
      %v8179 = vrot.slane %v8178, 4
      %v8180 = vrot.slane %v7110, 5
      %v8181 = vsel %vm2592, %v8179, %v8180
      %v8182 = vrot.slane %v8180, 4
      %v8183 = vrot.slane %v7143, 5
      %v8184 = vsel %vm2592, %v8182, %v8183
      %v8185 = vrot.slane %v8119, 5
      %v8186 = vrot.slane %v8185, 4
      %v8187 = vrot.slane %v7112, 5
      %v8188 = vsel %vm2592, %v8186, %v8187
      %v8189 = vrot.slane %v8187, 4
      %v8190 = vrot.slane %v7144, 5
      %v8191 = vsel %vm2592, %v8189, %v8190
      %v8192 = vrot.slane %v8120, 5
      %v8193 = vrot.slane %v8192, 4
      %v8194 = vrot.slane %v7114, 5
      %v8195 = vsel %vm2592, %v8193, %v8194
      %v8196 = vrot.slane %v8194, 4
      %v8197 = vrot.slane %v7145, 5
      %v8198 = vsel %vm2592, %v8196, %v8197
      %v8199 = vrot.slane %v8121, 5
      %v8200 = vrot.slane %v8199, 4
      %v8201 = vrot.slane %v7116, 5
      %v8202 = vsel %vm2592, %v8200, %v8201
      %v8203 = vrot.slane %v8201, 4
      %v8204 = vrot.slane %v7146, 5
      %v8205 = vsel %vm2592, %v8203, %v8204
      %v8206 = vrot.slane %v8122, 5
      %v8207 = vrot.slane %v8206, 4
      %v8208 = vrot.slane %v7118, 5
      %v8209 = vsel %vm2592, %v8207, %v8208
      %v8210 = vrot.slane %v8208, 4
      %v8211 = vrot.slane %v7147, 5
      %v8212 = vsel %vm2592, %v8210, %v8211
      %v8213 = vrot.slane %v8123, 5
      %v8214 = vrot.slane %v8213, 4
      %v8215 = vrot.slane %v7120, 5
      %v8216 = vsel %vm2592, %v8214, %v8215
      %v8217 = vrot.slane %v8215, 4
      %v8218 = vrot.slane %v7148, 5
      %v8219 = vsel %vm2592, %v8217, %v8218
      %v8220 = vrot.slane %v8124, 5
      %v8221 = vrot.slane %v8220, 4
      %v8222 = vrot.slane %v7122, 5
      %v8223 = vsel %vm2592, %v8221, %v8222
      %v8224 = vrot.slane %v8222, 4
      %v8225 = vrot.slane %v7149, 5
      %v8226 = vsel %vm2592, %v8224, %v8225
      %v8227 = vrot.slane %v8125, 5
      %v8228 = vrot.slane %v8227, 4
      %v8229 = vrot.slane %v7124, 5
      %v8230 = vsel %vm2592, %v8228, %v8229
      %v8231 = vrot.slane %v8229, 4
      %v8232 = vrot.slane %v7150, 5
      %v8233 = vsel %vm2592, %v8231, %v8232
      %v8234 = vrot.slane %v8126, 5
      %v8235 = vrot.slane %v8234, 4
      %v8236 = vrot.slane %v7126, 5
      %v8237 = vsel %vm2592, %v8235, %v8236
      %v8238 = vrot.slane %v8236, 4
      %v8239 = vrot.slane %v7151, 5
      %v8240 = vsel %vm2592, %v8238, %v8239
      %v8241 = vrot.slane %v8127, 5
      %v8242 = vrot.slane %v8241, 4
      %v8243 = vrot.slane %v7128, 5
      %v8244 = vsel %vm2592, %v8242, %v8243
      %v8245 = vrot.slane %v8243, 4
      %v8246 = vrot.slane %v7152, 5
      %v8247 = vsel %vm2592, %v8245, %v8246
      %v8248 = vrot.slane %v8128, 5
      %v8249 = vrot.slane %v8248, 4
      %v8250 = vrot.slane %v7130, 5
      %v8251 = vsel %vm2592, %v8249, %v8250
      %v8252 = vrot.slane %v8250, 4
      %v8253 = vrot.slane %v7153, 5
      %v8254 = vsel %vm2592, %v8252, %v8253
      %v8255 = vrot.slane %v8129, 5
      %v8256 = vrot.slane %v8255, 4
      %v8257 = vrot.slane %v7132, 5
      %v8258 = vsel %vm2592, %v8256, %v8257
      %v8259 = vrot.slane %v8257, 4
      %v8260 = vrot.slane %v7154, 5
      %v8261 = vsel %vm2592, %v8259, %v8260
      %v8262 = vrot.slane %v8130, 5
      %v8263 = vrot.slane %v8262, 4
      %v8264 = vrot.slane %v7134, 5
      %v8265 = vsel %vm2592, %v8263, %v8264
      %v8266 = vrot.slane %v8264, 4
      %v8267 = vrot.slane %v7155, 5
      %v8268 = vsel %vm2592, %v8266, %v8267
      %v8269 = vrot.slane %v8131, 5
      %v8270 = vrot.slane %v8269, 4
      %v8271 = vrot.slane %v7136, 5
      %v8272 = vsel %vm2592, %v8270, %v8271
      %v8273 = vrot.slane %v8271, 4
      %v8274 = vrot.slane %v7156, 5
      %v8275 = vsel %vm2592, %v8273, %v8274
      %s8276 = scalar_lea.vmem %s3, 32
      %v8277 = vld [vmem:[%s8276] sm:$0xf]
      %v8278 = vld [vmem:[%s8276 + $0x4] sm:$0xf]
      %v8279 = vld [vmem:[%s8276 + $0x8] sm:$0xf]
      %v8280 = vld [vmem:[%s8276 + $0xc] sm:$0xf]
      %v8281 = vunpack.c.l.b16 %v8167
      %v8282 = vunpack.c.l.b16 %v8170
      %v8283 = vunpack.c.l.b16 %v8174
      %v8284 = vunpack.c.l.b16 %v8177
      %v8285 = vunpack.c.l.b16 %v8181
      %v8286 = vunpack.c.l.b16 %v8184
      %v8287 = vunpack.c.l.b16 %v8188
      %v8288 = vunpack.c.l.b16 %v8191
      %v8289 = vunpack.c.l.b16 %v8195
      %v8290 = vunpack.c.l.b16 %v8198
      %v8291 = vunpack.c.l.b16 %v8202
      %v8292 = vunpack.c.l.b16 %v8205
      %v8293 = vunpack.c.l.b16 %v8209
      %v8294 = vunpack.c.l.b16 %v8212
      %v8295 = vunpack.c.l.b16 %v8216
      %v8296 = vunpack.c.l.b16 %v8219
      %v8297 = vunpack.c.l.b16 %v8223
      %v8298 = vunpack.c.l.b16 %v8226
      %v8299 = vunpack.c.l.b16 %v8230
      %v8300 = vunpack.c.l.b16 %v8233
      %v8301 = vunpack.c.l.b16 %v8237
      %v8302 = vunpack.c.l.b16 %v8240
      %v8303 = vunpack.c.l.b16 %v8244
      %v8304 = vunpack.c.l.b16 %v8247
      %v8305 = vunpack.c.l.b16 %v8251
      %v8306 = vunpack.c.l.b16 %v8254
      %v8307 = vunpack.c.l.b16 %v8258
      %v8308 = vunpack.c.l.b16 %v8261
      %v8309 = vunpack.c.l.b16 %v8265
      %v8310 = vunpack.c.l.b16 %v8268
      %v8311 = vunpack.c.l.b16 %v8272
      %v8312 = vunpack.c.l.b16 %v8275
      %v8313 = vpack.c.b16 %v8282, %v8281
      %v8314 = vpack.c.b16 %v8284, %v8283
      %v8315 = vpack.c.b16 %v8286, %v8285
      %v8316 = vpack.c.b16 %v8288, %v8287
      %v8317 = vpack.c.b16 %v8290, %v8289
      %v8318 = vpack.c.b16 %v8292, %v8291
      %v8319 = vpack.c.b16 %v8294, %v8293
      %v8320 = vpack.c.b16 %v8296, %v8295
      %v8321 = vpack.c.b16 %v8298, %v8297
      %v8322 = vpack.c.b16 %v8300, %v8299
      %v8323 = vpack.c.b16 %v8302, %v8301
      %v8324 = vpack.c.b16 %v8304, %v8303
      %v8325 = vpack.c.b16 %v8306, %v8305
      %v8326 = vpack.c.b16 %v8308, %v8307
      %v8327 = vpack.c.b16 %v8310, %v8309
      %v8328 = vpack.c.b16 %v8312, %v8311
      %v8333 = vunpack.c.l.b16 %v8277
      %v8334 = vunpack.c.l.b16 %v8278
      %v8335 = vunpack.c.l.b16 %v8279
      %v8336 = vunpack.c.l.b16 %v8280
      %v8337 = vpack.c.b16 %v8334, %v8333
      %v8338 = vpack.c.b16 %v8336, %v8335
      %v8342 = vsel %vm6304, %v8313, 0
      %v8345 = vsel %vm6304, %v8314, 0
      %v8348 = vsel %vm6304, %v8315, 0
      %v8351 = vsel %vm6304, %v8316, 0
      %v8354 = vsel %vm6304, %v8317, 0
      %v8357 = vsel %vm6304, %v8318, 0
      %v8360 = vsel %vm6304, %v8319, 0
      %v8363 = vsel %vm6304, %v8320, 0
      %v8366 = vsel %vm6304, %v8321, 0
      %v8369 = vsel %vm6304, %v8322, 0
      %v8372 = vsel %vm6304, %v8323, 0
      %v8375 = vsel %vm6304, %v8324, 0
      %v8378 = vsel %vm6304, %v8325, 0
      %v8381 = vsel %vm6304, %v8326, 0
      %v8384 = vsel %vm6304, %v8327, 0
      %v8387 = vsel %vm6304, %v8328, 0
      %8389 = vmatprep.subr.bf16.mxu0 0
      %8390 = vmatpush1.bf16.msra.mxu0 0
      %8391 = vmatprep.subr.bf16.mxu0 0
      %8392 = vmatpush1.bf16.msra.mxu0 0
      %8393 = vmatprep.subr.bf16.mxu0 0
      %8394 = vmatpush1.bf16.msra.mxu0 0
      %8395 = vmatprep.subr.bf16.mxu0 0
      %8396 = vmatpush1.bf16.msra.mxu0 0
      %8397 = vmatprep.subr.bf16.mxu0 0
      %8398 = vmatpush1.bf16.msra.mxu0 0
      %8399 = vmatprep.subr.bf16.mxu0 0
      %8400 = vmatpush1.bf16.msra.mxu0 0
      %8401 = vmatprep.subr.bf16.mxu0 0
      %8402 = vmatpush1.bf16.msra.mxu0 %v8338
      %8403 = vmatprep.subr.bf16.mxu0 0
      %8404 = vmatpush1.bf16.msra.mxu0 %v8337
      %8405 = vmatprep.subr.bf16.mxu0 0
      %8406 = vmatpush2.bf16.msra.mxu0 0
      %8407 = vmatprep.subr.bf16.mxu0 0
      %8408 = vmatpush2.bf16.msra.mxu0 0
      %8409 = vmatprep.subr.bf16.mxu0 0
      %8410 = vmatpush2.bf16.msra.mxu0 0
      %8411 = vmatprep.subr.bf16.mxu0 0
      %8412 = vmatpush2.bf16.msra.mxu0 0
      %8413 = vmatprep.subr.bf16.mxu0 0
      %8414 = vmatpush2.bf16.msra.mxu0 0
      %8415 = vmatprep.subr.bf16.mxu0 0
      %8416 = vmatpush2.bf16.msra.mxu0 0
      %8417 = vmatprep.subr.bf16.mxu0 0
      %8418 = vmatpush2.bf16.msra.mxu0 0
      %8419 = vmatprep.subr.bf16.mxu0 0
      %8420 = vmatpush2.bf16.msra.mxu0 0
      %8421 = vmatprep.mubr.bf16.mxu0 0
      %8422 = vmatmul.mubr.bf16.gmra.mxu0 %v8342
      %v8423 = vpop.f32.mrf.mxu0
      %v8424 = vadd.f32 0.0, %v8423
      %v8425 = vpop.f32.mrf.mxu0
      %v8426 = vpop.f32.mrf.mxu0
      %v8427 = vadd.f32 0.0, %v8426
      %v8428 = vpop.f32.mrf.mxu0
      %8429 = vmatprep.mubr.bf16.mxu0 0
      %8430 = vmatmul.mubr.bf16.gmra.mxu0 %v8345
      %v8431 = vpop.f32.mrf.mxu0
      %v8432 = vadd.f32 0.0, %v8431
      %v8433 = vpop.f32.mrf.mxu0
      %v8434 = vpop.f32.mrf.mxu0
      %v8435 = vadd.f32 0.0, %v8434
      %v8436 = vpop.f32.mrf.mxu0
      %8437 = vmatprep.mubr.bf16.mxu0 0
      %8438 = vmatmul.mubr.bf16.gmra.mxu0 %v8348
      %v8439 = vpop.f32.mrf.mxu0
      %v8440 = vadd.f32 0.0, %v8439
      %v8441 = vpop.f32.mrf.mxu0
      %v8442 = vpop.f32.mrf.mxu0
      %v8443 = vadd.f32 0.0, %v8442
      %v8444 = vpop.f32.mrf.mxu0
      %8445 = vmatprep.mubr.bf16.mxu0 0
      %8446 = vmatmul.mubr.bf16.gmra.mxu0 %v8351
      %v8447 = vpop.f32.mrf.mxu0
      %v8448 = vadd.f32 0.0, %v8447
      %v8449 = vpop.f32.mrf.mxu0
      %v8450 = vpop.f32.mrf.mxu0
      %v8451 = vadd.f32 0.0, %v8450
      %v8452 = vpop.f32.mrf.mxu0
      %8453 = vmatprep.mubr.bf16.mxu0 0
      %8454 = vmatmul.mubr.bf16.gmra.mxu0 %v8354
      %v8455 = vpop.f32.mrf.mxu0
      %v8456 = vadd.f32 0.0, %v8455
      %v8457 = vpop.f32.mrf.mxu0
      %v8458 = vpop.f32.mrf.mxu0
      %v8459 = vadd.f32 0.0, %v8458
      %v8460 = vpop.f32.mrf.mxu0
      %8461 = vmatprep.mubr.bf16.mxu0 0
      %8462 = vmatmul.mubr.bf16.gmra.mxu0 %v8357
      %v8463 = vpop.f32.mrf.mxu0
      %v8464 = vadd.f32 0.0, %v8463
      %v8465 = vpop.f32.mrf.mxu0
      %v8466 = vpop.f32.mrf.mxu0
      %v8467 = vadd.f32 0.0, %v8466
      %v8468 = vpop.f32.mrf.mxu0
      %8469 = vmatprep.mubr.bf16.mxu0 0
      %8470 = vmatmul.mubr.bf16.gmra.mxu0 %v8360
      %v8471 = vpop.f32.mrf.mxu0
      %v8472 = vadd.f32 0.0, %v8471
      %v8473 = vpop.f32.mrf.mxu0
      %v8474 = vpop.f32.mrf.mxu0
      %v8475 = vadd.f32 0.0, %v8474
      %v8476 = vpop.f32.mrf.mxu0
      %8477 = vmatprep.mubr.bf16.mxu0 0
      %8478 = vmatmul.mubr.bf16.gmra.mxu0 %v8363
      %v8479 = vpop.f32.mrf.mxu0
      %v8480 = vadd.f32 0.0, %v8479
      %v8481 = vpop.f32.mrf.mxu0
      %v8482 = vpop.f32.mrf.mxu0
      %v8483 = vadd.f32 0.0, %v8482
      %v8484 = vpop.f32.mrf.mxu0
      %8485 = vmatprep.mubr.bf16.mxu0 0
      %8486 = vmatmul.mubr.bf16.gmra.mxu0 %v8366
      %v8487 = vpop.f32.mrf.mxu0
      %v8488 = vadd.f32 0.0, %v8487
      %v8489 = vpop.f32.mrf.mxu0
      %v8490 = vpop.f32.mrf.mxu0
      %v8491 = vadd.f32 0.0, %v8490
      %v8492 = vpop.f32.mrf.mxu0
      %8493 = vmatprep.mubr.bf16.mxu0 0
      %8494 = vmatmul.mubr.bf16.gmra.mxu0 %v8369
      %v8495 = vpop.f32.mrf.mxu0
      %v8496 = vadd.f32 0.0, %v8495
      %v8497 = vpop.f32.mrf.mxu0
      %v8498 = vpop.f32.mrf.mxu0
      %v8499 = vadd.f32 0.0, %v8498
      %v8500 = vpop.f32.mrf.mxu0
      %8501 = vmatprep.mubr.bf16.mxu0 0
      %8502 = vmatmul.mubr.bf16.gmra.mxu0 %v8372
      %v8503 = vpop.f32.mrf.mxu0
      %v8504 = vadd.f32 0.0, %v8503
      %v8505 = vpop.f32.mrf.mxu0
      %v8506 = vpop.f32.mrf.mxu0
      %v8507 = vadd.f32 0.0, %v8506
      %v8508 = vpop.f32.mrf.mxu0
      %8509 = vmatprep.mubr.bf16.mxu0 0
      %8510 = vmatmul.mubr.bf16.gmra.mxu0 %v8375
      %v8511 = vpop.f32.mrf.mxu0
      %v8512 = vadd.f32 0.0, %v8511
      %v8513 = vpop.f32.mrf.mxu0
      %v8514 = vpop.f32.mrf.mxu0
      %v8515 = vadd.f32 0.0, %v8514
      %v8516 = vpop.f32.mrf.mxu0
      %8517 = vmatprep.mubr.bf16.mxu0 0
      %8518 = vmatmul.mubr.bf16.gmra.mxu0 %v8378
      %v8519 = vpop.f32.mrf.mxu0
      %v8520 = vadd.f32 0.0, %v8519
      %v8521 = vpop.f32.mrf.mxu0
      %v8522 = vpop.f32.mrf.mxu0
      %v8523 = vadd.f32 0.0, %v8522
      %v8524 = vpop.f32.mrf.mxu0
      %8525 = vmatprep.mubr.bf16.mxu0 0
      %8526 = vmatmul.mubr.bf16.gmra.mxu0 %v8381
      %v8527 = vpop.f32.mrf.mxu0
      %v8528 = vadd.f32 0.0, %v8527
      %v8529 = vpop.f32.mrf.mxu0
      %v8530 = vpop.f32.mrf.mxu0
      %v8531 = vadd.f32 0.0, %v8530
      %v8532 = vpop.f32.mrf.mxu0
      %8533 = vmatprep.mubr.bf16.mxu0 0
      %8534 = vmatmul.mubr.bf16.gmra.mxu0 %v8384
      %v8535 = vpop.f32.mrf.mxu0
      %v8536 = vadd.f32 0.0, %v8535
      %v8537 = vpop.f32.mrf.mxu0
      %v8538 = vpop.f32.mrf.mxu0
      %v8539 = vadd.f32 0.0, %v8538
      %v8540 = vpop.f32.mrf.mxu0
      %8541 = vmatprep.mubr.bf16.mxu0 0
      %8542 = vmatmul.mubr.bf16.gmra.mxu0 %v8387
      %v8543 = vpop.f32.mrf.mxu0
      %v8544 = vadd.f32 0.0, %v8543
      %v8545 = vpop.f32.mrf.mxu0
      %v8546 = vpop.f32.mrf.mxu0
      %v8547 = vadd.f32 0.0, %v8546
      %v8548 = vpop.f32.mrf.mxu0
      %8549 = vdwg.mxu0
      %v8550 = vadd.f32 %v7990, %v8424
      %v8551 = vadd.f32 %v7993, %v8427
      %v8552 = vadd.f32 %v7998, %v8432
      %v8553 = vadd.f32 %v8001, %v8435
      %v8554 = vadd.f32 %v8006, %v8440
      %v8555 = vadd.f32 %v8009, %v8443
      %v8556 = vadd.f32 %v8014, %v8448
      %v8557 = vadd.f32 %v8017, %v8451
      %v8558 = vadd.f32 %v8022, %v8456
      %v8559 = vadd.f32 %v8025, %v8459
      %v8560 = vadd.f32 %v8030, %v8464
      %v8561 = vadd.f32 %v8033, %v8467
      %v8562 = vadd.f32 %v8038, %v8472
      %v8563 = vadd.f32 %v8041, %v8475
      %v8564 = vadd.f32 %v8046, %v8480
      %v8565 = vadd.f32 %v8049, %v8483
      %v8566 = vadd.f32 %v8054, %v8488
      %v8567 = vadd.f32 %v8057, %v8491
      %v8568 = vadd.f32 %v8062, %v8496
      %v8569 = vadd.f32 %v8065, %v8499
      %v8570 = vadd.f32 %v8070, %v8504
      %v8571 = vadd.f32 %v8073, %v8507
      %v8572 = vadd.f32 %v8078, %v8512
      %v8573 = vadd.f32 %v8081, %v8515
      %v8574 = vadd.f32 %v8086, %v8520
      %v8575 = vadd.f32 %v8089, %v8523
      %v8576 = vadd.f32 %v8094, %v8528
      %v8577 = vadd.f32 %v8097, %v8531
      %v8578 = vadd.f32 %v8102, %v8536
      %v8579 = vadd.f32 %v8105, %v8539
      %v8580 = vadd.f32 %v8110, %v8544
      %v8581 = vadd.f32 %v8113, %v8547
      %v8582 = vld [vmem:[%s6992] sm:$0xf]
      %v8583 = vld [vmem:[%s6992 + $0x4] sm:$0xf]
      %v8584 = vld [vmem:[%s6992 + $0xc] sm:$0xf]
      %v8585 = vld [vmem:[%s6992 + $0x10] sm:$0xf]
      %v8586 = vld [vmem:[%s6992 + $0x18] sm:$0xf]
      %v8587 = vld [vmem:[%s6992 + $0x1c] sm:$0xf]
      %v8588 = vld [vmem:[%s6992 + $0x24] sm:$0xf]
      %v8589 = vld [vmem:[%s6992 + $0x28] sm:$0xf]
      %v8590 = vld [vmem:[%s6992 + $0x30] sm:$0xf]
      %v8591 = vld [vmem:[%s6992 + $0x34] sm:$0xf]
      %v8592 = vld [vmem:[%s6992 + $0x3c] sm:$0xf]
      %v8593 = vld [vmem:[%s6992 + $0x40] sm:$0xf]
      %v8594 = vld [vmem:[%s6992 + $0x48] sm:$0xf]
      %v8595 = vld [vmem:[%s6992 + $0x4c] sm:$0xf]
      %v8596 = vld [vmem:[%s6992 + $0x54] sm:$0xf]
      %v8597 = vld [vmem:[%s6992 + $0x58] sm:$0xf]
      %v8598 = vld [vmem:[%s6992 + $0x60] sm:$0xf]
      %v8599 = vld [vmem:[%s6992 + $0x64] sm:$0xf]
      %v8600 = vld [vmem:[%s6992 + $0x6c] sm:$0xf]
      %v8601 = vld [vmem:[%s6992 + $0x70] sm:$0xf]
      %v8602 = vld [vmem:[%s6992 + $0x78] sm:$0xf]
      %v8603 = vld [vmem:[%s6992 + $0x7c] sm:$0xf]
      %v8604 = vld [vmem:[%s6992 + $0x84] sm:$0xf]
      %v8605 = vld [vmem:[%s6992 + $0x88] sm:$0xf]
      %v8606 = vld [vmem:[%s6992 + $0x90] sm:$0xf]
      %v8607 = vld [vmem:[%s6992 + $0x94] sm:$0xf]
      %v8608 = vld [vmem:[%s6992 + $0x9c] sm:$0xf]
      %v8609 = vld [vmem:[%s6992 + $0xa0] sm:$0xf]
      %v8610 = vld [vmem:[%s6992 + $0xa8] sm:$0xf]
      %v8611 = vld [vmem:[%s6992 + $0xac] sm:$0xf]
      %v8612 = vld [vmem:[%s6992 + $0xb4] sm:$0xf]
      %v8613 = vld [vmem:[%s6992 + $0xb8] sm:$0xf]
      %s8614 = scalar_lea.vmem %s3, 48
      %v8615 = vld [vmem:[%s8614] sm:$0xf]
      %v8616 = vld [vmem:[%s8614 + $0x4] sm:$0xf]
      %v8617 = vld [vmem:[%s8614 + $0x8] sm:$0xf]
      %v8618 = vld [vmem:[%s8614 + $0xc] sm:$0xf]
      %v8651 = vunpack.c.l.b16 %v8582
      %v8652 = vunpack.c.l.b16 %v8583
      %v8653 = vunpack.c.l.b16 %v8584
      %v8654 = vunpack.c.l.b16 %v8585
      %v8655 = vunpack.c.l.b16 %v8586
      %v8656 = vunpack.c.l.b16 %v8587
      %v8657 = vunpack.c.l.b16 %v8588
      %v8658 = vunpack.c.l.b16 %v8589
      %v8659 = vunpack.c.l.b16 %v8590
      %v8660 = vunpack.c.l.b16 %v8591
      %v8661 = vunpack.c.l.b16 %v8592
      %v8662 = vunpack.c.l.b16 %v8593
      %v8663 = vunpack.c.l.b16 %v8594
      %v8664 = vunpack.c.l.b16 %v8595
      %v8665 = vunpack.c.l.b16 %v8596
      %v8666 = vunpack.c.l.b16 %v8597
      %v8667 = vunpack.c.l.b16 %v8598
      %v8668 = vunpack.c.l.b16 %v8599
      %v8669 = vunpack.c.l.b16 %v8600
      %v8670 = vunpack.c.l.b16 %v8601
      %v8671 = vunpack.c.l.b16 %v8602
      %v8672 = vunpack.c.l.b16 %v8603
      %v8673 = vunpack.c.l.b16 %v8604
      %v8674 = vunpack.c.l.b16 %v8605
      %v8675 = vunpack.c.l.b16 %v8606
      %v8676 = vunpack.c.l.b16 %v8607
      %v8677 = vunpack.c.l.b16 %v8608
      %v8678 = vunpack.c.l.b16 %v8609
      %v8679 = vunpack.c.l.b16 %v8610
      %v8680 = vunpack.c.l.b16 %v8611
      %v8681 = vunpack.c.l.b16 %v8612
      %v8682 = vunpack.c.l.b16 %v8613
      %v8683 = vpack.c.b16 %v8652, %v8651
      %v8684 = vpack.c.b16 %v8654, %v8653
      %v8685 = vpack.c.b16 %v8656, %v8655
      %v8686 = vpack.c.b16 %v8658, %v8657
      %v8687 = vpack.c.b16 %v8660, %v8659
      %v8688 = vpack.c.b16 %v8662, %v8661
      %v8689 = vpack.c.b16 %v8664, %v8663
      %v8690 = vpack.c.b16 %v8666, %v8665
      %v8691 = vpack.c.b16 %v8668, %v8667
      %v8692 = vpack.c.b16 %v8670, %v8669
      %v8693 = vpack.c.b16 %v8672, %v8671
      %v8694 = vpack.c.b16 %v8674, %v8673
      %v8695 = vpack.c.b16 %v8676, %v8675
      %v8696 = vpack.c.b16 %v8678, %v8677
      %v8697 = vpack.c.b16 %v8680, %v8679
      %v8698 = vpack.c.b16 %v8682, %v8681
      %v8703 = vunpack.c.l.b16 %v8615
      %v8704 = vunpack.c.l.b16 %v8616
      %v8705 = vunpack.c.l.b16 %v8617
      %v8706 = vunpack.c.l.b16 %v8618
      %v8707 = vpack.c.b16 %v8704, %v8703
      %v8708 = vpack.c.b16 %v8706, %v8705
      %v8712 = vsel %vm6304, %v8683, 0
      %v8715 = vsel %vm6304, %v8684, 0
      %v8718 = vsel %vm6304, %v8685, 0
      %v8721 = vsel %vm6304, %v8686, 0
      %v8724 = vsel %vm6304, %v8687, 0
      %v8727 = vsel %vm6304, %v8688, 0
      %v8730 = vsel %vm6304, %v8689, 0
      %v8733 = vsel %vm6304, %v8690, 0
      %v8736 = vsel %vm6304, %v8691, 0
      %v8739 = vsel %vm6304, %v8692, 0
      %v8742 = vsel %vm6304, %v8693, 0
      %v8745 = vsel %vm6304, %v8694, 0
      %v8748 = vsel %vm6304, %v8695, 0
      %v8751 = vsel %vm6304, %v8696, 0
      %v8754 = vsel %vm6304, %v8697, 0
      %v8757 = vsel %vm6304, %v8698, 0
      %8759 = vmatprep.subr.bf16.mxu0 0
      %8760 = vmatpush1.bf16.msra.mxu0 0
      %8761 = vmatprep.subr.bf16.mxu0 0
      %8762 = vmatpush1.bf16.msra.mxu0 0
      %8763 = vmatprep.subr.bf16.mxu0 0
      %8764 = vmatpush1.bf16.msra.mxu0 0
      %8765 = vmatprep.subr.bf16.mxu0 0
      %8766 = vmatpush1.bf16.msra.mxu0 0
      %8767 = vmatprep.subr.bf16.mxu0 0
      %8768 = vmatpush1.bf16.msra.mxu0 0
      %8769 = vmatprep.subr.bf16.mxu0 0
      %8770 = vmatpush1.bf16.msra.mxu0 0
      %8771 = vmatprep.subr.bf16.mxu0 0
      %8772 = vmatpush1.bf16.msra.mxu0 %v8708
      %8773 = vmatprep.subr.bf16.mxu0 0
      %8774 = vmatpush1.bf16.msra.mxu0 %v8707
      %8775 = vmatprep.subr.bf16.mxu0 0
      %8776 = vmatpush2.bf16.msra.mxu0 0
      %8777 = vmatprep.subr.bf16.mxu0 0
      %8778 = vmatpush2.bf16.msra.mxu0 0
      %8779 = vmatprep.subr.bf16.mxu0 0
      %8780 = vmatpush2.bf16.msra.mxu0 0
      %8781 = vmatprep.subr.bf16.mxu0 0
      %8782 = vmatpush2.bf16.msra.mxu0 0
      %8783 = vmatprep.subr.bf16.mxu0 0
      %8784 = vmatpush2.bf16.msra.mxu0 0
      %8785 = vmatprep.subr.bf16.mxu0 0
      %8786 = vmatpush2.bf16.msra.mxu0 0
      %8787 = vmatprep.subr.bf16.mxu0 0
      %8788 = vmatpush2.bf16.msra.mxu0 0
      %8789 = vmatprep.subr.bf16.mxu0 0
      %8790 = vmatpush2.bf16.msra.mxu0 0
      %8791 = vmatprep.mubr.bf16.mxu0 0
      %8792 = vmatmul.mubr.bf16.gmra.mxu0 %v8712
      %v8793 = vpop.f32.mrf.mxu0
      %v8794 = vadd.f32 0.0, %v8793
      %v8795 = vpop.f32.mrf.mxu0
      %v8796 = vpop.f32.mrf.mxu0
      %v8797 = vadd.f32 0.0, %v8796
      %v8798 = vpop.f32.mrf.mxu0
      %8799 = vmatprep.mubr.bf16.mxu0 0
      %8800 = vmatmul.mubr.bf16.gmra.mxu0 %v8715
      %v8801 = vpop.f32.mrf.mxu0
      %v8802 = vadd.f32 0.0, %v8801
      %v8803 = vpop.f32.mrf.mxu0
      %v8804 = vpop.f32.mrf.mxu0
      %v8805 = vadd.f32 0.0, %v8804
      %v8806 = vpop.f32.mrf.mxu0
      %8807 = vmatprep.mubr.bf16.mxu0 0
      %8808 = vmatmul.mubr.bf16.gmra.mxu0 %v8718
      %v8809 = vpop.f32.mrf.mxu0
      %v8810 = vadd.f32 0.0, %v8809
      %v8811 = vpop.f32.mrf.mxu0
      %v8812 = vpop.f32.mrf.mxu0
      %v8813 = vadd.f32 0.0, %v8812
      %v8814 = vpop.f32.mrf.mxu0
      %8815 = vmatprep.mubr.bf16.mxu0 0
      %8816 = vmatmul.mubr.bf16.gmra.mxu0 %v8721
      %v8817 = vpop.f32.mrf.mxu0
      %v8818 = vadd.f32 0.0, %v8817
      %v8819 = vpop.f32.mrf.mxu0
      %v8820 = vpop.f32.mrf.mxu0
      %v8821 = vadd.f32 0.0, %v8820
      %v8822 = vpop.f32.mrf.mxu0
      %8823 = vmatprep.mubr.bf16.mxu0 0
      %8824 = vmatmul.mubr.bf16.gmra.mxu0 %v8724
      %v8825 = vpop.f32.mrf.mxu0
      %v8826 = vadd.f32 0.0, %v8825
      %v8827 = vpop.f32.mrf.mxu0
      %v8828 = vpop.f32.mrf.mxu0
      %v8829 = vadd.f32 0.0, %v8828
      %v8830 = vpop.f32.mrf.mxu0
      %8831 = vmatprep.mubr.bf16.mxu0 0
      %8832 = vmatmul.mubr.bf16.gmra.mxu0 %v8727
      %v8833 = vpop.f32.mrf.mxu0
      %v8834 = vadd.f32 0.0, %v8833
      %v8835 = vpop.f32.mrf.mxu0
      %v8836 = vpop.f32.mrf.mxu0
      %v8837 = vadd.f32 0.0, %v8836
      %v8838 = vpop.f32.mrf.mxu0
      %8839 = vmatprep.mubr.bf16.mxu0 0
      %8840 = vmatmul.mubr.bf16.gmra.mxu0 %v8730
      %v8841 = vpop.f32.mrf.mxu0
      %v8842 = vadd.f32 0.0, %v8841
      %v8843 = vpop.f32.mrf.mxu0
      %v8844 = vpop.f32.mrf.mxu0
      %v8845 = vadd.f32 0.0, %v8844
      %v8846 = vpop.f32.mrf.mxu0
      %8847 = vmatprep.mubr.bf16.mxu0 0
      %8848 = vmatmul.mubr.bf16.gmra.mxu0 %v8733
      %v8849 = vpop.f32.mrf.mxu0
      %v8850 = vadd.f32 0.0, %v8849
      %v8851 = vpop.f32.mrf.mxu0
      %v8852 = vpop.f32.mrf.mxu0
      %v8853 = vadd.f32 0.0, %v8852
      %v8854 = vpop.f32.mrf.mxu0
      %8855 = vmatprep.mubr.bf16.mxu0 0
      %8856 = vmatmul.mubr.bf16.gmra.mxu0 %v8736
      %v8857 = vpop.f32.mrf.mxu0
      %v8858 = vadd.f32 0.0, %v8857
      %v8859 = vpop.f32.mrf.mxu0
      %v8860 = vpop.f32.mrf.mxu0
      %v8861 = vadd.f32 0.0, %v8860
      %v8862 = vpop.f32.mrf.mxu0
      %8863 = vmatprep.mubr.bf16.mxu0 0
      %8864 = vmatmul.mubr.bf16.gmra.mxu0 %v8739
      %v8865 = vpop.f32.mrf.mxu0
      %v8866 = vadd.f32 0.0, %v8865
      %v8867 = vpop.f32.mrf.mxu0
      %v8868 = vpop.f32.mrf.mxu0
      %v8869 = vadd.f32 0.0, %v8868
      %v8870 = vpop.f32.mrf.mxu0
      %8871 = vmatprep.mubr.bf16.mxu0 0
      %8872 = vmatmul.mubr.bf16.gmra.mxu0 %v8742
      %v8873 = vpop.f32.mrf.mxu0
      %v8874 = vadd.f32 0.0, %v8873
      %v8875 = vpop.f32.mrf.mxu0
      %v8876 = vpop.f32.mrf.mxu0
      %v8877 = vadd.f32 0.0, %v8876
      %v8878 = vpop.f32.mrf.mxu0
      %8879 = vmatprep.mubr.bf16.mxu0 0
      %8880 = vmatmul.mubr.bf16.gmra.mxu0 %v8745
      %v8881 = vpop.f32.mrf.mxu0
      %v8882 = vadd.f32 0.0, %v8881
      %v8883 = vpop.f32.mrf.mxu0
      %v8884 = vpop.f32.mrf.mxu0
      %v8885 = vadd.f32 0.0, %v8884
      %v8886 = vpop.f32.mrf.mxu0
      %8887 = vmatprep.mubr.bf16.mxu0 0
      %8888 = vmatmul.mubr.bf16.gmra.mxu0 %v8748
      %v8889 = vpop.f32.mrf.mxu0
      %v8890 = vadd.f32 0.0, %v8889
      %v8891 = vpop.f32.mrf.mxu0
      %v8892 = vpop.f32.mrf.mxu0
      %v8893 = vadd.f32 0.0, %v8892
      %v8894 = vpop.f32.mrf.mxu0
      %8895 = vmatprep.mubr.bf16.mxu0 0
      %8896 = vmatmul.mubr.bf16.gmra.mxu0 %v8751
      %v8897 = vpop.f32.mrf.mxu0
      %v8898 = vadd.f32 0.0, %v8897
      %v8899 = vpop.f32.mrf.mxu0
      %v8900 = vpop.f32.mrf.mxu0
      %v8901 = vadd.f32 0.0, %v8900
      %v8902 = vpop.f32.mrf.mxu0
      %8903 = vmatprep.mubr.bf16.mxu0 0
      %8904 = vmatmul.mubr.bf16.gmra.mxu0 %v8754
      %v8905 = vpop.f32.mrf.mxu0
      %v8906 = vadd.f32 0.0, %v8905
      %v8907 = vpop.f32.mrf.mxu0
      %v8908 = vpop.f32.mrf.mxu0
      %v8909 = vadd.f32 0.0, %v8908
      %v8910 = vpop.f32.mrf.mxu0
      %8911 = vmatprep.mubr.bf16.mxu0 0
      %8912 = vmatmul.mubr.bf16.gmra.mxu0 %v8757
      %v8913 = vpop.f32.mrf.mxu0
      %v8914 = vadd.f32 0.0, %v8913
      %v8915 = vpop.f32.mrf.mxu0
      %v8916 = vpop.f32.mrf.mxu0
      %v8917 = vadd.f32 0.0, %v8916
      %v8918 = vpop.f32.mrf.mxu0
      %8919 = vdwg.mxu0
      %v8920 = vadd.f32 %v8550, %v8794
      %v8921 = vadd.f32 %v8551, %v8797
      %v8922 = vadd.f32 %v8552, %v8802
      %v8923 = vadd.f32 %v8553, %v8805
      %v8924 = vadd.f32 %v8554, %v8810
      %v8925 = vadd.f32 %v8555, %v8813
      %v8926 = vadd.f32 %v8556, %v8818
      %v8927 = vadd.f32 %v8557, %v8821
      %v8928 = vadd.f32 %v8558, %v8826
      %v8929 = vadd.f32 %v8559, %v8829
      %v8930 = vadd.f32 %v8560, %v8834
      %v8931 = vadd.f32 %v8561, %v8837
      %v8932 = vadd.f32 %v8562, %v8842
      %v8933 = vadd.f32 %v8563, %v8845
      %v8934 = vadd.f32 %v8564, %v8850
      %v8935 = vadd.f32 %v8565, %v8853
      %v8936 = vadd.f32 %v8566, %v8858
      %v8937 = vadd.f32 %v8567, %v8861
      %v8938 = vadd.f32 %v8568, %v8866
      %v8939 = vadd.f32 %v8569, %v8869
      %v8940 = vadd.f32 %v8570, %v8874
      %v8941 = vadd.f32 %v8571, %v8877
      %v8942 = vadd.f32 %v8572, %v8882
      %v8943 = vadd.f32 %v8573, %v8885
      %v8944 = vadd.f32 %v8574, %v8890
      %v8945 = vadd.f32 %v8575, %v8893
      %v8946 = vadd.f32 %v8576, %v8898
      %v8947 = vadd.f32 %v8577, %v8901
      %v8948 = vadd.f32 %v8578, %v8906
      %v8949 = vadd.f32 %v8579, %v8909
      %v8950 = vadd.f32 %v8580, %v8914
      %v8951 = vadd.f32 %v8581, %v8917
      %v8952 = vld [vmem:[%s6992] sm:$0xf]
      %v8953 = vld [vmem:[%s6992 + $0x4] sm:$0xf]
      %v8954 = vld [vmem:[%s6992 + $0x8] sm:$0x1]
      %v8955 = vld [vmem:[%s6992 + $0xc] sm:$0xf]
      %v8956 = vld [vmem:[%s6992 + $0x10] sm:$0xf]
      %v8957 = vld [vmem:[%s6992 + $0x14] sm:$0x1]
      %v8958 = vld [vmem:[%s6992 + $0x18] sm:$0xf]
      %v8959 = vld [vmem:[%s6992 + $0x1c] sm:$0xf]
      %v8960 = vld [vmem:[%s6992 + $0x20] sm:$0x1]
      %v8961 = vld [vmem:[%s6992 + $0x24] sm:$0xf]
      %v8962 = vld [vmem:[%s6992 + $0x28] sm:$0xf]
      %v8963 = vld [vmem:[%s6992 + $0x2c] sm:$0x1]
      %v8964 = vld [vmem:[%s6992 + $0x30] sm:$0xf]
      %v8965 = vld [vmem:[%s6992 + $0x34] sm:$0xf]
      %v8966 = vld [vmem:[%s6992 + $0x38] sm:$0x1]
      %v8967 = vld [vmem:[%s6992 + $0x3c] sm:$0xf]
      %v8968 = vld [vmem:[%s6992 + $0x40] sm:$0xf]
      %v8969 = vld [vmem:[%s6992 + $0x44] sm:$0x1]
      %v8970 = vld [vmem:[%s6992 + $0x48] sm:$0xf]
      %v8971 = vld [vmem:[%s6992 + $0x4c] sm:$0xf]
      %v8972 = vld [vmem:[%s6992 + $0x50] sm:$0x1]
      %v8973 = vld [vmem:[%s6992 + $0x54] sm:$0xf]
      %v8974 = vld [vmem:[%s6992 + $0x58] sm:$0xf]
      %v8975 = vld [vmem:[%s6992 + $0x5c] sm:$0x1]
      %v8976 = vld [vmem:[%s6992 + $0x60] sm:$0xf]
      %v8977 = vld [vmem:[%s6992 + $0x64] sm:$0xf]
      %v8978 = vld [vmem:[%s6992 + $0x68] sm:$0x1]
      %v8979 = vld [vmem:[%s6992 + $0x6c] sm:$0xf]
      %v8980 = vld [vmem:[%s6992 + $0x70] sm:$0xf]
      %v8981 = vld [vmem:[%s6992 + $0x74] sm:$0x1]
      %v8982 = vld [vmem:[%s6992 + $0x78] sm:$0xf]
      %v8983 = vld [vmem:[%s6992 + $0x7c] sm:$0xf]
      %v8984 = vld [vmem:[%s6992 + $0x80] sm:$0x1]
      %v8985 = vld [vmem:[%s6992 + $0x84] sm:$0xf]
      %v8986 = vld [vmem:[%s6992 + $0x88] sm:$0xf]
      %v8987 = vld [vmem:[%s6992 + $0x8c] sm:$0x1]
      %v8988 = vld [vmem:[%s6992 + $0x90] sm:$0xf]
      %v8989 = vld [vmem:[%s6992 + $0x94] sm:$0xf]
      %v8990 = vld [vmem:[%s6992 + $0x98] sm:$0x1]
      %v8991 = vld [vmem:[%s6992 + $0x9c] sm:$0xf]
      %v8992 = vld [vmem:[%s6992 + $0xa0] sm:$0xf]
      %v8993 = vld [vmem:[%s6992 + $0xa4] sm:$0x1]
      %v8994 = vld [vmem:[%s6992 + $0xa8] sm:$0xf]
      %v8995 = vld [vmem:[%s6992 + $0xac] sm:$0xf]
      %v8996 = vld [vmem:[%s6992 + $0xb0] sm:$0x1]
      %v8997 = vld [vmem:[%s6992 + $0xb4] sm:$0xf]
      %v8998 = vld [vmem:[%s6992 + $0xb8] sm:$0xf]
      %v8999 = vld [vmem:[%s6992 + $0xbc] sm:$0x1]
      %v9001 = vshrl.u32 %v8952, 16
      %v9003 = vrot.slane %v9001, 4
      %v9004 = vshll.u32 %v8952, 16
      %v9006 = vrot.slane %v9004, 5
      %v9007 = vor.u32 %v9003, %v9006
      %v9008 = vrot.slane %v9007, 4
      %v9010 = vshll.u32 %v8953, 16
      %v9012 = vrot.slane %v9010, 5
      %v9013 = vsel %vm1553, %v9008, %v9012
      %v9014 = vshrl.u32 %v8953, 16
      %v9016 = vrot.slane %v9014, 4
      %v9017 = vor.u32 %v9016, %v9012
      %v9018 = vrot.slane %v9017, 4
      %v9020 = vshll.u32 %v8954, 16
      %v9022 = vrot.slane %v9020, 5
      %v9023 = vsel %vm1553, %v9018, %v9022
      %v9025 = vshrl.u32 %v8955, 16
      %v9027 = vrot.slane %v9025, 4
      %v9028 = vshll.u32 %v8955, 16
      %v9030 = vrot.slane %v9028, 5
      %v9031 = vor.u32 %v9027, %v9030
      %v9032 = vrot.slane %v9031, 4
      %v9034 = vshll.u32 %v8956, 16
      %v9036 = vrot.slane %v9034, 5
      %v9037 = vsel %vm1553, %v9032, %v9036
      %v9038 = vshrl.u32 %v8956, 16
      %v9040 = vrot.slane %v9038, 4
      %v9041 = vor.u32 %v9040, %v9036
      %v9042 = vrot.slane %v9041, 4
      %v9044 = vshll.u32 %v8957, 16
      %v9046 = vrot.slane %v9044, 5
      %v9047 = vsel %vm1553, %v9042, %v9046
      %v9049 = vshrl.u32 %v8958, 16
      %v9051 = vrot.slane %v9049, 4
      %v9052 = vshll.u32 %v8958, 16
      %v9054 = vrot.slane %v9052, 5
      %v9055 = vor.u32 %v9051, %v9054
      %v9056 = vrot.slane %v9055, 4
      %v9058 = vshll.u32 %v8959, 16
      %v9060 = vrot.slane %v9058, 5
      %v9061 = vsel %vm1553, %v9056, %v9060
      %v9062 = vshrl.u32 %v8959, 16
      %v9064 = vrot.slane %v9062, 4
      %v9065 = vor.u32 %v9064, %v9060
      %v9066 = vrot.slane %v9065, 4
      %v9068 = vshll.u32 %v8960, 16
      %v9070 = vrot.slane %v9068, 5
      %v9071 = vsel %vm1553, %v9066, %v9070
      %v9073 = vshrl.u32 %v8961, 16
      %v9075 = vrot.slane %v9073, 4
      %v9076 = vshll.u32 %v8961, 16
      %v9078 = vrot.slane %v9076, 5
      %v9079 = vor.u32 %v9075, %v9078
      %v9080 = vrot.slane %v9079, 4
      %v9082 = vshll.u32 %v8962, 16
      %v9084 = vrot.slane %v9082, 5
      %v9085 = vsel %vm1553, %v9080, %v9084
      %v9086 = vshrl.u32 %v8962, 16
      %v9088 = vrot.slane %v9086, 4
      %v9089 = vor.u32 %v9088, %v9084
      %v9090 = vrot.slane %v9089, 4
      %v9092 = vshll.u32 %v8963, 16
      %v9094 = vrot.slane %v9092, 5
      %v9095 = vsel %vm1553, %v9090, %v9094
      %v9097 = vshrl.u32 %v8964, 16
      %v9099 = vrot.slane %v9097, 4
      %v9100 = vshll.u32 %v8964, 16
      %v9102 = vrot.slane %v9100, 5
      %v9103 = vor.u32 %v9099, %v9102
      %v9104 = vrot.slane %v9103, 4
      %v9106 = vshll.u32 %v8965, 16
      %v9108 = vrot.slane %v9106, 5
      %v9109 = vsel %vm1553, %v9104, %v9108
      %v9110 = vshrl.u32 %v8965, 16
      %v9112 = vrot.slane %v9110, 4
      %v9113 = vor.u32 %v9112, %v9108
      %v9114 = vrot.slane %v9113, 4
      %v9116 = vshll.u32 %v8966, 16
      %v9118 = vrot.slane %v9116, 5
      %v9119 = vsel %vm1553, %v9114, %v9118
      %v9121 = vshrl.u32 %v8967, 16
      %v9123 = vrot.slane %v9121, 4
      %v9124 = vshll.u32 %v8967, 16
      %v9126 = vrot.slane %v9124, 5
      %v9127 = vor.u32 %v9123, %v9126
      %v9128 = vrot.slane %v9127, 4
      %v9130 = vshll.u32 %v8968, 16
      %v9132 = vrot.slane %v9130, 5
      %v9133 = vsel %vm1553, %v9128, %v9132
      %v9134 = vshrl.u32 %v8968, 16
      %v9136 = vrot.slane %v9134, 4
      %v9137 = vor.u32 %v9136, %v9132
      %v9138 = vrot.slane %v9137, 4
      %v9140 = vshll.u32 %v8969, 16
      %v9142 = vrot.slane %v9140, 5
      %v9143 = vsel %vm1553, %v9138, %v9142
      %v9145 = vshrl.u32 %v8970, 16
      %v9147 = vrot.slane %v9145, 4
      %v9148 = vshll.u32 %v8970, 16
      %v9150 = vrot.slane %v9148, 5
      %v9151 = vor.u32 %v9147, %v9150
      %v9152 = vrot.slane %v9151, 4
      %v9154 = vshll.u32 %v8971, 16
      %v9156 = vrot.slane %v9154, 5
      %v9157 = vsel %vm1553, %v9152, %v9156
      %v9158 = vshrl.u32 %v8971, 16
      %v9160 = vrot.slane %v9158, 4
      %v9161 = vor.u32 %v9160, %v9156
      %v9162 = vrot.slane %v9161, 4
      %v9164 = vshll.u32 %v8972, 16
      %v9166 = vrot.slane %v9164, 5
      %v9167 = vsel %vm1553, %v9162, %v9166
      %v9169 = vshrl.u32 %v8973, 16
      %v9171 = vrot.slane %v9169, 4
      %v9172 = vshll.u32 %v8973, 16
      %v9174 = vrot.slane %v9172, 5
      %v9175 = vor.u32 %v9171, %v9174
      %v9176 = vrot.slane %v9175, 4
      %v9178 = vshll.u32 %v8974, 16
      %v9180 = vrot.slane %v9178, 5
      %v9181 = vsel %vm1553, %v9176, %v9180
      %v9182 = vshrl.u32 %v8974, 16
      %v9184 = vrot.slane %v9182, 4
      %v9185 = vor.u32 %v9184, %v9180
      %v9186 = vrot.slane %v9185, 4
      %v9188 = vshll.u32 %v8975, 16
      %v9190 = vrot.slane %v9188, 5
      %v9191 = vsel %vm1553, %v9186, %v9190
      %v9193 = vshrl.u32 %v8976, 16
      %v9195 = vrot.slane %v9193, 4
      %v9196 = vshll.u32 %v8976, 16
      %v9198 = vrot.slane %v9196, 5
      %v9199 = vor.u32 %v9195, %v9198
      %v9200 = vrot.slane %v9199, 4
      %v9202 = vshll.u32 %v8977, 16
      %v9204 = vrot.slane %v9202, 5
      %v9205 = vsel %vm1553, %v9200, %v9204
      %v9206 = vshrl.u32 %v8977, 16
      %v9208 = vrot.slane %v9206, 4
      %v9209 = vor.u32 %v9208, %v9204
      %v9210 = vrot.slane %v9209, 4
      %v9212 = vshll.u32 %v8978, 16
      %v9214 = vrot.slane %v9212, 5
      %v9215 = vsel %vm1553, %v9210, %v9214
      %v9217 = vshrl.u32 %v8979, 16
      %v9219 = vrot.slane %v9217, 4
      %v9220 = vshll.u32 %v8979, 16
      %v9222 = vrot.slane %v9220, 5
      %v9223 = vor.u32 %v9219, %v9222
      %v9224 = vrot.slane %v9223, 4
      %v9226 = vshll.u32 %v8980, 16
      %v9228 = vrot.slane %v9226, 5
      %v9229 = vsel %vm1553, %v9224, %v9228
      %v9230 = vshrl.u32 %v8980, 16
      %v9232 = vrot.slane %v9230, 4
      %v9233 = vor.u32 %v9232, %v9228
      %v9234 = vrot.slane %v9233, 4
      %v9236 = vshll.u32 %v8981, 16
      %v9238 = vrot.slane %v9236, 5
      %v9239 = vsel %vm1553, %v9234, %v9238
      %v9241 = vshrl.u32 %v8982, 16
      %v9243 = vrot.slane %v9241, 4
      %v9244 = vshll.u32 %v8982, 16
      %v9246 = vrot.slane %v9244, 5
      %v9247 = vor.u32 %v9243, %v9246
      %v9248 = vrot.slane %v9247, 4
      %v9250 = vshll.u32 %v8983, 16
      %v9252 = vrot.slane %v9250, 5
      %v9253 = vsel %vm1553, %v9248, %v9252
      %v9254 = vshrl.u32 %v8983, 16
      %v9256 = vrot.slane %v9254, 4
      %v9257 = vor.u32 %v9256, %v9252
      %v9258 = vrot.slane %v9257, 4
      %v9260 = vshll.u32 %v8984, 16
      %v9262 = vrot.slane %v9260, 5
      %v9263 = vsel %vm1553, %v9258, %v9262
      %v9265 = vshrl.u32 %v8985, 16
      %v9267 = vrot.slane %v9265, 4
      %v9268 = vshll.u32 %v8985, 16
      %v9270 = vrot.slane %v9268, 5
      %v9271 = vor.u32 %v9267, %v9270
      %v9272 = vrot.slane %v9271, 4
      %v9274 = vshll.u32 %v8986, 16
      %v9276 = vrot.slane %v9274, 5
      %v9277 = vsel %vm1553, %v9272, %v9276
      %v9278 = vshrl.u32 %v8986, 16
      %v9280 = vrot.slane %v9278, 4
      %v9281 = vor.u32 %v9280, %v9276
      %v9282 = vrot.slane %v9281, 4
      %v9284 = vshll.u32 %v8987, 16
      %v9286 = vrot.slane %v9284, 5
      %v9287 = vsel %vm1553, %v9282, %v9286
      %v9289 = vshrl.u32 %v8988, 16
      %v9291 = vrot.slane %v9289, 4
      %v9292 = vshll.u32 %v8988, 16
      %v9294 = vrot.slane %v9292, 5
      %v9295 = vor.u32 %v9291, %v9294
      %v9296 = vrot.slane %v9295, 4
      %v9298 = vshll.u32 %v8989, 16
      %v9300 = vrot.slane %v9298, 5
      %v9301 = vsel %vm1553, %v9296, %v9300
      %v9302 = vshrl.u32 %v8989, 16
      %v9304 = vrot.slane %v9302, 4
      %v9305 = vor.u32 %v9304, %v9300
      %v9306 = vrot.slane %v9305, 4
      %v9308 = vshll.u32 %v8990, 16
      %v9310 = vrot.slane %v9308, 5
      %v9311 = vsel %vm1553, %v9306, %v9310
      %v9313 = vshrl.u32 %v8991, 16
      %v9315 = vrot.slane %v9313, 4
      %v9316 = vshll.u32 %v8991, 16
      %v9318 = vrot.slane %v9316, 5
      %v9319 = vor.u32 %v9315, %v9318
      %v9320 = vrot.slane %v9319, 4
      %v9322 = vshll.u32 %v8992, 16
      %v9324 = vrot.slane %v9322, 5
      %v9325 = vsel %vm1553, %v9320, %v9324
      %v9326 = vshrl.u32 %v8992, 16
      %v9328 = vrot.slane %v9326, 4
      %v9329 = vor.u32 %v9328, %v9324
      %v9330 = vrot.slane %v9329, 4
      %v9332 = vshll.u32 %v8993, 16
      %v9334 = vrot.slane %v9332, 5
      %v9335 = vsel %vm1553, %v9330, %v9334
      %v9337 = vshrl.u32 %v8994, 16
      %v9339 = vrot.slane %v9337, 4
      %v9340 = vshll.u32 %v8994, 16
      %v9342 = vrot.slane %v9340, 5
      %v9343 = vor.u32 %v9339, %v9342
      %v9344 = vrot.slane %v9343, 4
      %v9346 = vshll.u32 %v8995, 16
      %v9348 = vrot.slane %v9346, 5
      %v9349 = vsel %vm1553, %v9344, %v9348
      %v9350 = vshrl.u32 %v8995, 16
      %v9352 = vrot.slane %v9350, 4
      %v9353 = vor.u32 %v9352, %v9348
      %v9354 = vrot.slane %v9353, 4
      %v9356 = vshll.u32 %v8996, 16
      %v9358 = vrot.slane %v9356, 5
      %v9359 = vsel %vm1553, %v9354, %v9358
      %v9361 = vshrl.u32 %v8997, 16
      %v9363 = vrot.slane %v9361, 4
      %v9364 = vshll.u32 %v8997, 16
      %v9366 = vrot.slane %v9364, 5
      %v9367 = vor.u32 %v9363, %v9366
      %v9368 = vrot.slane %v9367, 4
      %v9370 = vshll.u32 %v8998, 16
      %v9372 = vrot.slane %v9370, 5
      %v9373 = vsel %vm1553, %v9368, %v9372
      %v9374 = vshrl.u32 %v8998, 16
      %v9376 = vrot.slane %v9374, 4
      %v9377 = vor.u32 %v9376, %v9372
      %v9378 = vrot.slane %v9377, 4
      %v9380 = vshll.u32 %v8999, 16
      %v9382 = vrot.slane %v9380, 5
      %v9383 = vsel %vm1553, %v9378, %v9382
      %s9384 = scalar_lea.vmem %s3, 64
      %v9385 = vld [vmem:[%s9384] sm:$0xf]
      %v9386 = vld [vmem:[%s9384 + $0x4] sm:$0xf]
      %v9387 = vld [vmem:[%s9384 + $0x8] sm:$0xf]
      %v9388 = vld [vmem:[%s9384 + $0xc] sm:$0xf]
      %v9389 = vunpack.c.l.b16 %v9013
      %v9390 = vunpack.c.l.b16 %v9023
      %v9391 = vunpack.c.l.b16 %v9037
      %v9392 = vunpack.c.l.b16 %v9047
      %v9393 = vunpack.c.l.b16 %v9061
      %v9394 = vunpack.c.l.b16 %v9071
      %v9395 = vunpack.c.l.b16 %v9085
      %v9396 = vunpack.c.l.b16 %v9095
      %v9397 = vunpack.c.l.b16 %v9109
      %v9398 = vunpack.c.l.b16 %v9119
      %v9399 = vunpack.c.l.b16 %v9133
      %v9400 = vunpack.c.l.b16 %v9143
      %v9401 = vunpack.c.l.b16 %v9157
      %v9402 = vunpack.c.l.b16 %v9167
      %v9403 = vunpack.c.l.b16 %v9181
      %v9404 = vunpack.c.l.b16 %v9191
      %v9405 = vunpack.c.l.b16 %v9205
      %v9406 = vunpack.c.l.b16 %v9215
      %v9407 = vunpack.c.l.b16 %v9229
      %v9408 = vunpack.c.l.b16 %v9239
      %v9409 = vunpack.c.l.b16 %v9253
      %v9410 = vunpack.c.l.b16 %v9263
      %v9411 = vunpack.c.l.b16 %v9277
      %v9412 = vunpack.c.l.b16 %v9287
      %v9413 = vunpack.c.l.b16 %v9301
      %v9414 = vunpack.c.l.b16 %v9311
      %v9415 = vunpack.c.l.b16 %v9325
      %v9416 = vunpack.c.l.b16 %v9335
      %v9417 = vunpack.c.l.b16 %v9349
      %v9418 = vunpack.c.l.b16 %v9359
      %v9419 = vunpack.c.l.b16 %v9373
      %v9420 = vunpack.c.l.b16 %v9383
      %v9421 = vpack.c.b16 %v9390, %v9389
      %v9422 = vpack.c.b16 %v9392, %v9391
      %v9423 = vpack.c.b16 %v9394, %v9393
      %v9424 = vpack.c.b16 %v9396, %v9395
      %v9425 = vpack.c.b16 %v9398, %v9397
      %v9426 = vpack.c.b16 %v9400, %v9399
      %v9427 = vpack.c.b16 %v9402, %v9401
      %v9428 = vpack.c.b16 %v9404, %v9403
      %v9429 = vpack.c.b16 %v9406, %v9405
      %v9430 = vpack.c.b16 %v9408, %v9407
      %v9431 = vpack.c.b16 %v9410, %v9409
      %v9432 = vpack.c.b16 %v9412, %v9411
      %v9433 = vpack.c.b16 %v9414, %v9413
      %v9434 = vpack.c.b16 %v9416, %v9415
      %v9435 = vpack.c.b16 %v9418, %v9417
      %v9436 = vpack.c.b16 %v9420, %v9419
      %v9441 = vunpack.c.l.b16 %v9385
      %v9442 = vunpack.c.l.b16 %v9386
      %v9443 = vunpack.c.l.b16 %v9387
      %v9444 = vunpack.c.l.b16 %v9388
      %v9445 = vpack.c.b16 %v9442, %v9441
      %v9446 = vpack.c.b16 %v9444, %v9443
      %v9450 = vsel %vm6304, %v9421, 0
      %v9453 = vsel %vm6304, %v9422, 0
      %v9456 = vsel %vm6304, %v9423, 0
      %v9459 = vsel %vm6304, %v9424, 0
      %v9462 = vsel %vm6304, %v9425, 0
      %v9465 = vsel %vm6304, %v9426, 0
      %v9468 = vsel %vm6304, %v9427, 0
      %v9471 = vsel %vm6304, %v9428, 0
      %v9474 = vsel %vm6304, %v9429, 0
      %v9477 = vsel %vm6304, %v9430, 0
      %v9480 = vsel %vm6304, %v9431, 0
      %v9483 = vsel %vm6304, %v9432, 0
      %v9486 = vsel %vm6304, %v9433, 0
      %v9489 = vsel %vm6304, %v9434, 0
      %v9492 = vsel %vm6304, %v9435, 0
      %v9495 = vsel %vm6304, %v9436, 0
      %9497 = vmatprep.subr.bf16.mxu0 0
      %9498 = vmatpush1.bf16.msra.mxu0 0
      %9499 = vmatprep.subr.bf16.mxu0 0
      %9500 = vmatpush1.bf16.msra.mxu0 0
      %9501 = vmatprep.subr.bf16.mxu0 0
      %9502 = vmatpush1.bf16.msra.mxu0 0
      %9503 = vmatprep.subr.bf16.mxu0 0
      %9504 = vmatpush1.bf16.msra.mxu0 0
      %9505 = vmatprep.subr.bf16.mxu0 0
      %9506 = vmatpush1.bf16.msra.mxu0 0
      %9507 = vmatprep.subr.bf16.mxu0 0
      %9508 = vmatpush1.bf16.msra.mxu0 0
      %9509 = vmatprep.subr.bf16.mxu0 0
      %9510 = vmatpush1.bf16.msra.mxu0 %v9446
      %9511 = vmatprep.subr.bf16.mxu0 0
      %9512 = vmatpush1.bf16.msra.mxu0 %v9445
      %9513 = vmatprep.subr.bf16.mxu0 0
      %9514 = vmatpush2.bf16.msra.mxu0 0
      %9515 = vmatprep.subr.bf16.mxu0 0
      %9516 = vmatpush2.bf16.msra.mxu0 0
      %9517 = vmatprep.subr.bf16.mxu0 0
      %9518 = vmatpush2.bf16.msra.mxu0 0
      %9519 = vmatprep.subr.bf16.mxu0 0
      %9520 = vmatpush2.bf16.msra.mxu0 0
      %9521 = vmatprep.subr.bf16.mxu0 0
      %9522 = vmatpush2.bf16.msra.mxu0 0
      %9523 = vmatprep.subr.bf16.mxu0 0
      %9524 = vmatpush2.bf16.msra.mxu0 0
      %9525 = vmatprep.subr.bf16.mxu0 0
      %9526 = vmatpush2.bf16.msra.mxu0 0
      %9527 = vmatprep.subr.bf16.mxu0 0
      %9528 = vmatpush2.bf16.msra.mxu0 0
      %9529 = vmatprep.mubr.bf16.mxu0 0
      %9530 = vmatmul.mubr.bf16.gmra.mxu0 %v9450
      %v9531 = vpop.f32.mrf.mxu0
      %v9532 = vadd.f32 0.0, %v9531
      %v9533 = vpop.f32.mrf.mxu0
      %v9534 = vpop.f32.mrf.mxu0
      %v9535 = vadd.f32 0.0, %v9534
      %v9536 = vpop.f32.mrf.mxu0
      %9537 = vmatprep.mubr.bf16.mxu0 0
      %9538 = vmatmul.mubr.bf16.gmra.mxu0 %v9453
      %v9539 = vpop.f32.mrf.mxu0
      %v9540 = vadd.f32 0.0, %v9539
      %v9541 = vpop.f32.mrf.mxu0
      %v9542 = vpop.f32.mrf.mxu0
      %v9543 = vadd.f32 0.0, %v9542
      %v9544 = vpop.f32.mrf.mxu0
      %9545 = vmatprep.mubr.bf16.mxu0 0
      %9546 = vmatmul.mubr.bf16.gmra.mxu0 %v9456
      %v9547 = vpop.f32.mrf.mxu0
      %v9548 = vadd.f32 0.0, %v9547
      %v9549 = vpop.f32.mrf.mxu0
      %v9550 = vpop.f32.mrf.mxu0
      %v9551 = vadd.f32 0.0, %v9550
      %v9552 = vpop.f32.mrf.mxu0
      %9553 = vmatprep.mubr.bf16.mxu0 0
      %9554 = vmatmul.mubr.bf16.gmra.mxu0 %v9459
      %v9555 = vpop.f32.mrf.mxu0
      %v9556 = vadd.f32 0.0, %v9555
      %v9557 = vpop.f32.mrf.mxu0
      %v9558 = vpop.f32.mrf.mxu0
      %v9559 = vadd.f32 0.0, %v9558
      %v9560 = vpop.f32.mrf.mxu0
      %9561 = vmatprep.mubr.bf16.mxu0 0
      %9562 = vmatmul.mubr.bf16.gmra.mxu0 %v9462
      %v9563 = vpop.f32.mrf.mxu0
      %v9564 = vadd.f32 0.0, %v9563
      %v9565 = vpop.f32.mrf.mxu0
      %v9566 = vpop.f32.mrf.mxu0
      %v9567 = vadd.f32 0.0, %v9566
      %v9568 = vpop.f32.mrf.mxu0
      %9569 = vmatprep.mubr.bf16.mxu0 0
      %9570 = vmatmul.mubr.bf16.gmra.mxu0 %v9465
      %v9571 = vpop.f32.mrf.mxu0
      %v9572 = vadd.f32 0.0, %v9571
      %v9573 = vpop.f32.mrf.mxu0
      %v9574 = vpop.f32.mrf.mxu0
      %v9575 = vadd.f32 0.0, %v9574
      %v9576 = vpop.f32.mrf.mxu0
      %9577 = vmatprep.mubr.bf16.mxu0 0
      %9578 = vmatmul.mubr.bf16.gmra.mxu0 %v9468
      %v9579 = vpop.f32.mrf.mxu0
      %v9580 = vadd.f32 0.0, %v9579
      %v9581 = vpop.f32.mrf.mxu0
      %v9582 = vpop.f32.mrf.mxu0
      %v9583 = vadd.f32 0.0, %v9582
      %v9584 = vpop.f32.mrf.mxu0
      %9585 = vmatprep.mubr.bf16.mxu0 0
      %9586 = vmatmul.mubr.bf16.gmra.mxu0 %v9471
      %v9587 = vpop.f32.mrf.mxu0
      %v9588 = vadd.f32 0.0, %v9587
      %v9589 = vpop.f32.mrf.mxu0
      %v9590 = vpop.f32.mrf.mxu0
      %v9591 = vadd.f32 0.0, %v9590
      %v9592 = vpop.f32.mrf.mxu0
      %9593 = vmatprep.mubr.bf16.mxu0 0
      %9594 = vmatmul.mubr.bf16.gmra.mxu0 %v9474
      %v9595 = vpop.f32.mrf.mxu0
      %v9596 = vadd.f32 0.0, %v9595
      %v9597 = vpop.f32.mrf.mxu0
      %v9598 = vpop.f32.mrf.mxu0
      %v9599 = vadd.f32 0.0, %v9598
      %v9600 = vpop.f32.mrf.mxu0
      %9601 = vmatprep.mubr.bf16.mxu0 0
      %9602 = vmatmul.mubr.bf16.gmra.mxu0 %v9477
      %v9603 = vpop.f32.mrf.mxu0
      %v9604 = vadd.f32 0.0, %v9603
      %v9605 = vpop.f32.mrf.mxu0
      %v9606 = vpop.f32.mrf.mxu0
      %v9607 = vadd.f32 0.0, %v9606
      %v9608 = vpop.f32.mrf.mxu0
      %9609 = vmatprep.mubr.bf16.mxu0 0
      %9610 = vmatmul.mubr.bf16.gmra.mxu0 %v9480
      %v9611 = vpop.f32.mrf.mxu0
      %v9612 = vadd.f32 0.0, %v9611
      %v9613 = vpop.f32.mrf.mxu0
      %v9614 = vpop.f32.mrf.mxu0
      %v9615 = vadd.f32 0.0, %v9614
      %v9616 = vpop.f32.mrf.mxu0
      %9617 = vmatprep.mubr.bf16.mxu0 0
      %9618 = vmatmul.mubr.bf16.gmra.mxu0 %v9483
      %v9619 = vpop.f32.mrf.mxu0
      %v9620 = vadd.f32 0.0, %v9619
      %v9621 = vpop.f32.mrf.mxu0
      %v9622 = vpop.f32.mrf.mxu0
      %v9623 = vadd.f32 0.0, %v9622
      %v9624 = vpop.f32.mrf.mxu0
      %9625 = vmatprep.mubr.bf16.mxu0 0
      %9626 = vmatmul.mubr.bf16.gmra.mxu0 %v9486
      %v9627 = vpop.f32.mrf.mxu0
      %v9628 = vadd.f32 0.0, %v9627
      %v9629 = vpop.f32.mrf.mxu0
      %v9630 = vpop.f32.mrf.mxu0
      %v9631 = vadd.f32 0.0, %v9630
      %v9632 = vpop.f32.mrf.mxu0
      %9633 = vmatprep.mubr.bf16.mxu0 0
      %9634 = vmatmul.mubr.bf16.gmra.mxu0 %v9489
      %v9635 = vpop.f32.mrf.mxu0
      %v9636 = vadd.f32 0.0, %v9635
      %v9637 = vpop.f32.mrf.mxu0
      %v9638 = vpop.f32.mrf.mxu0
      %v9639 = vadd.f32 0.0, %v9638
      %v9640 = vpop.f32.mrf.mxu0
      %9641 = vmatprep.mubr.bf16.mxu0 0
      %9642 = vmatmul.mubr.bf16.gmra.mxu0 %v9492
      %v9643 = vpop.f32.mrf.mxu0
      %v9644 = vadd.f32 0.0, %v9643
      %v9645 = vpop.f32.mrf.mxu0
      %v9646 = vpop.f32.mrf.mxu0
      %v9647 = vadd.f32 0.0, %v9646
      %v9648 = vpop.f32.mrf.mxu0
      %9649 = vmatprep.mubr.bf16.mxu0 0
      %9650 = vmatmul.mubr.bf16.gmra.mxu0 %v9495
      %v9651 = vpop.f32.mrf.mxu0
      %v9652 = vadd.f32 0.0, %v9651
      %v9653 = vpop.f32.mrf.mxu0
      %v9654 = vpop.f32.mrf.mxu0
      %v9655 = vadd.f32 0.0, %v9654
      %v9656 = vpop.f32.mrf.mxu0
      %9657 = vdwg.mxu0
      %v9658 = vadd.f32 %v8920, %v9532
      %v9659 = vadd.f32 %v8921, %v9535
      %v9660 = vadd.f32 %v8922, %v9540
      %v9661 = vadd.f32 %v8923, %v9543
      %v9662 = vadd.f32 %v8924, %v9548
      %v9663 = vadd.f32 %v8925, %v9551
      %v9664 = vadd.f32 %v8926, %v9556
      %v9665 = vadd.f32 %v8927, %v9559
      %v9666 = vadd.f32 %v8928, %v9564
      %v9667 = vadd.f32 %v8929, %v9567
      %v9668 = vadd.f32 %v8930, %v9572
      %v9669 = vadd.f32 %v8931, %v9575
      %v9670 = vadd.f32 %v8932, %v9580
      %v9671 = vadd.f32 %v8933, %v9583
      %v9672 = vadd.f32 %v8934, %v9588
      %v9673 = vadd.f32 %v8935, %v9591
      %v9674 = vadd.f32 %v8936, %v9596
      %v9675 = vadd.f32 %v8937, %v9599
      %v9676 = vadd.f32 %v8938, %v9604
      %v9677 = vadd.f32 %v8939, %v9607
      %v9678 = vadd.f32 %v8940, %v9612
      %v9679 = vadd.f32 %v8941, %v9615
      %v9680 = vadd.f32 %v8942, %v9620
      %v9681 = vadd.f32 %v8943, %v9623
      %v9682 = vadd.f32 %v8944, %v9628
      %v9683 = vadd.f32 %v8945, %v9631
      %v9684 = vadd.f32 %v8946, %v9636
      %v9685 = vadd.f32 %v8947, %v9639
      %v9686 = vadd.f32 %v8948, %v9644
      %v9687 = vadd.f32 %v8949, %v9647
      %v9688 = vadd.f32 %v8950, %v9652
      %v9689 = vadd.f32 %v8951, %v9655
      %v9690 = vld [vmem:[%s6992] sm:$0xe]
      %v9691 = vld [vmem:[%s6992 + $0xc] sm:$0xe]
      %v9692 = vld [vmem:[%s6992 + $0x18] sm:$0xe]
      %v9693 = vld [vmem:[%s6992 + $0x24] sm:$0xe]
      %v9694 = vld [vmem:[%s6992 + $0x30] sm:$0xe]
      %v9695 = vld [vmem:[%s6992 + $0x3c] sm:$0xe]
      %v9696 = vld [vmem:[%s6992 + $0x48] sm:$0xe]
      %v9697 = vld [vmem:[%s6992 + $0x54] sm:$0xe]
      %v9698 = vld [vmem:[%s6992 + $0x60] sm:$0xe]
      %v9699 = vld [vmem:[%s6992 + $0x6c] sm:$0xe]
      %v9700 = vld [vmem:[%s6992 + $0x78] sm:$0xe]
      %v9701 = vld [vmem:[%s6992 + $0x84] sm:$0xe]
      %v9702 = vld [vmem:[%s6992 + $0x90] sm:$0xe]
      %v9703 = vld [vmem:[%s6992 + $0x9c] sm:$0xe]
      %v9704 = vld [vmem:[%s6992 + $0xa8] sm:$0xe]
      %v9705 = vld [vmem:[%s6992 + $0xb4] sm:$0xe]
      %v9754 = vrot.slane %v9690, 5
      %v9755 = vrot.slane %v9754, 4
      %v9756 = vrot.slane %v8953, 5
      %v9757 = vsel %vm2592, %v9755, %v9756
      %v9758 = vrot.slane %v9756, 4
      %v9759 = vrot.slane %v8954, 5
      %v9760 = vsel %vm2592, %v9758, %v9759
      %v9761 = vrot.slane %v9691, 5
      %v9762 = vrot.slane %v9761, 4
      %v9763 = vrot.slane %v8956, 5
      %v9764 = vsel %vm2592, %v9762, %v9763
      %v9765 = vrot.slane %v9763, 4
      %v9766 = vrot.slane %v8957, 5
      %v9767 = vsel %vm2592, %v9765, %v9766
      %v9768 = vrot.slane %v9692, 5
      %v9769 = vrot.slane %v9768, 4
      %v9770 = vrot.slane %v8959, 5
      %v9771 = vsel %vm2592, %v9769, %v9770
      %v9772 = vrot.slane %v9770, 4
      %v9773 = vrot.slane %v8960, 5
      %v9774 = vsel %vm2592, %v9772, %v9773
      %v9775 = vrot.slane %v9693, 5
      %v9776 = vrot.slane %v9775, 4
      %v9777 = vrot.slane %v8962, 5
      %v9778 = vsel %vm2592, %v9776, %v9777
      %v9779 = vrot.slane %v9777, 4
      %v9780 = vrot.slane %v8963, 5
      %v9781 = vsel %vm2592, %v9779, %v9780
      %v9782 = vrot.slane %v9694, 5
      %v9783 = vrot.slane %v9782, 4
      %v9784 = vrot.slane %v8965, 5
      %v9785 = vsel %vm2592, %v9783, %v9784
      %v9786 = vrot.slane %v9784, 4
      %v9787 = vrot.slane %v8966, 5
      %v9788 = vsel %vm2592, %v9786, %v9787
      %v9789 = vrot.slane %v9695, 5
      %v9790 = vrot.slane %v9789, 4
      %v9791 = vrot.slane %v8968, 5
      %v9792 = vsel %vm2592, %v9790, %v9791
      %v9793 = vrot.slane %v9791, 4
      %v9794 = vrot.slane %v8969, 5
      %v9795 = vsel %vm2592, %v9793, %v9794
      %v9796 = vrot.slane %v9696, 5
      %v9797 = vrot.slane %v9796, 4
      %v9798 = vrot.slane %v8971, 5
      %v9799 = vsel %vm2592, %v9797, %v9798
      %v9800 = vrot.slane %v9798, 4
      %v9801 = vrot.slane %v8972, 5
      %v9802 = vsel %vm2592, %v9800, %v9801
      %v9803 = vrot.slane %v9697, 5
      %v9804 = vrot.slane %v9803, 4
      %v9805 = vrot.slane %v8974, 5
      %v9806 = vsel %vm2592, %v9804, %v9805
      %v9807 = vrot.slane %v9805, 4
      %v9808 = vrot.slane %v8975, 5
      %v9809 = vsel %vm2592, %v9807, %v9808
      %v9810 = vrot.slane %v9698, 5
      %v9811 = vrot.slane %v9810, 4
      %v9812 = vrot.slane %v8977, 5
      %v9813 = vsel %vm2592, %v9811, %v9812
      %v9814 = vrot.slane %v9812, 4
      %v9815 = vrot.slane %v8978, 5
      %v9816 = vsel %vm2592, %v9814, %v9815
      %v9817 = vrot.slane %v9699, 5
      %v9818 = vrot.slane %v9817, 4
      %v9819 = vrot.slane %v8980, 5
      %v9820 = vsel %vm2592, %v9818, %v9819
      %v9821 = vrot.slane %v9819, 4
      %v9822 = vrot.slane %v8981, 5
      %v9823 = vsel %vm2592, %v9821, %v9822
      %v9824 = vrot.slane %v9700, 5
      %v9825 = vrot.slane %v9824, 4
      %v9826 = vrot.slane %v8983, 5
      %v9827 = vsel %vm2592, %v9825, %v9826
      %v9828 = vrot.slane %v9826, 4
      %v9829 = vrot.slane %v8984, 5
      %v9830 = vsel %vm2592, %v9828, %v9829
      %v9831 = vrot.slane %v9701, 5
      %v9832 = vrot.slane %v9831, 4
      %v9833 = vrot.slane %v8986, 5
      %v9834 = vsel %vm2592, %v9832, %v9833
      %v9835 = vrot.slane %v9833, 4
      %v9836 = vrot.slane %v8987, 5
      %v9837 = vsel %vm2592, %v9835, %v9836
      %v9838 = vrot.slane %v9702, 5
      %v9839 = vrot.slane %v9838, 4
      %v9840 = vrot.slane %v8989, 5
      %v9841 = vsel %vm2592, %v9839, %v9840
      %v9842 = vrot.slane %v9840, 4
      %v9843 = vrot.slane %v8990, 5
      %v9844 = vsel %vm2592, %v9842, %v9843
      %v9845 = vrot.slane %v9703, 5
      %v9846 = vrot.slane %v9845, 4
      %v9847 = vrot.slane %v8992, 5
      %v9848 = vsel %vm2592, %v9846, %v9847
      %v9849 = vrot.slane %v9847, 4
      %v9850 = vrot.slane %v8993, 5
      %v9851 = vsel %vm2592, %v9849, %v9850
      %v9852 = vrot.slane %v9704, 5
      %v9853 = vrot.slane %v9852, 4
      %v9854 = vrot.slane %v8995, 5
      %v9855 = vsel %vm2592, %v9853, %v9854
      %v9856 = vrot.slane %v9854, 4
      %v9857 = vrot.slane %v8996, 5
      %v9858 = vsel %vm2592, %v9856, %v9857
      %v9859 = vrot.slane %v9705, 5
      %v9860 = vrot.slane %v9859, 4
      %v9861 = vrot.slane %v8998, 5
      %v9862 = vsel %vm2592, %v9860, %v9861
      %v9863 = vrot.slane %v9861, 4
      %v9864 = vrot.slane %v8999, 5
      %v9865 = vsel %vm2592, %v9863, %v9864
      %s9866 = scalar_lea.vmem %s3, 80
      %v9867 = vld [vmem:[%s9866] sm:$0xf]
      %v9868 = vld [vmem:[%s9866 + $0x4] sm:$0xf]
      %v9869 = vld [vmem:[%s9866 + $0x8] sm:$0xf]
      %v9870 = vld [vmem:[%s9866 + $0xc] sm:$0xf]
      %v9871 = vunpack.c.l.b16 %v9757
      %v9872 = vunpack.c.l.b16 %v9760
      %v9873 = vunpack.c.l.b16 %v9764
      %v9874 = vunpack.c.l.b16 %v9767
      %v9875 = vunpack.c.l.b16 %v9771
      %v9876 = vunpack.c.l.b16 %v9774
      %v9877 = vunpack.c.l.b16 %v9778
      %v9878 = vunpack.c.l.b16 %v9781
      %v9879 = vunpack.c.l.b16 %v9785
      %v9880 = vunpack.c.l.b16 %v9788
      %v9881 = vunpack.c.l.b16 %v9792
      %v9882 = vunpack.c.l.b16 %v9795
      %v9883 = vunpack.c.l.b16 %v9799
      %v9884 = vunpack.c.l.b16 %v9802
      %v9885 = vunpack.c.l.b16 %v9806
      %v9886 = vunpack.c.l.b16 %v9809
      %v9887 = vunpack.c.l.b16 %v9813
      %v9888 = vunpack.c.l.b16 %v9816
      %v9889 = vunpack.c.l.b16 %v9820
      %v9890 = vunpack.c.l.b16 %v9823
      %v9891 = vunpack.c.l.b16 %v9827
      %v9892 = vunpack.c.l.b16 %v9830
      %v9893 = vunpack.c.l.b16 %v9834
      %v9894 = vunpack.c.l.b16 %v9837
      %v9895 = vunpack.c.l.b16 %v9841
      %v9896 = vunpack.c.l.b16 %v9844
      %v9897 = vunpack.c.l.b16 %v9848
      %v9898 = vunpack.c.l.b16 %v9851
      %v9899 = vunpack.c.l.b16 %v9855
      %v9900 = vunpack.c.l.b16 %v9858
      %v9901 = vunpack.c.l.b16 %v9862
      %v9902 = vunpack.c.l.b16 %v9865
      %v9903 = vpack.c.b16 %v9872, %v9871
      %v9904 = vpack.c.b16 %v9874, %v9873
      %v9905 = vpack.c.b16 %v9876, %v9875
      %v9906 = vpack.c.b16 %v9878, %v9877
      %v9907 = vpack.c.b16 %v9880, %v9879
      %v9908 = vpack.c.b16 %v9882, %v9881
      %v9909 = vpack.c.b16 %v9884, %v9883
      %v9910 = vpack.c.b16 %v9886, %v9885
      %v9911 = vpack.c.b16 %v9888, %v9887
      %v9912 = vpack.c.b16 %v9890, %v9889
      %v9913 = vpack.c.b16 %v9892, %v9891
      %v9914 = vpack.c.b16 %v9894, %v9893
      %v9915 = vpack.c.b16 %v9896, %v9895
      %v9916 = vpack.c.b16 %v9898, %v9897
      %v9917 = vpack.c.b16 %v9900, %v9899
      %v9918 = vpack.c.b16 %v9902, %v9901
      %v9923 = vunpack.c.l.b16 %v9867
      %v9924 = vunpack.c.l.b16 %v9868
      %v9925 = vunpack.c.l.b16 %v9869
      %v9926 = vunpack.c.l.b16 %v9870
      %v9927 = vpack.c.b16 %v9924, %v9923
      %v9928 = vpack.c.b16 %v9926, %v9925
      %v9932 = vsel %vm6304, %v9903, 0
      %v9935 = vsel %vm6304, %v9904, 0
      %v9938 = vsel %vm6304, %v9905, 0
      %v9941 = vsel %vm6304, %v9906, 0
      %v9944 = vsel %vm6304, %v9907, 0
      %v9947 = vsel %vm6304, %v9908, 0
      %v9950 = vsel %vm6304, %v9909, 0
      %v9953 = vsel %vm6304, %v9910, 0
      %v9956 = vsel %vm6304, %v9911, 0
      %v9959 = vsel %vm6304, %v9912, 0
      %v9962 = vsel %vm6304, %v9913, 0
      %v9965 = vsel %vm6304, %v9914, 0
      %v9968 = vsel %vm6304, %v9915, 0
      %v9971 = vsel %vm6304, %v9916, 0
      %v9974 = vsel %vm6304, %v9917, 0
      %v9977 = vsel %vm6304, %v9918, 0
      %9979 = vmatprep.subr.bf16.mxu0 0
      %9980 = vmatpush1.bf16.msra.mxu0 0
      %9981 = vmatprep.subr.bf16.mxu0 0
      %9982 = vmatpush1.bf16.msra.mxu0 0
      %9983 = vmatprep.subr.bf16.mxu0 0
      %9984 = vmatpush1.bf16.msra.mxu0 0
      %9985 = vmatprep.subr.bf16.mxu0 0
      %9986 = vmatpush1.bf16.msra.mxu0 0
      %9987 = vmatprep.subr.bf16.mxu0 0
      %9988 = vmatpush1.bf16.msra.mxu0 0
      %9989 = vmatprep.subr.bf16.mxu0 0
      %9990 = vmatpush1.bf16.msra.mxu0 0
      %9991 = vmatprep.subr.bf16.mxu0 0
      %9992 = vmatpush1.bf16.msra.mxu0 %v9928
      %9993 = vmatprep.subr.bf16.mxu0 0
      %9994 = vmatpush1.bf16.msra.mxu0 %v9927
      %9995 = vmatprep.subr.bf16.mxu0 0
      %9996 = vmatpush2.bf16.msra.mxu0 0
      %9997 = vmatprep.subr.bf16.mxu0 0
      %9998 = vmatpush2.bf16.msra.mxu0 0
      %9999 = vmatprep.subr.bf16.mxu0 0
      %10000 = vmatpush2.bf16.msra.mxu0 0
      %10001 = vmatprep.subr.bf16.mxu0 0
      %10002 = vmatpush2.bf16.msra.mxu0 0
      %10003 = vmatprep.subr.bf16.mxu0 0
      %10004 = vmatpush2.bf16.msra.mxu0 0
      %10005 = vmatprep.subr.bf16.mxu0 0
      %10006 = vmatpush2.bf16.msra.mxu0 0
      %10007 = vmatprep.subr.bf16.mxu0 0
      %10008 = vmatpush2.bf16.msra.mxu0 0
      %10009 = vmatprep.subr.bf16.mxu0 0
      %10010 = vmatpush2.bf16.msra.mxu0 0
      %10011 = vmatprep.mubr.bf16.mxu0 0
      %10012 = vmatmul.mubr.bf16.gmra.mxu0 %v9932
      %v10013 = vpop.f32.mrf.mxu0
      %v10014 = vadd.f32 0.0, %v10013
      %v10015 = vpop.f32.mrf.mxu0
      %v10016 = vpop.f32.mrf.mxu0
      %v10017 = vadd.f32 0.0, %v10016
      %v10018 = vpop.f32.mrf.mxu0
      %10019 = vmatprep.mubr.bf16.mxu0 0
      %10020 = vmatmul.mubr.bf16.gmra.mxu0 %v9935
      %v10021 = vpop.f32.mrf.mxu0
      %v10022 = vadd.f32 0.0, %v10021
      %v10023 = vpop.f32.mrf.mxu0
      %v10024 = vpop.f32.mrf.mxu0
      %v10025 = vadd.f32 0.0, %v10024
      %v10026 = vpop.f32.mrf.mxu0
      %10027 = vmatprep.mubr.bf16.mxu0 0
      %10028 = vmatmul.mubr.bf16.gmra.mxu0 %v9938
      %v10029 = vpop.f32.mrf.mxu0
      %v10030 = vadd.f32 0.0, %v10029
      %v10031 = vpop.f32.mrf.mxu0
      %v10032 = vpop.f32.mrf.mxu0
      %v10033 = vadd.f32 0.0, %v10032
      %v10034 = vpop.f32.mrf.mxu0
      %10035 = vmatprep.mubr.bf16.mxu0 0
      %10036 = vmatmul.mubr.bf16.gmra.mxu0 %v9941
      %v10037 = vpop.f32.mrf.mxu0
      %v10038 = vadd.f32 0.0, %v10037
      %v10039 = vpop.f32.mrf.mxu0
      %v10040 = vpop.f32.mrf.mxu0
      %v10041 = vadd.f32 0.0, %v10040
      %v10042 = vpop.f32.mrf.mxu0
      %10043 = vmatprep.mubr.bf16.mxu0 0
      %10044 = vmatmul.mubr.bf16.gmra.mxu0 %v9944
      %v10045 = vpop.f32.mrf.mxu0
      %v10046 = vadd.f32 0.0, %v10045
      %v10047 = vpop.f32.mrf.mxu0
      %v10048 = vpop.f32.mrf.mxu0
      %v10049 = vadd.f32 0.0, %v10048
      %v10050 = vpop.f32.mrf.mxu0
      %10051 = vmatprep.mubr.bf16.mxu0 0
      %10052 = vmatmul.mubr.bf16.gmra.mxu0 %v9947
      %v10053 = vpop.f32.mrf.mxu0
      %v10054 = vadd.f32 0.0, %v10053
      %v10055 = vpop.f32.mrf.mxu0
      %v10056 = vpop.f32.mrf.mxu0
      %v10057 = vadd.f32 0.0, %v10056
      %v10058 = vpop.f32.mrf.mxu0
      %10059 = vmatprep.mubr.bf16.mxu0 0
      %10060 = vmatmul.mubr.bf16.gmra.mxu0 %v9950
      %v10061 = vpop.f32.mrf.mxu0
      %v10062 = vadd.f32 0.0, %v10061
      %v10063 = vpop.f32.mrf.mxu0
      %v10064 = vpop.f32.mrf.mxu0
      %v10065 = vadd.f32 0.0, %v10064
      %v10066 = vpop.f32.mrf.mxu0
      %10067 = vmatprep.mubr.bf16.mxu0 0
      %10068 = vmatmul.mubr.bf16.gmra.mxu0 %v9953
      %v10069 = vpop.f32.mrf.mxu0
      %v10070 = vadd.f32 0.0, %v10069
      %v10071 = vpop.f32.mrf.mxu0
      %v10072 = vpop.f32.mrf.mxu0
      %v10073 = vadd.f32 0.0, %v10072
      %v10074 = vpop.f32.mrf.mxu0
      %10075 = vmatprep.mubr.bf16.mxu0 0
      %10076 = vmatmul.mubr.bf16.gmra.mxu0 %v9956
      %v10077 = vpop.f32.mrf.mxu0
      %v10078 = vadd.f32 0.0, %v10077
      %v10079 = vpop.f32.mrf.mxu0
      %v10080 = vpop.f32.mrf.mxu0
      %v10081 = vadd.f32 0.0, %v10080
      %v10082 = vpop.f32.mrf.mxu0
      %10083 = vmatprep.mubr.bf16.mxu0 0
      %10084 = vmatmul.mubr.bf16.gmra.mxu0 %v9959
      %v10085 = vpop.f32.mrf.mxu0
      %v10086 = vadd.f32 0.0, %v10085
      %v10087 = vpop.f32.mrf.mxu0
      %v10088 = vpop.f32.mrf.mxu0
      %v10089 = vadd.f32 0.0, %v10088
      %v10090 = vpop.f32.mrf.mxu0
      %10091 = vmatprep.mubr.bf16.mxu0 0
      %10092 = vmatmul.mubr.bf16.gmra.mxu0 %v9962
      %v10093 = vpop.f32.mrf.mxu0
      %v10094 = vadd.f32 0.0, %v10093
      %v10095 = vpop.f32.mrf.mxu0
      %v10096 = vpop.f32.mrf.mxu0
      %v10097 = vadd.f32 0.0, %v10096
      %v10098 = vpop.f32.mrf.mxu0
      %10099 = vmatprep.mubr.bf16.mxu0 0
      %10100 = vmatmul.mubr.bf16.gmra.mxu0 %v9965
      %v10101 = vpop.f32.mrf.mxu0
      %v10102 = vadd.f32 0.0, %v10101
      %v10103 = vpop.f32.mrf.mxu0
      %v10104 = vpop.f32.mrf.mxu0
      %v10105 = vadd.f32 0.0, %v10104
      %v10106 = vpop.f32.mrf.mxu0
      %10107 = vmatprep.mubr.bf16.mxu0 0
      %10108 = vmatmul.mubr.bf16.gmra.mxu0 %v9968
      %v10109 = vpop.f32.mrf.mxu0
      %v10110 = vadd.f32 0.0, %v10109
      %v10111 = vpop.f32.mrf.mxu0
      %v10112 = vpop.f32.mrf.mxu0
      %v10113 = vadd.f32 0.0, %v10112
      %v10114 = vpop.f32.mrf.mxu0
      %10115 = vmatprep.mubr.bf16.mxu0 0
      %10116 = vmatmul.mubr.bf16.gmra.mxu0 %v9971
      %v10117 = vpop.f32.mrf.mxu0
      %v10118 = vadd.f32 0.0, %v10117
      %v10119 = vpop.f32.mrf.mxu0
      %v10120 = vpop.f32.mrf.mxu0
      %v10121 = vadd.f32 0.0, %v10120
      %v10122 = vpop.f32.mrf.mxu0
      %10123 = vmatprep.mubr.bf16.mxu0 0
      %10124 = vmatmul.mubr.bf16.gmra.mxu0 %v9974
      %v10125 = vpop.f32.mrf.mxu0
      %v10126 = vadd.f32 0.0, %v10125
      %v10127 = vpop.f32.mrf.mxu0
      %v10128 = vpop.f32.mrf.mxu0
      %v10129 = vadd.f32 0.0, %v10128
      %v10130 = vpop.f32.mrf.mxu0
      %10131 = vmatprep.mubr.bf16.mxu0 0
      %10132 = vmatmul.mubr.bf16.gmra.mxu0 %v9977
      %v10133 = vpop.f32.mrf.mxu0
      %v10134 = vadd.f32 0.0, %v10133
      %v10135 = vpop.f32.mrf.mxu0
      %v10136 = vpop.f32.mrf.mxu0
      %v10137 = vadd.f32 0.0, %v10136
      %v10138 = vpop.f32.mrf.mxu0
      %10139 = vdwg.mxu0
      %v10140 = vadd.f32 %v9658, %v10014
      %v10141 = vadd.f32 %v9659, %v10017
      %v10142 = vadd.f32 %v9660, %v10022
      %v10143 = vadd.f32 %v9661, %v10025
      %v10144 = vadd.f32 %v9662, %v10030
      %v10145 = vadd.f32 %v9663, %v10033
      %v10146 = vadd.f32 %v9664, %v10038
      %v10147 = vadd.f32 %v9665, %v10041
      %v10148 = vadd.f32 %v9666, %v10046
      %v10149 = vadd.f32 %v9667, %v10049
      %v10150 = vadd.f32 %v9668, %v10054
      %v10151 = vadd.f32 %v9669, %v10057
      %v10152 = vadd.f32 %v9670, %v10062
      %v10153 = vadd.f32 %v9671, %v10065
      %v10154 = vadd.f32 %v9672, %v10070
      %v10155 = vadd.f32 %v9673, %v10073
      %v10156 = vadd.f32 %v9674, %v10078
      %v10157 = vadd.f32 %v9675, %v10081
      %v10158 = vadd.f32 %v9676, %v10086
      %v10159 = vadd.f32 %v9677, %v10089
      %v10160 = vadd.f32 %v9678, %v10094
      %v10161 = vadd.f32 %v9679, %v10097
      %v10162 = vadd.f32 %v9680, %v10102
      %v10163 = vadd.f32 %v9681, %v10105
      %v10164 = vadd.f32 %v9682, %v10110
      %v10165 = vadd.f32 %v9683, %v10113
      %v10166 = vadd.f32 %v9684, %v10118
      %v10167 = vadd.f32 %v9685, %v10121
      %v10168 = vadd.f32 %v9686, %v10126
      %v10169 = vadd.f32 %v9687, %v10129
      %v10170 = vadd.f32 %v9688, %v10134
      %v10171 = vadd.f32 %v9689, %v10137
      %s10172 = scalar_lea.vmem [#allocation3], 24
      %v10173 = vld [vmem:[%s10172] sm:$0xf]
      %v10174 = vld [vmem:[%s10172 + $0x4] sm:$0xf]
      %v10175 = vld [vmem:[%s10172 + $0xc] sm:$0xf]
      %v10176 = vld [vmem:[%s10172 + $0x10] sm:$0xf]
      %v10177 = vld [vmem:[%s10172 + $0x18] sm:$0xf]
      %v10178 = vld [vmem:[%s10172 + $0x1c] sm:$0xf]
      %v10179 = vld [vmem:[%s10172 + $0x24] sm:$0xf]
      %v10180 = vld [vmem:[%s10172 + $0x28] sm:$0xf]
      %v10181 = vld [vmem:[%s10172 + $0x30] sm:$0xf]
      %v10182 = vld [vmem:[%s10172 + $0x34] sm:$0xf]
      %v10183 = vld [vmem:[%s10172 + $0x3c] sm:$0xf]
      %v10184 = vld [vmem:[%s10172 + $0x40] sm:$0xf]
      %v10185 = vld [vmem:[%s10172 + $0x48] sm:$0xf]
      %v10186 = vld [vmem:[%s10172 + $0x4c] sm:$0xf]
      %v10187 = vld [vmem:[%s10172 + $0x54] sm:$0xf]
      %v10188 = vld [vmem:[%s10172 + $0x58] sm:$0xf]
      %v10189 = vld [vmem:[%s10172 + $0x60] sm:$0xf]
      %v10190 = vld [vmem:[%s10172 + $0x64] sm:$0xf]
      %v10191 = vld [vmem:[%s10172 + $0x6c] sm:$0xf]
      %v10192 = vld [vmem:[%s10172 + $0x70] sm:$0xf]
      %v10193 = vld [vmem:[%s10172 + $0x78] sm:$0xf]
      %v10194 = vld [vmem:[%s10172 + $0x7c] sm:$0xf]
      %v10195 = vld [vmem:[%s10172 + $0x84] sm:$0xf]
      %v10196 = vld [vmem:[%s10172 + $0x88] sm:$0xf]
      %v10197 = vld [vmem:[%s10172 + $0x90] sm:$0xf]
      %v10198 = vld [vmem:[%s10172 + $0x94] sm:$0xf]
      %v10199 = vld [vmem:[%s10172 + $0x9c] sm:$0xf]
      %v10200 = vld [vmem:[%s10172 + $0xa0] sm:$0xf]
      %v10201 = vld [vmem:[%s10172 + $0xa8] sm:$0xf]
      %v10202 = vld [vmem:[%s10172 + $0xac] sm:$0xf]
      %v10203 = vld [vmem:[%s10172 + $0xb4] sm:$0xf]
      %v10204 = vld [vmem:[%s10172 + $0xb8] sm:$0xf]
      %s10205 = scalar_lea.vmem %s3, 96
      %v10206 = vld [vmem:[%s10205] sm:$0xf]
      %v10207 = vld [vmem:[%s10205 + $0x4] sm:$0xf]
      %v10208 = vld [vmem:[%s10205 + $0x8] sm:$0xf]
      %v10209 = vld [vmem:[%s10205 + $0xc] sm:$0xf]
      %v10242 = vunpack.c.l.b16 %v10173
      %v10243 = vunpack.c.l.b16 %v10174
      %v10244 = vunpack.c.l.b16 %v10175
      %v10245 = vunpack.c.l.b16 %v10176
      %v10246 = vunpack.c.l.b16 %v10177
      %v10247 = vunpack.c.l.b16 %v10178
      %v10248 = vunpack.c.l.b16 %v10179
      %v10249 = vunpack.c.l.b16 %v10180
      %v10250 = vunpack.c.l.b16 %v10181
      %v10251 = vunpack.c.l.b16 %v10182
      %v10252 = vunpack.c.l.b16 %v10183
      %v10253 = vunpack.c.l.b16 %v10184
      %v10254 = vunpack.c.l.b16 %v10185
      %v10255 = vunpack.c.l.b16 %v10186
      %v10256 = vunpack.c.l.b16 %v10187
      %v10257 = vunpack.c.l.b16 %v10188
      %v10258 = vunpack.c.l.b16 %v10189
      %v10259 = vunpack.c.l.b16 %v10190
      %v10260 = vunpack.c.l.b16 %v10191
      %v10261 = vunpack.c.l.b16 %v10192
      %v10262 = vunpack.c.l.b16 %v10193
      %v10263 = vunpack.c.l.b16 %v10194
      %v10264 = vunpack.c.l.b16 %v10195
      %v10265 = vunpack.c.l.b16 %v10196
      %v10266 = vunpack.c.l.b16 %v10197
      %v10267 = vunpack.c.l.b16 %v10198
      %v10268 = vunpack.c.l.b16 %v10199
      %v10269 = vunpack.c.l.b16 %v10200
      %v10270 = vunpack.c.l.b16 %v10201
      %v10271 = vunpack.c.l.b16 %v10202
      %v10272 = vunpack.c.l.b16 %v10203
      %v10273 = vunpack.c.l.b16 %v10204
      %v10274 = vpack.c.b16 %v10243, %v10242
      %v10275 = vpack.c.b16 %v10245, %v10244
      %v10276 = vpack.c.b16 %v10247, %v10246
      %v10277 = vpack.c.b16 %v10249, %v10248
      %v10278 = vpack.c.b16 %v10251, %v10250
      %v10279 = vpack.c.b16 %v10253, %v10252
      %v10280 = vpack.c.b16 %v10255, %v10254
      %v10281 = vpack.c.b16 %v10257, %v10256
      %v10282 = vpack.c.b16 %v10259, %v10258
      %v10283 = vpack.c.b16 %v10261, %v10260
      %v10284 = vpack.c.b16 %v10263, %v10262
      %v10285 = vpack.c.b16 %v10265, %v10264
      %v10286 = vpack.c.b16 %v10267, %v10266
      %v10287 = vpack.c.b16 %v10269, %v10268
      %v10288 = vpack.c.b16 %v10271, %v10270
      %v10289 = vpack.c.b16 %v10273, %v10272
      %v10294 = vunpack.c.l.b16 %v10206
      %v10295 = vunpack.c.l.b16 %v10207
      %v10296 = vunpack.c.l.b16 %v10208
      %v10297 = vunpack.c.l.b16 %v10209
      %v10298 = vpack.c.b16 %v10295, %v10294
      %v10299 = vpack.c.b16 %v10297, %v10296
      %v10303 = vsel %vm6304, %v10274, 0
      %v10306 = vsel %vm6304, %v10275, 0
      %v10309 = vsel %vm6304, %v10276, 0
      %v10312 = vsel %vm6304, %v10277, 0
      %v10315 = vsel %vm6304, %v10278, 0
      %v10318 = vsel %vm6304, %v10279, 0
      %v10321 = vsel %vm6304, %v10280, 0
      %v10324 = vsel %vm6304, %v10281, 0
      %v10327 = vsel %vm6304, %v10282, 0
      %v10330 = vsel %vm6304, %v10283, 0
      %v10333 = vsel %vm6304, %v10284, 0
      %v10336 = vsel %vm6304, %v10285, 0
      %v10339 = vsel %vm6304, %v10286, 0
      %v10342 = vsel %vm6304, %v10287, 0
      %v10345 = vsel %vm6304, %v10288, 0
      %v10348 = vsel %vm6304, %v10289, 0
      %10350 = vmatprep.subr.bf16.mxu0 0
      %10351 = vmatpush1.bf16.msra.mxu0 0
      %10352 = vmatprep.subr.bf16.mxu0 0
      %10353 = vmatpush1.bf16.msra.mxu0 0
      %10354 = vmatprep.subr.bf16.mxu0 0
      %10355 = vmatpush1.bf16.msra.mxu0 0
      %10356 = vmatprep.subr.bf16.mxu0 0
      %10357 = vmatpush1.bf16.msra.mxu0 0
      %10358 = vmatprep.subr.bf16.mxu0 0
      %10359 = vmatpush1.bf16.msra.mxu0 0
      %10360 = vmatprep.subr.bf16.mxu0 0
      %10361 = vmatpush1.bf16.msra.mxu0 0
      %10362 = vmatprep.subr.bf16.mxu0 0
      %10363 = vmatpush1.bf16.msra.mxu0 %v10299
      %10364 = vmatprep.subr.bf16.mxu0 0
      %10365 = vmatpush1.bf16.msra.mxu0 %v10298
      %10366 = vmatprep.subr.bf16.mxu0 0
      %10367 = vmatpush2.bf16.msra.mxu0 0
      %10368 = vmatprep.subr.bf16.mxu0 0
      %10369 = vmatpush2.bf16.msra.mxu0 0
      %10370 = vmatprep.subr.bf16.mxu0 0
      %10371 = vmatpush2.bf16.msra.mxu0 0
      %10372 = vmatprep.subr.bf16.mxu0 0
      %10373 = vmatpush2.bf16.msra.mxu0 0
      %10374 = vmatprep.subr.bf16.mxu0 0
      %10375 = vmatpush2.bf16.msra.mxu0 0
      %10376 = vmatprep.subr.bf16.mxu0 0
      %10377 = vmatpush2.bf16.msra.mxu0 0
      %10378 = vmatprep.subr.bf16.mxu0 0
      %10379 = vmatpush2.bf16.msra.mxu0 0
      %10380 = vmatprep.subr.bf16.mxu0 0
      %10381 = vmatpush2.bf16.msra.mxu0 0
      %10382 = vmatprep.mubr.bf16.mxu0 0
      %10383 = vmatmul.mubr.bf16.gmra.mxu0 %v10303
      %v10384 = vpop.f32.mrf.mxu0
      %v10385 = vadd.f32 0.0, %v10384
      %v10386 = vpop.f32.mrf.mxu0
      %v10387 = vpop.f32.mrf.mxu0
      %v10388 = vadd.f32 0.0, %v10387
      %v10389 = vpop.f32.mrf.mxu0
      %10390 = vmatprep.mubr.bf16.mxu0 0
      %10391 = vmatmul.mubr.bf16.gmra.mxu0 %v10306
      %v10392 = vpop.f32.mrf.mxu0
      %v10393 = vadd.f32 0.0, %v10392
      %v10394 = vpop.f32.mrf.mxu0
      %v10395 = vpop.f32.mrf.mxu0
      %v10396 = vadd.f32 0.0, %v10395
      %v10397 = vpop.f32.mrf.mxu0
      %10398 = vmatprep.mubr.bf16.mxu0 0
      %10399 = vmatmul.mubr.bf16.gmra.mxu0 %v10309
      %v10400 = vpop.f32.mrf.mxu0
      %v10401 = vadd.f32 0.0, %v10400
      %v10402 = vpop.f32.mrf.mxu0
      %v10403 = vpop.f32.mrf.mxu0
      %v10404 = vadd.f32 0.0, %v10403
      %v10405 = vpop.f32.mrf.mxu0
      %10406 = vmatprep.mubr.bf16.mxu0 0
      %10407 = vmatmul.mubr.bf16.gmra.mxu0 %v10312
      %v10408 = vpop.f32.mrf.mxu0
      %v10409 = vadd.f32 0.0, %v10408
      %v10410 = vpop.f32.mrf.mxu0
      %v10411 = vpop.f32.mrf.mxu0
      %v10412 = vadd.f32 0.0, %v10411
      %v10413 = vpop.f32.mrf.mxu0
      %10414 = vmatprep.mubr.bf16.mxu0 0
      %10415 = vmatmul.mubr.bf16.gmra.mxu0 %v10315
      %v10416 = vpop.f32.mrf.mxu0
      %v10417 = vadd.f32 0.0, %v10416
      %v10418 = vpop.f32.mrf.mxu0
      %v10419 = vpop.f32.mrf.mxu0
      %v10420 = vadd.f32 0.0, %v10419
      %v10421 = vpop.f32.mrf.mxu0
      %10422 = vmatprep.mubr.bf16.mxu0 0
      %10423 = vmatmul.mubr.bf16.gmra.mxu0 %v10318
      %v10424 = vpop.f32.mrf.mxu0
      %v10425 = vadd.f32 0.0, %v10424
      %v10426 = vpop.f32.mrf.mxu0
      %v10427 = vpop.f32.mrf.mxu0
      %v10428 = vadd.f32 0.0, %v10427
      %v10429 = vpop.f32.mrf.mxu0
      %10430 = vmatprep.mubr.bf16.mxu0 0
      %10431 = vmatmul.mubr.bf16.gmra.mxu0 %v10321
      %v10432 = vpop.f32.mrf.mxu0
      %v10433 = vadd.f32 0.0, %v10432
      %v10434 = vpop.f32.mrf.mxu0
      %v10435 = vpop.f32.mrf.mxu0
      %v10436 = vadd.f32 0.0, %v10435
      %v10437 = vpop.f32.mrf.mxu0
      %10438 = vmatprep.mubr.bf16.mxu0 0
      %10439 = vmatmul.mubr.bf16.gmra.mxu0 %v10324
      %v10440 = vpop.f32.mrf.mxu0
      %v10441 = vadd.f32 0.0, %v10440
      %v10442 = vpop.f32.mrf.mxu0
      %v10443 = vpop.f32.mrf.mxu0
      %v10444 = vadd.f32 0.0, %v10443
      %v10445 = vpop.f32.mrf.mxu0
      %10446 = vmatprep.mubr.bf16.mxu0 0
      %10447 = vmatmul.mubr.bf16.gmra.mxu0 %v10327
      %v10448 = vpop.f32.mrf.mxu0
      %v10449 = vadd.f32 0.0, %v10448
      %v10450 = vpop.f32.mrf.mxu0
      %v10451 = vpop.f32.mrf.mxu0
      %v10452 = vadd.f32 0.0, %v10451
      %v10453 = vpop.f32.mrf.mxu0
      %10454 = vmatprep.mubr.bf16.mxu0 0
      %10455 = vmatmul.mubr.bf16.gmra.mxu0 %v10330
      %v10456 = vpop.f32.mrf.mxu0
      %v10457 = vadd.f32 0.0, %v10456
      %v10458 = vpop.f32.mrf.mxu0
      %v10459 = vpop.f32.mrf.mxu0
      %v10460 = vadd.f32 0.0, %v10459
      %v10461 = vpop.f32.mrf.mxu0
      %10462 = vmatprep.mubr.bf16.mxu0 0
      %10463 = vmatmul.mubr.bf16.gmra.mxu0 %v10333
      %v10464 = vpop.f32.mrf.mxu0
      %v10465 = vadd.f32 0.0, %v10464
      %v10466 = vpop.f32.mrf.mxu0
      %v10467 = vpop.f32.mrf.mxu0
      %v10468 = vadd.f32 0.0, %v10467
      %v10469 = vpop.f32.mrf.mxu0
      %10470 = vmatprep.mubr.bf16.mxu0 0
      %10471 = vmatmul.mubr.bf16.gmra.mxu0 %v10336
      %v10472 = vpop.f32.mrf.mxu0
      %v10473 = vadd.f32 0.0, %v10472
      %v10474 = vpop.f32.mrf.mxu0
      %v10475 = vpop.f32.mrf.mxu0
      %v10476 = vadd.f32 0.0, %v10475
      %v10477 = vpop.f32.mrf.mxu0
      %10478 = vmatprep.mubr.bf16.mxu0 0
      %10479 = vmatmul.mubr.bf16.gmra.mxu0 %v10339
      %v10480 = vpop.f32.mrf.mxu0
      %v10481 = vadd.f32 0.0, %v10480
      %v10482 = vpop.f32.mrf.mxu0
      %v10483 = vpop.f32.mrf.mxu0
      %v10484 = vadd.f32 0.0, %v10483
      %v10485 = vpop.f32.mrf.mxu0
      %10486 = vmatprep.mubr.bf16.mxu0 0
      %10487 = vmatmul.mubr.bf16.gmra.mxu0 %v10342
      %v10488 = vpop.f32.mrf.mxu0
      %v10489 = vadd.f32 0.0, %v10488
      %v10490 = vpop.f32.mrf.mxu0
      %v10491 = vpop.f32.mrf.mxu0
      %v10492 = vadd.f32 0.0, %v10491
      %v10493 = vpop.f32.mrf.mxu0
      %10494 = vmatprep.mubr.bf16.mxu0 0
      %10495 = vmatmul.mubr.bf16.gmra.mxu0 %v10345
      %v10496 = vpop.f32.mrf.mxu0
      %v10497 = vadd.f32 0.0, %v10496
      %v10498 = vpop.f32.mrf.mxu0
      %v10499 = vpop.f32.mrf.mxu0
      %v10500 = vadd.f32 0.0, %v10499
      %v10501 = vpop.f32.mrf.mxu0
      %10502 = vmatprep.mubr.bf16.mxu0 0
      %10503 = vmatmul.mubr.bf16.gmra.mxu0 %v10348
      %v10504 = vpop.f32.mrf.mxu0
      %v10505 = vadd.f32 0.0, %v10504
      %v10506 = vpop.f32.mrf.mxu0
      %v10507 = vpop.f32.mrf.mxu0
      %v10508 = vadd.f32 0.0, %v10507
      %v10509 = vpop.f32.mrf.mxu0
      %10510 = vdwg.mxu0
      %v10511 = vadd.f32 %v10140, %v10385
      %v10512 = vadd.f32 %v10141, %v10388
      %v10513 = vadd.f32 %v10142, %v10393
      %v10514 = vadd.f32 %v10143, %v10396
      %v10515 = vadd.f32 %v10144, %v10401
      %v10516 = vadd.f32 %v10145, %v10404
      %v10517 = vadd.f32 %v10146, %v10409
      %v10518 = vadd.f32 %v10147, %v10412
      %v10519 = vadd.f32 %v10148, %v10417
      %v10520 = vadd.f32 %v10149, %v10420
      %v10521 = vadd.f32 %v10150, %v10425
      %v10522 = vadd.f32 %v10151, %v10428
      %v10523 = vadd.f32 %v10152, %v10433
      %v10524 = vadd.f32 %v10153, %v10436
      %v10525 = vadd.f32 %v10154, %v10441
      %v10526 = vadd.f32 %v10155, %v10444
      %v10527 = vadd.f32 %v10156, %v10449
      %v10528 = vadd.f32 %v10157, %v10452
      %v10529 = vadd.f32 %v10158, %v10457
      %v10530 = vadd.f32 %v10159, %v10460
      %v10531 = vadd.f32 %v10160, %v10465
      %v10532 = vadd.f32 %v10161, %v10468
      %v10533 = vadd.f32 %v10162, %v10473
      %v10534 = vadd.f32 %v10163, %v10476
      %v10535 = vadd.f32 %v10164, %v10481
      %v10536 = vadd.f32 %v10165, %v10484
      %v10537 = vadd.f32 %v10166, %v10489
      %v10538 = vadd.f32 %v10167, %v10492
      %v10539 = vadd.f32 %v10168, %v10497
      %v10540 = vadd.f32 %v10169, %v10500
      %v10541 = vadd.f32 %v10170, %v10505
      %v10542 = vadd.f32 %v10171, %v10508
      %v10543 = vld [vmem:[%s10172] sm:$0xf]
      %v10544 = vld [vmem:[%s10172 + $0x4] sm:$0xf]
      %v10545 = vld [vmem:[%s10172 + $0x8] sm:$0x1]
      %v10546 = vld [vmem:[%s10172 + $0xc] sm:$0xf]
      %v10547 = vld [vmem:[%s10172 + $0x10] sm:$0xf]
      %v10548 = vld [vmem:[%s10172 + $0x14] sm:$0x1]
      %v10549 = vld [vmem:[%s10172 + $0x18] sm:$0xf]
      %v10550 = vld [vmem:[%s10172 + $0x1c] sm:$0xf]
      %v10551 = vld [vmem:[%s10172 + $0x20] sm:$0x1]
      %v10552 = vld [vmem:[%s10172 + $0x24] sm:$0xf]
      %v10553 = vld [vmem:[%s10172 + $0x28] sm:$0xf]
      %v10554 = vld [vmem:[%s10172 + $0x2c] sm:$0x1]
      %v10555 = vld [vmem:[%s10172 + $0x30] sm:$0xf]
      %v10556 = vld [vmem:[%s10172 + $0x34] sm:$0xf]
      %v10557 = vld [vmem:[%s10172 + $0x38] sm:$0x1]
      %v10558 = vld [vmem:[%s10172 + $0x3c] sm:$0xf]
      %v10559 = vld [vmem:[%s10172 + $0x40] sm:$0xf]
      %v10560 = vld [vmem:[%s10172 + $0x44] sm:$0x1]
      %v10561 = vld [vmem:[%s10172 + $0x48] sm:$0xf]
      %v10562 = vld [vmem:[%s10172 + $0x4c] sm:$0xf]
      %v10563 = vld [vmem:[%s10172 + $0x50] sm:$0x1]
      %v10564 = vld [vmem:[%s10172 + $0x54] sm:$0xf]
      %v10565 = vld [vmem:[%s10172 + $0x58] sm:$0xf]
      %v10566 = vld [vmem:[%s10172 + $0x5c] sm:$0x1]
      %v10567 = vld [vmem:[%s10172 + $0x60] sm:$0xf]
      %v10568 = vld [vmem:[%s10172 + $0x64] sm:$0xf]
      %v10569 = vld [vmem:[%s10172 + $0x68] sm:$0x1]
      %v10570 = vld [vmem:[%s10172 + $0x6c] sm:$0xf]
      %v10571 = vld [vmem:[%s10172 + $0x70] sm:$0xf]
      %v10572 = vld [vmem:[%s10172 + $0x74] sm:$0x1]
      %v10573 = vld [vmem:[%s10172 + $0x78] sm:$0xf]
      %v10574 = vld [vmem:[%s10172 + $0x7c] sm:$0xf]
      %v10575 = vld [vmem:[%s10172 + $0x80] sm:$0x1]
      %v10576 = vld [vmem:[%s10172 + $0x84] sm:$0xf]
      %v10577 = vld [vmem:[%s10172 + $0x88] sm:$0xf]
      %v10578 = vld [vmem:[%s10172 + $0x8c] sm:$0x1]
      %v10579 = vld [vmem:[%s10172 + $0x90] sm:$0xf]
      %v10580 = vld [vmem:[%s10172 + $0x94] sm:$0xf]
      %v10581 = vld [vmem:[%s10172 + $0x98] sm:$0x1]
      %v10582 = vld [vmem:[%s10172 + $0x9c] sm:$0xf]
      %v10583 = vld [vmem:[%s10172 + $0xa0] sm:$0xf]
      %v10584 = vld [vmem:[%s10172 + $0xa4] sm:$0x1]
      %v10585 = vld [vmem:[%s10172 + $0xa8] sm:$0xf]
      %v10586 = vld [vmem:[%s10172 + $0xac] sm:$0xf]
      %v10587 = vld [vmem:[%s10172 + $0xb0] sm:$0x1]
      %v10588 = vld [vmem:[%s10172 + $0xb4] sm:$0xf]
      %v10589 = vld [vmem:[%s10172 + $0xb8] sm:$0xf]
      %v10590 = vld [vmem:[%s10172 + $0xbc] sm:$0x1]
      %v10592 = vshrl.u32 %v10543, 16
      %v10594 = vrot.slane %v10592, 4
      %v10595 = vshll.u32 %v10543, 16
      %v10597 = vrot.slane %v10595, 5
      %v10598 = vor.u32 %v10594, %v10597
      %v10599 = vrot.slane %v10598, 4
      %v10601 = vshll.u32 %v10544, 16
      %v10603 = vrot.slane %v10601, 5
      %v10604 = vsel %vm1553, %v10599, %v10603
      %v10605 = vshrl.u32 %v10544, 16
      %v10607 = vrot.slane %v10605, 4
      %v10608 = vor.u32 %v10607, %v10603
      %v10609 = vrot.slane %v10608, 4
      %v10611 = vshll.u32 %v10545, 16
      %v10613 = vrot.slane %v10611, 5
      %v10614 = vsel %vm1553, %v10609, %v10613
      %v10616 = vshrl.u32 %v10546, 16
      %v10618 = vrot.slane %v10616, 4
      %v10619 = vshll.u32 %v10546, 16
      %v10621 = vrot.slane %v10619, 5
      %v10622 = vor.u32 %v10618, %v10621
      %v10623 = vrot.slane %v10622, 4
      %v10625 = vshll.u32 %v10547, 16
      %v10627 = vrot.slane %v10625, 5
      %v10628 = vsel %vm1553, %v10623, %v10627
      %v10629 = vshrl.u32 %v10547, 16
      %v10631 = vrot.slane %v10629, 4
      %v10632 = vor.u32 %v10631, %v10627
      %v10633 = vrot.slane %v10632, 4
      %v10635 = vshll.u32 %v10548, 16
      %v10637 = vrot.slane %v10635, 5
      %v10638 = vsel %vm1553, %v10633, %v10637
      %v10640 = vshrl.u32 %v10549, 16
      %v10642 = vrot.slane %v10640, 4
      %v10643 = vshll.u32 %v10549, 16
      %v10645 = vrot.slane %v10643, 5
      %v10646 = vor.u32 %v10642, %v10645
      %v10647 = vrot.slane %v10646, 4
      %v10649 = vshll.u32 %v10550, 16
      %v10651 = vrot.slane %v10649, 5
      %v10652 = vsel %vm1553, %v10647, %v10651
      %v10653 = vshrl.u32 %v10550, 16
      %v10655 = vrot.slane %v10653, 4
      %v10656 = vor.u32 %v10655, %v10651
      %v10657 = vrot.slane %v10656, 4
      %v10659 = vshll.u32 %v10551, 16
      %v10661 = vrot.slane %v10659, 5
      %v10662 = vsel %vm1553, %v10657, %v10661
      %v10664 = vshrl.u32 %v10552, 16
      %v10666 = vrot.slane %v10664, 4
      %v10667 = vshll.u32 %v10552, 16
      %v10669 = vrot.slane %v10667, 5
      %v10670 = vor.u32 %v10666, %v10669
      %v10671 = vrot.slane %v10670, 4
      %v10673 = vshll.u32 %v10553, 16
      %v10675 = vrot.slane %v10673, 5
      %v10676 = vsel %vm1553, %v10671, %v10675
      %v10677 = vshrl.u32 %v10553, 16
      %v10679 = vrot.slane %v10677, 4
      %v10680 = vor.u32 %v10679, %v10675
      %v10681 = vrot.slane %v10680, 4
      %v10683 = vshll.u32 %v10554, 16
      %v10685 = vrot.slane %v10683, 5
      %v10686 = vsel %vm1553, %v10681, %v10685
      %v10688 = vshrl.u32 %v10555, 16
      %v10690 = vrot.slane %v10688, 4
      %v10691 = vshll.u32 %v10555, 16
      %v10693 = vrot.slane %v10691, 5
      %v10694 = vor.u32 %v10690, %v10693
      %v10695 = vrot.slane %v10694, 4
      %v10697 = vshll.u32 %v10556, 16
      %v10699 = vrot.slane %v10697, 5
      %v10700 = vsel %vm1553, %v10695, %v10699
      %v10701 = vshrl.u32 %v10556, 16
      %v10703 = vrot.slane %v10701, 4
      %v10704 = vor.u32 %v10703, %v10699
      %v10705 = vrot.slane %v10704, 4
      %v10707 = vshll.u32 %v10557, 16
      %v10709 = vrot.slane %v10707, 5
      %v10710 = vsel %vm1553, %v10705, %v10709
      %v10712 = vshrl.u32 %v10558, 16
      %v10714 = vrot.slane %v10712, 4
      %v10715 = vshll.u32 %v10558, 16
      %v10717 = vrot.slane %v10715, 5
      %v10718 = vor.u32 %v10714, %v10717
      %v10719 = vrot.slane %v10718, 4
      %v10721 = vshll.u32 %v10559, 16
      %v10723 = vrot.slane %v10721, 5
      %v10724 = vsel %vm1553, %v10719, %v10723
      %v10725 = vshrl.u32 %v10559, 16
      %v10727 = vrot.slane %v10725, 4
      %v10728 = vor.u32 %v10727, %v10723
      %v10729 = vrot.slane %v10728, 4
      %v10731 = vshll.u32 %v10560, 16
      %v10733 = vrot.slane %v10731, 5
      %v10734 = vsel %vm1553, %v10729, %v10733
      %v10736 = vshrl.u32 %v10561, 16
      %v10738 = vrot.slane %v10736, 4
      %v10739 = vshll.u32 %v10561, 16
      %v10741 = vrot.slane %v10739, 5
      %v10742 = vor.u32 %v10738, %v10741
      %v10743 = vrot.slane %v10742, 4
      %v10745 = vshll.u32 %v10562, 16
      %v10747 = vrot.slane %v10745, 5
      %v10748 = vsel %vm1553, %v10743, %v10747
      %v10749 = vshrl.u32 %v10562, 16
      %v10751 = vrot.slane %v10749, 4
      %v10752 = vor.u32 %v10751, %v10747
      %v10753 = vrot.slane %v10752, 4
      %v10755 = vshll.u32 %v10563, 16
      %v10757 = vrot.slane %v10755, 5
      %v10758 = vsel %vm1553, %v10753, %v10757
      %v10760 = vshrl.u32 %v10564, 16
      %v10762 = vrot.slane %v10760, 4
      %v10763 = vshll.u32 %v10564, 16
      %v10765 = vrot.slane %v10763, 5
      %v10766 = vor.u32 %v10762, %v10765
      %v10767 = vrot.slane %v10766, 4
      %v10769 = vshll.u32 %v10565, 16
      %v10771 = vrot.slane %v10769, 5
      %v10772 = vsel %vm1553, %v10767, %v10771
      %v10773 = vshrl.u32 %v10565, 16
      %v10775 = vrot.slane %v10773, 4
      %v10776 = vor.u32 %v10775, %v10771
      %v10777 = vrot.slane %v10776, 4
      %v10779 = vshll.u32 %v10566, 16
      %v10781 = vrot.slane %v10779, 5
      %v10782 = vsel %vm1553, %v10777, %v10781
      %v10784 = vshrl.u32 %v10567, 16
      %v10786 = vrot.slane %v10784, 4
      %v10787 = vshll.u32 %v10567, 16
      %v10789 = vrot.slane %v10787, 5
      %v10790 = vor.u32 %v10786, %v10789
      %v10791 = vrot.slane %v10790, 4
      %v10793 = vshll.u32 %v10568, 16
      %v10795 = vrot.slane %v10793, 5
      %v10796 = vsel %vm1553, %v10791, %v10795
      %v10797 = vshrl.u32 %v10568, 16
      %v10799 = vrot.slane %v10797, 4
      %v10800 = vor.u32 %v10799, %v10795
      %v10801 = vrot.slane %v10800, 4
      %v10803 = vshll.u32 %v10569, 16
      %v10805 = vrot.slane %v10803, 5
      %v10806 = vsel %vm1553, %v10801, %v10805
      %v10808 = vshrl.u32 %v10570, 16
      %v10810 = vrot.slane %v10808, 4
      %v10811 = vshll.u32 %v10570, 16
      %v10813 = vrot.slane %v10811, 5
      %v10814 = vor.u32 %v10810, %v10813
      %v10815 = vrot.slane %v10814, 4
      %v10817 = vshll.u32 %v10571, 16
      %v10819 = vrot.slane %v10817, 5
      %v10820 = vsel %vm1553, %v10815, %v10819
      %v10821 = vshrl.u32 %v10571, 16
      %v10823 = vrot.slane %v10821, 4
      %v10824 = vor.u32 %v10823, %v10819
      %v10825 = vrot.slane %v10824, 4
      %v10827 = vshll.u32 %v10572, 16
      %v10829 = vrot.slane %v10827, 5
      %v10830 = vsel %vm1553, %v10825, %v10829
      %v10832 = vshrl.u32 %v10573, 16
      %v10834 = vrot.slane %v10832, 4
      %v10835 = vshll.u32 %v10573, 16
      %v10837 = vrot.slane %v10835, 5
      %v10838 = vor.u32 %v10834, %v10837
      %v10839 = vrot.slane %v10838, 4
      %v10841 = vshll.u32 %v10574, 16
      %v10843 = vrot.slane %v10841, 5
      %v10844 = vsel %vm1553, %v10839, %v10843
      %v10845 = vshrl.u32 %v10574, 16
      %v10847 = vrot.slane %v10845, 4
      %v10848 = vor.u32 %v10847, %v10843
      %v10849 = vrot.slane %v10848, 4
      %v10851 = vshll.u32 %v10575, 16
      %v10853 = vrot.slane %v10851, 5
      %v10854 = vsel %vm1553, %v10849, %v10853
      %v10856 = vshrl.u32 %v10576, 16
      %v10858 = vrot.slane %v10856, 4
      %v10859 = vshll.u32 %v10576, 16
      %v10861 = vrot.slane %v10859, 5
      %v10862 = vor.u32 %v10858, %v10861
      %v10863 = vrot.slane %v10862, 4
      %v10865 = vshll.u32 %v10577, 16
      %v10867 = vrot.slane %v10865, 5
      %v10868 = vsel %vm1553, %v10863, %v10867
      %v10869 = vshrl.u32 %v10577, 16
      %v10871 = vrot.slane %v10869, 4
      %v10872 = vor.u32 %v10871, %v10867
      %v10873 = vrot.slane %v10872, 4
      %v10875 = vshll.u32 %v10578, 16
      %v10877 = vrot.slane %v10875, 5
      %v10878 = vsel %vm1553, %v10873, %v10877
      %v10880 = vshrl.u32 %v10579, 16
      %v10882 = vrot.slane %v10880, 4
      %v10883 = vshll.u32 %v10579, 16
      %v10885 = vrot.slane %v10883, 5
      %v10886 = vor.u32 %v10882, %v10885
      %v10887 = vrot.slane %v10886, 4
      %v10889 = vshll.u32 %v10580, 16
      %v10891 = vrot.slane %v10889, 5
      %v10892 = vsel %vm1553, %v10887, %v10891
      %v10893 = vshrl.u32 %v10580, 16
      %v10895 = vrot.slane %v10893, 4
      %v10896 = vor.u32 %v10895, %v10891
      %v10897 = vrot.slane %v10896, 4
      %v10899 = vshll.u32 %v10581, 16
      %v10901 = vrot.slane %v10899, 5
      %v10902 = vsel %vm1553, %v10897, %v10901
      %v10904 = vshrl.u32 %v10582, 16
      %v10906 = vrot.slane %v10904, 4
      %v10907 = vshll.u32 %v10582, 16
      %v10909 = vrot.slane %v10907, 5
      %v10910 = vor.u32 %v10906, %v10909
      %v10911 = vrot.slane %v10910, 4
      %v10913 = vshll.u32 %v10583, 16
      %v10915 = vrot.slane %v10913, 5
      %v10916 = vsel %vm1553, %v10911, %v10915
      %v10917 = vshrl.u32 %v10583, 16
      %v10919 = vrot.slane %v10917, 4
      %v10920 = vor.u32 %v10919, %v10915
      %v10921 = vrot.slane %v10920, 4
      %v10923 = vshll.u32 %v10584, 16
      %v10925 = vrot.slane %v10923, 5
      %v10926 = vsel %vm1553, %v10921, %v10925
      %v10928 = vshrl.u32 %v10585, 16
      %v10930 = vrot.slane %v10928, 4
      %v10931 = vshll.u32 %v10585, 16
      %v10933 = vrot.slane %v10931, 5
      %v10934 = vor.u32 %v10930, %v10933
      %v10935 = vrot.slane %v10934, 4
      %v10937 = vshll.u32 %v10586, 16
      %v10939 = vrot.slane %v10937, 5
      %v10940 = vsel %vm1553, %v10935, %v10939
      %v10941 = vshrl.u32 %v10586, 16
      %v10943 = vrot.slane %v10941, 4
      %v10944 = vor.u32 %v10943, %v10939
      %v10945 = vrot.slane %v10944, 4
      %v10947 = vshll.u32 %v10587, 16
      %v10949 = vrot.slane %v10947, 5
      %v10950 = vsel %vm1553, %v10945, %v10949
      %v10952 = vshrl.u32 %v10588, 16
      %v10954 = vrot.slane %v10952, 4
      %v10955 = vshll.u32 %v10588, 16
      %v10957 = vrot.slane %v10955, 5
      %v10958 = vor.u32 %v10954, %v10957
      %v10959 = vrot.slane %v10958, 4
      %v10961 = vshll.u32 %v10589, 16
      %v10963 = vrot.slane %v10961, 5
      %v10964 = vsel %vm1553, %v10959, %v10963
      %v10965 = vshrl.u32 %v10589, 16
      %v10967 = vrot.slane %v10965, 4
      %v10968 = vor.u32 %v10967, %v10963
      %v10969 = vrot.slane %v10968, 4
      %v10971 = vshll.u32 %v10590, 16
      %v10973 = vrot.slane %v10971, 5
      %v10974 = vsel %vm1553, %v10969, %v10973
      %s10975 = scalar_lea.vmem %s3, 112
      %v10976 = vld [vmem:[%s10975] sm:$0xf]
      %v10977 = vld [vmem:[%s10975 + $0x4] sm:$0xf]
      %v10978 = vld [vmem:[%s10975 + $0x8] sm:$0xf]
      %v10979 = vld [vmem:[%s10975 + $0xc] sm:$0xf]
      %v10980 = vunpack.c.l.b16 %v10604
      %v10981 = vunpack.c.l.b16 %v10614
      %v10982 = vunpack.c.l.b16 %v10628
      %v10983 = vunpack.c.l.b16 %v10638
      %v10984 = vunpack.c.l.b16 %v10652
      %v10985 = vunpack.c.l.b16 %v10662
      %v10986 = vunpack.c.l.b16 %v10676
      %v10987 = vunpack.c.l.b16 %v10686
      %v10988 = vunpack.c.l.b16 %v10700
      %v10989 = vunpack.c.l.b16 %v10710
      %v10990 = vunpack.c.l.b16 %v10724
      %v10991 = vunpack.c.l.b16 %v10734
      %v10992 = vunpack.c.l.b16 %v10748
      %v10993 = vunpack.c.l.b16 %v10758
      %v10994 = vunpack.c.l.b16 %v10772
      %v10995 = vunpack.c.l.b16 %v10782
      %v10996 = vunpack.c.l.b16 %v10796
      %v10997 = vunpack.c.l.b16 %v10806
      %v10998 = vunpack.c.l.b16 %v10820
      %v10999 = vunpack.c.l.b16 %v10830
      %v11000 = vunpack.c.l.b16 %v10844
      %v11001 = vunpack.c.l.b16 %v10854
      %v11002 = vunpack.c.l.b16 %v10868
      %v11003 = vunpack.c.l.b16 %v10878
      %v11004 = vunpack.c.l.b16 %v10892
      %v11005 = vunpack.c.l.b16 %v10902
      %v11006 = vunpack.c.l.b16 %v10916
      %v11007 = vunpack.c.l.b16 %v10926
      %v11008 = vunpack.c.l.b16 %v10940
      %v11009 = vunpack.c.l.b16 %v10950
      %v11010 = vunpack.c.l.b16 %v10964
      %v11011 = vunpack.c.l.b16 %v10974
      %v11012 = vpack.c.b16 %v10981, %v10980
      %v11013 = vpack.c.b16 %v10983, %v10982
      %v11014 = vpack.c.b16 %v10985, %v10984
      %v11015 = vpack.c.b16 %v10987, %v10986
      %v11016 = vpack.c.b16 %v10989, %v10988
      %v11017 = vpack.c.b16 %v10991, %v10990
      %v11018 = vpack.c.b16 %v10993, %v10992
      %v11019 = vpack.c.b16 %v10995, %v10994
      %v11020 = vpack.c.b16 %v10997, %v10996
      %v11021 = vpack.c.b16 %v10999, %v10998
      %v11022 = vpack.c.b16 %v11001, %v11000
      %v11023 = vpack.c.b16 %v11003, %v11002
      %v11024 = vpack.c.b16 %v11005, %v11004
      %v11025 = vpack.c.b16 %v11007, %v11006
      %v11026 = vpack.c.b16 %v11009, %v11008
      %v11027 = vpack.c.b16 %v11011, %v11010
      %v11032 = vunpack.c.l.b16 %v10976
      %v11033 = vunpack.c.l.b16 %v10977
      %v11034 = vunpack.c.l.b16 %v10978
      %v11035 = vunpack.c.l.b16 %v10979
      %v11036 = vpack.c.b16 %v11033, %v11032
      %v11037 = vpack.c.b16 %v11035, %v11034
      %v11041 = vsel %vm6304, %v11012, 0
      %v11044 = vsel %vm6304, %v11013, 0
      %v11047 = vsel %vm6304, %v11014, 0
      %v11050 = vsel %vm6304, %v11015, 0
      %v11053 = vsel %vm6304, %v11016, 0
      %v11056 = vsel %vm6304, %v11017, 0
      %v11059 = vsel %vm6304, %v11018, 0
      %v11062 = vsel %vm6304, %v11019, 0
      %v11065 = vsel %vm6304, %v11020, 0
      %v11068 = vsel %vm6304, %v11021, 0
      %v11071 = vsel %vm6304, %v11022, 0
      %v11074 = vsel %vm6304, %v11023, 0
      %v11077 = vsel %vm6304, %v11024, 0
      %v11080 = vsel %vm6304, %v11025, 0
      %v11083 = vsel %vm6304, %v11026, 0
      %v11086 = vsel %vm6304, %v11027, 0
      %11088 = vmatprep.subr.bf16.mxu0 0
      %11089 = vmatpush1.bf16.msra.mxu0 0
      %11090 = vmatprep.subr.bf16.mxu0 0
      %11091 = vmatpush1.bf16.msra.mxu0 0
      %11092 = vmatprep.subr.bf16.mxu0 0
      %11093 = vmatpush1.bf16.msra.mxu0 0
      %11094 = vmatprep.subr.bf16.mxu0 0
      %11095 = vmatpush1.bf16.msra.mxu0 0
      %11096 = vmatprep.subr.bf16.mxu0 0
      %11097 = vmatpush1.bf16.msra.mxu0 0
      %11098 = vmatprep.subr.bf16.mxu0 0
      %11099 = vmatpush1.bf16.msra.mxu0 0
      %11100 = vmatprep.subr.bf16.mxu0 0
      %11101 = vmatpush1.bf16.msra.mxu0 %v11037
      %11102 = vmatprep.subr.bf16.mxu0 0
      %11103 = vmatpush1.bf16.msra.mxu0 %v11036
      %11104 = vmatprep.subr.bf16.mxu0 0
      %11105 = vmatpush2.bf16.msra.mxu0 0
      %11106 = vmatprep.subr.bf16.mxu0 0
      %11107 = vmatpush2.bf16.msra.mxu0 0
      %11108 = vmatprep.subr.bf16.mxu0 0
      %11109 = vmatpush2.bf16.msra.mxu0 0
      %11110 = vmatprep.subr.bf16.mxu0 0
      %11111 = vmatpush2.bf16.msra.mxu0 0
      %11112 = vmatprep.subr.bf16.mxu0 0
      %11113 = vmatpush2.bf16.msra.mxu0 0
      %11114 = vmatprep.subr.bf16.mxu0 0
      %11115 = vmatpush2.bf16.msra.mxu0 0
      %11116 = vmatprep.subr.bf16.mxu0 0
      %11117 = vmatpush2.bf16.msra.mxu0 0
      %11118 = vmatprep.subr.bf16.mxu0 0
      %11119 = vmatpush2.bf16.msra.mxu0 0
      %11120 = vmatprep.mubr.bf16.mxu0 0
      %11121 = vmatmul.mubr.bf16.gmra.mxu0 %v11041
      %v11122 = vpop.f32.mrf.mxu0
      %v11123 = vadd.f32 0.0, %v11122
      %v11124 = vpop.f32.mrf.mxu0
      %v11125 = vpop.f32.mrf.mxu0
      %v11126 = vadd.f32 0.0, %v11125
      %v11127 = vpop.f32.mrf.mxu0
      %11128 = vmatprep.mubr.bf16.mxu0 0
      %11129 = vmatmul.mubr.bf16.gmra.mxu0 %v11044
      %v11130 = vpop.f32.mrf.mxu0
      %v11131 = vadd.f32 0.0, %v11130
      %v11132 = vpop.f32.mrf.mxu0
      %v11133 = vpop.f32.mrf.mxu0
      %v11134 = vadd.f32 0.0, %v11133
      %v11135 = vpop.f32.mrf.mxu0
      %11136 = vmatprep.mubr.bf16.mxu0 0
      %11137 = vmatmul.mubr.bf16.gmra.mxu0 %v11047
      %v11138 = vpop.f32.mrf.mxu0
      %v11139 = vadd.f32 0.0, %v11138
      %v11140 = vpop.f32.mrf.mxu0
      %v11141 = vpop.f32.mrf.mxu0
      %v11142 = vadd.f32 0.0, %v11141
      %v11143 = vpop.f32.mrf.mxu0
      %11144 = vmatprep.mubr.bf16.mxu0 0
      %11145 = vmatmul.mubr.bf16.gmra.mxu0 %v11050
      %v11146 = vpop.f32.mrf.mxu0
      %v11147 = vadd.f32 0.0, %v11146
      %v11148 = vpop.f32.mrf.mxu0
      %v11149 = vpop.f32.mrf.mxu0
      %v11150 = vadd.f32 0.0, %v11149
      %v11151 = vpop.f32.mrf.mxu0
      %11152 = vmatprep.mubr.bf16.mxu0 0
      %11153 = vmatmul.mubr.bf16.gmra.mxu0 %v11053
      %v11154 = vpop.f32.mrf.mxu0
      %v11155 = vadd.f32 0.0, %v11154
      %v11156 = vpop.f32.mrf.mxu0
      %v11157 = vpop.f32.mrf.mxu0
      %v11158 = vadd.f32 0.0, %v11157
      %v11159 = vpop.f32.mrf.mxu0
      %11160 = vmatprep.mubr.bf16.mxu0 0
      %11161 = vmatmul.mubr.bf16.gmra.mxu0 %v11056
      %v11162 = vpop.f32.mrf.mxu0
      %v11163 = vadd.f32 0.0, %v11162
      %v11164 = vpop.f32.mrf.mxu0
      %v11165 = vpop.f32.mrf.mxu0
      %v11166 = vadd.f32 0.0, %v11165
      %v11167 = vpop.f32.mrf.mxu0
      %11168 = vmatprep.mubr.bf16.mxu0 0
      %11169 = vmatmul.mubr.bf16.gmra.mxu0 %v11059
      %v11170 = vpop.f32.mrf.mxu0
      %v11171 = vadd.f32 0.0, %v11170
      %v11172 = vpop.f32.mrf.mxu0
      %v11173 = vpop.f32.mrf.mxu0
      %v11174 = vadd.f32 0.0, %v11173
      %v11175 = vpop.f32.mrf.mxu0
      %11176 = vmatprep.mubr.bf16.mxu0 0
      %11177 = vmatmul.mubr.bf16.gmra.mxu0 %v11062
      %v11178 = vpop.f32.mrf.mxu0
      %v11179 = vadd.f32 0.0, %v11178
      %v11180 = vpop.f32.mrf.mxu0
      %v11181 = vpop.f32.mrf.mxu0
      %v11182 = vadd.f32 0.0, %v11181
      %v11183 = vpop.f32.mrf.mxu0
      %11184 = vmatprep.mubr.bf16.mxu0 0
      %11185 = vmatmul.mubr.bf16.gmra.mxu0 %v11065
      %v11186 = vpop.f32.mrf.mxu0
      %v11187 = vadd.f32 0.0, %v11186
      %v11188 = vpop.f32.mrf.mxu0
      %v11189 = vpop.f32.mrf.mxu0
      %v11190 = vadd.f32 0.0, %v11189
      %v11191 = vpop.f32.mrf.mxu0
      %11192 = vmatprep.mubr.bf16.mxu0 0
      %11193 = vmatmul.mubr.bf16.gmra.mxu0 %v11068
      %v11194 = vpop.f32.mrf.mxu0
      %v11195 = vadd.f32 0.0, %v11194
      %v11196 = vpop.f32.mrf.mxu0
      %v11197 = vpop.f32.mrf.mxu0
      %v11198 = vadd.f32 0.0, %v11197
      %v11199 = vpop.f32.mrf.mxu0
      %11200 = vmatprep.mubr.bf16.mxu0 0
      %11201 = vmatmul.mubr.bf16.gmra.mxu0 %v11071
      %v11202 = vpop.f32.mrf.mxu0
      %v11203 = vadd.f32 0.0, %v11202
      %v11204 = vpop.f32.mrf.mxu0
      %v11205 = vpop.f32.mrf.mxu0
      %v11206 = vadd.f32 0.0, %v11205
      %v11207 = vpop.f32.mrf.mxu0
      %11208 = vmatprep.mubr.bf16.mxu0 0
      %11209 = vmatmul.mubr.bf16.gmra.mxu0 %v11074
      %v11210 = vpop.f32.mrf.mxu0
      %v11211 = vadd.f32 0.0, %v11210
      %v11212 = vpop.f32.mrf.mxu0
      %v11213 = vpop.f32.mrf.mxu0
      %v11214 = vadd.f32 0.0, %v11213
      %v11215 = vpop.f32.mrf.mxu0
      %11216 = vmatprep.mubr.bf16.mxu0 0
      %11217 = vmatmul.mubr.bf16.gmra.mxu0 %v11077
      %v11218 = vpop.f32.mrf.mxu0
      %v11219 = vadd.f32 0.0, %v11218
      %v11220 = vpop.f32.mrf.mxu0
      %v11221 = vpop.f32.mrf.mxu0
      %v11222 = vadd.f32 0.0, %v11221
      %v11223 = vpop.f32.mrf.mxu0
      %11224 = vmatprep.mubr.bf16.mxu0 0
      %11225 = vmatmul.mubr.bf16.gmra.mxu0 %v11080
      %v11226 = vpop.f32.mrf.mxu0
      %v11227 = vadd.f32 0.0, %v11226
      %v11228 = vpop.f32.mrf.mxu0
      %v11229 = vpop.f32.mrf.mxu0
      %v11230 = vadd.f32 0.0, %v11229
      %v11231 = vpop.f32.mrf.mxu0
      %11232 = vmatprep.mubr.bf16.mxu0 0
      %11233 = vmatmul.mubr.bf16.gmra.mxu0 %v11083
      %v11234 = vpop.f32.mrf.mxu0
      %v11235 = vadd.f32 0.0, %v11234
      %v11236 = vpop.f32.mrf.mxu0
      %v11237 = vpop.f32.mrf.mxu0
      %v11238 = vadd.f32 0.0, %v11237
      %v11239 = vpop.f32.mrf.mxu0
      %11240 = vmatprep.mubr.bf16.mxu0 0
      %11241 = vmatmul.mubr.bf16.gmra.mxu0 %v11086
      %v11242 = vpop.f32.mrf.mxu0
      %v11243 = vadd.f32 0.0, %v11242
      %v11244 = vpop.f32.mrf.mxu0
      %v11245 = vpop.f32.mrf.mxu0
      %v11246 = vadd.f32 0.0, %v11245
      %v11247 = vpop.f32.mrf.mxu0
      %11248 = vdwg.mxu0
      %v11249 = vadd.f32 %v10511, %v11123
      %v11250 = vadd.f32 %v10512, %v11126
      %v11251 = vadd.f32 %v10513, %v11131
      %v11252 = vadd.f32 %v10514, %v11134
      %v11253 = vadd.f32 %v10515, %v11139
      %v11254 = vadd.f32 %v10516, %v11142
      %v11255 = vadd.f32 %v10517, %v11147
      %v11256 = vadd.f32 %v10518, %v11150
      %v11257 = vadd.f32 %v10519, %v11155
      %v11258 = vadd.f32 %v10520, %v11158
      %v11259 = vadd.f32 %v10521, %v11163
      %v11260 = vadd.f32 %v10522, %v11166
      %v11261 = vadd.f32 %v10523, %v11171
      %v11262 = vadd.f32 %v10524, %v11174
      %v11263 = vadd.f32 %v10525, %v11179
      %v11264 = vadd.f32 %v10526, %v11182
      %v11265 = vadd.f32 %v10527, %v11187
      %v11266 = vadd.f32 %v10528, %v11190
      %v11267 = vadd.f32 %v10529, %v11195
      %v11268 = vadd.f32 %v10530, %v11198
      %v11269 = vadd.f32 %v10531, %v11203
      %v11270 = vadd.f32 %v10532, %v11206
      %v11271 = vadd.f32 %v10533, %v11211
      %v11272 = vadd.f32 %v10534, %v11214
      %v11273 = vadd.f32 %v10535, %v11219
      %v11274 = vadd.f32 %v10536, %v11222
      %v11275 = vadd.f32 %v10537, %v11227
      %v11276 = vadd.f32 %v10538, %v11230
      %v11277 = vadd.f32 %v10539, %v11235
      %v11278 = vadd.f32 %v10540, %v11238
      %v11279 = vadd.f32 %v10541, %v11243
      %v11280 = vadd.f32 %v10542, %v11246
      %v11281 = vld [vmem:[%s10172] sm:$0xe]
      %v11282 = vld [vmem:[%s10172 + $0xc] sm:$0xe]
      %v11283 = vld [vmem:[%s10172 + $0x18] sm:$0xe]
      %v11284 = vld [vmem:[%s10172 + $0x24] sm:$0xe]
      %v11285 = vld [vmem:[%s10172 + $0x30] sm:$0xe]
      %v11286 = vld [vmem:[%s10172 + $0x3c] sm:$0xe]
      %v11287 = vld [vmem:[%s10172 + $0x48] sm:$0xe]
      %v11288 = vld [vmem:[%s10172 + $0x54] sm:$0xe]
      %v11289 = vld [vmem:[%s10172 + $0x60] sm:$0xe]
      %v11290 = vld [vmem:[%s10172 + $0x6c] sm:$0xe]
      %v11291 = vld [vmem:[%s10172 + $0x78] sm:$0xe]
      %v11292 = vld [vmem:[%s10172 + $0x84] sm:$0xe]
      %v11293 = vld [vmem:[%s10172 + $0x90] sm:$0xe]
      %v11294 = vld [vmem:[%s10172 + $0x9c] sm:$0xe]
      %v11295 = vld [vmem:[%s10172 + $0xa8] sm:$0xe]
      %v11296 = vld [vmem:[%s10172 + $0xb4] sm:$0xe]
      %v11345 = vrot.slane %v11281, 5
      %v11346 = vrot.slane %v11345, 4
      %v11347 = vrot.slane %v10544, 5
      %v11348 = vsel %vm2592, %v11346, %v11347
      %v11349 = vrot.slane %v11347, 4
      %v11350 = vrot.slane %v10545, 5
      %v11351 = vsel %vm2592, %v11349, %v11350
      %v11352 = vrot.slane %v11282, 5
      %v11353 = vrot.slane %v11352, 4
      %v11354 = vrot.slane %v10547, 5
      %v11355 = vsel %vm2592, %v11353, %v11354
      %v11356 = vrot.slane %v11354, 4
      %v11357 = vrot.slane %v10548, 5
      %v11358 = vsel %vm2592, %v11356, %v11357
      %v11359 = vrot.slane %v11283, 5
      %v11360 = vrot.slane %v11359, 4
      %v11361 = vrot.slane %v10550, 5
      %v11362 = vsel %vm2592, %v11360, %v11361
      %v11363 = vrot.slane %v11361, 4
      %v11364 = vrot.slane %v10551, 5
      %v11365 = vsel %vm2592, %v11363, %v11364
      %v11366 = vrot.slane %v11284, 5
      %v11367 = vrot.slane %v11366, 4
      %v11368 = vrot.slane %v10553, 5
      %v11369 = vsel %vm2592, %v11367, %v11368
      %v11370 = vrot.slane %v11368, 4
      %v11371 = vrot.slane %v10554, 5
      %v11372 = vsel %vm2592, %v11370, %v11371
      %v11373 = vrot.slane %v11285, 5
      %v11374 = vrot.slane %v11373, 4
      %v11375 = vrot.slane %v10556, 5
      %v11376 = vsel %vm2592, %v11374, %v11375
      %v11377 = vrot.slane %v11375, 4
      %v11378 = vrot.slane %v10557, 5
      %v11379 = vsel %vm2592, %v11377, %v11378
      %v11380 = vrot.slane %v11286, 5
      %v11381 = vrot.slane %v11380, 4
      %v11382 = vrot.slane %v10559, 5
      %v11383 = vsel %vm2592, %v11381, %v11382
      %v11384 = vrot.slane %v11382, 4
      %v11385 = vrot.slane %v10560, 5
      %v11386 = vsel %vm2592, %v11384, %v11385
      %v11387 = vrot.slane %v11287, 5
      %v11388 = vrot.slane %v11387, 4
      %v11389 = vrot.slane %v10562, 5
      %v11390 = vsel %vm2592, %v11388, %v11389
      %v11391 = vrot.slane %v11389, 4
      %v11392 = vrot.slane %v10563, 5
      %v11393 = vsel %vm2592, %v11391, %v11392
      %v11394 = vrot.slane %v11288, 5
      %v11395 = vrot.slane %v11394, 4
      %v11396 = vrot.slane %v10565, 5
      %v11397 = vsel %vm2592, %v11395, %v11396
      %v11398 = vrot.slane %v11396, 4
      %v11399 = vrot.slane %v10566, 5
      %v11400 = vsel %vm2592, %v11398, %v11399
      %v11401 = vrot.slane %v11289, 5
      %v11402 = vrot.slane %v11401, 4
      %v11403 = vrot.slane %v10568, 5
      %v11404 = vsel %vm2592, %v11402, %v11403
      %v11405 = vrot.slane %v11403, 4
      %v11406 = vrot.slane %v10569, 5
      %v11407 = vsel %vm2592, %v11405, %v11406
      %v11408 = vrot.slane %v11290, 5
      %v11409 = vrot.slane %v11408, 4
      %v11410 = vrot.slane %v10571, 5
      %v11411 = vsel %vm2592, %v11409, %v11410
      %v11412 = vrot.slane %v11410, 4
      %v11413 = vrot.slane %v10572, 5
      %v11414 = vsel %vm2592, %v11412, %v11413
      %v11415 = vrot.slane %v11291, 5
      %v11416 = vrot.slane %v11415, 4
      %v11417 = vrot.slane %v10574, 5
      %v11418 = vsel %vm2592, %v11416, %v11417
      %v11419 = vrot.slane %v11417, 4
      %v11420 = vrot.slane %v10575, 5
      %v11421 = vsel %vm2592, %v11419, %v11420
      %v11422 = vrot.slane %v11292, 5
      %v11423 = vrot.slane %v11422, 4
      %v11424 = vrot.slane %v10577, 5
      %v11425 = vsel %vm2592, %v11423, %v11424
      %v11426 = vrot.slane %v11424, 4
      %v11427 = vrot.slane %v10578, 5
      %v11428 = vsel %vm2592, %v11426, %v11427
      %v11429 = vrot.slane %v11293, 5
      %v11430 = vrot.slane %v11429, 4
      %v11431 = vrot.slane %v10580, 5
      %v11432 = vsel %vm2592, %v11430, %v11431
      %v11433 = vrot.slane %v11431, 4
      %v11434 = vrot.slane %v10581, 5
      %v11435 = vsel %vm2592, %v11433, %v11434
      %v11436 = vrot.slane %v11294, 5
      %v11437 = vrot.slane %v11436, 4
      %v11438 = vrot.slane %v10583, 5
      %v11439 = vsel %vm2592, %v11437, %v11438
      %v11440 = vrot.slane %v11438, 4
      %v11441 = vrot.slane %v10584, 5
      %v11442 = vsel %vm2592, %v11440, %v11441
      %v11443 = vrot.slane %v11295, 5
      %v11444 = vrot.slane %v11443, 4
      %v11445 = vrot.slane %v10586, 5
      %v11446 = vsel %vm2592, %v11444, %v11445
      %v11447 = vrot.slane %v11445, 4
      %v11448 = vrot.slane %v10587, 5
      %v11449 = vsel %vm2592, %v11447, %v11448
      %v11450 = vrot.slane %v11296, 5
      %v11451 = vrot.slane %v11450, 4
      %v11452 = vrot.slane %v10589, 5
      %v11453 = vsel %vm2592, %v11451, %v11452
      %v11454 = vrot.slane %v11452, 4
      %v11455 = vrot.slane %v10590, 5
      %v11456 = vsel %vm2592, %v11454, %v11455
      %s11457 = scalar_lea.vmem %s3, 128
      %v11458 = vld [vmem:[%s11457] sm:$0xf]
      %v11459 = vld [vmem:[%s11457 + $0x4] sm:$0xf]
      %v11460 = vld [vmem:[%s11457 + $0x8] sm:$0xf]
      %v11461 = vld [vmem:[%s11457 + $0xc] sm:$0xf]
      %v11462 = vunpack.c.l.b16 %v11348
      %v11463 = vunpack.c.l.b16 %v11351
      %v11464 = vunpack.c.l.b16 %v11355
      %v11465 = vunpack.c.l.b16 %v11358
      %v11466 = vunpack.c.l.b16 %v11362
      %v11467 = vunpack.c.l.b16 %v11365
      %v11468 = vunpack.c.l.b16 %v11369
      %v11469 = vunpack.c.l.b16 %v11372
      %v11470 = vunpack.c.l.b16 %v11376
      %v11471 = vunpack.c.l.b16 %v11379
      %v11472 = vunpack.c.l.b16 %v11383
      %v11473 = vunpack.c.l.b16 %v11386
      %v11474 = vunpack.c.l.b16 %v11390
      %v11475 = vunpack.c.l.b16 %v11393
      %v11476 = vunpack.c.l.b16 %v11397
      %v11477 = vunpack.c.l.b16 %v11400
      %v11478 = vunpack.c.l.b16 %v11404
      %v11479 = vunpack.c.l.b16 %v11407
      %v11480 = vunpack.c.l.b16 %v11411
      %v11481 = vunpack.c.l.b16 %v11414
      %v11482 = vunpack.c.l.b16 %v11418
      %v11483 = vunpack.c.l.b16 %v11421
      %v11484 = vunpack.c.l.b16 %v11425
      %v11485 = vunpack.c.l.b16 %v11428
      %v11486 = vunpack.c.l.b16 %v11432
      %v11487 = vunpack.c.l.b16 %v11435
      %v11488 = vunpack.c.l.b16 %v11439
      %v11489 = vunpack.c.l.b16 %v11442
      %v11490 = vunpack.c.l.b16 %v11446
      %v11491 = vunpack.c.l.b16 %v11449
      %v11492 = vunpack.c.l.b16 %v11453
      %v11493 = vunpack.c.l.b16 %v11456
      %v11494 = vpack.c.b16 %v11463, %v11462
      %v11495 = vpack.c.b16 %v11465, %v11464
      %v11496 = vpack.c.b16 %v11467, %v11466
      %v11497 = vpack.c.b16 %v11469, %v11468
      %v11498 = vpack.c.b16 %v11471, %v11470
      %v11499 = vpack.c.b16 %v11473, %v11472
      %v11500 = vpack.c.b16 %v11475, %v11474
      %v11501 = vpack.c.b16 %v11477, %v11476
      %v11502 = vpack.c.b16 %v11479, %v11478
      %v11503 = vpack.c.b16 %v11481, %v11480
      %v11504 = vpack.c.b16 %v11483, %v11482
      %v11505 = vpack.c.b16 %v11485, %v11484
      %v11506 = vpack.c.b16 %v11487, %v11486
      %v11507 = vpack.c.b16 %v11489, %v11488
      %v11508 = vpack.c.b16 %v11491, %v11490
      %v11509 = vpack.c.b16 %v11493, %v11492
      %v11514 = vunpack.c.l.b16 %v11458
      %v11515 = vunpack.c.l.b16 %v11459
      %v11516 = vunpack.c.l.b16 %v11460
      %v11517 = vunpack.c.l.b16 %v11461
      %v11518 = vpack.c.b16 %v11515, %v11514
      %v11519 = vpack.c.b16 %v11517, %v11516
      %v11523 = vsel %vm6304, %v11494, 0
      %v11526 = vsel %vm6304, %v11495, 0
      %v11529 = vsel %vm6304, %v11496, 0
      %v11532 = vsel %vm6304, %v11497, 0
      %v11535 = vsel %vm6304, %v11498, 0
      %v11538 = vsel %vm6304, %v11499, 0
      %v11541 = vsel %vm6304, %v11500, 0
      %v11544 = vsel %vm6304, %v11501, 0
      %v11547 = vsel %vm6304, %v11502, 0
      %v11550 = vsel %vm6304, %v11503, 0
      %v11553 = vsel %vm6304, %v11504, 0
      %v11556 = vsel %vm6304, %v11505, 0
      %v11559 = vsel %vm6304, %v11506, 0
      %v11562 = vsel %vm6304, %v11507, 0
      %v11565 = vsel %vm6304, %v11508, 0
      %v11568 = vsel %vm6304, %v11509, 0
      %11570 = vmatprep.subr.bf16.mxu0 0
      %11571 = vmatpush1.bf16.msra.mxu0 0
      %11572 = vmatprep.subr.bf16.mxu0 0
      %11573 = vmatpush1.bf16.msra.mxu0 0
      %11574 = vmatprep.subr.bf16.mxu0 0
      %11575 = vmatpush1.bf16.msra.mxu0 0
      %11576 = vmatprep.subr.bf16.mxu0 0
      %11577 = vmatpush1.bf16.msra.mxu0 0
      %11578 = vmatprep.subr.bf16.mxu0 0
      %11579 = vmatpush1.bf16.msra.mxu0 0
      %11580 = vmatprep.subr.bf16.mxu0 0
      %11581 = vmatpush1.bf16.msra.mxu0 0
      %11582 = vmatprep.subr.bf16.mxu0 0
      %11583 = vmatpush1.bf16.msra.mxu0 %v11519
      %11584 = vmatprep.subr.bf16.mxu0 0
      %11585 = vmatpush1.bf16.msra.mxu0 %v11518
      %11586 = vmatprep.subr.bf16.mxu0 0
      %11587 = vmatpush2.bf16.msra.mxu0 0
      %11588 = vmatprep.subr.bf16.mxu0 0
      %11589 = vmatpush2.bf16.msra.mxu0 0
      %11590 = vmatprep.subr.bf16.mxu0 0
      %11591 = vmatpush2.bf16.msra.mxu0 0
      %11592 = vmatprep.subr.bf16.mxu0 0
      %11593 = vmatpush2.bf16.msra.mxu0 0
      %11594 = vmatprep.subr.bf16.mxu0 0
      %11595 = vmatpush2.bf16.msra.mxu0 0
      %11596 = vmatprep.subr.bf16.mxu0 0
      %11597 = vmatpush2.bf16.msra.mxu0 0
      %11598 = vmatprep.subr.bf16.mxu0 0
      %11599 = vmatpush2.bf16.msra.mxu0 0
      %11600 = vmatprep.subr.bf16.mxu0 0
      %11601 = vmatpush2.bf16.msra.mxu0 0
      %11602 = vmatprep.mubr.bf16.mxu0 0
      %11603 = vmatmul.mubr.bf16.gmra.mxu0 %v11523
      %v11604 = vpop.f32.mrf.mxu0
      %v11605 = vadd.f32 0.0, %v11604
      %v11606 = vpop.f32.mrf.mxu0
      %v11607 = vpop.f32.mrf.mxu0
      %v11608 = vadd.f32 0.0, %v11607
      %v11609 = vpop.f32.mrf.mxu0
      %11610 = vmatprep.mubr.bf16.mxu0 0
      %11611 = vmatmul.mubr.bf16.gmra.mxu0 %v11526
      %v11612 = vpop.f32.mrf.mxu0
      %v11613 = vadd.f32 0.0, %v11612
      %v11614 = vpop.f32.mrf.mxu0
      %v11615 = vpop.f32.mrf.mxu0
      %v11616 = vadd.f32 0.0, %v11615
      %v11617 = vpop.f32.mrf.mxu0
      %11618 = vmatprep.mubr.bf16.mxu0 0
      %11619 = vmatmul.mubr.bf16.gmra.mxu0 %v11529
      %v11620 = vpop.f32.mrf.mxu0
      %v11621 = vadd.f32 0.0, %v11620
      %v11622 = vpop.f32.mrf.mxu0
      %v11623 = vpop.f32.mrf.mxu0
      %v11624 = vadd.f32 0.0, %v11623
      %v11625 = vpop.f32.mrf.mxu0
      %11626 = vmatprep.mubr.bf16.mxu0 0
      %11627 = vmatmul.mubr.bf16.gmra.mxu0 %v11532
      %v11628 = vpop.f32.mrf.mxu0
      %v11629 = vadd.f32 0.0, %v11628
      %v11630 = vpop.f32.mrf.mxu0
      %v11631 = vpop.f32.mrf.mxu0
      %v11632 = vadd.f32 0.0, %v11631
      %v11633 = vpop.f32.mrf.mxu0
      %11634 = vmatprep.mubr.bf16.mxu0 0
      %11635 = vmatmul.mubr.bf16.gmra.mxu0 %v11535
      %v11636 = vpop.f32.mrf.mxu0
      %v11637 = vadd.f32 0.0, %v11636
      %v11638 = vpop.f32.mrf.mxu0
      %v11639 = vpop.f32.mrf.mxu0
      %v11640 = vadd.f32 0.0, %v11639
      %v11641 = vpop.f32.mrf.mxu0
      %11642 = vmatprep.mubr.bf16.mxu0 0
      %11643 = vmatmul.mubr.bf16.gmra.mxu0 %v11538
      %v11644 = vpop.f32.mrf.mxu0
      %v11645 = vadd.f32 0.0, %v11644
      %v11646 = vpop.f32.mrf.mxu0
      %v11647 = vpop.f32.mrf.mxu0
      %v11648 = vadd.f32 0.0, %v11647
      %v11649 = vpop.f32.mrf.mxu0
      %11650 = vmatprep.mubr.bf16.mxu0 0
      %11651 = vmatmul.mubr.bf16.gmra.mxu0 %v11541
      %v11652 = vpop.f32.mrf.mxu0
      %v11653 = vadd.f32 0.0, %v11652
      %v11654 = vpop.f32.mrf.mxu0
      %v11655 = vpop.f32.mrf.mxu0
      %v11656 = vadd.f32 0.0, %v11655
      %v11657 = vpop.f32.mrf.mxu0
      %11658 = vmatprep.mubr.bf16.mxu0 0
      %11659 = vmatmul.mubr.bf16.gmra.mxu0 %v11544
      %v11660 = vpop.f32.mrf.mxu0
      %v11661 = vadd.f32 0.0, %v11660
      %v11662 = vpop.f32.mrf.mxu0
      %v11663 = vpop.f32.mrf.mxu0
      %v11664 = vadd.f32 0.0, %v11663
      %v11665 = vpop.f32.mrf.mxu0
      %11666 = vmatprep.mubr.bf16.mxu0 0
      %11667 = vmatmul.mubr.bf16.gmra.mxu0 %v11547
      %v11668 = vpop.f32.mrf.mxu0
      %v11669 = vadd.f32 0.0, %v11668
      %v11670 = vpop.f32.mrf.mxu0
      %v11671 = vpop.f32.mrf.mxu0
      %v11672 = vadd.f32 0.0, %v11671
      %v11673 = vpop.f32.mrf.mxu0
      %11674 = vmatprep.mubr.bf16.mxu0 0
      %11675 = vmatmul.mubr.bf16.gmra.mxu0 %v11550
      %v11676 = vpop.f32.mrf.mxu0
      %v11677 = vadd.f32 0.0, %v11676
      %v11678 = vpop.f32.mrf.mxu0
      %v11679 = vpop.f32.mrf.mxu0
      %v11680 = vadd.f32 0.0, %v11679
      %v11681 = vpop.f32.mrf.mxu0
      %11682 = vmatprep.mubr.bf16.mxu0 0
      %11683 = vmatmul.mubr.bf16.gmra.mxu0 %v11553
      %v11684 = vpop.f32.mrf.mxu0
      %v11685 = vadd.f32 0.0, %v11684
      %v11686 = vpop.f32.mrf.mxu0
      %v11687 = vpop.f32.mrf.mxu0
      %v11688 = vadd.f32 0.0, %v11687
      %v11689 = vpop.f32.mrf.mxu0
      %11690 = vmatprep.mubr.bf16.mxu0 0
      %11691 = vmatmul.mubr.bf16.gmra.mxu0 %v11556
      %v11692 = vpop.f32.mrf.mxu0
      %v11693 = vadd.f32 0.0, %v11692
      %v11694 = vpop.f32.mrf.mxu0
      %v11695 = vpop.f32.mrf.mxu0
      %v11696 = vadd.f32 0.0, %v11695
      %v11697 = vpop.f32.mrf.mxu0
      %11698 = vmatprep.mubr.bf16.mxu0 0
      %11699 = vmatmul.mubr.bf16.gmra.mxu0 %v11559
      %v11700 = vpop.f32.mrf.mxu0
      %v11701 = vadd.f32 0.0, %v11700
      %v11702 = vpop.f32.mrf.mxu0
      %v11703 = vpop.f32.mrf.mxu0
      %v11704 = vadd.f32 0.0, %v11703
      %v11705 = vpop.f32.mrf.mxu0
      %11706 = vmatprep.mubr.bf16.mxu0 0
      %11707 = vmatmul.mubr.bf16.gmra.mxu0 %v11562
      %v11708 = vpop.f32.mrf.mxu0
      %v11709 = vadd.f32 0.0, %v11708
      %v11710 = vpop.f32.mrf.mxu0
      %v11711 = vpop.f32.mrf.mxu0
      %v11712 = vadd.f32 0.0, %v11711
      %v11713 = vpop.f32.mrf.mxu0
      %11714 = vmatprep.mubr.bf16.mxu0 0
      %11715 = vmatmul.mubr.bf16.gmra.mxu0 %v11565
      %v11716 = vpop.f32.mrf.mxu0
      %v11717 = vadd.f32 0.0, %v11716
      %v11718 = vpop.f32.mrf.mxu0
      %v11719 = vpop.f32.mrf.mxu0
      %v11720 = vadd.f32 0.0, %v11719
      %v11721 = vpop.f32.mrf.mxu0
      %11722 = vmatprep.mubr.bf16.mxu0 0
      %11723 = vmatmul.mubr.bf16.gmra.mxu0 %v11568
      %v11724 = vpop.f32.mrf.mxu0
      %v11725 = vadd.f32 0.0, %v11724
      %v11726 = vpop.f32.mrf.mxu0
      %v11727 = vpop.f32.mrf.mxu0
      %v11728 = vadd.f32 0.0, %v11727
      %v11729 = vpop.f32.mrf.mxu0
      %11730 = vdwg.mxu0
      %v11731 = vadd.f32 %v11249, %v11605
      %v11732 = vadd.f32 %v11250, %v11608
      %v11733 = vadd.f32 %v11251, %v11613
      %v11734 = vadd.f32 %v11252, %v11616
      %v11735 = vadd.f32 %v11253, %v11621
      %v11736 = vadd.f32 %v11254, %v11624
      %v11737 = vadd.f32 %v11255, %v11629
      %v11738 = vadd.f32 %v11256, %v11632
      %v11739 = vadd.f32 %v11257, %v11637
      %v11740 = vadd.f32 %v11258, %v11640
      %v11741 = vadd.f32 %v11259, %v11645
      %v11742 = vadd.f32 %v11260, %v11648
      %v11743 = vadd.f32 %v11261, %v11653
      %v11744 = vadd.f32 %v11262, %v11656
      %v11745 = vadd.f32 %v11263, %v11661
      %v11746 = vadd.f32 %v11264, %v11664
      %v11747 = vadd.f32 %v11265, %v11669
      %v11748 = vadd.f32 %v11266, %v11672
      %v11749 = vadd.f32 %v11267, %v11677
      %v11750 = vadd.f32 %v11268, %v11680
      %v11751 = vadd.f32 %v11269, %v11685
      %v11752 = vadd.f32 %v11270, %v11688
      %v11753 = vadd.f32 %v11271, %v11693
      %v11754 = vadd.f32 %v11272, %v11696
      %v11755 = vadd.f32 %v11273, %v11701
      %v11756 = vadd.f32 %v11274, %v11704
      %v11757 = vadd.f32 %v11275, %v11709
      %v11758 = vadd.f32 %v11276, %v11712
      %v11759 = vadd.f32 %v11277, %v11717
      %v11760 = vadd.f32 %v11278, %v11720
      %v11761 = vadd.f32 %v11279, %v11725
      %v11762 = vadd.f32 %v11280, %v11728
      %v11763 = vsel %vm6304, %v11731, 0.0
      %v11764 = vsel %vm6304, %v11732, 0.0
      %v11765 = vadd.f32 %v11763, %v11764
      %v11766 = vsel %vm6304, %v11733, 0.0
      %v11767 = vadd.f32 %v11765, %v11766
      %v11768 = vsel %vm6304, %v11734, 0.0
      %v11769 = vadd.f32 %v11767, %v11768
      %v11770 = vsel %vm6304, %v11735, 0.0
      %v11771 = vadd.f32 %v11769, %v11770
      %v11772 = vsel %vm6304, %v11736, 0.0
      %v11773 = vadd.f32 %v11771, %v11772
      %v11774 = vsel %vm6304, %v11737, 0.0
      %v11775 = vadd.f32 %v11773, %v11774
      %v11776 = vsel %vm6304, %v11738, 0.0
      %v11777 = vadd.f32 %v11775, %v11776
      %v11778 = vsel %vm6304, %v11739, 0.0
      %v11779 = vadd.f32 %v11777, %v11778
      %v11780 = vsel %vm6304, %v11740, 0.0
      %v11781 = vadd.f32 %v11779, %v11780
      %v11782 = vsel %vm6304, %v11741, 0.0
      %v11783 = vadd.f32 %v11781, %v11782
      %v11784 = vsel %vm6304, %v11742, 0.0
      %v11785 = vadd.f32 %v11783, %v11784
      %v11786 = vsel %vm6304, %v11743, 0.0
      %v11787 = vadd.f32 %v11785, %v11786
      %v11788 = vsel %vm6304, %v11744, 0.0
      %v11789 = vadd.f32 %v11787, %v11788
      %v11790 = vsel %vm6304, %v11745, 0.0
      %v11791 = vadd.f32 %v11789, %v11790
      %v11792 = vsel %vm6304, %v11746, 0.0
      %v11793 = vadd.f32 %v11791, %v11792
      %v11794 = vsel %vm6304, %v11747, 0.0
      %v11795 = vadd.f32 %v11793, %v11794
      %v11796 = vsel %vm6304, %v11748, 0.0
      %v11797 = vadd.f32 %v11795, %v11796
      %v11798 = vsel %vm6304, %v11749, 0.0
      %v11799 = vadd.f32 %v11797, %v11798
      %v11800 = vsel %vm6304, %v11750, 0.0
      %v11801 = vadd.f32 %v11799, %v11800
      %v11802 = vsel %vm6304, %v11751, 0.0
      %v11803 = vadd.f32 %v11801, %v11802
      %v11804 = vsel %vm6304, %v11752, 0.0
      %v11805 = vadd.f32 %v11803, %v11804
      %v11806 = vsel %vm6304, %v11753, 0.0
      %v11807 = vadd.f32 %v11805, %v11806
      %v11808 = vsel %vm6304, %v11754, 0.0
      %v11809 = vadd.f32 %v11807, %v11808
      %v11810 = vsel %vm6304, %v11755, 0.0
      %v11811 = vadd.f32 %v11809, %v11810
      %v11812 = vsel %vm6304, %v11756, 0.0
      %v11813 = vadd.f32 %v11811, %v11812
      %v11814 = vsel %vm6304, %v11757, 0.0
      %v11815 = vadd.f32 %v11813, %v11814
      %v11816 = vsel %vm6304, %v11758, 0.0
      %v11817 = vadd.f32 %v11815, %v11816
      %v11818 = vsel %vm6304, %v11759, 0.0
      %v11819 = vadd.f32 %v11817, %v11818
      %v11820 = vsel %vm6304, %v11760, 0.0
      %v11821 = vadd.f32 %v11819, %v11820
      %v11822 = vsel %vm6304, %v11761, 0.0
      %v11823 = vadd.f32 %v11821, %v11822
      %v11824 = vsel %vm6304, %v11762, 0.0
      %v11825 = vadd.f32 %v11823, %v11824
      %v11826 = vrot.slane %v11825, 4
      %v11827 = vadd.f32 %v11825, %v11826
      %v11828 = vrot.slane %v11827, 2
      %v11829 = vadd.f32 %v11827, %v11828
      %v11830 = vrot.slane %v11829, 1
      %v11831 = vadd.f32 %v11829, %v11830
      %v11832 = vmul.f32 %v11831, %v6374
      %v11833 = vsub.f32 %v11731, %v11832
      %v11834 = vsub.f32 %v11732, %v11832
      %v11835 = vsub.f32 %v11733, %v11832
      %v11836 = vsub.f32 %v11734, %v11832
      %v11837 = vsub.f32 %v11735, %v11832
      %v11838 = vsub.f32 %v11736, %v11832
      %v11839 = vsub.f32 %v11737, %v11832
      %v11840 = vsub.f32 %v11738, %v11832
      %v11841 = vsub.f32 %v11739, %v11832
      %v11842 = vsub.f32 %v11740, %v11832
      %v11843 = vsub.f32 %v11741, %v11832
      %v11844 = vsub.f32 %v11742, %v11832
      %v11845 = vsub.f32 %v11743, %v11832
      %v11846 = vsub.f32 %v11744, %v11832
      %v11847 = vsub.f32 %v11745, %v11832
      %v11848 = vsub.f32 %v11746, %v11832
      %v11849 = vsub.f32 %v11747, %v11832
      %v11850 = vsub.f32 %v11748, %v11832
      %v11851 = vsub.f32 %v11749, %v11832
      %v11852 = vsub.f32 %v11750, %v11832
      %v11853 = vsub.f32 %v11751, %v11832
      %v11854 = vsub.f32 %v11752, %v11832
      %v11855 = vsub.f32 %v11753, %v11832
      %v11856 = vsub.f32 %v11754, %v11832
      %v11857 = vsub.f32 %v11755, %v11832
      %v11858 = vsub.f32 %v11756, %v11832
      %v11859 = vsub.f32 %v11757, %v11832
      %v11860 = vsub.f32 %v11758, %v11832
      %v11861 = vsub.f32 %v11759, %v11832
      %v11862 = vsub.f32 %v11760, %v11832
      %v11863 = vsub.f32 %v11761, %v11832
      %v11864 = vsub.f32 %v11762, %v11832
      %v11865 = vmul.f32 %v11833, %v11833
      %v11866 = vmul.f32 %v11834, %v11834
      %v11867 = vmul.f32 %v11835, %v11835
      %v11868 = vmul.f32 %v11836, %v11836
      %v11869 = vmul.f32 %v11837, %v11837
      %v11870 = vmul.f32 %v11838, %v11838
      %v11871 = vmul.f32 %v11839, %v11839
      %v11872 = vmul.f32 %v11840, %v11840
      %v11873 = vmul.f32 %v11841, %v11841
      %v11874 = vmul.f32 %v11842, %v11842
      %v11875 = vmul.f32 %v11843, %v11843
      %v11876 = vmul.f32 %v11844, %v11844
      %v11877 = vmul.f32 %v11845, %v11845
      %v11878 = vmul.f32 %v11846, %v11846
      %v11879 = vmul.f32 %v11847, %v11847
      %v11880 = vmul.f32 %v11848, %v11848
      %v11881 = vmul.f32 %v11849, %v11849
      %v11882 = vmul.f32 %v11850, %v11850
      %v11883 = vmul.f32 %v11851, %v11851
      %v11884 = vmul.f32 %v11852, %v11852
      %v11885 = vmul.f32 %v11853, %v11853
      %v11886 = vmul.f32 %v11854, %v11854
      %v11887 = vmul.f32 %v11855, %v11855
      %v11888 = vmul.f32 %v11856, %v11856
      %v11889 = vmul.f32 %v11857, %v11857
      %v11890 = vmul.f32 %v11858, %v11858
      %v11891 = vmul.f32 %v11859, %v11859
      %v11892 = vmul.f32 %v11860, %v11860
      %v11893 = vmul.f32 %v11861, %v11861
      %v11894 = vmul.f32 %v11862, %v11862
      %v11895 = vmul.f32 %v11863, %v11863
      %v11896 = vmul.f32 %v11864, %v11864
      %v11897 = vsel %vm6304, %v11865, 0.0
      %v11898 = vsel %vm6304, %v11866, 0.0
      %v11899 = vadd.f32 %v11897, %v11898
      %v11900 = vsel %vm6304, %v11867, 0.0
      %v11901 = vadd.f32 %v11899, %v11900
      %v11902 = vsel %vm6304, %v11868, 0.0
      %v11903 = vadd.f32 %v11901, %v11902
      %v11904 = vsel %vm6304, %v11869, 0.0
      %v11905 = vadd.f32 %v11903, %v11904
      %v11906 = vsel %vm6304, %v11870, 0.0
      %v11907 = vadd.f32 %v11905, %v11906
      %v11908 = vsel %vm6304, %v11871, 0.0
      %v11909 = vadd.f32 %v11907, %v11908
      %v11910 = vsel %vm6304, %v11872, 0.0
      %v11911 = vadd.f32 %v11909, %v11910
      %v11912 = vsel %vm6304, %v11873, 0.0
      %v11913 = vadd.f32 %v11911, %v11912
      %v11914 = vsel %vm6304, %v11874, 0.0
      %v11915 = vadd.f32 %v11913, %v11914
      %v11916 = vsel %vm6304, %v11875, 0.0
      %v11917 = vadd.f32 %v11915, %v11916
      %v11918 = vsel %vm6304, %v11876, 0.0
      %v11919 = vadd.f32 %v11917, %v11918
      %v11920 = vsel %vm6304, %v11877, 0.0
      %v11921 = vadd.f32 %v11919, %v11920
      %v11922 = vsel %vm6304, %v11878, 0.0
      %v11923 = vadd.f32 %v11921, %v11922
      %v11924 = vsel %vm6304, %v11879, 0.0
      %v11925 = vadd.f32 %v11923, %v11924
      %v11926 = vsel %vm6304, %v11880, 0.0
      %v11927 = vadd.f32 %v11925, %v11926
      %v11928 = vsel %vm6304, %v11881, 0.0
      %v11929 = vadd.f32 %v11927, %v11928
      %v11930 = vsel %vm6304, %v11882, 0.0
      %v11931 = vadd.f32 %v11929, %v11930
      %v11932 = vsel %vm6304, %v11883, 0.0
      %v11933 = vadd.f32 %v11931, %v11932
      %v11934 = vsel %vm6304, %v11884, 0.0
      %v11935 = vadd.f32 %v11933, %v11934
      %v11936 = vsel %vm6304, %v11885, 0.0
      %v11937 = vadd.f32 %v11935, %v11936
      %v11938 = vsel %vm6304, %v11886, 0.0
      %v11939 = vadd.f32 %v11937, %v11938
      %v11940 = vsel %vm6304, %v11887, 0.0
      %v11941 = vadd.f32 %v11939, %v11940
      %v11942 = vsel %vm6304, %v11888, 0.0
      %v11943 = vadd.f32 %v11941, %v11942
      %v11944 = vsel %vm6304, %v11889, 0.0
      %v11945 = vadd.f32 %v11943, %v11944
      %v11946 = vsel %vm6304, %v11890, 0.0
      %v11947 = vadd.f32 %v11945, %v11946
      %v11948 = vsel %vm6304, %v11891, 0.0
      %v11949 = vadd.f32 %v11947, %v11948
      %v11950 = vsel %vm6304, %v11892, 0.0
      %v11951 = vadd.f32 %v11949, %v11950
      %v11952 = vsel %vm6304, %v11893, 0.0
      %v11953 = vadd.f32 %v11951, %v11952
      %v11954 = vsel %vm6304, %v11894, 0.0
      %v11955 = vadd.f32 %v11953, %v11954
      %v11956 = vsel %vm6304, %v11895, 0.0
      %v11957 = vadd.f32 %v11955, %v11956
      %v11958 = vsel %vm6304, %v11896, 0.0
      %v11959 = vadd.f32 %v11957, %v11958
      %v11960 = vrot.slane %v11959, 4
      %v11961 = vadd.f32 %v11959, %v11960
      %v11962 = vrot.slane %v11961, 2
      %v11963 = vadd.f32 %v11961, %v11962
      %v11964 = vrot.slane %v11963, 1
      %v11965 = vadd.f32 %v11963, %v11964
      %v11966 = vmul.f32 %v11965, %v6374
      %v11967 = vadd.f32 %v11966, 1e-05
      %v11968 = vrsqrt.pop %v11967
      %v11969 = vmul.f32 %v11833, %v11968
      %v11970 = vmul.f32 %v11834, %v11968
      %v11971 = vmul.f32 %v11835, %v11968
      %v11972 = vmul.f32 %v11836, %v11968
      %v11973 = vmul.f32 %v11837, %v11968
      %v11974 = vmul.f32 %v11838, %v11968
      %v11975 = vmul.f32 %v11839, %v11968
      %v11976 = vmul.f32 %v11840, %v11968
      %v11977 = vmul.f32 %v11841, %v11968
      %v11978 = vmul.f32 %v11842, %v11968
      %v11979 = vmul.f32 %v11843, %v11968
      %v11980 = vmul.f32 %v11844, %v11968
      %v11981 = vmul.f32 %v11845, %v11968
      %v11982 = vmul.f32 %v11846, %v11968
      %v11983 = vmul.f32 %v11847, %v11968
      %v11984 = vmul.f32 %v11848, %v11968
      %v11985 = vmul.f32 %v11849, %v11968
      %v11986 = vmul.f32 %v11850, %v11968
      %v11987 = vmul.f32 %v11851, %v11968
      %v11988 = vmul.f32 %v11852, %v11968
      %v11989 = vmul.f32 %v11853, %v11968
      %v11990 = vmul.f32 %v11854, %v11968
      %v11991 = vmul.f32 %v11855, %v11968
      %v11992 = vmul.f32 %v11856, %v11968
      %v11993 = vmul.f32 %v11857, %v11968
      %v11994 = vmul.f32 %v11858, %v11968
      %v11995 = vmul.f32 %v11859, %v11968
      %v11996 = vmul.f32 %v11860, %v11968
      %v11997 = vmul.f32 %v11861, %v11968
      %v11998 = vmul.f32 %v11862, %v11968
      %v11999 = vmul.f32 %v11863, %v11968
      %v12000 = vmul.f32 %v11864, %v11968
      %v12001 = vmax.f32 %v11969, 0.0
      %v12002 = vmax.f32 %v11970, 0.0
      %v12003 = vmax.f32 %v11971, 0.0
      %v12004 = vmax.f32 %v11972, 0.0
      %v12005 = vmax.f32 %v11973, 0.0
      %v12006 = vmax.f32 %v11974, 0.0
      %v12007 = vmax.f32 %v11975, 0.0
      %v12008 = vmax.f32 %v11976, 0.0
      %v12009 = vmax.f32 %v11977, 0.0
      %v12010 = vmax.f32 %v11978, 0.0
      %v12011 = vmax.f32 %v11979, 0.0
      %v12012 = vmax.f32 %v11980, 0.0
      %v12013 = vmax.f32 %v11981, 0.0
      %v12014 = vmax.f32 %v11982, 0.0
      %v12015 = vmax.f32 %v11983, 0.0
      %v12016 = vmax.f32 %v11984, 0.0
      %v12017 = vmax.f32 %v11985, 0.0
      %v12018 = vmax.f32 %v11986, 0.0
      %v12019 = vmax.f32 %v11987, 0.0
      %v12020 = vmax.f32 %v11988, 0.0
      %v12021 = vmax.f32 %v11989, 0.0
      %v12022 = vmax.f32 %v11990, 0.0
      %v12023 = vmax.f32 %v11991, 0.0
      %v12024 = vmax.f32 %v11992, 0.0
      %v12025 = vmax.f32 %v11993, 0.0
      %v12026 = vmax.f32 %v11994, 0.0
      %v12027 = vmax.f32 %v11995, 0.0
      %v12028 = vmax.f32 %v11996, 0.0
      %v12029 = vmax.f32 %v11997, 0.0
      %v12030 = vmax.f32 %v11998, 0.0
      %v12031 = vmax.f32 %v11999, 0.0
      %v12032 = vmax.f32 %v12000, 0.0
      %12033 = vxpose.xlu0.b32.start [1/16] %v12001, 128
      %12034 = vxpose.xlu0.b32.cont [2/16] %v12002, 128
      %12035 = vxpose.xlu0.b32.cont [3/16] %v12003, 128
      %12036 = vxpose.xlu0.b32.cont [4/16] %v12004, 128
      %12037 = vxpose.xlu0.b32.cont [5/16] %v12005, 128
      %12038 = vxpose.xlu0.b32.cont [6/16] %v12006, 128
      %12039 = vxpose.xlu0.b32.cont [7/16] %v12007, 128
      %12040 = vxpose.xlu0.b32.cont [8/16] %v12008, 128
      %12041 = vxpose.xlu0.b32.cont [9/16] %v12009, 128
      %12042 = vxpose.xlu0.b32.cont [10/16] %v12010, 128
      %12043 = vxpose.xlu0.b32.cont [11/16] %v12011, 128
      %12044 = vxpose.xlu0.b32.cont [12/16] %v12012, 128
      %12045 = vxpose.xlu0.b32.cont [13/16] %v12013, 128
      %12046 = vxpose.xlu0.b32.cont [14/16] %v12014, 128
      %12047 = vxpose.xlu0.b32.cont [15/16] %v12015, 128
      %12048 = vxpose.xlu0.b32.end [16/16] %v12016, 128
      %v12049 = vpop.trf.xlu0
      %v12050 = vpop.trf.xlu0
      %v12051 = vpop.trf.xlu0
      %v12052 = vpop.trf.xlu0
      %v12053 = vpop.trf.xlu0
      %v12054 = vpop.trf.xlu0
      %v12055 = vpop.trf.xlu0
      %v12056 = vpop.trf.xlu0
      %v12057 = vpop.trf.xlu0
      %v12058 = vpop.trf.xlu0
      %v12059 = vpop.trf.xlu0
      %v12060 = vpop.trf.xlu0
      %v12061 = vpop.trf.xlu0
      %v12062 = vpop.trf.xlu0
      %v12063 = vpop.trf.xlu0
      %v12064 = vpop.trf.xlu0
      %12065 = vxpose.xlu0.b32.start [1/16] %v12017, 128
      %12066 = vxpose.xlu0.b32.cont [2/16] %v12018, 128
      %12067 = vxpose.xlu0.b32.cont [3/16] %v12019, 128
      %12068 = vxpose.xlu0.b32.cont [4/16] %v12020, 128
      %12069 = vxpose.xlu0.b32.cont [5/16] %v12021, 128
      %12070 = vxpose.xlu0.b32.cont [6/16] %v12022, 128
      %12071 = vxpose.xlu0.b32.cont [7/16] %v12023, 128
      %12072 = vxpose.xlu0.b32.cont [8/16] %v12024, 128
      %12073 = vxpose.xlu0.b32.cont [9/16] %v12025, 128
      %12074 = vxpose.xlu0.b32.cont [10/16] %v12026, 128
      %12075 = vxpose.xlu0.b32.cont [11/16] %v12027, 128
      %12076 = vxpose.xlu0.b32.cont [12/16] %v12028, 128
      %12077 = vxpose.xlu0.b32.cont [13/16] %v12029, 128
      %12078 = vxpose.xlu0.b32.cont [14/16] %v12030, 128
      %12079 = vxpose.xlu0.b32.cont [15/16] %v12031, 128
      %12080 = vxpose.xlu0.b32.end [16/16] %v12032, 128
      %v12081 = vpop.trf.xlu0
      %v12082 = vpop.trf.xlu0
      %v12083 = vpop.trf.xlu0
      %v12084 = vpop.trf.xlu0
      %v12085 = vpop.trf.xlu0
      %v12086 = vpop.trf.xlu0
      %v12087 = vpop.trf.xlu0
      %v12088 = vpop.trf.xlu0
      %v12089 = vpop.trf.xlu0
      %v12090 = vpop.trf.xlu0
      %v12091 = vpop.trf.xlu0
      %v12092 = vpop.trf.xlu0
      %v12093 = vpop.trf.xlu0
      %v12094 = vpop.trf.xlu0
      %v12095 = vpop.trf.xlu0
      %v12096 = vpop.trf.xlu0
      %12097 = vst [vmem:[%s217] sm:$0xff] %v12049
      %12098 = vst [vmem:[%s217 + $0x8] sm:$0xff] %v12081
      %12099 = vst [vmem:[%s217 + $0x10] sm:$0xff] %v12050
      %12100 = vst [vmem:[%s217 + $0x18] sm:$0xff] %v12082
      %12101 = vst [vmem:[%s217 + $0x20] sm:$0xff] %v12051
      %12102 = vst [vmem:[%s217 + $0x28] sm:$0xff] %v12083
      %12103 = vst [vmem:[%s217 + $0x30] sm:$0xff] %v12052
      %12104 = vst [vmem:[%s217 + $0x38] sm:$0xff] %v12084
      %p12105 = scmp.lt.s32.totalorder %s15, 1
      %s12106 = scalar_select %p12105, %s15, 1
      %s12107 = smul.addr %s12106, 8
      %s12108 = smul.addr %s12107, 8
      %s12109 = scalar_lea.vmem %s4, %s12108
      // Predicated region
      $region37: #{up_forward.3} parent=35 // pred_check
        %p12110 = pneg %p127
      $region38: #{up_forward.3} parent=35 // pred_check_branch
        %12112 = sbr.rel (%p12110) target = $region40
      $region39: #{up_forward.3} parent=35 // pred_region
        _
      $region40: #{up_forward.3} parent=35 // pred_fallthru
        _
    $region36: #{up_forward.3} parent=5 // pred_fallthru
      _
    %p12113 = scmp.le.s32.totalorder 2, %s10
    // Predicated region
    $region41: #{up_forward.3} parent=5 // pred_check
      %p12114 = pneg %p12113
    $region42: #{up_forward.3} parent=5 // pred_check_branch
      %12116 = sbr.rel (%p12114) target = $region44
    $region43: #{up_forward.3} parent=5 // pred_region
      %s12117 = ssub.s32 %s10, 2
      // Predicated region
      $region45: #{up_forward.3} parent=43 // pred_check
        %p12118 = pneg %p133
      $region46: #{up_forward.3} parent=43 // pred_check_branch
        %12120 = sbr.rel (%p12118) target = $region48
      $region47: #{up_forward.3} parent=43 // pred_region
        %p12121 = scmp.lt.s32.totalorder %s16, 1
        %s12122 = scalar_select %p12121, %s16, 1
        %s12123 = smul.addr %s12122, 8
        %s12124 = smul.addr %s12123, 8
        %s12125 = scalar_lea.vmem %s4, %s12124
      $region48: #{up_forward.3} parent=43 // pred_fallthru
        _
    $region44: #{up_forward.3} parent=5 // pred_fallthru
      _
  $region6: #{up_forward.3} parent=0 // loop_footer
    %s14 = sadd.s32 1, %s10
  $region7: #{up_forward.3} parent=0 // loop_footer_branch
    %9 = sbr.rel target = $region3
  $region8: #{up_forward.3} parent=0 // loop_exit
    _

</llo_original>
